<compile_context>
chip_gen: v5e
topology: v5e:2x2
jax: 0.10.0
libtpu: 0.0.40
codegen_flags: <defaults>
</compile_context>

<pallas_src>
import functools

import jax
import jax.numpy as jnp
from jax.experimental import pallas as pl
from jax.experimental.pallas import tpu as pltpu

EPS = 1e-5
LANE = 128
SUBLANE = 8
TP_MAX = 512                       # spatial rows per tile (fits v7x VMEM budget)
VMEM_LIMIT = 48 * 1024 * 1024      # < 64 MiB physical on v7x, < 128 MiB on v5e/v6e


def _round_up(v, m):
    return (v + m - 1) // m * m


# ---------------------------------------------------------------------------
# Pallas kernels
# ---------------------------------------------------------------------------
def _make_matmul_stats_kernel(n_ops):
    """patches_0..n-1, weights_0..n-1 -> conv output tile + partial IN stats."""

    def kernel(*refs):
        p_refs = refs[:n_ops]
        w_refs = refs[n_ops:2 * n_ops]
        y_ref, st_ref = refs[2 * n_ops], refs[2 * n_ops + 1]

        acc = jnp.dot(p_refs[0][0], w_refs[0][...],
                      preferred_element_type=jnp.float32)
        for t in range(1, n_ops):
            acc = acc + jnp.dot(p_refs[t][0], w_refs[t][...],
                                preferred_element_type=jnp.float32)
        y_ref[0] = acc

        s = jnp.sum(acc, axis=0, keepdims=True)          # (1, C)
        sq = jnp.sum(acc * acc, axis=0, keepdims=True)   # (1, C)
        row = jax.lax.broadcasted_iota(jnp.int32, (8, acc.shape[1]), 0)
        st_ref[...] = jnp.where(row == 0, s,
                                jnp.where(row == 1, sq, 0.0))[None, None]

    return kernel


def _make_norm_act_kernel(act, has_residual):
    """y * scale + shift -> activation -> (+ residual)."""

    def kernel(*refs):
        if has_residual:
            y_ref, sc_ref, sh_ref, r_ref, o_ref = refs
        else:
            y_ref, sc_ref, sh_ref, o_ref = refs
        out = y_ref[0] * sc_ref[0] + sh_ref[0]
        if act == "relu":
            out = jnp.maximum(out, 0.0)
        elif act == "leaky":
            out = jnp.where(out > 0, out, 0.01 * out)
        if has_residual:
            out = out + r_ref[0]
        o_ref[0] = out

    return kernel


# ---------------------------------------------------------------------------
# Host-side glue: im2col (NHWC), weight reshaping
# ---------------------------------------------------------------------------
def _im2col_nhwc(x, kh, kw, stride, pad):
    """x: (N, H, W, C) -> (N, Ho*Wo, kh*kw*C), Ho, Wo  (tap-major, channel-minor)."""
    n, h, w, c = x.shape
    xp = jnp.pad(x, ((0, 0), (pad, pad), (pad, pad), (0, 0)))
    ho = (h + 2 * pad - kh) // stride + 1
    wo = (w + 2 * pad - kw) // stride + 1
    taps = []
    for i in range(kh):
        for j in range(kw):
            taps.append(xp[:, i:i + stride * ho:stride, j:j + stride * wo:stride, :])
    patches = jnp.concatenate(taps, axis=-1).reshape(n, ho * wo, kh * kw * c)
    return patches, ho, wo


def _weight_to_mat(w):
    """(Cols, C_in, kh, kw) -> (kh*kw*C_in, Cols), matching _im2col_nhwc layout."""
    cols, ci, kh, kw = w.shape
    return w.transpose(2, 3, 1, 0).reshape(kh * kw * ci, cols)


# ---------------------------------------------------------------------------
# Fused Conv (sum over operands) + InstanceNorm + activation (+ residual)
# ---------------------------------------------------------------------------
def fused_conv_in_act(operands, gamma, beta, act, *, stride, pad,
                      phase_groups=1, residual=None):
    """operands: [(x_nhwc, w), ...] with w: (Cols, C_in_i, kh, kw),
    Cols == phase_groups * C_out.  gamma/beta are per real channel (C_out,).
    Returns NHWC activation with Cols channels (caller handles phase shuffle)."""
    cols = operands[0][1].shape[0]
    c_out = cols // phase_groups
    c_pad = _round_up(cols, LANE)
    n = operands[0][0].shape[0]

    patch_list, wmat_list = [], []
    ho = wo = None
    for x, w in operands:
        kh, kw = w.shape[2], w.shape[3]
        patches, ho, wo = _im2col_nhwc(x, kh, kw, stride, pad)
        k = patches.shape[-1]
        k_pad = _round_up(k, LANE)
        wm = _weight_to_mat(w)
        wmat_list.append(
            jnp.pad(wm, ((0, k_pad - k), (0, c_pad - cols))).astype(jnp.bfloat16))
        patch_list.append(
            jnp.pad(patches, ((0, 0), (0, 0), (0, k_pad - k))).astype(jnp.bfloat16))

    p_real = ho * wo
    tp = TP_MAX if p_real >= TP_MAX else _round_up(p_real, SUBLANE)
    p_pad = _round_up(p_real, tp)
    pt = p_pad // tp
    patch_list = [jnp.pad(p, ((0, 0), (0, p_pad - p_real), (0, 0)))
                  for p in patch_list]

    n_ops = len(operands)
    in_specs = (
        [pl.BlockSpec((1, tp, p.shape[-1]), lambda b, t: (b, t, 0))
         for p in patch_list]
        + [pl.BlockSpec(w.shape, lambda b, t: (0, 0)) for w in wmat_list])

    flops = 2 * n * p_pad * c_pad * sum(p.shape[-1] for p in patch_list)
    bytes_acc = (sum(int(p.size) * 2 for p in patch_list)
                 + sum(int(w.size) * 2 for w in wmat_list)
                 + n * p_pad * c_pad * 4 + n * pt * 8 * c_pad * 4)

    # Pass 1: tiled matmul + per-tile partial instance-norm statistics.
    y, stats = pl.pallas_call(
        _make_matmul_stats_kernel(n_ops),
        out_shape=(jax.ShapeDtypeStruct((n, p_pad, c_pad), jnp.float32),
                   jax.ShapeDtypeStruct((n, pt, 8, c_pad), jnp.float32)),
        grid=(n, pt),
        in_specs=in_specs,
        out_specs=(pl.BlockSpec((1, tp, c_pad), lambda b, t: (b, t, 0)),
                   pl.BlockSpec((1, 1, 8, c_pad), lambda b, t: (b, t, 0, 0))),
        compiler_params=pltpu.CompilerParams(
            dimension_semantics=("parallel", "parallel"),
            vmem_limit_bytes=VMEM_LIMIT),
        cost_estimate=pl.CostEstimate(flops=flops, transcendentals=0,
                                      bytes_accessed=bytes_acc),
    )(*patch_list, *wmat_list)

    # Tiny per-channel reduction in JAX (padded rows/channels contribute zeros).
    col_sum = jnp.sum(stats[:, :, 0, :], axis=1)        # (N, c_pad)
    col_sq = jnp.sum(stats[:, :, 1, :], axis=1)
    if phase_groups > 1:
        count = float(p_real * phase_groups)
        s = col_sum[:, :cols].reshape(n, phase_groups, c_out).sum(axis=1)
        q = col_sq[:, :cols].reshape(n, phase_groups, c_out).sum(axis=1)
        mean = s / count
        var = jnp.maximum(q / count - mean * mean, 0.0)
        scale_c = gamma * jax.lax.rsqrt(var + EPS)       # (N, c_out)
        shift_c = beta - mean * scale_c
        scale = jnp.pad(jnp.tile(scale_c, (1, phase_groups)),
                        ((0, 0), (0, c_pad - cols)))
        shift = jnp.pad(jnp.tile(shift_c, (1, phase_groups)),
                        ((0, 0), (0, c_pad - cols)))
    else:
        count = float(p_real)
        mean = col_sum / count
        var = jnp.maximum(col_sq / count - mean * mean, 0.0)
        g = jnp.pad(gamma, (0, c_pad - cols))
        b = jnp.pad(beta, (0, c_pad - cols))
        scale = g * jax.lax.rsqrt(var + EPS)             # (N, c_pad)
        shift = b - mean * scale
    scale = scale.reshape(n, 1, c_pad).astype(jnp.float32)
    shift = shift.reshape(n, 1, c_pad).astype(jnp.float32)

    # Pass 2: normalize + affine + activation (+ fused residual add).
    args = [y, scale, shift]
    in_specs2 = [pl.BlockSpec((1, tp, c_pad), lambda b, t: (b, t, 0)),
                 pl.BlockSpec((1, 1, c_pad), lambda b, t: (b, 0, 0)),
                 pl.BlockSpec((1, 1, c_pad), lambda b, t: (b, 0, 0))]
    if residual is not None:
        r = residual.reshape(n, p_real, cols).astype(jnp.float32)
        r = jnp.pad(r, ((0, 0), (0, p_pad - p_real), (0, c_pad - cols)))
        args.append(r)
        in_specs2.append(pl.BlockSpec((1, tp, c_pad), lambda b, t: (b, t, 0)))

    out = pl.pallas_call(
        _make_norm_act_kernel(act, residual is not None),
        out_shape=jax.ShapeDtypeStruct((n, p_pad, c_pad), jnp.float32),
        grid=(n, pt),
        in_specs=in_specs2,
        out_specs=pl.BlockSpec((1, tp, c_pad), lambda b, t: (b, t, 0)),
        compiler_params=pltpu.CompilerParams(
            dimension_semantics=("parallel", "parallel"),
            vmem_limit_bytes=VMEM_LIMIT),
    )(*args)

    return out[:, :p_real, :cols].reshape(n, ho, wo, cols)


# ---------------------------------------------------------------------------
# ConvTranspose wrappers
# ---------------------------------------------------------------------------
def convT_s2_in_act(x, w_t, gamma, beta, act):
    """ConvTranspose2d(k=4, s=2, p=1) + InstanceNorm + act via sub-pixel conv."""
    c_in, c_out = w_t.shape[0], w_t.shape[1]
    # Output phase (rh, rw) is a stride-1 conv over the input with a 3x3
    # effective kernel (taps over input offsets -1, 0, +1 per axis):
    #   r == 0 uses transposed-kernel taps (3, 1); r == 1 uses taps (2, 0).
    kmap = {0: {0: 3, 1: 1}, 1: {1: 2, 2: 0}}
    w_eff = jnp.zeros((4 * c_out, c_in, 3, 3), jnp.float32)
    for rh in (0, 1):
        for rw in (0, 1):
            ph = rh * 2 + rw
            for th, ki in kmap[rh].items():
                for tw, kj in kmap[rw].items():
                    w_eff = w_eff.at[ph * c_out:(ph + 1) * c_out, :, th, tw].set(
                        w_t[:, :, ki, kj].T)
    y = fused_conv_in_act([(x, w_eff)], gamma, beta, act, stride=1, pad=1,
                          phase_groups=4)
    n, h, w, _ = y.shape
    y = y.reshape(n, h, w, 2, 2, c_out).transpose(0, 1, 3, 2, 4, 5)
    return y.reshape(n, 2 * h, 2 * w, c_out)             # depth-to-space


def convT_s1_in_act(x, w_t, gamma, beta, act, pad):
    """Stride-1 ConvTranspose2d == flipped-kernel conv with padding k-1-pad."""
    k = w_t.shape[2]
    w_conv = jnp.flip(w_t, axis=(2, 3)).transpose(1, 0, 2, 3)
    return fused_conv_in_act([(x, w_conv)], gamma, beta, act,
                             stride=1, pad=k - 1 - pad)


# ---------------------------------------------------------------------------
# Parameters (deterministic init) and forward pass
# ---------------------------------------------------------------------------
def init_params(key, cd):
    keys = iter(jax.random.split(key, 64))

    def w(shape):
        return 0.1 * jax.random.normal(next(keys), shape, jnp.float32)

    ones = lambda c: jnp.ones((c,), jnp.float32)
    zeros = lambda c: jnp.zeros((c,), jnp.float32)

    # NOTE: conv / convT biases are omitted -- every conv here is followed by an
    # InstanceNorm whose mean subtraction cancels a per-channel bias exactly.
    p = {}
    p["down1"] = dict(w=w((cd, 3, 7, 7)))
    p["down2"] = dict(w=w((2 * cd, cd, 4, 4)))
    p["down3"] = dict(w=w((4 * cd, 2 * cd, 4, 4)))
    for i in range(1, 6):
        p[f"res1_{i}"] = dict(
            w1=w((4 * cd, 8 * cd, 3, 3)), g1=ones(4 * cd), b1=zeros(4 * cd),
            w2=w((4 * cd, 4 * cd, 3, 3)), g2=ones(4 * cd), b2=zeros(4 * cd),
            w3=w((4 * cd, 8 * cd, 1, 1)), g3=ones(4 * cd), b3=zeros(4 * cd))
    p["res2_1"] = dict(
        w1=w((4 * cd, 4 * cd, 3, 3)), g1=ones(4 * cd), b1=zeros(4 * cd),
        w2=w((4 * cd, 4 * cd, 3, 3)), g2=ones(4 * cd), b2=zeros(4 * cd))
    p["up1"] = dict(w=w((4 * cd, 2 * cd, 4, 4)))   # ConvTranspose2d layout
    p["up2"] = dict(w=w((2 * cd, cd, 4, 4)))
    p["up3"] = dict(w=w((cd, 3, 7, 7)))
    return p


def generator_forward(p, x, z1, z2, z3, z4, z5, *, cd):
    ones = lambda c: jnp.ones((c,), jnp.float32)
    zeros = lambda c: jnp.zeros((c,), jnp.float32)

    # NCHW -> NHWC once at the boundary; activations stay NHWC throughout.
    x = jnp.transpose(x, (0, 2, 3, 1))
    zs = [jnp.transpose(z, (0, 2, 3, 1)) for z in (z1, z2, z3, z4, z5)]

    # down path: Conv + InstanceNorm(no affine) + ReLU
    x = fused_conv_in_act([(x, p["down1"]["w"])], ones(cd), zeros(cd),
                          "relu", stride=1, pad=3)
    x = fused_conv_in_act([(x, p["down2"]["w"])], ones(2 * cd), zeros(2 * cd),
                          "relu", stride=2, pad=1)
    x = fused_conv_in_act([(x, p["down3"]["w"])], ones(4 * cd), zeros(4 * cd),
                          "relu", stride=2, pad=1)

    # res1_1 .. res1_5 : ResidualBlock1 on cat([x, z_i], channel).
    # The concat is never materialized: weights are split along input channels
    # and the kernel sums both matmuls; the skip add is fused into the second
    # conv's epilogue.
    c4 = 4 * cd
    for i, z in enumerate(zs, start=1):
        rp = p[f"res1_{i}"]
        w1x, w1z = rp["w1"][:, :c4], rp["w1"][:, c4:]
        w3x, w3z = rp["w3"][:, :c4], rp["w3"][:, c4:]
        h2 = fused_conv_in_act([(x, w3x), (z, w3z)], rp["g3"], rp["b3"],
                               "relu", stride=1, pad=0)
        h1 = fused_conv_in_act([(x, w1x), (z, w1z)], rp["g1"], rp["b1"],
                               "relu", stride=1, pad=1)
        x = fused_conv_in_act([(h1, rp["w2"])], rp["g2"], rp["b2"],
                              "none", stride=1, pad=1, residual=h2)

    # res2_1 : ResidualBlock2 (no skip add)
    rp = p["res2_1"]
    x = fused_conv_in_act([(x, rp["w1"])], rp["g1"], rp["b1"], "relu",
                          stride=1, pad=1)
    x = fused_conv_in_act([(x, rp["w2"])], rp["g2"], rp["b2"], "none",
                          stride=1, pad=1)

    # up path: ConvTranspose + InstanceNorm(no affine) + LeakyReLU(0.01)
    x = convT_s2_in_act(x, p["up1"]["w"], ones(2 * cd), zeros(2 * cd), "leaky")
    x = convT_s2_in_act(x, p["up2"]["w"], ones(cd), zeros(cd), "leaky")
    x = convT_s1_in_act(x, p["up3"]["w"], ones(3), zeros(3), "leaky", pad=3)

    return jnp.transpose(x, (0, 3, 1, 2))                 # back to NCHW


if __name__ == "__main__":
    cd = 8          # conv_dim (64 in the original; small here for the test)
    N, H, W = 2, 16, 16

    key = jax.random.PRNGKey(0)
    k_params, kx, kz1, kz2, kz3, kz4, kz5 = jax.random.split(key, 7)

    params = init_params(k_params, cd)
    x = jax.random.normal(kx, (N, 3, H, W), jnp.float32)
    zshape = (N, 4 * cd, H // 4, W // 4)
    z1 = jax.random.normal(kz1, zshape, jnp.float32)
    z2 = jax.random.normal(kz2, zshape, jnp.float32)
    z3 = jax.random.normal(kz3, zshape, jnp.float32)
    z4 = jax.random.normal(kz4, zshape, jnp.float32)
    z5 = jax.random.normal(kz5, zshape, jnp.float32)

    fwd = jax.jit(functools.partial(generator_forward, cd=cd))
    out = fwd(params, x, z1, z2, z3, z4, z5)
    jax.block_until_ready(out)

    assert out.shape == (N, 3, H, W), out.shape
    assert bool(jnp.all(jnp.isfinite(out)))
    print("KERNEL_OK")
</pallas_src>

<mosaic_0001>
module attributes {stable_mosaic.version = 11 : i64} {
  func.func @kernel(%arg0: i32, %arg1: i32, %arg2: memref<1x256x256xbf16, #tpu.memory_space<vmem>>, %arg3: memref<256x128xbf16, #tpu.memory_space<vmem>>, %arg4: memref<1x256x128xf32, #tpu.memory_space<vmem>>, %arg5: memref<1x1x8x128xf32, #tpu.memory_space<vmem>>) attributes {dimension_semantics = [#tpu.dimension_semantics<parallel>, #tpu.dimension_semantics<parallel>], iteration_bounds = array<i64: 2, 1>, scalar_prefetch = 0 : i64, scratch_operands = 0 : i64, tpu.core_type = #tpu.core_type<tc>, window_params = [{transform_indices = @transform_0, window_bounds = array<i64: 1, 256, 256>}, {pipeline_mode = #tpu.pipeline_mode<synchronous>, transform_indices = @transform_1, window_bounds = array<i64: 256, 128>}, {transform_indices = @transform_2, window_bounds = array<i64: 1, 256, 128>}, {transform_indices = @transform_3, window_bounds = array<i64: 1, 1, 8, 128>}]} {
    %c0 = arith.constant 0 : index
    %c0_0 = arith.constant 0 : index
    %c0_1 = arith.constant 0 : index
    %0 = vector.load %arg2[%c0, %c0_0, %c0_1] : memref<1x256x256xbf16, #tpu.memory_space<vmem>>, vector<1x256x256xbf16>
    %1 = vector.shape_cast %0 : vector<1x256x256xbf16> to vector<256x256xbf16>
    %c0_2 = arith.constant 0 : index
    %c0_3 = arith.constant 0 : index
    %2 = vector.load %arg3[%c0_2, %c0_3] : memref<256x128xbf16, #tpu.memory_space<vmem>>, vector<256x128xbf16>
    %cst = arith.constant dense<0.000000e+00> : vector<256x128xf32>
    %3 = tpu.matmul %1, %2, %cst {dimension_numbers = #tpu.dot_dimension_numbers<[1], [0], [0], [1], [0, 0, 1, 1], [], []>} : vector<256x256xbf16>, vector<256x128xbf16>, vector<256x128xf32> -> vector<256x128xf32>
    %c0_4 = arith.constant 0 : index
    %c0_5 = arith.constant 0 : index
    %c0_6 = arith.constant 0 : index
    %4 = vector.load %arg4[%c0_4, %c0_5, %c0_6] : memref<1x256x128xf32, #tpu.memory_space<vmem>>, vector<1x256x128xf32>
    %5 = vector.shape_cast %4 : vector<1x256x128xf32> to vector<256x128xf32>
    %6 = vector.shape_cast %3 : vector<256x128xf32> to vector<1x256x128xf32>
    tpu.vector_store %arg4[%c0_4, %c0_5, %c0_6], %6 {strides = array<i32>} : memref<1x256x128xf32, #tpu.memory_space<vmem>>, vector<1x256x128xf32>,
    %cst_7 = arith.constant dense<0.000000e+00> : vector<128xf32>
    %7 = vector.multi_reduction <add>, %3, %cst_7 [0] : vector<256x128xf32> to vector<128xf32>
    %8 = vector.shape_cast %7 : vector<128xf32> to vector<1x128xf32>
    %9 = arith.mulf %3, %3 : vector<256x128xf32>
    %cst_8 = arith.constant dense<0.000000e+00> : vector<128xf32>
    %10 = vector.multi_reduction <add>, %9, %cst_8 [0] : vector<256x128xf32> to vector<128xf32>
    %11 = vector.shape_cast %10 : vector<128xf32> to vector<1x128xf32>
    %12 = tpu.iota {dimensions = array<i32: 0>} : vector<8x128xi32>
    %c0_i32 = arith.constant 0 : i32
    %13 = vector.broadcast %c0_i32 : i32 to vector<8x128xi32>
    %14 = arith.cmpi eq, %12, %13 : vector<8x128xi32>
    %c1_i32 = arith.constant 1 : i32
    %15 = vector.broadcast %c1_i32 : i32 to vector<8x128xi32>
    %16 = arith.cmpi eq, %12, %15 : vector<8x128xi32>
    %cst_9 = arith.constant 0.000000e+00 : f32
    %17 = vector.shape_cast %11 : vector<1x128xf32> to vector<1x128xf32>
    %18 = vector.broadcast %17 : vector<1x128xf32> to vector<8x128xf32>
    %19 = vector.broadcast %cst_9 : f32 to vector<8x128xf32>
    %20 = arith.select %16, %18, %19 : vector<8x128xi1>, vector<8x128xf32>
    %21 = vector.shape_cast %8 : vector<1x128xf32> to vector<1x128xf32>
    %22 = vector.broadcast %21 : vector<1x128xf32> to vector<8x128xf32>
    %23 = arith.select %14, %22, %20 : vector<8x128xi1>, vector<8x128xf32>
    %24 = vector.shape_cast %23 : vector<8x128xf32> to vector<1x1x8x128xf32>
    %c0_10 = arith.constant 0 : index
    %c0_11 = arith.constant 0 : index
    %c0_12 = arith.constant 0 : index
    %c0_13 = arith.constant 0 : index
    %25 = vector.load %arg5[%c0_10, %c0_11, %c0_12, %c0_13] : memref<1x1x8x128xf32, #tpu.memory_space<vmem>>, vector<1x1x8x128xf32>
    tpu.vector_store %arg5[%c0_10, %c0_11, %c0_12, %c0_13], %24 {strides = array<i32>} : memref<1x1x8x128xf32, #tpu.memory_space<vmem>>, vector<1x1x8x128xf32>,
    return
  }
  func.func @transform_0(%arg0: i32, %arg1: i32) -> (i32, i32, i32) {
    %c0_i32 = arith.constant 0 : i32
    %c0_i32_0 = arith.constant 0 : i32
    return %arg0, %arg1, %c0_i32 : i32, i32, i32
  }
  func.func @transform_1(%arg0: i32, %arg1: i32) -> (i32, i32) {
    %c0_i32 = arith.constant 0 : i32
    %c0_i32_0 = arith.constant 0 : i32
    %c0_i32_1 = arith.constant 0 : i32
    return %c0_i32, %c0_i32_0 : i32, i32
  }
  func.func @transform_2(%arg0: i32, %arg1: i32) -> (i32, i32, i32) {
    %c0_i32 = arith.constant 0 : i32
    %c0_i32_0 = arith.constant 0 : i32
    return %arg0, %arg1, %c0_i32 : i32, i32, i32
  }
  func.func @transform_3(%arg0: i32, %arg1: i32) -> (i32, i32, i32, i32) {
    %c0_i32 = arith.constant 0 : i32
    %c0_i32_0 = arith.constant 0 : i32
    %c0_i32_1 = arith.constant 0 : i32
    return %arg0, %arg1, %c0_i32, %c0_i32_0 : i32, i32, i32, i32
  }
}

module attributes {stable_mosaic.version = 11 : i64} {
  func.func @kernel(%arg0: i32, %arg1: i32, %arg2: memref<1x256x128xf32, #tpu.memory_space<vmem>>, %arg3: memref<1x1x128xf32, #tpu.memory_space<vmem>>, %arg4: memref<1x1x128xf32, #tpu.memory_space<vmem>>, %arg5: memref<1x256x128xf32, #tpu.memory_space<vmem>>) attributes {dimension_semantics = [#tpu.dimension_semantics<parallel>, #tpu.dimension_semantics<parallel>], iteration_bounds = array<i64: 2, 1>, scalar_prefetch = 0 : i64, scratch_operands = 0 : i64, tpu.core_type = #tpu.core_type<tc>, window_params = [{transform_indices = @transform_0, window_bounds = array<i64: 1, 256, 128>}, {transform_indices = @transform_1, window_bounds = array<i64: 1, 1, 128>}, {transform_indices = @transform_2, window_bounds = array<i64: 1, 1, 128>}, {transform_indices = @transform_3, window_bounds = array<i64: 1, 256, 128>}]} {
    %c0 = arith.constant 0 : index
    %c0_0 = arith.constant 0 : index
    %c0_1 = arith.constant 0 : index
    %0 = vector.load %arg2[%c0, %c0_0, %c0_1] : memref<1x256x128xf32, #tpu.memory_space<vmem>>, vector<1x256x128xf32>
    %1 = vector.shape_cast %0 : vector<1x256x128xf32> to vector<256x128xf32>
    %c0_2 = arith.constant 0 : index
    %c0_3 = arith.constant 0 : index
    %c0_4 = arith.constant 0 : index
    %2 = vector.load %arg3[%c0_2, %c0_3, %c0_4] : memref<1x1x128xf32, #tpu.memory_space<vmem>>, vector<1x1x128xf32>
    %3 = vector.shape_cast %2 : vector<1x1x128xf32> to vector<1x128xf32>
    %4 = vector.broadcast %3 : vector<1x128xf32> to vector<256x128xf32>
    %5 = arith.mulf %1, %4 : vector<256x128xf32>
    %c0_5 = arith.constant 0 : index
    %c0_6 = arith.constant 0 : index
    %c0_7 = arith.constant 0 : index
    %6 = vector.load %arg4[%c0_5, %c0_6, %c0_7] : memref<1x1x128xf32, #tpu.memory_space<vmem>>, vector<1x1x128xf32>
    %7 = vector.shape_cast %6 : vector<1x1x128xf32> to vector<1x128xf32>
    %8 = vector.broadcast %7 : vector<1x128xf32> to vector<256x128xf32>
    %9 = arith.addf %5, %8 : vector<256x128xf32>
    %cst = arith.constant 0.000000e+00 : f32
    %10 = vector.broadcast %cst : f32 to vector<256x128xf32>
    %11 = arith.maximumf %9, %10 : vector<256x128xf32>
    %c0_8 = arith.constant 0 : index
    %c0_9 = arith.constant 0 : index
    %c0_10 = arith.constant 0 : index
    %12 = vector.load %arg5[%c0_8, %c0_9, %c0_10] : memref<1x256x128xf32, #tpu.memory_space<vmem>>, vector<1x256x128xf32>
    %13 = vector.shape_cast %12 : vector<1x256x128xf32> to vector<256x128xf32>
    %14 = vector.shape_cast %11 : vector<256x128xf32> to vector<1x256x128xf32>
    tpu.vector_store %arg5[%c0_8, %c0_9, %c0_10], %14 {strides = array<i32>} : memref<1x256x128xf32, #tpu.memory_space<vmem>>, vector<1x256x128xf32>,
    return
  }
  func.func @transform_0(%arg0: i32, %arg1: i32) -> (i32, i32, i32) {
    %c0_i32 = arith.constant 0 : i32
    %c0_i32_0 = arith.constant 0 : i32
    return %arg0, %arg1, %c0_i32 : i32, i32, i32
  }
  func.func @transform_1(%arg0: i32, %arg1: i32) -> (i32, i32, i32) {
    %c0_i32 = arith.constant 0 : i32
    %c0_i32_0 = arith.constant 0 : i32
    %c0_i32_1 = arith.constant 0 : i32
    return %arg0, %c0_i32, %c0_i32_0 : i32, i32, i32
  }
  func.func @transform_2(%arg0: i32, %arg1: i32) -> (i32, i32, i32) {
    %c0_i32 = arith.constant 0 : i32
    %c0_i32_0 = arith.constant 0 : i32
    %c0_i32_1 = arith.constant 0 : i32
    return %arg0, %c0_i32, %c0_i32_0 : i32, i32, i32
  }
  func.func @transform_3(%arg0: i32, %arg1: i32) -> (i32, i32, i32) {
    %c0_i32 = arith.constant 0 : i32
    %c0_i32_0 = arith.constant 0 : i32
    return %arg0, %arg1, %c0_i32 : i32, i32, i32
  }
}

module attributes {stable_mosaic.version = 11 : i64} {
  func.func @kernel(%arg0: i32, %arg1: i32, %arg2: memref<1x64x128xbf16, #tpu.memory_space<vmem>>, %arg3: memref<128x128xbf16, #tpu.memory_space<vmem>>, %arg4: memref<1x64x128xf32, #tpu.memory_space<vmem>>, %arg5: memref<1x1x8x128xf32, #tpu.memory_space<vmem>>) attributes {dimension_semantics = [#tpu.dimension_semantics<parallel>, #tpu.dimension_semantics<parallel>], iteration_bounds = array<i64: 2, 1>, scalar_prefetch = 0 : i64, scratch_operands = 0 : i64, tpu.core_type = #tpu.core_type<tc>, window_params = [{transform_indices = @transform_0, window_bounds = array<i64: 1, 64, 128>}, {pipeline_mode = #tpu.pipeline_mode<synchronous>, transform_indices = @transform_1, window_bounds = array<i64: 128, 128>}, {transform_indices = @transform_2, window_bounds = array<i64: 1, 64, 128>}, {transform_indices = @transform_3, window_bounds = array<i64: 1, 1, 8, 128>}]} {
    %c0 = arith.constant 0 : index
    %c0_0 = arith.constant 0 : index
    %c0_1 = arith.constant 0 : index
    %0 = vector.load %arg2[%c0, %c0_0, %c0_1] : memref<1x64x128xbf16, #tpu.memory_space<vmem>>, vector<1x64x128xbf16>
    %1 = vector.shape_cast %0 : vector<1x64x128xbf16> to vector<64x128xbf16>
    %c0_2 = arith.constant 0 : index
    %c0_3 = arith.constant 0 : index
    %2 = vector.load %arg3[%c0_2, %c0_3] : memref<128x128xbf16, #tpu.memory_space<vmem>>, vector<128x128xbf16>
    %cst = arith.constant dense<0.000000e+00> : vector<64x128xf32>
    %3 = tpu.matmul %1, %2, %cst {dimension_numbers = #tpu.dot_dimension_numbers<[1], [0], [0], [1], [0, 0, 1, 1], [], []>} : vector<64x128xbf16>, vector<128x128xbf16>, vector<64x128xf32> -> vector<64x128xf32>
    %c0_4 = arith.constant 0 : index
    %c0_5 = arith.constant 0 : index
    %c0_6 = arith.constant 0 : index
    %4 = vector.load %arg4[%c0_4, %c0_5, %c0_6] : memref<1x64x128xf32, #tpu.memory_space<vmem>>, vector<1x64x128xf32>
    %5 = vector.shape_cast %4 : vector<1x64x128xf32> to vector<64x128xf32>
    %6 = vector.shape_cast %3 : vector<64x128xf32> to vector<1x64x128xf32>
    tpu.vector_store %arg4[%c0_4, %c0_5, %c0_6], %6 {strides = array<i32>} : memref<1x64x128xf32, #tpu.memory_space<vmem>>, vector<1x64x128xf32>,
    %cst_7 = arith.constant dense<0.000000e+00> : vector<128xf32>
    %7 = vector.multi_reduction <add>, %3, %cst_7 [0] : vector<64x128xf32> to vector<128xf32>
    %8 = vector.shape_cast %7 : vector<128xf32> to vector<1x128xf32>
    %9 = arith.mulf %3, %3 : vector<64x128xf32>
    %cst_8 = arith.constant dense<0.000000e+00> : vector<128xf32>
    %10 = vector.multi_reduction <add>, %9, %cst_8 [0] : vector<64x128xf32> to vector<128xf32>
    %11 = vector.shape_cast %10 : vector<128xf32> to vector<1x128xf32>
    %12 = tpu.iota {dimensions = array<i32: 0>} : vector<8x128xi32>
    %c0_i32 = arith.constant 0 : i32
    %13 = vector.broadcast %c0_i32 : i32 to vector<8x128xi32>
    %14 = arith.cmpi eq, %12, %13 : vector<8x128xi32>
    %c1_i32 = arith.constant 1 : i32
    %15 = vector.broadcast %c1_i32 : i32 to vector<8x128xi32>
    %16 = arith.cmpi eq, %12, %15 : vector<8x128xi32>
    %cst_9 = arith.constant 0.000000e+00 : f32
    %17 = vector.shape_cast %11 : vector<1x128xf32> to vector<1x128xf32>
    %18 = vector.broadcast %17 : vector<1x128xf32> to vector<8x128xf32>
    %19 = vector.broadcast %cst_9 : f32 to vector<8x128xf32>
    %20 = arith.select %16, %18, %19 : vector<8x128xi1>, vector<8x128xf32>
    %21 = vector.shape_cast %8 : vector<1x128xf32> to vector<1x128xf32>
    %22 = vector.broadcast %21 : vector<1x128xf32> to vector<8x128xf32>
    %23 = arith.select %14, %22, %20 : vector<8x128xi1>, vector<8x128xf32>
    %24 = vector.shape_cast %23 : vector<8x128xf32> to vector<1x1x8x128xf32>
    %c0_10 = arith.constant 0 : index
    %c0_11 = arith.constant 0 : index
    %c0_12 = arith.constant 0 : index
    %c0_13 = arith.constant 0 : index
    %25 = vector.load %arg5[%c0_10, %c0_11, %c0_12, %c0_13] : memref<1x1x8x128xf32, #tpu.memory_space<vmem>>, vector<1x1x8x128xf32>
    tpu.vector_store %arg5[%c0_10, %c0_11, %c0_12, %c0_13], %24 {strides = array<i32>} : memref<1x1x8x128xf32, #tpu.memory_space<vmem>>, vector<1x1x8x128xf32>,
    return
  }
  func.func @transform_0(%arg0: i32, %arg1: i32) -> (i32, i32, i32) {
    %c0_i32 = arith.constant 0 : i32
    %c0_i32_0 = arith.constant 0 : i32
    return %arg0, %arg1, %c0_i32 : i32, i32, i32
  }
  func.func @transform_1(%arg0: i32, %arg1: i32) -> (i32, i32) {
    %c0_i32 = arith.constant 0 : i32
    %c0_i32_0 = arith.constant 0 : i32
    %c0_i32_1 = arith.constant 0 : i32
    return %c0_i32, %c0_i32_0 : i32, i32
  }
  func.func @transform_2(%arg0: i32, %arg1: i32) -> (i32, i32, i32) {
    %c0_i32 = arith.constant 0 : i32
    %c0_i32_0 = arith.constant 0 : i32
    return %arg0, %arg1, %c0_i32 : i32, i32, i32
  }
  func.func @transform_3(%arg0: i32, %arg1: i32) -> (i32, i32, i32, i32) {
    %c0_i32 = arith.constant 0 : i32
    %c0_i32_0 = arith.constant 0 : i32
    %c0_i32_1 = arith.constant 0 : i32
    return %arg0, %arg1, %c0_i32, %c0_i32_0 : i32, i32, i32, i32
  }
}

module attributes {stable_mosaic.version = 11 : i64} {
  func.func @kernel(%arg0: i32, %arg1: i32, %arg2: memref<1x64x128xf32, #tpu.memory_space<vmem>>, %arg3: memref<1x1x128xf32, #tpu.memory_space<vmem>>, %arg4: memref<1x1x128xf32, #tpu.memory_space<vmem>>, %arg5: memref<1x64x128xf32, #tpu.memory_space<vmem>>) attributes {dimension_semantics = [#tpu.dimension_semantics<parallel>, #tpu.dimension_semantics<parallel>], iteration_bounds = array<i64: 2, 1>, scalar_prefetch = 0 : i64, scratch_operands = 0 : i64, tpu.core_type = #tpu.core_type<tc>, window_params = [{transform_indices = @transform_0, window_bounds = array<i64: 1, 64, 128>}, {transform_indices = @transform_1, window_bounds = array<i64: 1, 1, 128>}, {transform_indices = @transform_2, window_bounds = array<i64: 1, 1, 128>}, {transform_indices = @transform_3, window_bounds = array<i64: 1, 64, 128>}]} {
    %c0 = arith.constant 0 : index
    %c0_0 = arith.constant 0 : index
    %c0_1 = arith.constant 0 : index
    %0 = vector.load %arg2[%c0, %c0_0, %c0_1] : memref<1x64x128xf32, #tpu.memory_space<vmem>>, vector<1x64x128xf32>
    %1 = vector.shape_cast %0 : vector<1x64x128xf32> to vector<64x128xf32>
    %c0_2 = arith.constant 0 : index
    %c0_3 = arith.constant 0 : index
    %c0_4 = arith.constant 0 : index
    %2 = vector.load %arg3[%c0_2, %c0_3, %c0_4] : memref<1x1x128xf32, #tpu.memory_space<vmem>>, vector<1x1x128xf32>
    %3 = vector.shape_cast %2 : vector<1x1x128xf32> to vector<1x128xf32>
    %4 = vector.broadcast %3 : vector<1x128xf32> to vector<64x128xf32>
    %5 = arith.mulf %1, %4 : vector<64x128xf32>
    %c0_5 = arith.constant 0 : index
    %c0_6 = arith.constant 0 : index
    %c0_7 = arith.constant 0 : index
    %6 = vector.load %arg4[%c0_5, %c0_6, %c0_7] : memref<1x1x128xf32, #tpu.memory_space<vmem>>, vector<1x1x128xf32>
    %7 = vector.shape_cast %6 : vector<1x1x128xf32> to vector<1x128xf32>
    %8 = vector.broadcast %7 : vector<1x128xf32> to vector<64x128xf32>
    %9 = arith.addf %5, %8 : vector<64x128xf32>
    %cst = arith.constant 0.000000e+00 : f32
    %10 = vector.broadcast %cst : f32 to vector<64x128xf32>
    %11 = arith.maximumf %9, %10 : vector<64x128xf32>
    %c0_8 = arith.constant 0 : index
    %c0_9 = arith.constant 0 : index
    %c0_10 = arith.constant 0 : index
    %12 = vector.load %arg5[%c0_8, %c0_9, %c0_10] : memref<1x64x128xf32, #tpu.memory_space<vmem>>, vector<1x64x128xf32>
    %13 = vector.shape_cast %12 : vector<1x64x128xf32> to vector<64x128xf32>
    %14 = vector.shape_cast %11 : vector<64x128xf32> to vector<1x64x128xf32>
    tpu.vector_store %arg5[%c0_8, %c0_9, %c0_10], %14 {strides = array<i32>} : memref<1x64x128xf32, #tpu.memory_space<vmem>>, vector<1x64x128xf32>,
    return
  }
  func.func @transform_0(%arg0: i32, %arg1: i32) -> (i32, i32, i32) {
    %c0_i32 = arith.constant 0 : i32
    %c0_i32_0 = arith.constant 0 : i32
    return %arg0, %arg1, %c0_i32 : i32, i32, i32
  }
  func.func @transform_1(%arg0: i32, %arg1: i32) -> (i32, i32, i32) {
    %c0_i32 = arith.constant 0 : i32
    %c0_i32_0 = arith.constant 0 : i32
    %c0_i32_1 = arith.constant 0 : i32
    return %arg0, %c0_i32, %c0_i32_0 : i32, i32, i32
  }
  func.func @transform_2(%arg0: i32, %arg1: i32) -> (i32, i32, i32) {
    %c0_i32 = arith.constant 0 : i32
    %c0_i32_0 = arith.constant 0 : i32
    %c0_i32_1 = arith.constant 0 : i32
    return %arg0, %c0_i32, %c0_i32_0 : i32, i32, i32
  }
  func.func @transform_3(%arg0: i32, %arg1: i32) -> (i32, i32, i32) {
    %c0_i32 = arith.constant 0 : i32
    %c0_i32_0 = arith.constant 0 : i32
    return %arg0, %arg1, %c0_i32 : i32, i32, i32
  }
}

module attributes {stable_mosaic.version = 11 : i64} {
  func.func @kernel(%arg0: i32, %arg1: i32, %arg2: memref<1x16x128xf32, #tpu.memory_space<vmem>>, %arg3: memref<1x1x128xf32, #tpu.memory_space<vmem>>, %arg4: memref<1x1x128xf32, #tpu.memory_space<vmem>>, %arg5: memref<1x16x128xf32, #tpu.memory_space<vmem>>) attributes {dimension_semantics = [#tpu.dimension_semantics<parallel>, #tpu.dimension_semantics<parallel>], iteration_bounds = array<i64: 2, 1>, scalar_prefetch = 0 : i64, scratch_operands = 0 : i64, tpu.core_type = #tpu.core_type<tc>, window_params = [{transform_indices = @transform_0, window_bounds = array<i64: 1, 16, 128>}, {transform_indices = @transform_1, window_bounds = array<i64: 1, 1, 128>}, {transform_indices = @transform_2, window_bounds = array<i64: 1, 1, 128>}, {transform_indices = @transform_3, window_bounds = array<i64: 1, 16, 128>}]} {
    %c0 = arith.constant 0 : index
    %c0_0 = arith.constant 0 : index
    %c0_1 = arith.constant 0 : index
    %0 = vector.load %arg2[%c0, %c0_0, %c0_1] : memref<1x16x128xf32, #tpu.memory_space<vmem>>, vector<1x16x128xf32>
    %1 = vector.shape_cast %0 : vector<1x16x128xf32> to vector<16x128xf32>
    %c0_2 = arith.constant 0 : index
    %c0_3 = arith.constant 0 : index
    %c0_4 = arith.constant 0 : index
    %2 = vector.load %arg3[%c0_2, %c0_3, %c0_4] : memref<1x1x128xf32, #tpu.memory_space<vmem>>, vector<1x1x128xf32>
    %3 = vector.shape_cast %2 : vector<1x1x128xf32> to vector<1x128xf32>
    %4 = vector.broadcast %3 : vector<1x128xf32> to vector<16x128xf32>
    %5 = arith.mulf %1, %4 : vector<16x128xf32>
    %c0_5 = arith.constant 0 : index
    %c0_6 = arith.constant 0 : index
    %c0_7 = arith.constant 0 : index
    %6 = vector.load %arg4[%c0_5, %c0_6, %c0_7] : memref<1x1x128xf32, #tpu.memory_space<vmem>>, vector<1x1x128xf32>
    %7 = vector.shape_cast %6 : vector<1x1x128xf32> to vector<1x128xf32>
    %8 = vector.broadcast %7 : vector<1x128xf32> to vector<16x128xf32>
    %9 = arith.addf %5, %8 : vector<16x128xf32>
    %cst = arith.constant 0.000000e+00 : f32
    %10 = vector.broadcast %cst : f32 to vector<16x128xf32>
    %11 = arith.maximumf %9, %10 : vector<16x128xf32>
    %c0_8 = arith.constant 0 : index
    %c0_9 = arith.constant 0 : index
    %c0_10 = arith.constant 0 : index
    %12 = vector.load %arg5[%c0_8, %c0_9, %c0_10] : memref<1x16x128xf32, #tpu.memory_space<vmem>>, vector<1x16x128xf32>
    %13 = vector.shape_cast %12 : vector<1x16x128xf32> to vector<16x128xf32>
    %14 = vector.shape_cast %11 : vector<16x128xf32> to vector<1x16x128xf32>
    tpu.vector_store %arg5[%c0_8, %c0_9, %c0_10], %14 {strides = array<i32>} : memref<1x16x128xf32, #tpu.memory_space<vmem>>, vector<1x16x128xf32>,
    return
  }
  func.func @transform_0(%arg0: i32, %arg1: i32) -> (i32, i32, i32) {
    %c0_i32 = arith.constant 0 : i32
    %c0_i32_0 = arith.constant 0 : i32
    return %arg0, %arg1, %c0_i32 : i32, i32, i32
  }
  func.func @transform_1(%arg0: i32, %arg1: i32) -> (i32, i32, i32) {
    %c0_i32 = arith.constant 0 : i32
    %c0_i32_0 = arith.constant 0 : i32
    %c0_i32_1 = arith.constant 0 : i32
    return %arg0, %c0_i32, %c0_i32_0 : i32, i32, i32
  }
  func.func @transform_2(%arg0: i32, %arg1: i32) -> (i32, i32, i32) {
    %c0_i32 = arith.constant 0 : i32
    %c0_i32_0 = arith.constant 0 : i32
    %c0_i32_1 = arith.constant 0 : i32
    return %arg0, %c0_i32, %c0_i32_0 : i32, i32, i32
  }
  func.func @transform_3(%arg0: i32, %arg1: i32) -> (i32, i32, i32) {
    %c0_i32 = arith.constant 0 : i32
    %c0_i32_0 = arith.constant 0 : i32
    return %arg0, %arg1, %c0_i32 : i32, i32, i32
  }
}

module attributes {stable_mosaic.version = 11 : i64} {
  func.func @kernel(%arg0: i32, %arg1: i32, %arg2: memref<1x16x256xbf16, #tpu.memory_space<vmem>>, %arg3: memref<256x128xbf16, #tpu.memory_space<vmem>>, %arg4: memref<1x16x128xf32, #tpu.memory_space<vmem>>, %arg5: memref<1x1x8x128xf32, #tpu.memory_space<vmem>>) attributes {dimension_semantics = [#tpu.dimension_semantics<parallel>, #tpu.dimension_semantics<parallel>], iteration_bounds = array<i64: 2, 1>, scalar_prefetch = 0 : i64, scratch_operands = 0 : i64, tpu.core_type = #tpu.core_type<tc>, window_params = [{transform_indices = @transform_0, window_bounds = array<i64: 1, 16, 256>}, {pipeline_mode = #tpu.pipeline_mode<synchronous>, transform_indices = @transform_1, window_bounds = array<i64: 256, 128>}, {transform_indices = @transform_2, window_bounds = array<i64: 1, 16, 128>}, {transform_indices = @transform_3, window_bounds = array<i64: 1, 1, 8, 128>}]} {
    %c0 = arith.constant 0 : index
    %c0_0 = arith.constant 0 : index
    %c0_1 = arith.constant 0 : index
    %0 = vector.load %arg2[%c0, %c0_0, %c0_1] : memref<1x16x256xbf16, #tpu.memory_space<vmem>>, vector<1x16x256xbf16>
    %1 = vector.shape_cast %0 : vector<1x16x256xbf16> to vector<16x256xbf16>
    %c0_2 = arith.constant 0 : index
    %c0_3 = arith.constant 0 : index
    %2 = vector.load %arg3[%c0_2, %c0_3] : memref<256x128xbf16, #tpu.memory_space<vmem>>, vector<256x128xbf16>
    %cst = arith.constant dense<0.000000e+00> : vector<16x128xf32>
    %3 = tpu.matmul %1, %2, %cst {dimension_numbers = #tpu.dot_dimension_numbers<[1], [0], [0], [1], [0, 0, 1, 1], [], []>} : vector<16x256xbf16>, vector<256x128xbf16>, vector<16x128xf32> -> vector<16x128xf32>
    %c0_4 = arith.constant 0 : index
    %c0_5 = arith.constant 0 : index
    %c0_6 = arith.constant 0 : index
    %4 = vector.load %arg4[%c0_4, %c0_5, %c0_6] : memref<1x16x128xf32, #tpu.memory_space<vmem>>, vector<1x16x128xf32>
    %5 = vector.shape_cast %4 : vector<1x16x128xf32> to vector<16x128xf32>
    %6 = vector.shape_cast %3 : vector<16x128xf32> to vector<1x16x128xf32>
    tpu.vector_store %arg4[%c0_4, %c0_5, %c0_6], %6 {strides = array<i32>} : memref<1x16x128xf32, #tpu.memory_space<vmem>>, vector<1x16x128xf32>,
    %cst_7 = arith.constant dense<0.000000e+00> : vector<128xf32>
    %7 = vector.multi_reduction <add>, %3, %cst_7 [0] : vector<16x128xf32> to vector<128xf32>
    %8 = vector.shape_cast %7 : vector<128xf32> to vector<1x128xf32>
    %9 = arith.mulf %3, %3 : vector<16x128xf32>
    %cst_8 = arith.constant dense<0.000000e+00> : vector<128xf32>
    %10 = vector.multi_reduction <add>, %9, %cst_8 [0] : vector<16x128xf32> to vector<128xf32>
    %11 = vector.shape_cast %10 : vector<128xf32> to vector<1x128xf32>
    %12 = tpu.iota {dimensions = array<i32: 0>} : vector<8x128xi32>
    %c0_i32 = arith.constant 0 : i32
    %13 = vector.broadcast %c0_i32 : i32 to vector<8x128xi32>
    %14 = arith.cmpi eq, %12, %13 : vector<8x128xi32>
    %c1_i32 = arith.constant 1 : i32
    %15 = vector.broadcast %c1_i32 : i32 to vector<8x128xi32>
    %16 = arith.cmpi eq, %12, %15 : vector<8x128xi32>
    %cst_9 = arith.constant 0.000000e+00 : f32
    %17 = vector.shape_cast %11 : vector<1x128xf32> to vector<1x128xf32>
    %18 = vector.broadcast %17 : vector<1x128xf32> to vector<8x128xf32>
    %19 = vector.broadcast %cst_9 : f32 to vector<8x128xf32>
    %20 = arith.select %16, %18, %19 : vector<8x128xi1>, vector<8x128xf32>
    %21 = vector.shape_cast %8 : vector<1x128xf32> to vector<1x128xf32>
    %22 = vector.broadcast %21 : vector<1x128xf32> to vector<8x128xf32>
    %23 = arith.select %14, %22, %20 : vector<8x128xi1>, vector<8x128xf32>
    %24 = vector.shape_cast %23 : vector<8x128xf32> to vector<1x1x8x128xf32>
    %c0_10 = arith.constant 0 : index
    %c0_11 = arith.constant 0 : index
    %c0_12 = arith.constant 0 : index
    %c0_13 = arith.constant 0 : index
    %25 = vector.load %arg5[%c0_10, %c0_11, %c0_12, %c0_13] : memref<1x1x8x128xf32, #tpu.memory_space<vmem>>, vector<1x1x8x128xf32>
    tpu.vector_store %arg5[%c0_10, %c0_11, %c0_12, %c0_13], %24 {strides = array<i32>} : memref<1x1x8x128xf32, #tpu.memory_space<vmem>>, vector<1x1x8x128xf32>,
    return
  }
  func.func @transform_0(%arg0: i32, %arg1: i32) -> (i32, i32, i32) {
    %c0_i32 = arith.constant 0 : i32
    %c0_i32_0 = arith.constant 0 : i32
    return %arg0, %arg1, %c0_i32 : i32, i32, i32
  }
  func.func @transform_1(%arg0: i32, %arg1: i32) -> (i32, i32) {
    %c0_i32 = arith.constant 0 : i32
    %c0_i32_0 = arith.constant 0 : i32
    %c0_i32_1 = arith.constant 0 : i32
    return %c0_i32, %c0_i32_0 : i32, i32
  }
  func.func @transform_2(%arg0: i32, %arg1: i32) -> (i32, i32, i32) {
    %c0_i32 = arith.constant 0 : i32
    %c0_i32_0 = arith.constant 0 : i32
    return %arg0, %arg1, %c0_i32 : i32, i32, i32
  }
  func.func @transform_3(%arg0: i32, %arg1: i32) -> (i32, i32, i32, i32) {
    %c0_i32 = arith.constant 0 : i32
    %c0_i32_0 = arith.constant 0 : i32
    %c0_i32_1 = arith.constant 0 : i32
    return %arg0, %arg1, %c0_i32, %c0_i32_0 : i32, i32, i32, i32
  }
}

module attributes {stable_mosaic.version = 11 : i64} {
  func.func @kernel(%arg0: i32, %arg1: i32, %arg2: memref<1x16x384xbf16, #tpu.memory_space<vmem>>, %arg3: memref<384x128xbf16, #tpu.memory_space<vmem>>, %arg4: memref<1x16x128xf32, #tpu.memory_space<vmem>>, %arg5: memref<1x1x8x128xf32, #tpu.memory_space<vmem>>) attributes {dimension_semantics = [#tpu.dimension_semantics<parallel>, #tpu.dimension_semantics<parallel>], iteration_bounds = array<i64: 2, 1>, scalar_prefetch = 0 : i64, scratch_operands = 0 : i64, tpu.core_type = #tpu.core_type<tc>, window_params = [{transform_indices = @transform_0, window_bounds = array<i64: 1, 16, 384>}, {pipeline_mode = #tpu.pipeline_mode<synchronous>, transform_indices = @transform_1, window_bounds = array<i64: 384, 128>}, {transform_indices = @transform_2, window_bounds = array<i64: 1, 16, 128>}, {transform_indices = @transform_3, window_bounds = array<i64: 1, 1, 8, 128>}]} {
    %c0 = arith.constant 0 : index
    %c0_0 = arith.constant 0 : index
    %c0_1 = arith.constant 0 : index
    %0 = vector.load %arg2[%c0, %c0_0, %c0_1] : memref<1x16x384xbf16, #tpu.memory_space<vmem>>, vector<1x16x384xbf16>
    %1 = vector.shape_cast %0 : vector<1x16x384xbf16> to vector<16x384xbf16>
    %c0_2 = arith.constant 0 : index
    %c0_3 = arith.constant 0 : index
    %2 = vector.load %arg3[%c0_2, %c0_3] : memref<384x128xbf16, #tpu.memory_space<vmem>>, vector<384x128xbf16>
    %cst = arith.constant dense<0.000000e+00> : vector<16x128xf32>
    %3 = tpu.matmul %1, %2, %cst {dimension_numbers = #tpu.dot_dimension_numbers<[1], [0], [0], [1], [0, 0, 1, 1], [], []>} : vector<16x384xbf16>, vector<384x128xbf16>, vector<16x128xf32> -> vector<16x128xf32>
    %c0_4 = arith.constant 0 : index
    %c0_5 = arith.constant 0 : index
    %c0_6 = arith.constant 0 : index
    %4 = vector.load %arg4[%c0_4, %c0_5, %c0_6] : memref<1x16x128xf32, #tpu.memory_space<vmem>>, vector<1x16x128xf32>
    %5 = vector.shape_cast %4 : vector<1x16x128xf32> to vector<16x128xf32>
    %6 = vector.shape_cast %3 : vector<16x128xf32> to vector<1x16x128xf32>
    tpu.vector_store %arg4[%c0_4, %c0_5, %c0_6], %6 {strides = array<i32>} : memref<1x16x128xf32, #tpu.memory_space<vmem>>, vector<1x16x128xf32>,
    %cst_7 = arith.constant dense<0.000000e+00> : vector<128xf32>
    %7 = vector.multi_reduction <add>, %3, %cst_7 [0] : vector<16x128xf32> to vector<128xf32>
    %8 = vector.shape_cast %7 : vector<128xf32> to vector<1x128xf32>
    %9 = arith.mulf %3, %3 : vector<16x128xf32>
    %cst_8 = arith.constant dense<0.000000e+00> : vector<128xf32>
    %10 = vector.multi_reduction <add>, %9, %cst_8 [0] : vector<16x128xf32> to vector<128xf32>
    %11 = vector.shape_cast %10 : vector<128xf32> to vector<1x128xf32>
    %12 = tpu.iota {dimensions = array<i32: 0>} : vector<8x128xi32>
    %c0_i32 = arith.constant 0 : i32
    %13 = vector.broadcast %c0_i32 : i32 to vector<8x128xi32>
    %14 = arith.cmpi eq, %12, %13 : vector<8x128xi32>
    %c1_i32 = arith.constant 1 : i32
    %15 = vector.broadcast %c1_i32 : i32 to vector<8x128xi32>
    %16 = arith.cmpi eq, %12, %15 : vector<8x128xi32>
    %cst_9 = arith.constant 0.000000e+00 : f32
    %17 = vector.shape_cast %11 : vector<1x128xf32> to vector<1x128xf32>
    %18 = vector.broadcast %17 : vector<1x128xf32> to vector<8x128xf32>
    %19 = vector.broadcast %cst_9 : f32 to vector<8x128xf32>
    %20 = arith.select %16, %18, %19 : vector<8x128xi1>, vector<8x128xf32>
    %21 = vector.shape_cast %8 : vector<1x128xf32> to vector<1x128xf32>
    %22 = vector.broadcast %21 : vector<1x128xf32> to vector<8x128xf32>
    %23 = arith.select %14, %22, %20 : vector<8x128xi1>, vector<8x128xf32>
    %24 = vector.shape_cast %23 : vector<8x128xf32> to vector<1x1x8x128xf32>
    %c0_10 = arith.constant 0 : index
    %c0_11 = arith.constant 0 : index
    %c0_12 = arith.constant 0 : index
    %c0_13 = arith.constant 0 : index
    %25 = vector.load %arg5[%c0_10, %c0_11, %c0_12, %c0_13] : memref<1x1x8x128xf32, #tpu.memory_space<vmem>>, vector<1x1x8x128xf32>
    tpu.vector_store %arg5[%c0_10, %c0_11, %c0_12, %c0_13], %24 {strides = array<i32>} : memref<1x1x8x128xf32, #tpu.memory_space<vmem>>, vector<1x1x8x128xf32>,
    return
  }
  func.func @transform_0(%arg0: i32, %arg1: i32) -> (i32, i32, i32) {
    %c0_i32 = arith.constant 0 : i32
    %c0_i32_0 = arith.constant 0 : i32
    return %arg0, %arg1, %c0_i32 : i32, i32, i32
  }
  func.func @transform_1(%arg0: i32, %arg1: i32) -> (i32, i32) {
    %c0_i32 = arith.constant 0 : i32
    %c0_i32_0 = arith.constant 0 : i32
    %c0_i32_1 = arith.constant 0 : i32
    return %c0_i32, %c0_i32_0 : i32, i32
  }
  func.func @transform_2(%arg0: i32, %arg1: i32) -> (i32, i32, i32) {
    %c0_i32 = arith.constant 0 : i32
    %c0_i32_0 = arith.constant 0 : i32
    return %arg0, %arg1, %c0_i32 : i32, i32, i32
  }
  func.func @transform_3(%arg0: i32, %arg1: i32) -> (i32, i32, i32, i32) {
    %c0_i32 = arith.constant 0 : i32
    %c0_i32_0 = arith.constant 0 : i32
    %c0_i32_1 = arith.constant 0 : i32
    return %arg0, %arg1, %c0_i32, %c0_i32_0 : i32, i32, i32, i32
  }
}

module attributes {stable_mosaic.version = 11 : i64} {
  func.func @kernel(%arg0: i32, %arg1: i32, %arg2: memref<1x16x384xbf16, #tpu.memory_space<vmem>>, %arg3: memref<1x16x384xbf16, #tpu.memory_space<vmem>>, %arg4: memref<384x128xbf16, #tpu.memory_space<vmem>>, %arg5: memref<384x128xbf16, #tpu.memory_space<vmem>>, %arg6: memref<1x16x128xf32, #tpu.memory_space<vmem>>, %arg7: memref<1x1x8x128xf32, #tpu.memory_space<vmem>>) attributes {dimension_semantics = [#tpu.dimension_semantics<parallel>, #tpu.dimension_semantics<parallel>], iteration_bounds = array<i64: 2, 1>, scalar_prefetch = 0 : i64, scratch_operands = 0 : i64, tpu.core_type = #tpu.core_type<tc>, window_params = [{transform_indices = @transform_0, window_bounds = array<i64: 1, 16, 384>}, {transform_indices = @transform_1, window_bounds = array<i64: 1, 16, 384>}, {pipeline_mode = #tpu.pipeline_mode<synchronous>, transform_indices = @transform_2, window_bounds = array<i64: 384, 128>}, {pipeline_mode = #tpu.pipeline_mode<synchronous>, transform_indices = @transform_3, window_bounds = array<i64: 384, 128>}, {transform_indices = @transform_4, window_bounds = array<i64: 1, 16, 128>}, {transform_indices = @transform_5, window_bounds = array<i64: 1, 1, 8, 128>}]} {
    %c0 = arith.constant 0 : index
    %c0_0 = arith.constant 0 : index
    %c0_1 = arith.constant 0 : index
    %0 = vector.load %arg2[%c0, %c0_0, %c0_1] : memref<1x16x384xbf16, #tpu.memory_space<vmem>>, vector<1x16x384xbf16>
    %1 = vector.shape_cast %0 : vector<1x16x384xbf16> to vector<16x384xbf16>
    %c0_2 = arith.constant 0 : index
    %c0_3 = arith.constant 0 : index
    %2 = vector.load %arg4[%c0_2, %c0_3] : memref<384x128xbf16, #tpu.memory_space<vmem>>, vector<384x128xbf16>
    %cst = arith.constant dense<0.000000e+00> : vector<16x128xf32>
    %3 = tpu.matmul %1, %2, %cst {dimension_numbers = #tpu.dot_dimension_numbers<[1], [0], [0], [1], [0, 0, 1, 1], [], []>} : vector<16x384xbf16>, vector<384x128xbf16>, vector<16x128xf32> -> vector<16x128xf32>
    %c0_4 = arith.constant 0 : index
    %c0_5 = arith.constant 0 : index
    %c0_6 = arith.constant 0 : index
    %4 = vector.load %arg3[%c0_4, %c0_5, %c0_6] : memref<1x16x384xbf16, #tpu.memory_space<vmem>>, vector<1x16x384xbf16>
    %5 = vector.shape_cast %4 : vector<1x16x384xbf16> to vector<16x384xbf16>
    %c0_7 = arith.constant 0 : index
    %c0_8 = arith.constant 0 : index
    %6 = vector.load %arg5[%c0_7, %c0_8] : memref<384x128xbf16, #tpu.memory_space<vmem>>, vector<384x128xbf16>
    %cst_9 = arith.constant dense<0.000000e+00> : vector<16x128xf32>
    %7 = tpu.matmul %5, %6, %cst_9 {dimension_numbers = #tpu.dot_dimension_numbers<[1], [0], [0], [1], [0, 0, 1, 1], [], []>} : vector<16x384xbf16>, vector<384x128xbf16>, vector<16x128xf32> -> vector<16x128xf32>
    %8 = arith.addf %3, %7 : vector<16x128xf32>
    %c0_10 = arith.constant 0 : index
    %c0_11 = arith.constant 0 : index
    %c0_12 = arith.constant 0 : index
    %9 = vector.load %arg6[%c0_10, %c0_11, %c0_12] : memref<1x16x128xf32, #tpu.memory_space<vmem>>, vector<1x16x128xf32>
    %10 = vector.shape_cast %9 : vector<1x16x128xf32> to vector<16x128xf32>
    %11 = vector.shape_cast %8 : vector<16x128xf32> to vector<1x16x128xf32>
    tpu.vector_store %arg6[%c0_10, %c0_11, %c0_12], %11 {strides = array<i32>} : memref<1x16x128xf32, #tpu.memory_space<vmem>>, vector<1x16x128xf32>,
    %cst_13 = arith.constant dense<0.000000e+00> : vector<128xf32>
    %12 = vector.multi_reduction <add>, %8, %cst_13 [0] : vector<16x128xf32> to vector<128xf32>
    %13 = vector.shape_cast %12 : vector<128xf32> to vector<1x128xf32>
    %14 = arith.mulf %8, %8 : vector<16x128xf32>
    %cst_14 = arith.constant dense<0.000000e+00> : vector<128xf32>
    %15 = vector.multi_reduction <add>, %14, %cst_14 [0] : vector<16x128xf32> to vector<128xf32>
    %16 = vector.shape_cast %15 : vector<128xf32> to vector<1x128xf32>
    %17 = tpu.iota {dimensions = array<i32: 0>} : vector<8x128xi32>
    %c0_i32 = arith.constant 0 : i32
    %18 = vector.broadcast %c0_i32 : i32 to vector<8x128xi32>
    %19 = arith.cmpi eq, %17, %18 : vector<8x128xi32>
    %c1_i32 = arith.constant 1 : i32
    %20 = vector.broadcast %c1_i32 : i32 to vector<8x128xi32>
    %21 = arith.cmpi eq, %17, %20 : vector<8x128xi32>
    %cst_15 = arith.constant 0.000000e+00 : f32
    %22 = vector.shape_cast %16 : vector<1x128xf32> to vector<1x128xf32>
    %23 = vector.broadcast %22 : vector<1x128xf32> to vector<8x128xf32>
    %24 = vector.broadcast %cst_15 : f32 to vector<8x128xf32>
    %25 = arith.select %21, %23, %24 : vector<8x128xi1>, vector<8x128xf32>
    %26 = vector.shape_cast %13 : vector<1x128xf32> to vector<1x128xf32>
    %27 = vector.broadcast %26 : vector<1x128xf32> to vector<8x128xf32>
    %28 = arith.select %19, %27, %25 : vector<8x128xi1>, vector<8x128xf32>
    %29 = vector.shape_cast %28 : vector<8x128xf32> to vector<1x1x8x128xf32>
    %c0_16 = arith.constant 0 : index
    %c0_17 = arith.constant 0 : index
    %c0_18 = arith.constant 0 : index
    %c0_19 = arith.constant 0 : index
    %30 = vector.load %arg7[%c0_16, %c0_17, %c0_18, %c0_19] : memref<1x1x8x128xf32, #tpu.memory_space<vmem>>, vector<1x1x8x128xf32>
    tpu.vector_store %arg7[%c0_16, %c0_17, %c0_18, %c0_19], %29 {strides = array<i32>} : memref<1x1x8x128xf32, #tpu.memory_space<vmem>>, vector<1x1x8x128xf32>,
    return
  }
  func.func @transform_0(%arg0: i32, %arg1: i32) -> (i32, i32, i32) {
    %c0_i32 = arith.constant 0 : i32
    %c0_i32_0 = arith.constant 0 : i32
    return %arg0, %arg1, %c0_i32 : i32, i32, i32
  }
  func.func @transform_1(%arg0: i32, %arg1: i32) -> (i32, i32, i32) {
    %c0_i32 = arith.constant 0 : i32
    %c0_i32_0 = arith.constant 0 : i32
    return %arg0, %arg1, %c0_i32 : i32, i32, i32
  }
  func.func @transform_2(%arg0: i32, %arg1: i32) -> (i32, i32) {
    %c0_i32 = arith.constant 0 : i32
    %c0_i32_0 = arith.constant 0 : i32
    %c0_i32_1 = arith.constant 0 : i32
    return %c0_i32, %c0_i32_0 : i32, i32
  }
  func.func @transform_3(%arg0: i32, %arg1: i32) -> (i32, i32) {
    %c0_i32 = arith.constant 0 : i32
    %c0_i32_0 = arith.constant 0 : i32
    %c0_i32_1 = arith.constant 0 : i32
    return %c0_i32, %c0_i32_0 : i32, i32
  }
  func.func @transform_4(%arg0: i32, %arg1: i32) -> (i32, i32, i32) {
    %c0_i32 = arith.constant 0 : i32
    %c0_i32_0 = arith.constant 0 : i32
    return %arg0, %arg1, %c0_i32 : i32, i32, i32
  }
  func.func @transform_5(%arg0: i32, %arg1: i32) -> (i32, i32, i32, i32) {
    %c0_i32 = arith.constant 0 : i32
    %c0_i32_0 = arith.constant 0 : i32
    %c0_i32_1 = arith.constant 0 : i32
    return %arg0, %arg1, %c0_i32, %c0_i32_0 : i32, i32, i32, i32
  }
}

module attributes {stable_mosaic.version = 11 : i64} {
  func.func @kernel(%arg0: i32, %arg1: i32, %arg2: memref<1x16x128xbf16, #tpu.memory_space<vmem>>, %arg3: memref<1x16x128xbf16, #tpu.memory_space<vmem>>, %arg4: memref<128x128xbf16, #tpu.memory_space<vmem>>, %arg5: memref<128x128xbf16, #tpu.memory_space<vmem>>, %arg6: memref<1x16x128xf32, #tpu.memory_space<vmem>>, %arg7: memref<1x1x8x128xf32, #tpu.memory_space<vmem>>) attributes {dimension_semantics = [#tpu.dimension_semantics<parallel>, #tpu.dimension_semantics<parallel>], iteration_bounds = array<i64: 2, 1>, scalar_prefetch = 0 : i64, scratch_operands = 0 : i64, tpu.core_type = #tpu.core_type<tc>, window_params = [{transform_indices = @transform_0, window_bounds = array<i64: 1, 16, 128>}, {transform_indices = @transform_1, window_bounds = array<i64: 1, 16, 128>}, {pipeline_mode = #tpu.pipeline_mode<synchronous>, transform_indices = @transform_2, window_bounds = array<i64: 128, 128>}, {pipeline_mode = #tpu.pipeline_mode<synchronous>, transform_indices = @transform_3, window_bounds = array<i64: 128, 128>}, {transform_indices = @transform_4, window_bounds = array<i64: 1, 16, 128>}, {transform_indices = @transform_5, window_bounds = array<i64: 1, 1, 8, 128>}]} {
    %c0 = arith.constant 0 : index
    %c0_0 = arith.constant 0 : index
    %c0_1 = arith.constant 0 : index
    %0 = vector.load %arg2[%c0, %c0_0, %c0_1] : memref<1x16x128xbf16, #tpu.memory_space<vmem>>, vector<1x16x128xbf16>
    %1 = vector.shape_cast %0 : vector<1x16x128xbf16> to vector<16x128xbf16>
    %c0_2 = arith.constant 0 : index
    %c0_3 = arith.constant 0 : index
    %2 = vector.load %arg4[%c0_2, %c0_3] : memref<128x128xbf16, #tpu.memory_space<vmem>>, vector<128x128xbf16>
    %cst = arith.constant dense<0.000000e+00> : vector<16x128xf32>
    %3 = tpu.matmul %1, %2, %cst {dimension_numbers = #tpu.dot_dimension_numbers<[1], [0], [0], [1], [0, 0, 1, 1], [], []>} : vector<16x128xbf16>, vector<128x128xbf16>, vector<16x128xf32> -> vector<16x128xf32>
    %c0_4 = arith.constant 0 : index
    %c0_5 = arith.constant 0 : index
    %c0_6 = arith.constant 0 : index
    %4 = vector.load %arg3[%c0_4, %c0_5, %c0_6] : memref<1x16x128xbf16, #tpu.memory_space<vmem>>, vector<1x16x128xbf16>
    %5 = vector.shape_cast %4 : vector<1x16x128xbf16> to vector<16x128xbf16>
    %c0_7 = arith.constant 0 : index
    %c0_8 = arith.constant 0 : index
    %6 = vector.load %arg5[%c0_7, %c0_8] : memref<128x128xbf16, #tpu.memory_space<vmem>>, vector<128x128xbf16>
    %cst_9 = arith.constant dense<0.000000e+00> : vector<16x128xf32>
    %7 = tpu.matmul %5, %6, %cst_9 {dimension_numbers = #tpu.dot_dimension_numbers<[1], [0], [0], [1], [0, 0, 1, 1], [], []>} : vector<16x128xbf16>, vector<128x128xbf16>, vector<16x128xf32> -> vector<16x128xf32>
    %8 = arith.addf %3, %7 : vector<16x128xf32>
    %c0_10 = arith.constant 0 : index
    %c0_11 = arith.constant 0 : index
    %c0_12 = arith.constant 0 : index
    %9 = vector.load %arg6[%c0_10, %c0_11, %c0_12] : memref<1x16x128xf32, #tpu.memory_space<vmem>>, vector<1x16x128xf32>
    %10 = vector.shape_cast %9 : vector<1x16x128xf32> to vector<16x128xf32>
    %11 = vector.shape_cast %8 : vector<16x128xf32> to vector<1x16x128xf32>
    tpu.vector_store %arg6[%c0_10, %c0_11, %c0_12], %11 {strides = array<i32>} : memref<1x16x128xf32, #tpu.memory_space<vmem>>, vector<1x16x128xf32>,
    %cst_13 = arith.constant dense<0.000000e+00> : vector<128xf32>
    %12 = vector.multi_reduction <add>, %8, %cst_13 [0] : vector<16x128xf32> to vector<128xf32>
    %13 = vector.shape_cast %12 : vector<128xf32> to vector<1x128xf32>
    %14 = arith.mulf %8, %8 : vector<16x128xf32>
    %cst_14 = arith.constant dense<0.000000e+00> : vector<128xf32>
    %15 = vector.multi_reduction <add>, %14, %cst_14 [0] : vector<16x128xf32> to vector<128xf32>
    %16 = vector.shape_cast %15 : vector<128xf32> to vector<1x128xf32>
    %17 = tpu.iota {dimensions = array<i32: 0>} : vector<8x128xi32>
    %c0_i32 = arith.constant 0 : i32
    %18 = vector.broadcast %c0_i32 : i32 to vector<8x128xi32>
    %19 = arith.cmpi eq, %17, %18 : vector<8x128xi32>
    %c1_i32 = arith.constant 1 : i32
    %20 = vector.broadcast %c1_i32 : i32 to vector<8x128xi32>
    %21 = arith.cmpi eq, %17, %20 : vector<8x128xi32>
    %cst_15 = arith.constant 0.000000e+00 : f32
    %22 = vector.shape_cast %16 : vector<1x128xf32> to vector<1x128xf32>
    %23 = vector.broadcast %22 : vector<1x128xf32> to vector<8x128xf32>
    %24 = vector.broadcast %cst_15 : f32 to vector<8x128xf32>
    %25 = arith.select %21, %23, %24 : vector<8x128xi1>, vector<8x128xf32>
    %26 = vector.shape_cast %13 : vector<1x128xf32> to vector<1x128xf32>
    %27 = vector.broadcast %26 : vector<1x128xf32> to vector<8x128xf32>
    %28 = arith.select %19, %27, %25 : vector<8x128xi1>, vector<8x128xf32>
    %29 = vector.shape_cast %28 : vector<8x128xf32> to vector<1x1x8x128xf32>
    %c0_16 = arith.constant 0 : index
    %c0_17 = arith.constant 0 : index
    %c0_18 = arith.constant 0 : index
    %c0_19 = arith.constant 0 : index
    %30 = vector.load %arg7[%c0_16, %c0_17, %c0_18, %c0_19] : memref<1x1x8x128xf32, #tpu.memory_space<vmem>>, vector<1x1x8x128xf32>
    tpu.vector_store %arg7[%c0_16, %c0_17, %c0_18, %c0_19], %29 {strides = array<i32>} : memref<1x1x8x128xf32, #tpu.memory_space<vmem>>, vector<1x1x8x128xf32>,
    return
  }
  func.func @transform_0(%arg0: i32, %arg1: i32) -> (i32, i32, i32) {
    %c0_i32 = arith.constant 0 : i32
    %c0_i32_0 = arith.constant 0 : i32
    return %arg0, %arg1, %c0_i32 : i32, i32, i32
  }
  func.func @transform_1(%arg0: i32, %arg1: i32) -> (i32, i32, i32) {
    %c0_i32 = arith.constant 0 : i32
    %c0_i32_0 = arith.constant 0 : i32
    return %arg0, %arg1, %c0_i32 : i32, i32, i32
  }
  func.func @transform_2(%arg0: i32, %arg1: i32) -> (i32, i32) {
    %c0_i32 = arith.constant 0 : i32
    %c0_i32_0 = arith.constant 0 : i32
    %c0_i32_1 = arith.constant 0 : i32
    return %c0_i32, %c0_i32_0 : i32, i32
  }
  func.func @transform_3(%arg0: i32, %arg1: i32) -> (i32, i32) {
    %c0_i32 = arith.constant 0 : i32
    %c0_i32_0 = arith.constant 0 : i32
    %c0_i32_1 = arith.constant 0 : i32
    return %c0_i32, %c0_i32_0 : i32, i32
  }
  func.func @transform_4(%arg0: i32, %arg1: i32) -> (i32, i32, i32) {
    %c0_i32 = arith.constant 0 : i32
    %c0_i32_0 = arith.constant 0 : i32
    return %arg0, %arg1, %c0_i32 : i32, i32, i32
  }
  func.func @transform_5(%arg0: i32, %arg1: i32) -> (i32, i32, i32, i32) {
    %c0_i32 = arith.constant 0 : i32
    %c0_i32_0 = arith.constant 0 : i32
    %c0_i32_1 = arith.constant 0 : i32
    return %arg0, %arg1, %c0_i32, %c0_i32_0 : i32, i32, i32, i32
  }
}

module attributes {stable_mosaic.version = 11 : i64} {
  func.func @kernel(%arg0: i32, %arg1: i32, %arg2: memref<1x16x128xf32, #tpu.memory_space<vmem>>, %arg3: memref<1x1x128xf32, #tpu.memory_space<vmem>>, %arg4: memref<1x1x128xf32, #tpu.memory_space<vmem>>, %arg5: memref<1x16x128xf32, #tpu.memory_space<vmem>>, %arg6: memref<1x16x128xf32, #tpu.memory_space<vmem>>) attributes {dimension_semantics = [#tpu.dimension_semantics<parallel>, #tpu.dimension_semantics<parallel>], iteration_bounds = array<i64: 2, 1>, scalar_prefetch = 0 : i64, scratch_operands = 0 : i64, tpu.core_type = #tpu.core_type<tc>, window_params = [{transform_indices = @transform_0, window_bounds = array<i64: 1, 16, 128>}, {transform_indices = @transform_1, window_bounds = array<i64: 1, 1, 128>}, {transform_indices = @transform_2, window_bounds = array<i64: 1, 1, 128>}, {transform_indices = @transform_3, window_bounds = array<i64: 1, 16, 128>}, {transform_indices = @transform_4, window_bounds = array<i64: 1, 16, 128>}]} {
    %c0 = arith.constant 0 : index
    %c0_0 = arith.constant 0 : index
    %c0_1 = arith.constant 0 : index
    %0 = vector.load %arg2[%c0, %c0_0, %c0_1] : memref<1x16x128xf32, #tpu.memory_space<vmem>>, vector<1x16x128xf32>
    %1 = vector.shape_cast %0 : vector<1x16x128xf32> to vector<16x128xf32>
    %c0_2 = arith.constant 0 : index
    %c0_3 = arith.constant 0 : index
    %c0_4 = arith.constant 0 : index
    %2 = vector.load %arg3[%c0_2, %c0_3, %c0_4] : memref<1x1x128xf32, #tpu.memory_space<vmem>>, vector<1x1x128xf32>
    %3 = vector.shape_cast %2 : vector<1x1x128xf32> to vector<1x128xf32>
    %4 = vector.broadcast %3 : vector<1x128xf32> to vector<16x128xf32>
    %5 = arith.mulf %1, %4 : vector<16x128xf32>
    %c0_5 = arith.constant 0 : index
    %c0_6 = arith.constant 0 : index
    %c0_7 = arith.constant 0 : index
    %6 = vector.load %arg4[%c0_5, %c0_6, %c0_7] : memref<1x1x128xf32, #tpu.memory_space<vmem>>, vector<1x1x128xf32>
    %7 = vector.shape_cast %6 : vector<1x1x128xf32> to vector<1x128xf32>
    %8 = vector.broadcast %7 : vector<1x128xf32> to vector<16x128xf32>
    %9 = arith.addf %5, %8 : vector<16x128xf32>
    %c0_8 = arith.constant 0 : index
    %c0_9 = arith.constant 0 : index
    %c0_10 = arith.constant 0 : index
    %10 = vector.load %arg5[%c0_8, %c0_9, %c0_10] : memref<1x16x128xf32, #tpu.memory_space<vmem>>, vector<1x16x128xf32>
    %11 = vector.shape_cast %10 : vector<1x16x128xf32> to vector<16x128xf32>
    %12 = arith.addf %9, %11 : vector<16x128xf32>
    %c0_11 = arith.constant 0 : index
    %c0_12 = arith.constant 0 : index
    %c0_13 = arith.constant 0 : index
    %13 = vector.load %arg6[%c0_11, %c0_12, %c0_13] : memref<1x16x128xf32, #tpu.memory_space<vmem>>, vector<1x16x128xf32>
    %14 = vector.shape_cast %13 : vector<1x16x128xf32> to vector<16x128xf32>
    %15 = vector.shape_cast %12 : vector<16x128xf32> to vector<1x16x128xf32>
    tpu.vector_store %arg6[%c0_11, %c0_12, %c0_13], %15 {strides = array<i32>} : memref<1x16x128xf32, #tpu.memory_space<vmem>>, vector<1x16x128xf32>,
    return
  }
  func.func @transform_0(%arg0: i32, %arg1: i32) -> (i32, i32, i32) {
    %c0_i32 = arith.constant 0 : i32
    %c0_i32_0 = arith.constant 0 : i32
    return %arg0, %arg1, %c0_i32 : i32, i32, i32
  }
  func.func @transform_1(%arg0: i32, %arg1: i32) -> (i32, i32, i32) {
    %c0_i32 = arith.constant 0 : i32
    %c0_i32_0 = arith.constant 0 : i32
    %c0_i32_1 = arith.constant 0 : i32
    return %arg0, %c0_i32, %c0_i32_0 : i32, i32, i32
  }
  func.func @transform_2(%arg0: i32, %arg1: i32) -> (i32, i32, i32) {
    %c0_i32 = arith.constant 0 : i32
    %c0_i32_0 = arith.constant 0 : i32
    %c0_i32_1 = arith.constant 0 : i32
    return %arg0, %c0_i32, %c0_i32_0 : i32, i32, i32
  }
  func.func @transform_3(%arg0: i32, %arg1: i32) -> (i32, i32, i32) {
    %c0_i32 = arith.constant 0 : i32
    %c0_i32_0 = arith.constant 0 : i32
    return %arg0, %arg1, %c0_i32 : i32, i32, i32
  }
  func.func @transform_4(%arg0: i32, %arg1: i32) -> (i32, i32, i32) {
    %c0_i32 = arith.constant 0 : i32
    %c0_i32_0 = arith.constant 0 : i32
    return %arg0, %arg1, %c0_i32 : i32, i32, i32
  }
}

module attributes {stable_mosaic.version = 11 : i64} {
  func.func @kernel(%arg0: i32, %arg1: i32, %arg2: memref<1x16x128xf32, #tpu.memory_space<vmem>>, %arg3: memref<1x1x128xf32, #tpu.memory_space<vmem>>, %arg4: memref<1x1x128xf32, #tpu.memory_space<vmem>>, %arg5: memref<1x16x128xf32, #tpu.memory_space<vmem>>) attributes {dimension_semantics = [#tpu.dimension_semantics<parallel>, #tpu.dimension_semantics<parallel>], iteration_bounds = array<i64: 2, 1>, scalar_prefetch = 0 : i64, scratch_operands = 0 : i64, tpu.core_type = #tpu.core_type<tc>, window_params = [{transform_indices = @transform_0, window_bounds = array<i64: 1, 16, 128>}, {transform_indices = @transform_1, window_bounds = array<i64: 1, 1, 128>}, {transform_indices = @transform_2, window_bounds = array<i64: 1, 1, 128>}, {transform_indices = @transform_3, window_bounds = array<i64: 1, 16, 128>}]} {
    %c0 = arith.constant 0 : index
    %c0_0 = arith.constant 0 : index
    %c0_1 = arith.constant 0 : index
    %0 = vector.load %arg2[%c0, %c0_0, %c0_1] : memref<1x16x128xf32, #tpu.memory_space<vmem>>, vector<1x16x128xf32>
    %1 = vector.shape_cast %0 : vector<1x16x128xf32> to vector<16x128xf32>
    %c0_2 = arith.constant 0 : index
    %c0_3 = arith.constant 0 : index
    %c0_4 = arith.constant 0 : index
    %2 = vector.load %arg3[%c0_2, %c0_3, %c0_4] : memref<1x1x128xf32, #tpu.memory_space<vmem>>, vector<1x1x128xf32>
    %3 = vector.shape_cast %2 : vector<1x1x128xf32> to vector<1x128xf32>
    %4 = vector.broadcast %3 : vector<1x128xf32> to vector<16x128xf32>
    %5 = arith.mulf %1, %4 : vector<16x128xf32>
    %c0_5 = arith.constant 0 : index
    %c0_6 = arith.constant 0 : index
    %c0_7 = arith.constant 0 : index
    %6 = vector.load %arg4[%c0_5, %c0_6, %c0_7] : memref<1x1x128xf32, #tpu.memory_space<vmem>>, vector<1x1x128xf32>
    %7 = vector.shape_cast %6 : vector<1x1x128xf32> to vector<1x128xf32>
    %8 = vector.broadcast %7 : vector<1x128xf32> to vector<16x128xf32>
    %9 = arith.addf %5, %8 : vector<16x128xf32>
    %c0_8 = arith.constant 0 : index
    %c0_9 = arith.constant 0 : index
    %c0_10 = arith.constant 0 : index
    %10 = vector.load %arg5[%c0_8, %c0_9, %c0_10] : memref<1x16x128xf32, #tpu.memory_space<vmem>>, vector<1x16x128xf32>
    %11 = vector.shape_cast %10 : vector<1x16x128xf32> to vector<16x128xf32>
    %12 = vector.shape_cast %9 : vector<16x128xf32> to vector<1x16x128xf32>
    tpu.vector_store %arg5[%c0_8, %c0_9, %c0_10], %12 {strides = array<i32>} : memref<1x16x128xf32, #tpu.memory_space<vmem>>, vector<1x16x128xf32>,
    return
  }
  func.func @transform_0(%arg0: i32, %arg1: i32) -> (i32, i32, i32) {
    %c0_i32 = arith.constant 0 : i32
    %c0_i32_0 = arith.constant 0 : i32
    return %arg0, %arg1, %c0_i32 : i32, i32, i32
  }
  func.func @transform_1(%arg0: i32, %arg1: i32) -> (i32, i32, i32) {
    %c0_i32 = arith.constant 0 : i32
    %c0_i32_0 = arith.constant 0 : i32
    %c0_i32_1 = arith.constant 0 : i32
    return %arg0, %c0_i32, %c0_i32_0 : i32, i32, i32
  }
  func.func @transform_2(%arg0: i32, %arg1: i32) -> (i32, i32, i32) {
    %c0_i32 = arith.constant 0 : i32
    %c0_i32_0 = arith.constant 0 : i32
    %c0_i32_1 = arith.constant 0 : i32
    return %arg0, %c0_i32, %c0_i32_0 : i32, i32, i32
  }
  func.func @transform_3(%arg0: i32, %arg1: i32) -> (i32, i32, i32) {
    %c0_i32 = arith.constant 0 : i32
    %c0_i32_0 = arith.constant 0 : i32
    return %arg0, %arg1, %c0_i32 : i32, i32, i32
  }
}

module attributes {stable_mosaic.version = 11 : i64} {
  func.func @kernel(%arg0: i32, %arg1: i32, %arg2: memref<1x16x128xf32, #tpu.memory_space<vmem>>, %arg3: memref<1x1x128xf32, #tpu.memory_space<vmem>>, %arg4: memref<1x1x128xf32, #tpu.memory_space<vmem>>, %arg5: memref<1x16x128xf32, #tpu.memory_space<vmem>>) attributes {dimension_semantics = [#tpu.dimension_semantics<parallel>, #tpu.dimension_semantics<parallel>], iteration_bounds = array<i64: 2, 1>, scalar_prefetch = 0 : i64, scratch_operands = 0 : i64, tpu.core_type = #tpu.core_type<tc>, window_params = [{transform_indices = @transform_0, window_bounds = array<i64: 1, 16, 128>}, {transform_indices = @transform_1, window_bounds = array<i64: 1, 1, 128>}, {transform_indices = @transform_2, window_bounds = array<i64: 1, 1, 128>}, {transform_indices = @transform_3, window_bounds = array<i64: 1, 16, 128>}]} {
    %c0 = arith.constant 0 : index
    %c0_0 = arith.constant 0 : index
    %c0_1 = arith.constant 0 : index
    %0 = vector.load %arg2[%c0, %c0_0, %c0_1] : memref<1x16x128xf32, #tpu.memory_space<vmem>>, vector<1x16x128xf32>
    %1 = vector.shape_cast %0 : vector<1x16x128xf32> to vector<16x128xf32>
    %c0_2 = arith.constant 0 : index
    %c0_3 = arith.constant 0 : index
    %c0_4 = arith.constant 0 : index
    %2 = vector.load %arg3[%c0_2, %c0_3, %c0_4] : memref<1x1x128xf32, #tpu.memory_space<vmem>>, vector<1x1x128xf32>
    %3 = vector.shape_cast %2 : vector<1x1x128xf32> to vector<1x128xf32>
    %4 = vector.broadcast %3 : vector<1x128xf32> to vector<16x128xf32>
    %5 = arith.mulf %1, %4 : vector<16x128xf32>
    %c0_5 = arith.constant 0 : index
    %c0_6 = arith.constant 0 : index
    %c0_7 = arith.constant 0 : index
    %6 = vector.load %arg4[%c0_5, %c0_6, %c0_7] : memref<1x1x128xf32, #tpu.memory_space<vmem>>, vector<1x1x128xf32>
    %7 = vector.shape_cast %6 : vector<1x1x128xf32> to vector<1x128xf32>
    %8 = vector.broadcast %7 : vector<1x128xf32> to vector<16x128xf32>
    %9 = arith.addf %5, %8 : vector<16x128xf32>
    %cst = arith.constant 0.000000e+00 : f32
    %10 = vector.broadcast %cst : f32 to vector<16x128xf32>
    %11 = arith.cmpf ogt, %9, %10 : vector<16x128xf32>
    %cst_8 = arith.constant 0.00999999977 : f32
    %12 = vector.broadcast %cst_8 : f32 to vector<16x128xf32>
    %13 = arith.mulf %12, %9 : vector<16x128xf32>
    %14 = arith.select %11, %9, %13 : vector<16x128xi1>, vector<16x128xf32>
    %c0_9 = arith.constant 0 : index
    %c0_10 = arith.constant 0 : index
    %c0_11 = arith.constant 0 : index
    %15 = vector.load %arg5[%c0_9, %c0_10, %c0_11] : memref<1x16x128xf32, #tpu.memory_space<vmem>>, vector<1x16x128xf32>
    %16 = vector.shape_cast %15 : vector<1x16x128xf32> to vector<16x128xf32>
    %17 = vector.shape_cast %14 : vector<16x128xf32> to vector<1x16x128xf32>
    tpu.vector_store %arg5[%c0_9, %c0_10, %c0_11], %17 {strides = array<i32>} : memref<1x16x128xf32, #tpu.memory_space<vmem>>, vector<1x16x128xf32>,
    return
  }
  func.func @transform_0(%arg0: i32, %arg1: i32) -> (i32, i32, i32) {
    %c0_i32 = arith.constant 0 : i32
    %c0_i32_0 = arith.constant 0 : i32
    return %arg0, %arg1, %c0_i32 : i32, i32, i32
  }
  func.func @transform_1(%arg0: i32, %arg1: i32) -> (i32, i32, i32) {
    %c0_i32 = arith.constant 0 : i32
    %c0_i32_0 = arith.constant 0 : i32
    %c0_i32_1 = arith.constant 0 : i32
    return %arg0, %c0_i32, %c0_i32_0 : i32, i32, i32
  }
  func.func @transform_2(%arg0: i32, %arg1: i32) -> (i32, i32, i32) {
    %c0_i32 = arith.constant 0 : i32
    %c0_i32_0 = arith.constant 0 : i32
    %c0_i32_1 = arith.constant 0 : i32
    return %arg0, %c0_i32, %c0_i32_0 : i32, i32, i32
  }
  func.func @transform_3(%arg0: i32, %arg1: i32) -> (i32, i32, i32) {
    %c0_i32 = arith.constant 0 : i32
    %c0_i32_0 = arith.constant 0 : i32
    return %arg0, %arg1, %c0_i32 : i32, i32, i32
  }
}

module attributes {stable_mosaic.version = 11 : i64} {
  func.func @kernel(%arg0: i32, %arg1: i32, %arg2: memref<1x64x128xf32, #tpu.memory_space<vmem>>, %arg3: memref<1x1x128xf32, #tpu.memory_space<vmem>>, %arg4: memref<1x1x128xf32, #tpu.memory_space<vmem>>, %arg5: memref<1x64x128xf32, #tpu.memory_space<vmem>>) attributes {dimension_semantics = [#tpu.dimension_semantics<parallel>, #tpu.dimension_semantics<parallel>], iteration_bounds = array<i64: 2, 1>, scalar_prefetch = 0 : i64, scratch_operands = 0 : i64, tpu.core_type = #tpu.core_type<tc>, window_params = [{transform_indices = @transform_0, window_bounds = array<i64: 1, 64, 128>}, {transform_indices = @transform_1, window_bounds = array<i64: 1, 1, 128>}, {transform_indices = @transform_2, window_bounds = array<i64: 1, 1, 128>}, {transform_indices = @transform_3, window_bounds = array<i64: 1, 64, 128>}]} {
    %c0 = arith.constant 0 : index
    %c0_0 = arith.constant 0 : index
    %c0_1 = arith.constant 0 : index
    %0 = vector.load %arg2[%c0, %c0_0, %c0_1] : memref<1x64x128xf32, #tpu.memory_space<vmem>>, vector<1x64x128xf32>
    %1 = vector.shape_cast %0 : vector<1x64x128xf32> to vector<64x128xf32>
    %c0_2 = arith.constant 0 : index
    %c0_3 = arith.constant 0 : index
    %c0_4 = arith.constant 0 : index
    %2 = vector.load %arg3[%c0_2, %c0_3, %c0_4] : memref<1x1x128xf32, #tpu.memory_space<vmem>>, vector<1x1x128xf32>
    %3 = vector.shape_cast %2 : vector<1x1x128xf32> to vector<1x128xf32>
    %4 = vector.broadcast %3 : vector<1x128xf32> to vector<64x128xf32>
    %5 = arith.mulf %1, %4 : vector<64x128xf32>
    %c0_5 = arith.constant 0 : index
    %c0_6 = arith.constant 0 : index
    %c0_7 = arith.constant 0 : index
    %6 = vector.load %arg4[%c0_5, %c0_6, %c0_7] : memref<1x1x128xf32, #tpu.memory_space<vmem>>, vector<1x1x128xf32>
    %7 = vector.shape_cast %6 : vector<1x1x128xf32> to vector<1x128xf32>
    %8 = vector.broadcast %7 : vector<1x128xf32> to vector<64x128xf32>
    %9 = arith.addf %5, %8 : vector<64x128xf32>
    %cst = arith.constant 0.000000e+00 : f32
    %10 = vector.broadcast %cst : f32 to vector<64x128xf32>
    %11 = arith.cmpf ogt, %9, %10 : vector<64x128xf32>
    %cst_8 = arith.constant 0.00999999977 : f32
    %12 = vector.broadcast %cst_8 : f32 to vector<64x128xf32>
    %13 = arith.mulf %12, %9 : vector<64x128xf32>
    %14 = arith.select %11, %9, %13 : vector<64x128xi1>, vector<64x128xf32>
    %c0_9 = arith.constant 0 : index
    %c0_10 = arith.constant 0 : index
    %c0_11 = arith.constant 0 : index
    %15 = vector.load %arg5[%c0_9, %c0_10, %c0_11] : memref<1x64x128xf32, #tpu.memory_space<vmem>>, vector<1x64x128xf32>
    %16 = vector.shape_cast %15 : vector<1x64x128xf32> to vector<64x128xf32>
    %17 = vector.shape_cast %14 : vector<64x128xf32> to vector<1x64x128xf32>
    tpu.vector_store %arg5[%c0_9, %c0_10, %c0_11], %17 {strides = array<i32>} : memref<1x64x128xf32, #tpu.memory_space<vmem>>, vector<1x64x128xf32>,
    return
  }
  func.func @transform_0(%arg0: i32, %arg1: i32) -> (i32, i32, i32) {
    %c0_i32 = arith.constant 0 : i32
    %c0_i32_0 = arith.constant 0 : i32
    return %arg0, %arg1, %c0_i32 : i32, i32, i32
  }
  func.func @transform_1(%arg0: i32, %arg1: i32) -> (i32, i32, i32) {
    %c0_i32 = arith.constant 0 : i32
    %c0_i32_0 = arith.constant 0 : i32
    %c0_i32_1 = arith.constant 0 : i32
    return %arg0, %c0_i32, %c0_i32_0 : i32, i32, i32
  }
  func.func @transform_2(%arg0: i32, %arg1: i32) -> (i32, i32, i32) {
    %c0_i32 = arith.constant 0 : i32
    %c0_i32_0 = arith.constant 0 : i32
    %c0_i32_1 = arith.constant 0 : i32
    return %arg0, %c0_i32, %c0_i32_0 : i32, i32, i32
  }
  func.func @transform_3(%arg0: i32, %arg1: i32) -> (i32, i32, i32) {
    %c0_i32 = arith.constant 0 : i32
    %c0_i32_0 = arith.constant 0 : i32
    return %arg0, %arg1, %c0_i32 : i32, i32, i32
  }
}

module attributes {stable_mosaic.version = 11 : i64} {
  func.func @kernel(%arg0: i32, %arg1: i32, %arg2: memref<1x64x256xbf16, #tpu.memory_space<vmem>>, %arg3: memref<256x128xbf16, #tpu.memory_space<vmem>>, %arg4: memref<1x64x128xf32, #tpu.memory_space<vmem>>, %arg5: memref<1x1x8x128xf32, #tpu.memory_space<vmem>>) attributes {dimension_semantics = [#tpu.dimension_semantics<parallel>, #tpu.dimension_semantics<parallel>], iteration_bounds = array<i64: 2, 1>, scalar_prefetch = 0 : i64, scratch_operands = 0 : i64, tpu.core_type = #tpu.core_type<tc>, window_params = [{transform_indices = @transform_0, window_bounds = array<i64: 1, 64, 256>}, {pipeline_mode = #tpu.pipeline_mode<synchronous>, transform_indices = @transform_1, window_bounds = array<i64: 256, 128>}, {transform_indices = @transform_2, window_bounds = array<i64: 1, 64, 128>}, {transform_indices = @transform_3, window_bounds = array<i64: 1, 1, 8, 128>}]} {
    %c0 = arith.constant 0 : index
    %c0_0 = arith.constant 0 : index
    %c0_1 = arith.constant 0 : index
    %0 = vector.load %arg2[%c0, %c0_0, %c0_1] : memref<1x64x256xbf16, #tpu.memory_space<vmem>>, vector<1x64x256xbf16>
    %1 = vector.shape_cast %0 : vector<1x64x256xbf16> to vector<64x256xbf16>
    %c0_2 = arith.constant 0 : index
    %c0_3 = arith.constant 0 : index
    %2 = vector.load %arg3[%c0_2, %c0_3] : memref<256x128xbf16, #tpu.memory_space<vmem>>, vector<256x128xbf16>
    %cst = arith.constant dense<0.000000e+00> : vector<64x128xf32>
    %3 = tpu.matmul %1, %2, %cst {dimension_numbers = #tpu.dot_dimension_numbers<[1], [0], [0], [1], [0, 0, 1, 1], [], []>} : vector<64x256xbf16>, vector<256x128xbf16>, vector<64x128xf32> -> vector<64x128xf32>
    %c0_4 = arith.constant 0 : index
    %c0_5 = arith.constant 0 : index
    %c0_6 = arith.constant 0 : index
    %4 = vector.load %arg4[%c0_4, %c0_5, %c0_6] : memref<1x64x128xf32, #tpu.memory_space<vmem>>, vector<1x64x128xf32>
    %5 = vector.shape_cast %4 : vector<1x64x128xf32> to vector<64x128xf32>
    %6 = vector.shape_cast %3 : vector<64x128xf32> to vector<1x64x128xf32>
    tpu.vector_store %arg4[%c0_4, %c0_5, %c0_6], %6 {strides = array<i32>} : memref<1x64x128xf32, #tpu.memory_space<vmem>>, vector<1x64x128xf32>,
    %cst_7 = arith.constant dense<0.000000e+00> : vector<128xf32>
    %7 = vector.multi_reduction <add>, %3, %cst_7 [0] : vector<64x128xf32> to vector<128xf32>
    %8 = vector.shape_cast %7 : vector<128xf32> to vector<1x128xf32>
    %9 = arith.mulf %3, %3 : vector<64x128xf32>
    %cst_8 = arith.constant dense<0.000000e+00> : vector<128xf32>
    %10 = vector.multi_reduction <add>, %9, %cst_8 [0] : vector<64x128xf32> to vector<128xf32>
    %11 = vector.shape_cast %10 : vector<128xf32> to vector<1x128xf32>
    %12 = tpu.iota {dimensions = array<i32: 0>} : vector<8x128xi32>
    %c0_i32 = arith.constant 0 : i32
    %13 = vector.broadcast %c0_i32 : i32 to vector<8x128xi32>
    %14 = arith.cmpi eq, %12, %13 : vector<8x128xi32>
    %c1_i32 = arith.constant 1 : i32
    %15 = vector.broadcast %c1_i32 : i32 to vector<8x128xi32>
    %16 = arith.cmpi eq, %12, %15 : vector<8x128xi32>
    %cst_9 = arith.constant 0.000000e+00 : f32
    %17 = vector.shape_cast %11 : vector<1x128xf32> to vector<1x128xf32>
    %18 = vector.broadcast %17 : vector<1x128xf32> to vector<8x128xf32>
    %19 = vector.broadcast %cst_9 : f32 to vector<8x128xf32>
    %20 = arith.select %16, %18, %19 : vector<8x128xi1>, vector<8x128xf32>
    %21 = vector.shape_cast %8 : vector<1x128xf32> to vector<1x128xf32>
    %22 = vector.broadcast %21 : vector<1x128xf32> to vector<8x128xf32>
    %23 = arith.select %14, %22, %20 : vector<8x128xi1>, vector<8x128xf32>
    %24 = vector.shape_cast %23 : vector<8x128xf32> to vector<1x1x8x128xf32>
    %c0_10 = arith.constant 0 : index
    %c0_11 = arith.constant 0 : index
    %c0_12 = arith.constant 0 : index
    %c0_13 = arith.constant 0 : index
    %25 = vector.load %arg5[%c0_10, %c0_11, %c0_12, %c0_13] : memref<1x1x8x128xf32, #tpu.memory_space<vmem>>, vector<1x1x8x128xf32>
    tpu.vector_store %arg5[%c0_10, %c0_11, %c0_12, %c0_13], %24 {strides = array<i32>} : memref<1x1x8x128xf32, #tpu.memory_space<vmem>>, vector<1x1x8x128xf32>,
    return
  }
  func.func @transform_0(%arg0: i32, %arg1: i32) -> (i32, i32, i32) {
    %c0_i32 = arith.constant 0 : i32
    %c0_i32_0 = arith.constant 0 : i32
    return %arg0, %arg1, %c0_i32 : i32, i32, i32
  }
  func.func @transform_1(%arg0: i32, %arg1: i32) -> (i32, i32) {
    %c0_i32 = arith.constant 0 : i32
    %c0_i32_0 = arith.constant 0 : i32
    %c0_i32_1 = arith.constant 0 : i32
    return %c0_i32, %c0_i32_0 : i32, i32
  }
  func.func @transform_2(%arg0: i32, %arg1: i32) -> (i32, i32, i32) {
    %c0_i32 = arith.constant 0 : i32
    %c0_i32_0 = arith.constant 0 : i32
    return %arg0, %arg1, %c0_i32 : i32, i32, i32
  }
  func.func @transform_3(%arg0: i32, %arg1: i32) -> (i32, i32, i32, i32) {
    %c0_i32 = arith.constant 0 : i32
    %c0_i32_0 = arith.constant 0 : i32
    %c0_i32_1 = arith.constant 0 : i32
    return %arg0, %arg1, %c0_i32, %c0_i32_0 : i32, i32, i32, i32
  }
}

module attributes {stable_mosaic.version = 11 : i64} {
  func.func @kernel(%arg0: i32, %arg1: i32, %arg2: memref<1x256x512xbf16, #tpu.memory_space<vmem>>, %arg3: memref<512x128xbf16, #tpu.memory_space<vmem>>, %arg4: memref<1x256x128xf32, #tpu.memory_space<vmem>>, %arg5: memref<1x1x8x128xf32, #tpu.memory_space<vmem>>) attributes {dimension_semantics = [#tpu.dimension_semantics<parallel>, #tpu.dimension_semantics<parallel>], iteration_bounds = array<i64: 2, 1>, scalar_prefetch = 0 : i64, scratch_operands = 0 : i64, tpu.core_type = #tpu.core_type<tc>, window_params = [{transform_indices = @transform_0, window_bounds = array<i64: 1, 256, 512>}, {pipeline_mode = #tpu.pipeline_mode<synchronous>, transform_indices = @transform_1, window_bounds = array<i64: 512, 128>}, {transform_indices = @transform_2, window_bounds = array<i64: 1, 256, 128>}, {transform_indices = @transform_3, window_bounds = array<i64: 1, 1, 8, 128>}]} {
    %c0 = arith.constant 0 : index
    %c0_0 = arith.constant 0 : index
    %c0_1 = arith.constant 0 : index
    %0 = vector.load %arg2[%c0, %c0_0, %c0_1] : memref<1x256x512xbf16, #tpu.memory_space<vmem>>, vector<1x256x512xbf16>
    %1 = vector.shape_cast %0 : vector<1x256x512xbf16> to vector<256x512xbf16>
    %c0_2 = arith.constant 0 : index
    %c0_3 = arith.constant 0 : index
    %2 = vector.load %arg3[%c0_2, %c0_3] : memref<512x128xbf16, #tpu.memory_space<vmem>>, vector<512x128xbf16>
    %cst = arith.constant dense<0.000000e+00> : vector<256x128xf32>
    %3 = tpu.matmul %1, %2, %cst {dimension_numbers = #tpu.dot_dimension_numbers<[1], [0], [0], [1], [0, 0, 1, 1], [], []>} : vector<256x512xbf16>, vector<512x128xbf16>, vector<256x128xf32> -> vector<256x128xf32>
    %c0_4 = arith.constant 0 : index
    %c0_5 = arith.constant 0 : index
    %c0_6 = arith.constant 0 : index
    %4 = vector.load %arg4[%c0_4, %c0_5, %c0_6] : memref<1x256x128xf32, #tpu.memory_space<vmem>>, vector<1x256x128xf32>
    %5 = vector.shape_cast %4 : vector<1x256x128xf32> to vector<256x128xf32>
    %6 = vector.shape_cast %3 : vector<256x128xf32> to vector<1x256x128xf32>
    tpu.vector_store %arg4[%c0_4, %c0_5, %c0_6], %6 {strides = array<i32>} : memref<1x256x128xf32, #tpu.memory_space<vmem>>, vector<1x256x128xf32>,
    %cst_7 = arith.constant dense<0.000000e+00> : vector<128xf32>
    %7 = vector.multi_reduction <add>, %3, %cst_7 [0] : vector<256x128xf32> to vector<128xf32>
    %8 = vector.shape_cast %7 : vector<128xf32> to vector<1x128xf32>
    %9 = arith.mulf %3, %3 : vector<256x128xf32>
    %cst_8 = arith.constant dense<0.000000e+00> : vector<128xf32>
    %10 = vector.multi_reduction <add>, %9, %cst_8 [0] : vector<256x128xf32> to vector<128xf32>
    %11 = vector.shape_cast %10 : vector<128xf32> to vector<1x128xf32>
    %12 = tpu.iota {dimensions = array<i32: 0>} : vector<8x128xi32>
    %c0_i32 = arith.constant 0 : i32
    %13 = vector.broadcast %c0_i32 : i32 to vector<8x128xi32>
    %14 = arith.cmpi eq, %12, %13 : vector<8x128xi32>
    %c1_i32 = arith.constant 1 : i32
    %15 = vector.broadcast %c1_i32 : i32 to vector<8x128xi32>
    %16 = arith.cmpi eq, %12, %15 : vector<8x128xi32>
    %cst_9 = arith.constant 0.000000e+00 : f32
    %17 = vector.shape_cast %11 : vector<1x128xf32> to vector<1x128xf32>
    %18 = vector.broadcast %17 : vector<1x128xf32> to vector<8x128xf32>
    %19 = vector.broadcast %cst_9 : f32 to vector<8x128xf32>
    %20 = arith.select %16, %18, %19 : vector<8x128xi1>, vector<8x128xf32>
    %21 = vector.shape_cast %8 : vector<1x128xf32> to vector<1x128xf32>
    %22 = vector.broadcast %21 : vector<1x128xf32> to vector<8x128xf32>
    %23 = arith.select %14, %22, %20 : vector<8x128xi1>, vector<8x128xf32>
    %24 = vector.shape_cast %23 : vector<8x128xf32> to vector<1x1x8x128xf32>
    %c0_10 = arith.constant 0 : index
    %c0_11 = arith.constant 0 : index
    %c0_12 = arith.constant 0 : index
    %c0_13 = arith.constant 0 : index
    %25 = vector.load %arg5[%c0_10, %c0_11, %c0_12, %c0_13] : memref<1x1x8x128xf32, #tpu.memory_space<vmem>>, vector<1x1x8x128xf32>
    tpu.vector_store %arg5[%c0_10, %c0_11, %c0_12, %c0_13], %24 {strides = array<i32>} : memref<1x1x8x128xf32, #tpu.memory_space<vmem>>, vector<1x1x8x128xf32>,
    return
  }
  func.func @transform_0(%arg0: i32, %arg1: i32) -> (i32, i32, i32) {
    %c0_i32 = arith.constant 0 : i32
    %c0_i32_0 = arith.constant 0 : i32
    return %arg0, %arg1, %c0_i32 : i32, i32, i32
  }
  func.func @transform_1(%arg0: i32, %arg1: i32) -> (i32, i32) {
    %c0_i32 = arith.constant 0 : i32
    %c0_i32_0 = arith.constant 0 : i32
    %c0_i32_1 = arith.constant 0 : i32
    return %c0_i32, %c0_i32_0 : i32, i32
  }
  func.func @transform_2(%arg0: i32, %arg1: i32) -> (i32, i32, i32) {
    %c0_i32 = arith.constant 0 : i32
    %c0_i32_0 = arith.constant 0 : i32
    return %arg0, %arg1, %c0_i32 : i32, i32, i32
  }
  func.func @transform_3(%arg0: i32, %arg1: i32) -> (i32, i32, i32, i32) {
    %c0_i32 = arith.constant 0 : i32
    %c0_i32_0 = arith.constant 0 : i32
    %c0_i32_1 = arith.constant 0 : i32
    return %arg0, %arg1, %c0_i32, %c0_i32_0 : i32, i32, i32, i32
  }
}

module attributes {stable_mosaic.version = 11 : i64} {
  func.func @kernel(%arg0: i32, %arg1: i32, %arg2: memref<1x256x128xf32, #tpu.memory_space<vmem>>, %arg3: memref<1x1x128xf32, #tpu.memory_space<vmem>>, %arg4: memref<1x1x128xf32, #tpu.memory_space<vmem>>, %arg5: memref<1x256x128xf32, #tpu.memory_space<vmem>>) attributes {dimension_semantics = [#tpu.dimension_semantics<parallel>, #tpu.dimension_semantics<parallel>], iteration_bounds = array<i64: 2, 1>, scalar_prefetch = 0 : i64, scratch_operands = 0 : i64, tpu.core_type = #tpu.core_type<tc>, window_params = [{transform_indices = @transform_0, window_bounds = array<i64: 1, 256, 128>}, {transform_indices = @transform_1, window_bounds = array<i64: 1, 1, 128>}, {transform_indices = @transform_2, window_bounds = array<i64: 1, 1, 128>}, {transform_indices = @transform_3, window_bounds = array<i64: 1, 256, 128>}]} {
    %c0 = arith.constant 0 : index
    %c0_0 = arith.constant 0 : index
    %c0_1 = arith.constant 0 : index
    %0 = vector.load %arg2[%c0, %c0_0, %c0_1] : memref<1x256x128xf32, #tpu.memory_space<vmem>>, vector<1x256x128xf32>
    %1 = vector.shape_cast %0 : vector<1x256x128xf32> to vector<256x128xf32>
    %c0_2 = arith.constant 0 : index
    %c0_3 = arith.constant 0 : index
    %c0_4 = arith.constant 0 : index
    %2 = vector.load %arg3[%c0_2, %c0_3, %c0_4] : memref<1x1x128xf32, #tpu.memory_space<vmem>>, vector<1x1x128xf32>
    %3 = vector.shape_cast %2 : vector<1x1x128xf32> to vector<1x128xf32>
    %4 = vector.broadcast %3 : vector<1x128xf32> to vector<256x128xf32>
    %5 = arith.mulf %1, %4 : vector<256x128xf32>
    %c0_5 = arith.constant 0 : index
    %c0_6 = arith.constant 0 : index
    %c0_7 = arith.constant 0 : index
    %6 = vector.load %arg4[%c0_5, %c0_6, %c0_7] : memref<1x1x128xf32, #tpu.memory_space<vmem>>, vector<1x1x128xf32>
    %7 = vector.shape_cast %6 : vector<1x1x128xf32> to vector<1x128xf32>
    %8 = vector.broadcast %7 : vector<1x128xf32> to vector<256x128xf32>
    %9 = arith.addf %5, %8 : vector<256x128xf32>
    %cst = arith.constant 0.000000e+00 : f32
    %10 = vector.broadcast %cst : f32 to vector<256x128xf32>
    %11 = arith.cmpf ogt, %9, %10 : vector<256x128xf32>
    %cst_8 = arith.constant 0.00999999977 : f32
    %12 = vector.broadcast %cst_8 : f32 to vector<256x128xf32>
    %13 = arith.mulf %12, %9 : vector<256x128xf32>
    %14 = arith.select %11, %9, %13 : vector<256x128xi1>, vector<256x128xf32>
    %c0_9 = arith.constant 0 : index
    %c0_10 = arith.constant 0 : index
    %c0_11 = arith.constant 0 : index
    %15 = vector.load %arg5[%c0_9, %c0_10, %c0_11] : memref<1x256x128xf32, #tpu.memory_space<vmem>>, vector<1x256x128xf32>
    %16 = vector.shape_cast %15 : vector<1x256x128xf32> to vector<256x128xf32>
    %17 = vector.shape_cast %14 : vector<256x128xf32> to vector<1x256x128xf32>
    tpu.vector_store %arg5[%c0_9, %c0_10, %c0_11], %17 {strides = array<i32>} : memref<1x256x128xf32, #tpu.memory_space<vmem>>, vector<1x256x128xf32>,
    return
  }
  func.func @transform_0(%arg0: i32, %arg1: i32) -> (i32, i32, i32) {
    %c0_i32 = arith.constant 0 : i32
    %c0_i32_0 = arith.constant 0 : i32
    return %arg0, %arg1, %c0_i32 : i32, i32, i32
  }
  func.func @transform_1(%arg0: i32, %arg1: i32) -> (i32, i32, i32) {
    %c0_i32 = arith.constant 0 : i32
    %c0_i32_0 = arith.constant 0 : i32
    %c0_i32_1 = arith.constant 0 : i32
    return %arg0, %c0_i32, %c0_i32_0 : i32, i32, i32
  }
  func.func @transform_2(%arg0: i32, %arg1: i32) -> (i32, i32, i32) {
    %c0_i32 = arith.constant 0 : i32
    %c0_i32_0 = arith.constant 0 : i32
    %c0_i32_1 = arith.constant 0 : i32
    return %arg0, %c0_i32, %c0_i32_0 : i32, i32, i32
  }
  func.func @transform_3(%arg0: i32, %arg1: i32) -> (i32, i32, i32) {
    %c0_i32 = arith.constant 0 : i32
    %c0_i32_0 = arith.constant 0 : i32
    return %arg0, %arg1, %c0_i32 : i32, i32, i32
  }
}

</mosaic_0001>

<llo_original>
// kernel: generator_forward.47
$region0: #{generator_forward.47}
  #allocation0 [shape = 'u32[]', space=smem, size = 0x4, offset = 0x4, fixed_abs, tag = 'smem constant byte address 0x4 - core index']
  #allocation1 [shape = 'u32[72,128]{1,0:T(1,128)}', space=vmem, size = 0x9000, scoped, tag = 'internal scratch']
  %s0 = inlined_call_operand.vmem [shape: f32[2,256,128], index: 0, kind: input, shape index: {}]
  %s1 = inlined_call_operand.vmem [shape: f32[2,1,128], index: 1, kind: input, shape index: {}]
  %s2 = inlined_call_operand.vmem [shape: f32[2,1,128], index: 2, kind: input, shape index: {}]
  %s3 = inlined_call_operand.vmem [shape: f32[2,256,128], index: 3, kind: output, shape index: {}]
  %s4 = sld [smem:[#allocation0]]
  $region45: #{generator_forward.47} parent=0
    _
  %s6 = ssub.s32 1, %s4
  %s7 = scalar_select 0, %s6, %s4
  loop: start=0, step=1, limit=4
  $region2: #{generator_forward.47} parent=0 // loop_pre_header
    _
  $region3: #{generator_forward.47} parent=0 // loop_header
    %s9 = sphi 0, %s13
    %p10 = scmp.ge.s32.totalorder %s9, 4
    %s16 = sphi 0, %s28
    %s17 = sphi 0, %s24
    %s18 = sphi 0, %s16
    %s19 = sphi 0, %s17
    %s20 = sphi 0, %s18
    %s21 = sphi 0, %s19
    %s33 = sphi 0, %s35
    %s36 = sphi 0, %s33
    %s37 = sphi 0, %s36
    %s53 = sphi 0, %s37
    %s59 = sphi 0, %s61
    %s62 = sphi 0, %s59
    %s63 = sphi 0, %s62
    %s79 = sphi 0, %s63
    %s85 = sphi 0, %s87
    %s88 = sphi 0, %s85
    %s89 = sphi 0, %s88
    %s105 = sphi 0, %s89
    %s113 = sphi 0, %s115
    %s116 = sphi 0, %s113
    %s117 = sphi 0, %s116
    %s133 = sphi 0, %s117
  $region4: #{generator_forward.47} parent=0 // loop_header_branch
    %12 = sbr.rel (%p10) target = $region8
  $region5: #{generator_forward.47} parent=0 // loop_body
    %s14 = ssub.s32 %s9, 1
    %s15 = ssub.s32 %s9, 2
    %s22 = sadd.s32 1, %s17
    %p23 = scmp.ge.s32.totalorder %s22, 1
    %s24 = scalar_select %p23, 0, %s22
    %s25 = sadd.s32 1, %s16
    %s26 = scalar_select %p23, %s25, %s16
    %p27 = scmp.ge.s32.totalorder %s26, 2
    %s28 = scalar_select %p27, 0, %s26
    %s29 = ssub.s32 %s16, %s28
    %s30 = ssub.s32 %s17, %s24
    %s31 = sor.u32 %s29, %s30
    %p32 = scmp.eq.s32.totalorder %s31, 0
    %s34 = sadd.s32 %s33, 1
    %s35 = scalar_select %p32, %s33, %s34
    %p38 = pneg %p32
    %p39 = scmp.eq.s32.totalorder %s9, 1
    %p40 = por %p38, %p39
    %p41 = scmp.ne.s32.totalorder %s33, %s36
    %p42 = scmp.eq.s32.totalorder %s9, 0
    %p43 = por %p41, %p42
    %p44 = scmp.ne.s32.totalorder %s33, %s36
    %p45 = scmp.eq.s32.totalorder %s14, 1
    %p46 = por %p44, %p45
    %p47 = scmp.ne.s32.totalorder %s36, %s37
    %p48 = scmp.eq.s32.totalorder %s14, 0
    %p49 = por %p47, %p48
    %p50 = scmp.ne.s32.totalorder %s36, %s37
    %p51 = scmp.eq.s32.totalorder %s15, 1
    %p52 = por %p50, %p51
    %p54 = scmp.ne.s32.totalorder %s37, %s53
    %p55 = scmp.eq.s32.totalorder %s15, 0
    %p56 = por %p54, %p55
    %s57 = ssub.s32 %s16, %s28
    %p58 = scmp.eq.s32.totalorder %s57, 0
    %s60 = sadd.s32 %s59, 1
    %s61 = scalar_select %p58, %s59, %s60
    %p64 = pneg %p58
    %p65 = scmp.eq.s32.totalorder %s9, 1
    %p66 = por %p64, %p65
    %p67 = scmp.ne.s32.totalorder %s59, %s62
    %p68 = scmp.eq.s32.totalorder %s9, 0
    %p69 = por %p67, %p68
    %p70 = scmp.ne.s32.totalorder %s59, %s62
    %p71 = scmp.eq.s32.totalorder %s14, 1
    %p72 = por %p70, %p71
    %p73 = scmp.ne.s32.totalorder %s62, %s63
    %p74 = scmp.eq.s32.totalorder %s14, 0
    %p75 = por %p73, %p74
    %p76 = scmp.ne.s32.totalorder %s62, %s63
    %p77 = scmp.eq.s32.totalorder %s15, 1
    %p78 = por %p76, %p77
    %p80 = scmp.ne.s32.totalorder %s63, %s79
    %p81 = scmp.eq.s32.totalorder %s15, 0
    %p82 = por %p80, %p81
    %s83 = ssub.s32 %s16, %s28
    %p84 = scmp.eq.s32.totalorder %s83, 0
    %s86 = sadd.s32 %s85, 1
    %s87 = scalar_select %p84, %s85, %s86
    %p90 = pneg %p84
    %p91 = scmp.eq.s32.totalorder %s9, 1
    %p92 = por %p90, %p91
    %p93 = scmp.ne.s32.totalorder %s85, %s88
    %p94 = scmp.eq.s32.totalorder %s9, 0
    %p95 = por %p93, %p94
    %p96 = scmp.ne.s32.totalorder %s85, %s88
    %p97 = scmp.eq.s32.totalorder %s14, 1
    %p98 = por %p96, %p97
    %p99 = scmp.ne.s32.totalorder %s88, %s89
    %p100 = scmp.eq.s32.totalorder %s14, 0
    %p101 = por %p99, %p100
    %p102 = scmp.ne.s32.totalorder %s88, %s89
    %p103 = scmp.eq.s32.totalorder %s15, 1
    %p104 = por %p102, %p103
    %p106 = scmp.ne.s32.totalorder %s89, %s105
    %p107 = scmp.eq.s32.totalorder %s15, 0
    %p108 = por %p106, %p107
    %s109 = ssub.s32 %s16, %s28
    %s110 = ssub.s32 %s17, %s24
    %s111 = sor.u32 %s109, %s110
    %p112 = scmp.eq.s32.totalorder %s111, 0
    %s114 = sadd.s32 %s113, 1
    %s115 = scalar_select %p112, %s113, %s114
    %p118 = pneg %p112
    %p119 = scmp.eq.s32.totalorder %s9, 1
    %p120 = por %p118, %p119
    %p121 = scmp.ne.s32.totalorder %s113, %s116
    %p122 = scmp.eq.s32.totalorder %s9, 0
    %p123 = por %p121, %p122
    %p124 = scmp.ne.s32.totalorder %s113, %s116
    %p125 = scmp.eq.s32.totalorder %s14, 1
    %p126 = por %p124, %p125
    %p127 = scmp.ne.s32.totalorder %s116, %s117
    %p128 = scmp.eq.s32.totalorder %s14, 0
    %p129 = por %p127, %p128
    %p130 = scmp.ne.s32.totalorder %s116, %s117
    %p131 = scmp.eq.s32.totalorder %s15, 1
    %p132 = por %p130, %p131
    %p134 = scmp.ne.s32.totalorder %s117, %s133
    %p135 = scmp.eq.s32.totalorder %s15, 0
    %p136 = por %p134, %p135
    %p137 = scmp.le.s32.totalorder 1, %s9
    %p138 = scmp.lt.s32.totalorder %s9, 3
    %p139 = pnand %p137, %p138
    %p140 = pneg %p139
    // Predicated region
    $region9: #{generator_forward.47} parent=5 // pred_check
      _
    $region10: #{generator_forward.47} parent=5 // pred_check_branch
      %142 = sbr.rel (%p139) target = $region12
    $region11: #{generator_forward.47} parent=5 // pred_region
      %s143 = ssub.s32 %s9, 1
    $region12: #{generator_forward.47} parent=5 // pred_fallthru
      _
    %p144 = scmp.lt.s32.totalorder %s9, 2
    // Predicated region
    $region13: #{generator_forward.47} parent=5 // pred_check
      %p145 = pneg %p144
    $region14: #{generator_forward.47} parent=5 // pred_check_branch
      %147 = sbr.rel (%p145) target = $region16
    $region15: #{generator_forward.47} parent=5 // pred_region
      // Predicated region
      $region17: #{generator_forward.47} parent=15 // pred_check
        %p148 = pneg %p43
      $region18: #{generator_forward.47} parent=15 // pred_check_branch
        %150 = sbr.rel (%p148) target = $region20
      $region19: #{generator_forward.47} parent=15 // pred_region
        %s151 = smul.u32 32, %s17
        %p152 = scmp.lt.s32.totalorder %s16, 1
        %s153 = scalar_select %p152, %s16, 1
        %p154 = scmp.lt.s32.totalorder %s151, 31
        %s155 = scalar_select %p154, %s151, 31
        %s156 = smul.addr %s153, 32
        %s157 = sadd.s32 %s155, %s156
        %s158 = smul.addr %s157, 8
        %s159 = scalar_lea.vmem %s0, %s158
        %s160 = smul.u32 32, %s17
      $region20: #{generator_forward.47} parent=15 // pred_fallthru
        _
      // Predicated region
      $region21: #{generator_forward.47} parent=15 // pred_check
        %p161 = pneg %p69
      $region22: #{generator_forward.47} parent=15 // pred_check_branch
        %163 = sbr.rel (%p161) target = $region24
      $region23: #{generator_forward.47} parent=15 // pred_region
        %p164 = scmp.lt.s32.totalorder %s16, 1
        %s165 = scalar_select %p164, %s16, 1
        %s166 = scalar_lea.vmem %s1, %s165
      $region24: #{generator_forward.47} parent=15 // pred_fallthru
        _
      // Predicated region
      $region25: #{generator_forward.47} parent=15 // pred_check
        %p167 = pneg %p95
      $region26: #{generator_forward.47} parent=15 // pred_check_branch
        %169 = sbr.rel (%p167) target = $region28
      $region27: #{generator_forward.47} parent=15 // pred_region
        %p170 = scmp.lt.s32.totalorder %s16, 1
        %s171 = scalar_select %p170, %s16, 1
        %s172 = scalar_lea.vmem %s2, %s171
      $region28: #{generator_forward.47} parent=15 // pred_fallthru
        _
    $region16: #{generator_forward.47} parent=5 // pred_fallthru
      _
    %p173 = scmp.le.s32.totalorder 1, %s9
    %p174 = scmp.lt.s32.totalorder %s9, 3
    %p175 = pnand %p173, %p174
    %p176 = pneg %p175
    // Predicated region
    $region29: #{generator_forward.47} parent=5 // pred_check
      _
    $region30: #{generator_forward.47} parent=5 // pred_check_branch
      %178 = sbr.rel (%p175) target = $region32
    $region31: #{generator_forward.47} parent=5 // pred_region
      %s179 = ssub.s32 %s9, 1
      %s180 = smul.u32 32, %s19
      %p181 = scmp.lt.s32.totalorder %s18, 1
      %s182 = scalar_select %p181, %s18, 1
      %p183 = scmp.lt.s32.totalorder %s180, 31
      %s184 = scalar_select %p183, %s180, 31
      %s185 = smul.addr %s182, 32
      %s186 = sadd.s32 %s184, %s185
      %s187 = smul.addr %s186, 8
      %s188 = scalar_lea.vmem %s0, %s187
      %p189 = pneg %p49
      %p190 = pneg %p46
      %p191 = scmp.lt.s32.totalorder %s18, 1
      %s192 = scalar_select %p191, %s18, 1
      %s193 = scalar_lea.vmem %s1, %s192
      %p194 = pneg %p75
      %p195 = pneg %p72
      %p196 = scmp.lt.s32.totalorder %s18, 1
      %s197 = scalar_select %p196, %s18, 1
      %s198 = scalar_lea.vmem %s2, %s197
      %p199 = pneg %p101
      %p200 = pneg %p98
      %p201 = pneg %p129
      %p202 = pneg %p126
      %s203 = smul.u32 32, %s19
      %p204 = scmp.lt.s32.totalorder %s18, 1
      %s205 = scalar_select %p204, %s18, 1
      %p206 = scmp.lt.s32.totalorder %s203, 31
      %s207 = scalar_select %p206, %s203, 31
      %s208 = smul.addr %s205, 32
      %s209 = sadd.s32 %s207, %s208
      %s210 = smul.addr %s209, 8
      %s211 = scalar_lea.vmem %s3, %s210
      %s212 = smul.u32 32, %s19
      %p213 = scmp.lt.s32.totalorder %s18, 1
      %s214 = scalar_select %p213, %s18, 1
      %p215 = scmp.lt.s32.totalorder %s212, 31
      %s216 = scalar_select %p215, %s212, 31
      %s217 = smul.addr %s214, 32
      %s218 = sadd.s32 %s216, %s217
      %s219 = smul.addr %s218, 8
      %s220 = scalar_lea.vmem %s0, %s219
      %s221 = smul.u32 32, %s19
      %p222 = scmp.lt.s32.totalorder %s18, 1
      %s223 = scalar_select %p222, %s18, 1
      %s224 = scalar_lea.vmem %s1, %s223
      %p225 = scmp.lt.s32.totalorder %s18, 1
      %s226 = scalar_select %p225, %s18, 1
      %s227 = scalar_lea.vmem %s2, %s226
      %s228 = smul.u32 32, %s19
      %p229 = scmp.lt.s32.totalorder %s18, 1
      %s230 = scalar_select %p229, %s18, 1
      %p231 = scmp.lt.s32.totalorder %s228, 31
      %s232 = scalar_select %p231, %s228, 31
      %s233 = smul.addr %s230, 32
      %s234 = sadd.s32 %s232, %s233
      %s235 = smul.addr %s234, 8
      %s236 = scalar_lea.vmem %s3, %s235
      %s237 = smul.u32 32, %s19
      %v238 = vld [vmem:[%s220] sm:$0xff]
      %v239 = vld [vmem:[%s220 + $0x8] sm:$0xff]
      %v240 = vld [vmem:[%s220 + $0x10] sm:$0xff]
      %v241 = vld [vmem:[%s220 + $0x18] sm:$0xff]
      %v242 = vld [vmem:[%s220 + $0x20] sm:$0xff]
      %v243 = vld [vmem:[%s220 + $0x28] sm:$0xff]
      %v244 = vld [vmem:[%s220 + $0x30] sm:$0xff]
      %v245 = vld [vmem:[%s220 + $0x38] sm:$0xff]
      %v246 = vld [vmem:[%s220 + $0x40] sm:$0xff]
      %v247 = vld [vmem:[%s220 + $0x48] sm:$0xff]
      %v248 = vld [vmem:[%s220 + $0x50] sm:$0xff]
      %v249 = vld [vmem:[%s220 + $0x58] sm:$0xff]
      %v250 = vld [vmem:[%s220 + $0x60] sm:$0xff]
      %v251 = vld [vmem:[%s220 + $0x68] sm:$0xff]
      %v252 = vld [vmem:[%s220 + $0x70] sm:$0xff]
      %v253 = vld [vmem:[%s220 + $0x78] sm:$0xff]
      %v254 = vld [vmem:[%s220 + $0x80] sm:$0xff]
      %v255 = vld [vmem:[%s220 + $0x88] sm:$0xff]
      %v256 = vld [vmem:[%s220 + $0x90] sm:$0xff]
      %v257 = vld [vmem:[%s220 + $0x98] sm:$0xff]
      %v258 = vld [vmem:[%s220 + $0xa0] sm:$0xff]
      %v259 = vld [vmem:[%s220 + $0xa8] sm:$0xff]
      %v260 = vld [vmem:[%s220 + $0xb0] sm:$0xff]
      %v261 = vld [vmem:[%s220 + $0xb8] sm:$0xff]
      %v262 = vld [vmem:[%s220 + $0xc0] sm:$0xff]
      %v263 = vld [vmem:[%s220 + $0xc8] sm:$0xff]
      %v264 = vld [vmem:[%s220 + $0xd0] sm:$0xff]
      %v265 = vld [vmem:[%s220 + $0xd8] sm:$0xff]
      %v266 = vld [vmem:[%s220 + $0xe0] sm:$0xff]
      %v267 = vld [vmem:[%s220 + $0xe8] sm:$0xff]
      %v268 = vld [vmem:[%s220 + $0xf0] sm:$0xff]
      %v269 = vld [vmem:[%s220 + $0xf8] sm:$0xff]
      %v270 = vld [vmem:[%s224] sm:$0x1]
      %v272 = vperm.slane %v270, 0
      %v274 = vmul.f32 %v238, %v272
      %v275 = vmul.f32 %v239, %v272
      %v276 = vmul.f32 %v240, %v272
      %v277 = vmul.f32 %v241, %v272
      %v278 = vmul.f32 %v242, %v272
      %v279 = vmul.f32 %v243, %v272
      %v280 = vmul.f32 %v244, %v272
      %v281 = vmul.f32 %v245, %v272
      %v282 = vmul.f32 %v246, %v272
      %v283 = vmul.f32 %v247, %v272
      %v284 = vmul.f32 %v248, %v272
      %v285 = vmul.f32 %v249, %v272
      %v286 = vmul.f32 %v250, %v272
      %v287 = vmul.f32 %v251, %v272
      %v288 = vmul.f32 %v252, %v272
      %v289 = vmul.f32 %v253, %v272
      %v290 = vmul.f32 %v254, %v272
      %v291 = vmul.f32 %v255, %v272
      %v292 = vmul.f32 %v256, %v272
      %v293 = vmul.f32 %v257, %v272
      %v294 = vmul.f32 %v258, %v272
      %v295 = vmul.f32 %v259, %v272
      %v296 = vmul.f32 %v260, %v272
      %v297 = vmul.f32 %v261, %v272
      %v298 = vmul.f32 %v262, %v272
      %v299 = vmul.f32 %v263, %v272
      %v300 = vmul.f32 %v264, %v272
      %v301 = vmul.f32 %v265, %v272
      %v302 = vmul.f32 %v266, %v272
      %v303 = vmul.f32 %v267, %v272
      %v304 = vmul.f32 %v268, %v272
      %v305 = vmul.f32 %v269, %v272
      %v306 = vld [vmem:[%s227] sm:$0x1]
      %v308 = vperm.slane %v306, 0
      %v310 = vadd.f32 %v274, %v308
      %v311 = vadd.f32 %v275, %v308
      %v312 = vadd.f32 %v276, %v308
      %v313 = vadd.f32 %v277, %v308
      %v314 = vadd.f32 %v278, %v308
      %v315 = vadd.f32 %v279, %v308
      %v316 = vadd.f32 %v280, %v308
      %v317 = vadd.f32 %v281, %v308
      %v318 = vadd.f32 %v282, %v308
      %v319 = vadd.f32 %v283, %v308
      %v320 = vadd.f32 %v284, %v308
      %v321 = vadd.f32 %v285, %v308
      %v322 = vadd.f32 %v286, %v308
      %v323 = vadd.f32 %v287, %v308
      %v324 = vadd.f32 %v288, %v308
      %v325 = vadd.f32 %v289, %v308
      %v326 = vadd.f32 %v290, %v308
      %v327 = vadd.f32 %v291, %v308
      %v328 = vadd.f32 %v292, %v308
      %v329 = vadd.f32 %v293, %v308
      %v330 = vadd.f32 %v294, %v308
      %v331 = vadd.f32 %v295, %v308
      %v332 = vadd.f32 %v296, %v308
      %v333 = vadd.f32 %v297, %v308
      %v334 = vadd.f32 %v298, %v308
      %v335 = vadd.f32 %v299, %v308
      %v336 = vadd.f32 %v300, %v308
      %v337 = vadd.f32 %v301, %v308
      %v338 = vadd.f32 %v302, %v308
      %v339 = vadd.f32 %v303, %v308
      %v340 = vadd.f32 %v304, %v308
      %v341 = vadd.f32 %v305, %v308
      %v342 = vmax.f32 %v310, 0.0
      %v343 = vmax.f32 %v311, 0.0
      %v344 = vmax.f32 %v312, 0.0
      %v345 = vmax.f32 %v313, 0.0
      %v346 = vmax.f32 %v314, 0.0
      %v347 = vmax.f32 %v315, 0.0
      %v348 = vmax.f32 %v316, 0.0
      %v349 = vmax.f32 %v317, 0.0
      %v350 = vmax.f32 %v318, 0.0
      %v351 = vmax.f32 %v319, 0.0
      %v352 = vmax.f32 %v320, 0.0
      %v353 = vmax.f32 %v321, 0.0
      %v354 = vmax.f32 %v322, 0.0
      %v355 = vmax.f32 %v323, 0.0
      %v356 = vmax.f32 %v324, 0.0
      %v357 = vmax.f32 %v325, 0.0
      %v358 = vmax.f32 %v326, 0.0
      %v359 = vmax.f32 %v327, 0.0
      %v360 = vmax.f32 %v328, 0.0
      %v361 = vmax.f32 %v329, 0.0
      %v362 = vmax.f32 %v330, 0.0
      %v363 = vmax.f32 %v331, 0.0
      %v364 = vmax.f32 %v332, 0.0
      %v365 = vmax.f32 %v333, 0.0
      %v366 = vmax.f32 %v334, 0.0
      %v367 = vmax.f32 %v335, 0.0
      %v368 = vmax.f32 %v336, 0.0
      %v369 = vmax.f32 %v337, 0.0
      %v370 = vmax.f32 %v338, 0.0
      %v371 = vmax.f32 %v339, 0.0
      %v372 = vmax.f32 %v340, 0.0
      %v373 = vmax.f32 %v341, 0.0
      %374 = vst [vmem:[%s236] sm:$0xff] %v342
      %375 = vst [vmem:[%s236 + $0x8] sm:$0xff] %v343
      %376 = vst [vmem:[%s236 + $0x10] sm:$0xff] %v344
      %377 = vst [vmem:[%s236 + $0x18] sm:$0xff] %v345
      %378 = vst [vmem:[%s236 + $0x20] sm:$0xff] %v346
      %379 = vst [vmem:[%s236 + $0x28] sm:$0xff] %v347
      %380 = vst [vmem:[%s236 + $0x30] sm:$0xff] %v348
      %381 = vst [vmem:[%s236 + $0x38] sm:$0xff] %v349
      %382 = vst [vmem:[%s236 + $0x40] sm:$0xff] %v350
      %383 = vst [vmem:[%s236 + $0x48] sm:$0xff] %v351
      %384 = vst [vmem:[%s236 + $0x50] sm:$0xff] %v352
      %385 = vst [vmem:[%s236 + $0x58] sm:$0xff] %v353
      %386 = vst [vmem:[%s236 + $0x60] sm:$0xff] %v354
      %387 = vst [vmem:[%s236 + $0x68] sm:$0xff] %v355
      %388 = vst [vmem:[%s236 + $0x70] sm:$0xff] %v356
      %389 = vst [vmem:[%s236 + $0x78] sm:$0xff] %v357
      %390 = vst [vmem:[%s236 + $0x80] sm:$0xff] %v358
      %391 = vst [vmem:[%s236 + $0x88] sm:$0xff] %v359
      %392 = vst [vmem:[%s236 + $0x90] sm:$0xff] %v360
      %393 = vst [vmem:[%s236 + $0x98] sm:$0xff] %v361
      %394 = vst [vmem:[%s236 + $0xa0] sm:$0xff] %v362
      %395 = vst [vmem:[%s236 + $0xa8] sm:$0xff] %v363
      %396 = vst [vmem:[%s236 + $0xb0] sm:$0xff] %v364
      %397 = vst [vmem:[%s236 + $0xb8] sm:$0xff] %v365
      %398 = vst [vmem:[%s236 + $0xc0] sm:$0xff] %v366
      %399 = vst [vmem:[%s236 + $0xc8] sm:$0xff] %v367
      %400 = vst [vmem:[%s236 + $0xd0] sm:$0xff] %v368
      %401 = vst [vmem:[%s236 + $0xd8] sm:$0xff] %v369
      %402 = vst [vmem:[%s236 + $0xe0] sm:$0xff] %v370
      %403 = vst [vmem:[%s236 + $0xe8] sm:$0xff] %v371
      %404 = vst [vmem:[%s236 + $0xf0] sm:$0xff] %v372
      %405 = vst [vmem:[%s236 + $0xf8] sm:$0xff] %v373
      %s406 = smul.u32 32, %s19
      %p407 = scmp.lt.s32.totalorder %s18, 1
      %s408 = scalar_select %p407, %s18, 1
      %p409 = scmp.lt.s32.totalorder %s406, 31
      %s410 = scalar_select %p409, %s406, 31
      %s411 = smul.addr %s408, 32
      %s412 = sadd.s32 %s410, %s411
      %s413 = smul.addr %s412, 8
      %s414 = scalar_lea.vmem %s3, %s413
      // Predicated region
      $region33: #{generator_forward.47} parent=31 // pred_check
        %p415 = pneg %p126
      $region34: #{generator_forward.47} parent=31 // pred_check_branch
        %417 = sbr.rel (%p415) target = $region36
      $region35: #{generator_forward.47} parent=31 // pred_region
        %s418 = smul.u32 32, %s19
      $region36: #{generator_forward.47} parent=31 // pred_fallthru
        _
    $region32: #{generator_forward.47} parent=5 // pred_fallthru
      _
    %p419 = scmp.le.s32.totalorder 2, %s9
    // Predicated region
    $region37: #{generator_forward.47} parent=5 // pred_check
      %p420 = pneg %p419
    $region38: #{generator_forward.47} parent=5 // pred_check_branch
      %422 = sbr.rel (%p420) target = $region40
    $region39: #{generator_forward.47} parent=5 // pred_region
      %s423 = ssub.s32 %s9, 2
      // Predicated region
      $region41: #{generator_forward.47} parent=39 // pred_check
        %p424 = pneg %p132
      $region42: #{generator_forward.47} parent=39 // pred_check_branch
        %426 = sbr.rel (%p424) target = $region44
      $region43: #{generator_forward.47} parent=39 // pred_region
        %s427 = smul.u32 32, %s21
        %p428 = scmp.lt.s32.totalorder %s20, 1
        %s429 = scalar_select %p428, %s20, 1
        %p430 = scmp.lt.s32.totalorder %s427, 31
        %s431 = scalar_select %p430, %s427, 31
        %s432 = smul.addr %s429, 32
        %s433 = sadd.s32 %s431, %s432
        %s434 = smul.addr %s433, 8
        %s435 = scalar_lea.vmem %s3, %s434
      $region44: #{generator_forward.47} parent=39 // pred_fallthru
        _
    $region40: #{generator_forward.47} parent=5 // pred_fallthru
      _
  $region6: #{generator_forward.47} parent=0 // loop_footer
    %s13 = sadd.s32 1, %s9
  $region7: #{generator_forward.47} parent=0 // loop_footer_branch
    %8 = sbr.rel target = $region3
  $region8: #{generator_forward.47} parent=0 // loop_exit
    _

// kernel: generator_forward.46
$region0: #{generator_forward.46}
  #allocation0 [shape = 'u32[]', space=smem, size = 0x4, offset = 0x4, fixed_abs, tag = 'smem constant byte address 0x4 - core index']
  #allocation1 [shape = 'u32[72,128]{1,0:T(1,128)}', space=vmem, size = 0x9000, scoped, tag = 'internal scratch']
  %s0 = inlined_call_operand.vmem [shape: bf16[2,256,256], index: 0, kind: input, shape index: {}]
  %s1 = inlined_call_operand.vmem [shape: bf16[256,128], index: 1, kind: input, shape index: {}]
  %s2 = inlined_call_operand.vmem [shape: f32[2,256,128], index: 2, kind: output, shape index: {0}]
  %s3 = inlined_call_operand.vmem [shape: f32[2,1,8,128], index: 3, kind: output, shape index: {1}]
  %4 = xla_tuple %s2, %s3
  %s5 = sld [smem:[#allocation0]]
  $region49: #{generator_forward.46} parent=0
    _
  %s7 = ssub.s32 1, %s5
  %s8 = scalar_select 0, %s7, %s5
  loop: start=0, step=1, limit=4
  $region2: #{generator_forward.46} parent=0 // loop_pre_header
    _
  $region3: #{generator_forward.46} parent=0 // loop_header
    %s10 = sphi 0, %s14
    %p11 = scmp.ge.s32.totalorder %s10, 4
    %s17 = sphi 0, %s29
    %s18 = sphi 0, %s25
    %s19 = sphi 0, %s17
    %s20 = sphi 0, %s18
    %s21 = sphi 0, %s19
    %s22 = sphi 0, %s20
    %s34 = sphi 0, %s36
    %s37 = sphi 0, %s34
    %s38 = sphi 0, %s37
    %s54 = sphi 0, %s38
    %s58 = sphi 0, %s58
    %s60 = sphi 0, %s58
    %s61 = sphi 0, %s60
    %s75 = sphi 0, %s61
    %s83 = sphi 0, %s85
    %s86 = sphi 0, %s83
    %s87 = sphi 0, %s86
    %s103 = sphi 0, %s87
    %s111 = sphi 0, %s113
    %s114 = sphi 0, %s111
    %s115 = sphi 0, %s114
    %s131 = sphi 0, %s115
  $region4: #{generator_forward.46} parent=0 // loop_header_branch
    %13 = sbr.rel (%p11) target = $region8
  $region5: #{generator_forward.46} parent=0 // loop_body
    %s15 = ssub.s32 %s10, 1
    %s16 = ssub.s32 %s10, 2
    %s23 = sadd.s32 1, %s18
    %p24 = scmp.ge.s32.totalorder %s23, 1
    %s25 = scalar_select %p24, 0, %s23
    %s26 = sadd.s32 1, %s17
    %s27 = scalar_select %p24, %s26, %s17
    %p28 = scmp.ge.s32.totalorder %s27, 2
    %s29 = scalar_select %p28, 0, %s27
    %s30 = ssub.s32 %s17, %s29
    %s31 = ssub.s32 %s18, %s25
    %s32 = sor.u32 %s30, %s31
    %p33 = scmp.eq.s32.totalorder %s32, 0
    %s35 = sadd.s32 %s34, 1
    %s36 = scalar_select %p33, %s34, %s35
    %p39 = pneg %p33
    %p40 = scmp.eq.s32.totalorder %s10, 1
    %p41 = por %p39, %p40
    %p42 = scmp.ne.s32.totalorder %s34, %s37
    %p43 = scmp.eq.s32.totalorder %s10, 0
    %p44 = por %p42, %p43
    %p45 = scmp.ne.s32.totalorder %s34, %s37
    %p46 = scmp.eq.s32.totalorder %s15, 1
    %p47 = por %p45, %p46
    %p48 = scmp.ne.s32.totalorder %s37, %s38
    %p49 = scmp.eq.s32.totalorder %s15, 0
    %p50 = por %p48, %p49
    %p51 = scmp.ne.s32.totalorder %s37, %s38
    %p52 = scmp.eq.s32.totalorder %s16, 1
    %p53 = por %p51, %p52
    %p55 = scmp.ne.s32.totalorder %s38, %s54
    %p56 = scmp.eq.s32.totalorder %s16, 0
    %p57 = por %p55, %p56
    %s59 = sadd.s32 %s58, 1
    %p62 = scmp.eq.s32.totalorder %s10, 1
    %p63 = scmp.ne.s32.totalorder %s58, %s60
    %p64 = scmp.eq.s32.totalorder %s10, 0
    %p65 = por %p63, %p64
    %p66 = scmp.ne.s32.totalorder %s58, %s60
    %p67 = scmp.eq.s32.totalorder %s15, 1
    %p68 = por %p66, %p67
    %p69 = scmp.ne.s32.totalorder %s60, %s61
    %p70 = scmp.eq.s32.totalorder %s15, 0
    %p71 = por %p69, %p70
    %p72 = scmp.ne.s32.totalorder %s60, %s61
    %p73 = scmp.eq.s32.totalorder %s16, 1
    %p74 = por %p72, %p73
    %p76 = scmp.ne.s32.totalorder %s61, %s75
    %p77 = scmp.eq.s32.totalorder %s16, 0
    %p78 = por %p76, %p77
    %s79 = ssub.s32 %s17, %s29
    %s80 = ssub.s32 %s18, %s25
    %s81 = sor.u32 %s79, %s80
    %p82 = scmp.eq.s32.totalorder %s81, 0
    %s84 = sadd.s32 %s83, 1
    %s85 = scalar_select %p82, %s83, %s84
    %p88 = pneg %p82
    %p89 = scmp.eq.s32.totalorder %s10, 1
    %p90 = por %p88, %p89
    %p91 = scmp.ne.s32.totalorder %s83, %s86
    %p92 = scmp.eq.s32.totalorder %s10, 0
    %p93 = por %p91, %p92
    %p94 = scmp.ne.s32.totalorder %s83, %s86
    %p95 = scmp.eq.s32.totalorder %s15, 1
    %p96 = por %p94, %p95
    %p97 = scmp.ne.s32.totalorder %s86, %s87
    %p98 = scmp.eq.s32.totalorder %s15, 0
    %p99 = por %p97, %p98
    %p100 = scmp.ne.s32.totalorder %s86, %s87
    %p101 = scmp.eq.s32.totalorder %s16, 1
    %p102 = por %p100, %p101
    %p104 = scmp.ne.s32.totalorder %s87, %s103
    %p105 = scmp.eq.s32.totalorder %s16, 0
    %p106 = por %p104, %p105
    %s107 = ssub.s32 %s17, %s29
    %s108 = ssub.s32 %s18, %s25
    %s109 = sor.u32 %s107, %s108
    %p110 = scmp.eq.s32.totalorder %s109, 0
    %s112 = sadd.s32 %s111, 1
    %s113 = scalar_select %p110, %s111, %s112
    %p116 = pneg %p110
    %p117 = scmp.eq.s32.totalorder %s10, 1
    %p118 = por %p116, %p117
    %p119 = scmp.ne.s32.totalorder %s111, %s114
    %p120 = scmp.eq.s32.totalorder %s10, 0
    %p121 = por %p119, %p120
    %p122 = scmp.ne.s32.totalorder %s111, %s114
    %p123 = scmp.eq.s32.totalorder %s15, 1
    %p124 = por %p122, %p123
    %p125 = scmp.ne.s32.totalorder %s114, %s115
    %p126 = scmp.eq.s32.totalorder %s15, 0
    %p127 = por %p125, %p126
    %p128 = scmp.ne.s32.totalorder %s114, %s115
    %p129 = scmp.eq.s32.totalorder %s16, 1
    %p130 = por %p128, %p129
    %p132 = scmp.ne.s32.totalorder %s115, %s131
    %p133 = scmp.eq.s32.totalorder %s16, 0
    %p134 = por %p132, %p133
    %p135 = scmp.le.s32.totalorder 1, %s10
    %p136 = scmp.lt.s32.totalorder %s10, 3
    %p137 = pnand %p135, %p136
    %p138 = pneg %p137
    // Predicated region
    $region9: #{generator_forward.46} parent=5 // pred_check
      _
    $region10: #{generator_forward.46} parent=5 // pred_check_branch
      %140 = sbr.rel (%p137) target = $region12
    $region11: #{generator_forward.46} parent=5 // pred_region
      %s141 = ssub.s32 %s10, 1
      // Predicated region
      $region13: #{generator_forward.46} parent=11 // pred_check
        %p142 = pneg %p71
      $region14: #{generator_forward.46} parent=11 // pred_check_branch
        %144 = sbr.rel (%p142) target = $region16
      $region15: #{generator_forward.46} parent=11 // pred_region
        _
      $region16: #{generator_forward.46} parent=11 // pred_fallthru
        _
    $region12: #{generator_forward.46} parent=5 // pred_fallthru
      _
    %p145 = scmp.lt.s32.totalorder %s10, 2
    // Predicated region
    $region17: #{generator_forward.46} parent=5 // pred_check
      %p146 = pneg %p145
    $region18: #{generator_forward.46} parent=5 // pred_check_branch
      %148 = sbr.rel (%p146) target = $region20
    $region19: #{generator_forward.46} parent=5 // pred_region
      // Predicated region
      $region21: #{generator_forward.46} parent=19 // pred_check
        %p149 = pneg %p44
      $region22: #{generator_forward.46} parent=19 // pred_check_branch
        %151 = sbr.rel (%p149) target = $region24
      $region23: #{generator_forward.46} parent=19 // pred_region
        %s152 = smul.u32 32, %s18
        %p153 = scmp.lt.s32.totalorder %s17, 1
        %s154 = scalar_select %p153, %s17, 1
        %p155 = scmp.lt.s32.totalorder %s152, 31
        %s156 = scalar_select %p155, %s152, 31
        %s157 = smul.addr %s156, 2
        %s158 = smul.addr %s154, 64
        %s159 = sadd.s32 %s157, %s158
        %s160 = smul.addr %s159, 4
        %s161 = scalar_lea.vmem %s0, %s160
        %s162 = smul.u32 32, %s18
      $region24: #{generator_forward.46} parent=19 // pred_fallthru
        _
    $region20: #{generator_forward.46} parent=5 // pred_fallthru
      _
    %p163 = scmp.le.s32.totalorder 1, %s10
    %p164 = scmp.lt.s32.totalorder %s10, 3
    %p165 = pnand %p163, %p164
    %p166 = pneg %p165
    // Predicated region
    $region25: #{generator_forward.46} parent=5 // pred_check
      _
    $region26: #{generator_forward.46} parent=5 // pred_check_branch
      %168 = sbr.rel (%p165) target = $region28
    $region27: #{generator_forward.46} parent=5 // pred_region
      %s169 = ssub.s32 %s10, 1
      %s170 = smul.u32 32, %s20
      %p171 = scmp.lt.s32.totalorder %s19, 1
      %s172 = scalar_select %p171, %s19, 1
      %p173 = scmp.lt.s32.totalorder %s170, 31
      %s174 = scalar_select %p173, %s170, 31
      %s175 = smul.addr %s174, 2
      %s176 = smul.addr %s172, 64
      %s177 = sadd.s32 %s175, %s176
      %s178 = smul.addr %s177, 4
      %s179 = scalar_lea.vmem %s0, %s178
      %p180 = pneg %p50
      %p181 = pneg %p47
      %p182 = pneg %p71
      %p183 = pneg %p68
      %p184 = pneg %p99
      %p185 = pneg %p96
      %s186 = smul.u32 32, %s20
      %p187 = scmp.lt.s32.totalorder %s19, 1
      %s188 = scalar_select %p187, %s19, 1
      %p189 = scmp.lt.s32.totalorder %s186, 31
      %s190 = scalar_select %p189, %s186, 31
      %s191 = smul.addr %s188, 32
      %s192 = sadd.s32 %s190, %s191
      %s193 = smul.addr %s192, 8
      %s194 = scalar_lea.vmem %s2, %s193
      %p195 = pneg %p127
      %p196 = pneg %p124
      %p197 = scmp.lt.s32.totalorder %s19, 1
      %s198 = scalar_select %p197, %s19, 1
      %p199 = scmp.lt.s32.totalorder %s20, 0
      %s200 = scalar_select %p199, %s20, 0
      %s201 = sadd.s32 %s200, %s198
      %s202 = smul.addr %s201, 8
      %s203 = scalar_lea.vmem %s3, %s202
      %s204 = smul.u32 32, %s20
      %p205 = scmp.lt.s32.totalorder %s19, 1
      %s206 = scalar_select %p205, %s19, 1
      %p207 = scmp.lt.s32.totalorder %s204, 31
      %s208 = scalar_select %p207, %s204, 31
      %s209 = smul.addr %s208, 2
      %s210 = smul.addr %s206, 64
      %s211 = sadd.s32 %s209, %s210
      %s212 = smul.addr %s211, 4
      %s213 = scalar_lea.vmem %s0, %s212
      %s214 = smul.u32 32, %s20
      %s215 = smul.u32 32, %s20
      %p216 = scmp.lt.s32.totalorder %s19, 1
      %s217 = scalar_select %p216, %s19, 1
      %p218 = scmp.lt.s32.totalorder %s215, 31
      %s219 = scalar_select %p218, %s215, 31
      %s220 = smul.addr %s217, 32
      %s221 = sadd.s32 %s219, %s220
      %s222 = smul.addr %s221, 8
      %s223 = scalar_lea.vmem %s2, %s222
      %s224 = smul.u32 32, %s20
      %p225 = scmp.lt.s32.totalorder %s19, 1
      %s226 = scalar_select %p225, %s19, 1
      %p227 = scmp.lt.s32.totalorder %s20, 0
      %s228 = scalar_select %p227, %s20, 0
      %s229 = sadd.s32 %s228, %s226
      %s230 = smul.addr %s229, 8
      %s231 = scalar_lea.vmem %s3, %s230
      %v232 = vld [vmem:[%s213] sm:$0xff]
      %v233 = vld [vmem:[%s213 + $0x8] sm:$0xff]
      %v234 = vld [vmem:[%s213 + $0x10] sm:$0xff]
      %v235 = vld [vmem:[%s213 + $0x18] sm:$0xff]
      %v236 = vld [vmem:[%s213 + $0x20] sm:$0xff]
      %v237 = vld [vmem:[%s213 + $0x28] sm:$0xff]
      %v238 = vld [vmem:[%s213 + $0x30] sm:$0xff]
      %v239 = vld [vmem:[%s213 + $0x38] sm:$0xff]
      %v240 = vld [vmem:[%s213 + $0x40] sm:$0xff]
      %v241 = vld [vmem:[%s213 + $0x48] sm:$0xff]
      %v242 = vld [vmem:[%s213 + $0x50] sm:$0xff]
      %v243 = vld [vmem:[%s213 + $0x58] sm:$0xff]
      %v244 = vld [vmem:[%s213 + $0x60] sm:$0xff]
      %v245 = vld [vmem:[%s213 + $0x68] sm:$0xff]
      %v246 = vld [vmem:[%s213 + $0x70] sm:$0xff]
      %v247 = vld [vmem:[%s213 + $0x78] sm:$0xff]
      %v248 = vld [vmem:[%s213 + $0x80] sm:$0xff]
      %v249 = vld [vmem:[%s213 + $0x88] sm:$0xff]
      %v250 = vld [vmem:[%s213 + $0x90] sm:$0xff]
      %v251 = vld [vmem:[%s213 + $0x98] sm:$0xff]
      %v252 = vld [vmem:[%s213 + $0xa0] sm:$0xff]
      %v253 = vld [vmem:[%s213 + $0xa8] sm:$0xff]
      %v254 = vld [vmem:[%s213 + $0xb0] sm:$0xff]
      %v255 = vld [vmem:[%s213 + $0xb8] sm:$0xff]
      %v256 = vld [vmem:[%s213 + $0xc0] sm:$0xff]
      %v257 = vld [vmem:[%s213 + $0xc8] sm:$0xff]
      %v258 = vld [vmem:[%s213 + $0xd0] sm:$0xff]
      %v259 = vld [vmem:[%s213 + $0xd8] sm:$0xff]
      %v260 = vld [vmem:[%s213 + $0xe0] sm:$0xff]
      %v261 = vld [vmem:[%s213 + $0xe8] sm:$0xff]
      %v262 = vld [vmem:[%s213 + $0xf0] sm:$0xff]
      %v263 = vld [vmem:[%s213 + $0xf8] sm:$0xff]
      %v264 = vld [vmem:[%s1] sm:$0xf]
      %v265 = vld [vmem:[%s1 + $0x4] sm:$0xf]
      %v266 = vld [vmem:[%s1 + $0x8] sm:$0xf]
      %v267 = vld [vmem:[%s1 + $0xc] sm:$0xf]
      %v268 = vld [vmem:[%s1 + $0x10] sm:$0xf]
      %v269 = vld [vmem:[%s1 + $0x14] sm:$0xf]
      %v270 = vld [vmem:[%s1 + $0x18] sm:$0xf]
      %v271 = vld [vmem:[%s1 + $0x1c] sm:$0xf]
      %v272 = vld [vmem:[%s1 + $0x20] sm:$0xf]
      %v273 = vld [vmem:[%s1 + $0x24] sm:$0xf]
      %v274 = vld [vmem:[%s1 + $0x28] sm:$0xf]
      %v275 = vld [vmem:[%s1 + $0x2c] sm:$0xf]
      %v276 = vld [vmem:[%s1 + $0x30] sm:$0xf]
      %v277 = vld [vmem:[%s1 + $0x34] sm:$0xf]
      %v278 = vld [vmem:[%s1 + $0x38] sm:$0xf]
      %v279 = vld [vmem:[%s1 + $0x3c] sm:$0xf]
      %v280 = vld [vmem:[%s1 + $0x40] sm:$0xf]
      %v281 = vld [vmem:[%s1 + $0x44] sm:$0xf]
      %v282 = vld [vmem:[%s1 + $0x48] sm:$0xf]
      %v283 = vld [vmem:[%s1 + $0x4c] sm:$0xf]
      %v284 = vld [vmem:[%s1 + $0x50] sm:$0xf]
      %v285 = vld [vmem:[%s1 + $0x54] sm:$0xf]
      %v286 = vld [vmem:[%s1 + $0x58] sm:$0xf]
      %v287 = vld [vmem:[%s1 + $0x5c] sm:$0xf]
      %v288 = vld [vmem:[%s1 + $0x60] sm:$0xf]
      %v289 = vld [vmem:[%s1 + $0x64] sm:$0xf]
      %v290 = vld [vmem:[%s1 + $0x68] sm:$0xf]
      %v291 = vld [vmem:[%s1 + $0x6c] sm:$0xf]
      %v292 = vld [vmem:[%s1 + $0x70] sm:$0xf]
      %v293 = vld [vmem:[%s1 + $0x74] sm:$0xf]
      %v294 = vld [vmem:[%s1 + $0x78] sm:$0xf]
      %v295 = vld [vmem:[%s1 + $0x7c] sm:$0xf]
      %v328 = vunpack.c.l.b16 %v232
      %v329 = vunpack.c.h.b16 %v232
      %v330 = vunpack.c.l.b16 %v233
      %v331 = vunpack.c.h.b16 %v233
      %v332 = vunpack.c.l.b16 %v234
      %v333 = vunpack.c.h.b16 %v234
      %v334 = vunpack.c.l.b16 %v235
      %v335 = vunpack.c.h.b16 %v235
      %v336 = vunpack.c.l.b16 %v236
      %v337 = vunpack.c.h.b16 %v236
      %v338 = vunpack.c.l.b16 %v237
      %v339 = vunpack.c.h.b16 %v237
      %v340 = vunpack.c.l.b16 %v238
      %v341 = vunpack.c.h.b16 %v238
      %v342 = vunpack.c.l.b16 %v239
      %v343 = vunpack.c.h.b16 %v239
      %v344 = vunpack.c.l.b16 %v240
      %v345 = vunpack.c.h.b16 %v240
      %v346 = vunpack.c.l.b16 %v241
      %v347 = vunpack.c.h.b16 %v241
      %v348 = vunpack.c.l.b16 %v242
      %v349 = vunpack.c.h.b16 %v242
      %v350 = vunpack.c.l.b16 %v243
      %v351 = vunpack.c.h.b16 %v243
      %v352 = vunpack.c.l.b16 %v244
      %v353 = vunpack.c.h.b16 %v244
      %v354 = vunpack.c.l.b16 %v245
      %v355 = vunpack.c.h.b16 %v245
      %v356 = vunpack.c.l.b16 %v246
      %v357 = vunpack.c.h.b16 %v246
      %v358 = vunpack.c.l.b16 %v247
      %v359 = vunpack.c.h.b16 %v247
      %v360 = vunpack.c.l.b16 %v248
      %v361 = vunpack.c.h.b16 %v248
      %v362 = vunpack.c.l.b16 %v249
      %v363 = vunpack.c.h.b16 %v249
      %v364 = vunpack.c.l.b16 %v250
      %v365 = vunpack.c.h.b16 %v250
      %v366 = vunpack.c.l.b16 %v251
      %v367 = vunpack.c.h.b16 %v251
      %v368 = vunpack.c.l.b16 %v252
      %v369 = vunpack.c.h.b16 %v252
      %v370 = vunpack.c.l.b16 %v253
      %v371 = vunpack.c.h.b16 %v253
      %v372 = vunpack.c.l.b16 %v254
      %v373 = vunpack.c.h.b16 %v254
      %v374 = vunpack.c.l.b16 %v255
      %v375 = vunpack.c.h.b16 %v255
      %v376 = vunpack.c.l.b16 %v256
      %v377 = vunpack.c.h.b16 %v256
      %v378 = vunpack.c.l.b16 %v257
      %v379 = vunpack.c.h.b16 %v257
      %v380 = vunpack.c.l.b16 %v258
      %v381 = vunpack.c.h.b16 %v258
      %v382 = vunpack.c.l.b16 %v259
      %v383 = vunpack.c.h.b16 %v259
      %v384 = vunpack.c.l.b16 %v260
      %v385 = vunpack.c.h.b16 %v260
      %v386 = vunpack.c.l.b16 %v261
      %v387 = vunpack.c.h.b16 %v261
      %v388 = vunpack.c.l.b16 %v262
      %v389 = vunpack.c.h.b16 %v262
      %v390 = vunpack.c.l.b16 %v263
      %v391 = vunpack.c.h.b16 %v263
      %v392 = vpack.c.b16 %v330, %v328
      %v393 = vpack.c.b16 %v331, %v329
      %v394 = vpack.c.b16 %v334, %v332
      %v395 = vpack.c.b16 %v335, %v333
      %v396 = vpack.c.b16 %v338, %v336
      %v397 = vpack.c.b16 %v339, %v337
      %v398 = vpack.c.b16 %v342, %v340
      %v399 = vpack.c.b16 %v343, %v341
      %v400 = vpack.c.b16 %v346, %v344
      %v401 = vpack.c.b16 %v347, %v345
      %v402 = vpack.c.b16 %v350, %v348
      %v403 = vpack.c.b16 %v351, %v349
      %v404 = vpack.c.b16 %v354, %v352
      %v405 = vpack.c.b16 %v355, %v353
      %v406 = vpack.c.b16 %v358, %v356
      %v407 = vpack.c.b16 %v359, %v357
      %v408 = vpack.c.b16 %v362, %v360
      %v409 = vpack.c.b16 %v363, %v361
      %v410 = vpack.c.b16 %v366, %v364
      %v411 = vpack.c.b16 %v367, %v365
      %v412 = vpack.c.b16 %v370, %v368
      %v413 = vpack.c.b16 %v371, %v369
      %v414 = vpack.c.b16 %v374, %v372
      %v415 = vpack.c.b16 %v375, %v373
      %v416 = vpack.c.b16 %v378, %v376
      %v417 = vpack.c.b16 %v379, %v377
      %v418 = vpack.c.b16 %v382, %v380
      %v419 = vpack.c.b16 %v383, %v381
      %v420 = vpack.c.b16 %v386, %v384
      %v421 = vpack.c.b16 %v387, %v385
      %v422 = vpack.c.b16 %v390, %v388
      %v423 = vpack.c.b16 %v391, %v389
      %v488 = vunpack.c.l.b16 %v264
      %v489 = vunpack.c.l.b16 %v265
      %v490 = vunpack.c.l.b16 %v266
      %v491 = vunpack.c.l.b16 %v267
      %v492 = vunpack.c.l.b16 %v268
      %v493 = vunpack.c.l.b16 %v269
      %v494 = vunpack.c.l.b16 %v270
      %v495 = vunpack.c.l.b16 %v271
      %v496 = vunpack.c.l.b16 %v272
      %v497 = vunpack.c.l.b16 %v273
      %v498 = vunpack.c.l.b16 %v274
      %v499 = vunpack.c.l.b16 %v275
      %v500 = vunpack.c.l.b16 %v276
      %v501 = vunpack.c.l.b16 %v277
      %v502 = vunpack.c.l.b16 %v278
      %v503 = vunpack.c.l.b16 %v279
      %v504 = vunpack.c.l.b16 %v280
      %v505 = vunpack.c.l.b16 %v281
      %v506 = vunpack.c.l.b16 %v282
      %v507 = vunpack.c.l.b16 %v283
      %v508 = vunpack.c.l.b16 %v284
      %v509 = vunpack.c.l.b16 %v285
      %v510 = vunpack.c.l.b16 %v286
      %v511 = vunpack.c.l.b16 %v287
      %v512 = vunpack.c.l.b16 %v288
      %v513 = vunpack.c.l.b16 %v289
      %v514 = vunpack.c.l.b16 %v290
      %v515 = vunpack.c.l.b16 %v291
      %v516 = vunpack.c.l.b16 %v292
      %v517 = vunpack.c.l.b16 %v293
      %v518 = vunpack.c.l.b16 %v294
      %v519 = vunpack.c.l.b16 %v295
      %v520 = vpack.c.b16 %v489, %v488
      %v521 = vpack.c.b16 %v491, %v490
      %v522 = vpack.c.b16 %v493, %v492
      %v523 = vpack.c.b16 %v495, %v494
      %v524 = vpack.c.b16 %v497, %v496
      %v525 = vpack.c.b16 %v499, %v498
      %v526 = vpack.c.b16 %v501, %v500
      %v527 = vpack.c.b16 %v503, %v502
      %v528 = vpack.c.b16 %v505, %v504
      %v529 = vpack.c.b16 %v507, %v506
      %v530 = vpack.c.b16 %v509, %v508
      %v531 = vpack.c.b16 %v511, %v510
      %v532 = vpack.c.b16 %v513, %v512
      %v533 = vpack.c.b16 %v515, %v514
      %v534 = vpack.c.b16 %v517, %v516
      %v535 = vpack.c.b16 %v519, %v518
      %552 = vmatpush.bf16.msra.mxu0 %v527
      %553 = vmatpush.bf16.msra.mxu0 %v526
      %554 = vmatpush.bf16.msra.mxu0 %v525
      %555 = vmatpush.bf16.msra.mxu0 %v524
      %556 = vmatpush.bf16.msra.mxu0 %v523
      %557 = vmatpush.bf16.msra.mxu0 %v522
      %558 = vmatpush.bf16.msra.mxu0 %v521
      %559 = vmatpush.bf16.msra.mxu0 %v520
      %560 = vmatmul.bf16.gmra.mxu0 %v392
      %v561 = vpop.f32.mrf.mxu0
      %v562 = vadd.f32 0.0, %v561
      %v563 = vpop.f32.mrf.mxu0
      %v564 = vadd.f32 0.0, %v563
      %565 = vmatmul.bf16.gmra.mxu0 %v394
      %v566 = vpop.f32.mrf.mxu0
      %v567 = vadd.f32 0.0, %v566
      %v568 = vpop.f32.mrf.mxu0
      %v569 = vadd.f32 0.0, %v568
      %570 = vmatmul.bf16.gmra.mxu0 %v396
      %v571 = vpop.f32.mrf.mxu0
      %v572 = vadd.f32 0.0, %v571
      %v573 = vpop.f32.mrf.mxu0
      %v574 = vadd.f32 0.0, %v573
      %575 = vmatmul.bf16.gmra.mxu0 %v398
      %v576 = vpop.f32.mrf.mxu0
      %v577 = vadd.f32 0.0, %v576
      %v578 = vpop.f32.mrf.mxu0
      %v579 = vadd.f32 0.0, %v578
      %580 = vmatmul.bf16.gmra.mxu0 %v400
      %v581 = vpop.f32.mrf.mxu0
      %v582 = vadd.f32 0.0, %v581
      %v583 = vpop.f32.mrf.mxu0
      %v584 = vadd.f32 0.0, %v583
      %585 = vmatmul.bf16.gmra.mxu0 %v402
      %v586 = vpop.f32.mrf.mxu0
      %v587 = vadd.f32 0.0, %v586
      %v588 = vpop.f32.mrf.mxu0
      %v589 = vadd.f32 0.0, %v588
      %590 = vmatmul.bf16.gmra.mxu0 %v404
      %v591 = vpop.f32.mrf.mxu0
      %v592 = vadd.f32 0.0, %v591
      %v593 = vpop.f32.mrf.mxu0
      %v594 = vadd.f32 0.0, %v593
      %595 = vmatmul.bf16.gmra.mxu0 %v406
      %v596 = vpop.f32.mrf.mxu0
      %v597 = vadd.f32 0.0, %v596
      %v598 = vpop.f32.mrf.mxu0
      %v599 = vadd.f32 0.0, %v598
      %600 = vmatmul.bf16.gmra.mxu0 %v408
      %v601 = vpop.f32.mrf.mxu0
      %v602 = vadd.f32 0.0, %v601
      %v603 = vpop.f32.mrf.mxu0
      %v604 = vadd.f32 0.0, %v603
      %605 = vmatmul.bf16.gmra.mxu0 %v410
      %v606 = vpop.f32.mrf.mxu0
      %v607 = vadd.f32 0.0, %v606
      %v608 = vpop.f32.mrf.mxu0
      %v609 = vadd.f32 0.0, %v608
      %610 = vmatmul.bf16.gmra.mxu0 %v412
      %v611 = vpop.f32.mrf.mxu0
      %v612 = vadd.f32 0.0, %v611
      %v613 = vpop.f32.mrf.mxu0
      %v614 = vadd.f32 0.0, %v613
      %615 = vmatmul.bf16.gmra.mxu0 %v414
      %v616 = vpop.f32.mrf.mxu0
      %v617 = vadd.f32 0.0, %v616
      %v618 = vpop.f32.mrf.mxu0
      %v619 = vadd.f32 0.0, %v618
      %620 = vmatmul.bf16.gmra.mxu0 %v416
      %v621 = vpop.f32.mrf.mxu0
      %v622 = vadd.f32 0.0, %v621
      %v623 = vpop.f32.mrf.mxu0
      %v624 = vadd.f32 0.0, %v623
      %625 = vmatmul.bf16.gmra.mxu0 %v418
      %v626 = vpop.f32.mrf.mxu0
      %v627 = vadd.f32 0.0, %v626
      %v628 = vpop.f32.mrf.mxu0
      %v629 = vadd.f32 0.0, %v628
      %630 = vmatmul.bf16.gmra.mxu0 %v420
      %v631 = vpop.f32.mrf.mxu0
      %v632 = vadd.f32 0.0, %v631
      %v633 = vpop.f32.mrf.mxu0
      %v634 = vadd.f32 0.0, %v633
      %635 = vmatmul.bf16.gmra.mxu0 %v422
      %v636 = vpop.f32.mrf.mxu0
      %v637 = vadd.f32 0.0, %v636
      %v638 = vpop.f32.mrf.mxu0
      %v639 = vadd.f32 0.0, %v638
      %640 = vdwg.mxu0
      %641 = vmatpush.bf16.msra.mxu0 %v535
      %642 = vmatpush.bf16.msra.mxu0 %v534
      %643 = vmatpush.bf16.msra.mxu0 %v533
      %644 = vmatpush.bf16.msra.mxu0 %v532
      %645 = vmatpush.bf16.msra.mxu0 %v531
      %646 = vmatpush.bf16.msra.mxu0 %v530
      %647 = vmatpush.bf16.msra.mxu0 %v529
      %648 = vmatpush.bf16.msra.mxu0 %v528
      %649 = vmatmul.bf16.gmra.mxu0 %v393
      %v650 = vpop.f32.mrf.mxu0
      %v651 = vadd.f32 %v562, %v650
      %v652 = vpop.f32.mrf.mxu0
      %v653 = vadd.f32 %v564, %v652
      %654 = vmatmul.bf16.gmra.mxu0 %v395
      %v655 = vpop.f32.mrf.mxu0
      %v656 = vadd.f32 %v567, %v655
      %v657 = vpop.f32.mrf.mxu0
      %v658 = vadd.f32 %v569, %v657
      %659 = vmatmul.bf16.gmra.mxu0 %v397
      %v660 = vpop.f32.mrf.mxu0
      %v661 = vadd.f32 %v572, %v660
      %v662 = vpop.f32.mrf.mxu0
      %v663 = vadd.f32 %v574, %v662
      %664 = vmatmul.bf16.gmra.mxu0 %v399
      %v665 = vpop.f32.mrf.mxu0
      %v666 = vadd.f32 %v577, %v665
      %v667 = vpop.f32.mrf.mxu0
      %v668 = vadd.f32 %v579, %v667
      %669 = vmatmul.bf16.gmra.mxu0 %v401
      %v670 = vpop.f32.mrf.mxu0
      %v671 = vadd.f32 %v582, %v670
      %v672 = vpop.f32.mrf.mxu0
      %v673 = vadd.f32 %v584, %v672
      %674 = vmatmul.bf16.gmra.mxu0 %v403
      %v675 = vpop.f32.mrf.mxu0
      %v676 = vadd.f32 %v587, %v675
      %v677 = vpop.f32.mrf.mxu0
      %v678 = vadd.f32 %v589, %v677
      %679 = vmatmul.bf16.gmra.mxu0 %v405
      %v680 = vpop.f32.mrf.mxu0
      %v681 = vadd.f32 %v592, %v680
      %v682 = vpop.f32.mrf.mxu0
      %v683 = vadd.f32 %v594, %v682
      %684 = vmatmul.bf16.gmra.mxu0 %v407
      %v685 = vpop.f32.mrf.mxu0
      %v686 = vadd.f32 %v597, %v685
      %v687 = vpop.f32.mrf.mxu0
      %v688 = vadd.f32 %v599, %v687
      %689 = vmatmul.bf16.gmra.mxu0 %v409
      %v690 = vpop.f32.mrf.mxu0
      %v691 = vadd.f32 %v602, %v690
      %v692 = vpop.f32.mrf.mxu0
      %v693 = vadd.f32 %v604, %v692
      %694 = vmatmul.bf16.gmra.mxu0 %v411
      %v695 = vpop.f32.mrf.mxu0
      %v696 = vadd.f32 %v607, %v695
      %v697 = vpop.f32.mrf.mxu0
      %v698 = vadd.f32 %v609, %v697
      %699 = vmatmul.bf16.gmra.mxu0 %v413
      %v700 = vpop.f32.mrf.mxu0
      %v701 = vadd.f32 %v612, %v700
      %v702 = vpop.f32.mrf.mxu0
      %v703 = vadd.f32 %v614, %v702
      %704 = vmatmul.bf16.gmra.mxu0 %v415
      %v705 = vpop.f32.mrf.mxu0
      %v706 = vadd.f32 %v617, %v705
      %v707 = vpop.f32.mrf.mxu0
      %v708 = vadd.f32 %v619, %v707
      %709 = vmatmul.bf16.gmra.mxu0 %v417
      %v710 = vpop.f32.mrf.mxu0
      %v711 = vadd.f32 %v622, %v710
      %v712 = vpop.f32.mrf.mxu0
      %v713 = vadd.f32 %v624, %v712
      %714 = vmatmul.bf16.gmra.mxu0 %v419
      %v715 = vpop.f32.mrf.mxu0
      %v716 = vadd.f32 %v627, %v715
      %v717 = vpop.f32.mrf.mxu0
      %v718 = vadd.f32 %v629, %v717
      %719 = vmatmul.bf16.gmra.mxu0 %v421
      %v720 = vpop.f32.mrf.mxu0
      %v721 = vadd.f32 %v632, %v720
      %v722 = vpop.f32.mrf.mxu0
      %v723 = vadd.f32 %v634, %v722
      %724 = vmatmul.bf16.gmra.mxu0 %v423
      %v725 = vpop.f32.mrf.mxu0
      %v726 = vadd.f32 %v637, %v725
      %v727 = vpop.f32.mrf.mxu0
      %v728 = vadd.f32 %v639, %v727
      %729 = vdwg.mxu0
      %730 = vst [vmem:[%s223] sm:$0xff] %v651
      %731 = vst [vmem:[%s223 + $0x8] sm:$0xff] %v653
      %732 = vst [vmem:[%s223 + $0x10] sm:$0xff] %v656
      %733 = vst [vmem:[%s223 + $0x18] sm:$0xff] %v658
      %734 = vst [vmem:[%s223 + $0x20] sm:$0xff] %v661
      %735 = vst [vmem:[%s223 + $0x28] sm:$0xff] %v663
      %736 = vst [vmem:[%s223 + $0x30] sm:$0xff] %v666
      %737 = vst [vmem:[%s223 + $0x38] sm:$0xff] %v668
      %738 = vst [vmem:[%s223 + $0x40] sm:$0xff] %v671
      %739 = vst [vmem:[%s223 + $0x48] sm:$0xff] %v673
      %740 = vst [vmem:[%s223 + $0x50] sm:$0xff] %v676
      %741 = vst [vmem:[%s223 + $0x58] sm:$0xff] %v678
      %742 = vst [vmem:[%s223 + $0x60] sm:$0xff] %v681
      %743 = vst [vmem:[%s223 + $0x68] sm:$0xff] %v683
      %744 = vst [vmem:[%s223 + $0x70] sm:$0xff] %v686
      %745 = vst [vmem:[%s223 + $0x78] sm:$0xff] %v688
      %746 = vst [vmem:[%s223 + $0x80] sm:$0xff] %v691
      %747 = vst [vmem:[%s223 + $0x88] sm:$0xff] %v693
      %748 = vst [vmem:[%s223 + $0x90] sm:$0xff] %v696
      %749 = vst [vmem:[%s223 + $0x98] sm:$0xff] %v698
      %750 = vst [vmem:[%s223 + $0xa0] sm:$0xff] %v701
      %751 = vst [vmem:[%s223 + $0xa8] sm:$0xff] %v703
      %752 = vst [vmem:[%s223 + $0xb0] sm:$0xff] %v706
      %753 = vst [vmem:[%s223 + $0xb8] sm:$0xff] %v708
      %754 = vst [vmem:[%s223 + $0xc0] sm:$0xff] %v711
      %755 = vst [vmem:[%s223 + $0xc8] sm:$0xff] %v713
      %756 = vst [vmem:[%s223 + $0xd0] sm:$0xff] %v716
      %757 = vst [vmem:[%s223 + $0xd8] sm:$0xff] %v718
      %758 = vst [vmem:[%s223 + $0xe0] sm:$0xff] %v721
      %759 = vst [vmem:[%s223 + $0xe8] sm:$0xff] %v723
      %760 = vst [vmem:[%s223 + $0xf0] sm:$0xff] %v726
      %761 = vst [vmem:[%s223 + $0xf8] sm:$0xff] %v728
      %v762 = vadd.f32 %v651, %v653
      %v763 = vadd.f32 %v762, %v656
      %v764 = vadd.f32 %v763, %v658
      %v765 = vadd.f32 %v764, %v661
      %v766 = vadd.f32 %v765, %v663
      %v767 = vadd.f32 %v766, %v666
      %v768 = vadd.f32 %v767, %v668
      %v769 = vadd.f32 %v768, %v671
      %v770 = vadd.f32 %v769, %v673
      %v771 = vadd.f32 %v770, %v676
      %v772 = vadd.f32 %v771, %v678
      %v773 = vadd.f32 %v772, %v681
      %v774 = vadd.f32 %v773, %v683
      %v775 = vadd.f32 %v774, %v686
      %v776 = vadd.f32 %v775, %v688
      %v777 = vadd.f32 %v776, %v691
      %v778 = vadd.f32 %v777, %v693
      %v779 = vadd.f32 %v778, %v696
      %v780 = vadd.f32 %v779, %v698
      %v781 = vadd.f32 %v780, %v701
      %v782 = vadd.f32 %v781, %v703
      %v783 = vadd.f32 %v782, %v706
      %v784 = vadd.f32 %v783, %v708
      %v785 = vadd.f32 %v784, %v711
      %v786 = vadd.f32 %v785, %v713
      %v787 = vadd.f32 %v786, %v716
      %v788 = vadd.f32 %v787, %v718
      %v789 = vadd.f32 %v788, %v721
      %v790 = vadd.f32 %v789, %v723
      %v791 = vadd.f32 %v790, %v726
      %v792 = vadd.f32 %v791, %v728
      %v793 = vrot.slane %v792, 4
      %v794 = vadd.f32 %v792, %v793
      %v795 = vrot.slane %v794, 2
      %v796 = vadd.f32 %v794, %v795
      %v797 = vrot.slane %v796, 1
      %v798 = vadd.f32 %v796, %v797
      %v799 = vmul.f32 %v651, %v651
      %v800 = vmul.f32 %v653, %v653
      %v801 = vmul.f32 %v656, %v656
      %v802 = vmul.f32 %v658, %v658
      %v803 = vmul.f32 %v661, %v661
      %v804 = vmul.f32 %v663, %v663
      %v805 = vmul.f32 %v666, %v666
      %v806 = vmul.f32 %v668, %v668
      %v807 = vmul.f32 %v671, %v671
      %v808 = vmul.f32 %v673, %v673
      %v809 = vmul.f32 %v676, %v676
      %v810 = vmul.f32 %v678, %v678
      %v811 = vmul.f32 %v681, %v681
      %v812 = vmul.f32 %v683, %v683
      %v813 = vmul.f32 %v686, %v686
      %v814 = vmul.f32 %v688, %v688
      %v815 = vmul.f32 %v691, %v691
      %v816 = vmul.f32 %v693, %v693
      %v817 = vmul.f32 %v696, %v696
      %v818 = vmul.f32 %v698, %v698
      %v819 = vmul.f32 %v701, %v701
      %v820 = vmul.f32 %v703, %v703
      %v821 = vmul.f32 %v706, %v706
      %v822 = vmul.f32 %v708, %v708
      %v823 = vmul.f32 %v711, %v711
      %v824 = vmul.f32 %v713, %v713
      %v825 = vmul.f32 %v716, %v716
      %v826 = vmul.f32 %v718, %v718
      %v827 = vmul.f32 %v721, %v721
      %v828 = vmul.f32 %v723, %v723
      %v829 = vmul.f32 %v726, %v726
      %v830 = vmul.f32 %v728, %v728
      %v831 = vadd.f32 %v799, %v800
      %v832 = vadd.f32 %v831, %v801
      %v833 = vadd.f32 %v832, %v802
      %v834 = vadd.f32 %v833, %v803
      %v835 = vadd.f32 %v834, %v804
      %v836 = vadd.f32 %v835, %v805
      %v837 = vadd.f32 %v836, %v806
      %v838 = vadd.f32 %v837, %v807
      %v839 = vadd.f32 %v838, %v808
      %v840 = vadd.f32 %v839, %v809
      %v841 = vadd.f32 %v840, %v810
      %v842 = vadd.f32 %v841, %v811
      %v843 = vadd.f32 %v842, %v812
      %v844 = vadd.f32 %v843, %v813
      %v845 = vadd.f32 %v844, %v814
      %v846 = vadd.f32 %v845, %v815
      %v847 = vadd.f32 %v846, %v816
      %v848 = vadd.f32 %v847, %v817
      %v849 = vadd.f32 %v848, %v818
      %v850 = vadd.f32 %v849, %v819
      %v851 = vadd.f32 %v850, %v820
      %v852 = vadd.f32 %v851, %v821
      %v853 = vadd.f32 %v852, %v822
      %v854 = vadd.f32 %v853, %v823
      %v855 = vadd.f32 %v854, %v824
      %v856 = vadd.f32 %v855, %v825
      %v857 = vadd.f32 %v856, %v826
      %v858 = vadd.f32 %v857, %v827
      %v859 = vadd.f32 %v858, %v828
      %v860 = vadd.f32 %v859, %v829
      %v861 = vadd.f32 %v860, %v830
      %v862 = vrot.slane %v861, 4
      %v863 = vadd.f32 %v861, %v862
      %v864 = vrot.slane %v863, 2
      %v865 = vadd.f32 %v863, %v864
      %v866 = vrot.slane %v865, 1
      %v867 = vadd.f32 %v865, %v866
      %v868 = vlaneseq
      %v869 = vshrl.u32 %v868, 7
      %vm870 = vcmp.eq.s32.totalorder %v869, 0
      %vm871 = vcmp.eq.s32.totalorder %v869, 1
      %v872 = vsel %vm871, %v867, 0.0
      %v873 = vsel %vm870, %v798, %v872
      %874 = vst [vmem:[%s231] sm:$0xff] %v873
      %s875 = smul.u32 32, %s20
      %p876 = scmp.lt.s32.totalorder %s19, 1
      %s877 = scalar_select %p876, %s19, 1
      %p878 = scmp.lt.s32.totalorder %s875, 31
      %s879 = scalar_select %p878, %s875, 31
      %s880 = smul.addr %s877, 32
      %s881 = sadd.s32 %s879, %s880
      %s882 = smul.addr %s881, 8
      %s883 = scalar_lea.vmem %s2, %s882
      %p884 = scmp.lt.s32.totalorder %s19, 1
      %s885 = scalar_select %p884, %s19, 1
      %p886 = scmp.lt.s32.totalorder %s20, 0
      %s887 = scalar_select %p886, %s20, 0
      %s888 = sadd.s32 %s887, %s885
      %s889 = smul.addr %s888, 8
      %s890 = scalar_lea.vmem %s3, %s889
      // Predicated region
      $region29: #{generator_forward.46} parent=27 // pred_check
        %p891 = pneg %p96
      $region30: #{generator_forward.46} parent=27 // pred_check_branch
        %893 = sbr.rel (%p891) target = $region32
      $region31: #{generator_forward.46} parent=27 // pred_region
        %s894 = smul.u32 32, %s20
      $region32: #{generator_forward.46} parent=27 // pred_fallthru
        _
      // Predicated region
      $region33: #{generator_forward.46} parent=27 // pred_check
        %p895 = pneg %p124
      $region34: #{generator_forward.46} parent=27 // pred_check_branch
        %897 = sbr.rel (%p895) target = $region36
      $region35: #{generator_forward.46} parent=27 // pred_region
        _
      $region36: #{generator_forward.46} parent=27 // pred_fallthru
        _
    $region28: #{generator_forward.46} parent=5 // pred_fallthru
      _
    %p898 = scmp.le.s32.totalorder 2, %s10
    // Predicated region
    $region37: #{generator_forward.46} parent=5 // pred_check
      %p899 = pneg %p898
    $region38: #{generator_forward.46} parent=5 // pred_check_branch
      %901 = sbr.rel (%p899) target = $region40
    $region39: #{generator_forward.46} parent=5 // pred_region
      %s902 = ssub.s32 %s10, 2
      // Predicated region
      $region41: #{generator_forward.46} parent=39 // pred_check
        %p903 = pneg %p102
      $region42: #{generator_forward.46} parent=39 // pred_check_branch
        %905 = sbr.rel (%p903) target = $region44
      $region43: #{generator_forward.46} parent=39 // pred_region
        %s906 = smul.u32 32, %s22
        %p907 = scmp.lt.s32.totalorder %s21, 1
        %s908 = scalar_select %p907, %s21, 1
        %p909 = scmp.lt.s32.totalorder %s906, 31
        %s910 = scalar_select %p909, %s906, 31
        %s911 = smul.addr %s908, 32
        %s912 = sadd.s32 %s910, %s911
        %s913 = smul.addr %s912, 8
        %s914 = scalar_lea.vmem %s2, %s913
      $region44: #{generator_forward.46} parent=39 // pred_fallthru
        _
      // Predicated region
      $region45: #{generator_forward.46} parent=39 // pred_check
        %p915 = pneg %p130
      $region46: #{generator_forward.46} parent=39 // pred_check_branch
        %917 = sbr.rel (%p915) target = $region48
      $region47: #{generator_forward.46} parent=39 // pred_region
        %p918 = scmp.lt.s32.totalorder %s21, 1
        %s919 = scalar_select %p918, %s21, 1
        %p920 = scmp.lt.s32.totalorder %s22, 0
        %s921 = scalar_select %p920, %s22, 0
        %s922 = sadd.s32 %s921, %s919
        %s923 = smul.addr %s922, 8
        %s924 = scalar_lea.vmem %s3, %s923
      $region48: #{generator_forward.46} parent=39 // pred_fallthru
        _
    $region40: #{generator_forward.46} parent=5 // pred_fallthru
      _
  $region6: #{generator_forward.46} parent=0 // loop_footer
    %s14 = sadd.s32 1, %s10
  $region7: #{generator_forward.46} parent=0 // loop_footer_branch
    %9 = sbr.rel target = $region3
  $region8: #{generator_forward.46} parent=0 // loop_exit
    _

// kernel: generator_forward.48
$region0: #{generator_forward.48}
  #allocation0 [shape = 'u32[]', space=smem, size = 0x4, offset = 0x4, fixed_abs, tag = 'smem constant byte address 0x4 - core index']
  #allocation1 [shape = 'u32[72,128]{1,0:T(1,128)}', space=vmem, size = 0x9000, scoped, tag = 'internal scratch']
  %s0 = inlined_call_operand.vmem [shape: bf16[2,64,128], index: 0, kind: input, shape index: {}]
  %s1 = inlined_call_operand.vmem [shape: bf16[128,128], index: 1, kind: input, shape index: {}]
  %s2 = inlined_call_operand.vmem [shape: f32[2,64,128], index: 2, kind: output, shape index: {0}]
  %s3 = inlined_call_operand.vmem [shape: f32[2,1,8,128], index: 3, kind: output, shape index: {1}]
  %4 = xla_tuple %s2, %s3
  %s5 = sld [smem:[#allocation0]]
  $region49: #{generator_forward.48} parent=0
    _
  %s7 = ssub.s32 1, %s5
  %s8 = scalar_select 0, %s7, %s5
  loop: start=0, step=1, limit=4
  $region2: #{generator_forward.48} parent=0 // loop_pre_header
    _
  $region3: #{generator_forward.48} parent=0 // loop_header
    %s10 = sphi 0, %s14
    %p11 = scmp.ge.s32.totalorder %s10, 4
    %s17 = sphi 0, %s29
    %s18 = sphi 0, %s25
    %s19 = sphi 0, %s17
    %s20 = sphi 0, %s18
    %s21 = sphi 0, %s19
    %s22 = sphi 0, %s20
    %s34 = sphi 0, %s36
    %s37 = sphi 0, %s34
    %s38 = sphi 0, %s37
    %s54 = sphi 0, %s38
    %s58 = sphi 0, %s58
    %s60 = sphi 0, %s58
    %s61 = sphi 0, %s60
    %s75 = sphi 0, %s61
    %s83 = sphi 0, %s85
    %s86 = sphi 0, %s83
    %s87 = sphi 0, %s86
    %s103 = sphi 0, %s87
    %s111 = sphi 0, %s113
    %s114 = sphi 0, %s111
    %s115 = sphi 0, %s114
    %s131 = sphi 0, %s115
  $region4: #{generator_forward.48} parent=0 // loop_header_branch
    %13 = sbr.rel (%p11) target = $region8
  $region5: #{generator_forward.48} parent=0 // loop_body
    %s15 = ssub.s32 %s10, 1
    %s16 = ssub.s32 %s10, 2
    %s23 = sadd.s32 1, %s18
    %p24 = scmp.ge.s32.totalorder %s23, 1
    %s25 = scalar_select %p24, 0, %s23
    %s26 = sadd.s32 1, %s17
    %s27 = scalar_select %p24, %s26, %s17
    %p28 = scmp.ge.s32.totalorder %s27, 2
    %s29 = scalar_select %p28, 0, %s27
    %s30 = ssub.s32 %s17, %s29
    %s31 = ssub.s32 %s18, %s25
    %s32 = sor.u32 %s30, %s31
    %p33 = scmp.eq.s32.totalorder %s32, 0
    %s35 = sadd.s32 %s34, 1
    %s36 = scalar_select %p33, %s34, %s35
    %p39 = pneg %p33
    %p40 = scmp.eq.s32.totalorder %s10, 1
    %p41 = por %p39, %p40
    %p42 = scmp.ne.s32.totalorder %s34, %s37
    %p43 = scmp.eq.s32.totalorder %s10, 0
    %p44 = por %p42, %p43
    %p45 = scmp.ne.s32.totalorder %s34, %s37
    %p46 = scmp.eq.s32.totalorder %s15, 1
    %p47 = por %p45, %p46
    %p48 = scmp.ne.s32.totalorder %s37, %s38
    %p49 = scmp.eq.s32.totalorder %s15, 0
    %p50 = por %p48, %p49
    %p51 = scmp.ne.s32.totalorder %s37, %s38
    %p52 = scmp.eq.s32.totalorder %s16, 1
    %p53 = por %p51, %p52
    %p55 = scmp.ne.s32.totalorder %s38, %s54
    %p56 = scmp.eq.s32.totalorder %s16, 0
    %p57 = por %p55, %p56
    %s59 = sadd.s32 %s58, 1
    %p62 = scmp.eq.s32.totalorder %s10, 1
    %p63 = scmp.ne.s32.totalorder %s58, %s60
    %p64 = scmp.eq.s32.totalorder %s10, 0
    %p65 = por %p63, %p64
    %p66 = scmp.ne.s32.totalorder %s58, %s60
    %p67 = scmp.eq.s32.totalorder %s15, 1
    %p68 = por %p66, %p67
    %p69 = scmp.ne.s32.totalorder %s60, %s61
    %p70 = scmp.eq.s32.totalorder %s15, 0
    %p71 = por %p69, %p70
    %p72 = scmp.ne.s32.totalorder %s60, %s61
    %p73 = scmp.eq.s32.totalorder %s16, 1
    %p74 = por %p72, %p73
    %p76 = scmp.ne.s32.totalorder %s61, %s75
    %p77 = scmp.eq.s32.totalorder %s16, 0
    %p78 = por %p76, %p77
    %s79 = ssub.s32 %s17, %s29
    %s80 = ssub.s32 %s18, %s25
    %s81 = sor.u32 %s79, %s80
    %p82 = scmp.eq.s32.totalorder %s81, 0
    %s84 = sadd.s32 %s83, 1
    %s85 = scalar_select %p82, %s83, %s84
    %p88 = pneg %p82
    %p89 = scmp.eq.s32.totalorder %s10, 1
    %p90 = por %p88, %p89
    %p91 = scmp.ne.s32.totalorder %s83, %s86
    %p92 = scmp.eq.s32.totalorder %s10, 0
    %p93 = por %p91, %p92
    %p94 = scmp.ne.s32.totalorder %s83, %s86
    %p95 = scmp.eq.s32.totalorder %s15, 1
    %p96 = por %p94, %p95
    %p97 = scmp.ne.s32.totalorder %s86, %s87
    %p98 = scmp.eq.s32.totalorder %s15, 0
    %p99 = por %p97, %p98
    %p100 = scmp.ne.s32.totalorder %s86, %s87
    %p101 = scmp.eq.s32.totalorder %s16, 1
    %p102 = por %p100, %p101
    %p104 = scmp.ne.s32.totalorder %s87, %s103
    %p105 = scmp.eq.s32.totalorder %s16, 0
    %p106 = por %p104, %p105
    %s107 = ssub.s32 %s17, %s29
    %s108 = ssub.s32 %s18, %s25
    %s109 = sor.u32 %s107, %s108
    %p110 = scmp.eq.s32.totalorder %s109, 0
    %s112 = sadd.s32 %s111, 1
    %s113 = scalar_select %p110, %s111, %s112
    %p116 = pneg %p110
    %p117 = scmp.eq.s32.totalorder %s10, 1
    %p118 = por %p116, %p117
    %p119 = scmp.ne.s32.totalorder %s111, %s114
    %p120 = scmp.eq.s32.totalorder %s10, 0
    %p121 = por %p119, %p120
    %p122 = scmp.ne.s32.totalorder %s111, %s114
    %p123 = scmp.eq.s32.totalorder %s15, 1
    %p124 = por %p122, %p123
    %p125 = scmp.ne.s32.totalorder %s114, %s115
    %p126 = scmp.eq.s32.totalorder %s15, 0
    %p127 = por %p125, %p126
    %p128 = scmp.ne.s32.totalorder %s114, %s115
    %p129 = scmp.eq.s32.totalorder %s16, 1
    %p130 = por %p128, %p129
    %p132 = scmp.ne.s32.totalorder %s115, %s131
    %p133 = scmp.eq.s32.totalorder %s16, 0
    %p134 = por %p132, %p133
    %p135 = scmp.le.s32.totalorder 1, %s10
    %p136 = scmp.lt.s32.totalorder %s10, 3
    %p137 = pnand %p135, %p136
    %p138 = pneg %p137
    // Predicated region
    $region9: #{generator_forward.48} parent=5 // pred_check
      _
    $region10: #{generator_forward.48} parent=5 // pred_check_branch
      %140 = sbr.rel (%p137) target = $region12
    $region11: #{generator_forward.48} parent=5 // pred_region
      %s141 = ssub.s32 %s10, 1
      // Predicated region
      $region13: #{generator_forward.48} parent=11 // pred_check
        %p142 = pneg %p71
      $region14: #{generator_forward.48} parent=11 // pred_check_branch
        %144 = sbr.rel (%p142) target = $region16
      $region15: #{generator_forward.48} parent=11 // pred_region
        _
      $region16: #{generator_forward.48} parent=11 // pred_fallthru
        _
    $region12: #{generator_forward.48} parent=5 // pred_fallthru
      _
    %p145 = scmp.lt.s32.totalorder %s10, 2
    // Predicated region
    $region17: #{generator_forward.48} parent=5 // pred_check
      %p146 = pneg %p145
    $region18: #{generator_forward.48} parent=5 // pred_check_branch
      %148 = sbr.rel (%p146) target = $region20
    $region19: #{generator_forward.48} parent=5 // pred_region
      // Predicated region
      $region21: #{generator_forward.48} parent=19 // pred_check
        %p149 = pneg %p44
      $region22: #{generator_forward.48} parent=19 // pred_check_branch
        %151 = sbr.rel (%p149) target = $region24
      $region23: #{generator_forward.48} parent=19 // pred_region
        %s152 = smul.u32 8, %s18
        %p153 = scmp.lt.s32.totalorder %s17, 1
        %s154 = scalar_select %p153, %s17, 1
        %p155 = scmp.lt.s32.totalorder %s152, 7
        %s156 = scalar_select %p155, %s152, 7
        %s157 = smul.addr %s154, 8
        %s158 = sadd.s32 %s156, %s157
        %s159 = smul.addr %s158, 4
        %s160 = scalar_lea.vmem %s0, %s159
        %s161 = smul.u32 8, %s18
      $region24: #{generator_forward.48} parent=19 // pred_fallthru
        _
    $region20: #{generator_forward.48} parent=5 // pred_fallthru
      _
    %p162 = scmp.le.s32.totalorder 1, %s10
    %p163 = scmp.lt.s32.totalorder %s10, 3
    %p164 = pnand %p162, %p163
    %p165 = pneg %p164
    // Predicated region
    $region25: #{generator_forward.48} parent=5 // pred_check
      _
    $region26: #{generator_forward.48} parent=5 // pred_check_branch
      %167 = sbr.rel (%p164) target = $region28
    $region27: #{generator_forward.48} parent=5 // pred_region
      %s168 = ssub.s32 %s10, 1
      %s169 = smul.u32 8, %s20
      %p170 = scmp.lt.s32.totalorder %s19, 1
      %s171 = scalar_select %p170, %s19, 1
      %p172 = scmp.lt.s32.totalorder %s169, 7
      %s173 = scalar_select %p172, %s169, 7
      %s174 = smul.addr %s171, 8
      %s175 = sadd.s32 %s173, %s174
      %s176 = smul.addr %s175, 4
      %s177 = scalar_lea.vmem %s0, %s176
      %p178 = pneg %p50
      %p179 = pneg %p47
      %p180 = pneg %p71
      %p181 = pneg %p68
      %p182 = pneg %p99
      %p183 = pneg %p96
      %s184 = smul.u32 8, %s20
      %p185 = scmp.lt.s32.totalorder %s19, 1
      %s186 = scalar_select %p185, %s19, 1
      %p187 = scmp.lt.s32.totalorder %s184, 7
      %s188 = scalar_select %p187, %s184, 7
      %s189 = smul.addr %s186, 8
      %s190 = sadd.s32 %s188, %s189
      %s191 = smul.addr %s190, 8
      %s192 = scalar_lea.vmem %s2, %s191
      %p193 = pneg %p127
      %p194 = pneg %p124
      %p195 = scmp.lt.s32.totalorder %s19, 1
      %s196 = scalar_select %p195, %s19, 1
      %p197 = scmp.lt.s32.totalorder %s20, 0
      %s198 = scalar_select %p197, %s20, 0
      %s199 = sadd.s32 %s198, %s196
      %s200 = smul.addr %s199, 8
      %s201 = scalar_lea.vmem %s3, %s200
      %s202 = smul.u32 8, %s20
      %p203 = scmp.lt.s32.totalorder %s19, 1
      %s204 = scalar_select %p203, %s19, 1
      %p205 = scmp.lt.s32.totalorder %s202, 7
      %s206 = scalar_select %p205, %s202, 7
      %s207 = smul.addr %s204, 8
      %s208 = sadd.s32 %s206, %s207
      %s209 = smul.addr %s208, 4
      %s210 = scalar_lea.vmem %s0, %s209
      %s211 = smul.u32 8, %s20
      %s212 = smul.u32 8, %s20
      %p213 = scmp.lt.s32.totalorder %s19, 1
      %s214 = scalar_select %p213, %s19, 1
      %p215 = scmp.lt.s32.totalorder %s212, 7
      %s216 = scalar_select %p215, %s212, 7
      %s217 = smul.addr %s214, 8
      %s218 = sadd.s32 %s216, %s217
      %s219 = smul.addr %s218, 8
      %s220 = scalar_lea.vmem %s2, %s219
      %s221 = smul.u32 8, %s20
      %p222 = scmp.lt.s32.totalorder %s19, 1
      %s223 = scalar_select %p222, %s19, 1
      %p224 = scmp.lt.s32.totalorder %s20, 0
      %s225 = scalar_select %p224, %s20, 0
      %s226 = sadd.s32 %s225, %s223
      %s227 = smul.addr %s226, 8
      %s228 = scalar_lea.vmem %s3, %s227
      %v229 = vld [vmem:[%s210] sm:$0xf]
      %v230 = vld [vmem:[%s210 + $0x4] sm:$0xf]
      %v231 = vld [vmem:[%s210 + $0x8] sm:$0xf]
      %v232 = vld [vmem:[%s210 + $0xc] sm:$0xf]
      %v233 = vld [vmem:[%s210 + $0x10] sm:$0xf]
      %v234 = vld [vmem:[%s210 + $0x14] sm:$0xf]
      %v235 = vld [vmem:[%s210 + $0x18] sm:$0xf]
      %v236 = vld [vmem:[%s210 + $0x1c] sm:$0xf]
      %v237 = vld [vmem:[%s1] sm:$0xf]
      %v238 = vld [vmem:[%s1 + $0x4] sm:$0xf]
      %v239 = vld [vmem:[%s1 + $0x8] sm:$0xf]
      %v240 = vld [vmem:[%s1 + $0xc] sm:$0xf]
      %v241 = vld [vmem:[%s1 + $0x10] sm:$0xf]
      %v242 = vld [vmem:[%s1 + $0x14] sm:$0xf]
      %v243 = vld [vmem:[%s1 + $0x18] sm:$0xf]
      %v244 = vld [vmem:[%s1 + $0x1c] sm:$0xf]
      %v245 = vld [vmem:[%s1 + $0x20] sm:$0xf]
      %v246 = vld [vmem:[%s1 + $0x24] sm:$0xf]
      %v247 = vld [vmem:[%s1 + $0x28] sm:$0xf]
      %v248 = vld [vmem:[%s1 + $0x2c] sm:$0xf]
      %v249 = vld [vmem:[%s1 + $0x30] sm:$0xf]
      %v250 = vld [vmem:[%s1 + $0x34] sm:$0xf]
      %v251 = vld [vmem:[%s1 + $0x38] sm:$0xf]
      %v252 = vld [vmem:[%s1 + $0x3c] sm:$0xf]
      %v261 = vunpack.c.l.b16 %v229
      %v262 = vunpack.c.l.b16 %v230
      %v263 = vunpack.c.l.b16 %v231
      %v264 = vunpack.c.l.b16 %v232
      %v265 = vunpack.c.l.b16 %v233
      %v266 = vunpack.c.l.b16 %v234
      %v267 = vunpack.c.l.b16 %v235
      %v268 = vunpack.c.l.b16 %v236
      %v269 = vpack.c.b16 %v262, %v261
      %v270 = vpack.c.b16 %v264, %v263
      %v271 = vpack.c.b16 %v266, %v265
      %v272 = vpack.c.b16 %v268, %v267
      %v293 = vunpack.c.l.b16 %v237
      %v294 = vunpack.c.l.b16 %v238
      %v295 = vunpack.c.l.b16 %v239
      %v296 = vunpack.c.l.b16 %v240
      %v297 = vunpack.c.l.b16 %v241
      %v298 = vunpack.c.l.b16 %v242
      %v299 = vunpack.c.l.b16 %v243
      %v300 = vunpack.c.l.b16 %v244
      %v301 = vunpack.c.l.b16 %v245
      %v302 = vunpack.c.l.b16 %v246
      %v303 = vunpack.c.l.b16 %v247
      %v304 = vunpack.c.l.b16 %v248
      %v305 = vunpack.c.l.b16 %v249
      %v306 = vunpack.c.l.b16 %v250
      %v307 = vunpack.c.l.b16 %v251
      %v308 = vunpack.c.l.b16 %v252
      %v309 = vpack.c.b16 %v294, %v293
      %v310 = vpack.c.b16 %v296, %v295
      %v311 = vpack.c.b16 %v298, %v297
      %v312 = vpack.c.b16 %v300, %v299
      %v313 = vpack.c.b16 %v302, %v301
      %v314 = vpack.c.b16 %v304, %v303
      %v315 = vpack.c.b16 %v306, %v305
      %v316 = vpack.c.b16 %v308, %v307
      %325 = vmatpush.bf16.msra.mxu0 %v316
      %326 = vmatpush.bf16.msra.mxu0 %v315
      %327 = vmatpush.bf16.msra.mxu0 %v314
      %328 = vmatpush.bf16.msra.mxu0 %v313
      %329 = vmatpush.bf16.msra.mxu0 %v312
      %330 = vmatpush.bf16.msra.mxu0 %v311
      %331 = vmatpush.bf16.msra.mxu0 %v310
      %332 = vmatpush.bf16.msra.mxu0 %v309
      %333 = vmatmul.bf16.gmra.mxu0 %v269
      %v334 = vpop.f32.mrf.mxu0
      %v335 = vadd.f32 0.0, %v334
      %v336 = vpop.f32.mrf.mxu0
      %v337 = vadd.f32 0.0, %v336
      %338 = vmatmul.bf16.gmra.mxu0 %v270
      %v339 = vpop.f32.mrf.mxu0
      %v340 = vadd.f32 0.0, %v339
      %v341 = vpop.f32.mrf.mxu0
      %v342 = vadd.f32 0.0, %v341
      %343 = vmatmul.bf16.gmra.mxu0 %v271
      %v344 = vpop.f32.mrf.mxu0
      %v345 = vadd.f32 0.0, %v344
      %v346 = vpop.f32.mrf.mxu0
      %v347 = vadd.f32 0.0, %v346
      %348 = vmatmul.bf16.gmra.mxu0 %v272
      %v349 = vpop.f32.mrf.mxu0
      %v350 = vadd.f32 0.0, %v349
      %v351 = vpop.f32.mrf.mxu0
      %v352 = vadd.f32 0.0, %v351
      %353 = vdwg.mxu0
      %354 = vst [vmem:[%s220] sm:$0xff] %v335
      %355 = vst [vmem:[%s220 + $0x8] sm:$0xff] %v337
      %356 = vst [vmem:[%s220 + $0x10] sm:$0xff] %v340
      %357 = vst [vmem:[%s220 + $0x18] sm:$0xff] %v342
      %358 = vst [vmem:[%s220 + $0x20] sm:$0xff] %v345
      %359 = vst [vmem:[%s220 + $0x28] sm:$0xff] %v347
      %360 = vst [vmem:[%s220 + $0x30] sm:$0xff] %v350
      %361 = vst [vmem:[%s220 + $0x38] sm:$0xff] %v352
      %v362 = vadd.f32 %v335, %v337
      %v363 = vadd.f32 %v362, %v340
      %v364 = vadd.f32 %v363, %v342
      %v365 = vadd.f32 %v364, %v345
      %v366 = vadd.f32 %v365, %v347
      %v367 = vadd.f32 %v366, %v350
      %v368 = vadd.f32 %v367, %v352
      %v369 = vrot.slane %v368, 4
      %v370 = vadd.f32 %v368, %v369
      %v371 = vrot.slane %v370, 2
      %v372 = vadd.f32 %v370, %v371
      %v373 = vrot.slane %v372, 1
      %v374 = vadd.f32 %v372, %v373
      %v375 = vmul.f32 %v335, %v335
      %v376 = vmul.f32 %v337, %v337
      %v377 = vmul.f32 %v340, %v340
      %v378 = vmul.f32 %v342, %v342
      %v379 = vmul.f32 %v345, %v345
      %v380 = vmul.f32 %v347, %v347
      %v381 = vmul.f32 %v350, %v350
      %v382 = vmul.f32 %v352, %v352
      %v383 = vadd.f32 %v375, %v376
      %v384 = vadd.f32 %v383, %v377
      %v385 = vadd.f32 %v384, %v378
      %v386 = vadd.f32 %v385, %v379
      %v387 = vadd.f32 %v386, %v380
      %v388 = vadd.f32 %v387, %v381
      %v389 = vadd.f32 %v388, %v382
      %v390 = vrot.slane %v389, 4
      %v391 = vadd.f32 %v389, %v390
      %v392 = vrot.slane %v391, 2
      %v393 = vadd.f32 %v391, %v392
      %v394 = vrot.slane %v393, 1
      %v395 = vadd.f32 %v393, %v394
      %v396 = vlaneseq
      %v397 = vshrl.u32 %v396, 7
      %vm398 = vcmp.eq.s32.totalorder %v397, 0
      %vm399 = vcmp.eq.s32.totalorder %v397, 1
      %v400 = vsel %vm399, %v395, 0.0
      %v401 = vsel %vm398, %v374, %v400
      %402 = vst [vmem:[%s228] sm:$0xff] %v401
      %s403 = smul.u32 8, %s20
      %p404 = scmp.lt.s32.totalorder %s19, 1
      %s405 = scalar_select %p404, %s19, 1
      %p406 = scmp.lt.s32.totalorder %s403, 7
      %s407 = scalar_select %p406, %s403, 7
      %s408 = smul.addr %s405, 8
      %s409 = sadd.s32 %s407, %s408
      %s410 = smul.addr %s409, 8
      %s411 = scalar_lea.vmem %s2, %s410
      %p412 = scmp.lt.s32.totalorder %s19, 1
      %s413 = scalar_select %p412, %s19, 1
      %p414 = scmp.lt.s32.totalorder %s20, 0
      %s415 = scalar_select %p414, %s20, 0
      %s416 = sadd.s32 %s415, %s413
      %s417 = smul.addr %s416, 8
      %s418 = scalar_lea.vmem %s3, %s417
      // Predicated region
      $region29: #{generator_forward.48} parent=27 // pred_check
        %p419 = pneg %p96
      $region30: #{generator_forward.48} parent=27 // pred_check_branch
        %421 = sbr.rel (%p419) target = $region32
      $region31: #{generator_forward.48} parent=27 // pred_region
        %s422 = smul.u32 8, %s20
      $region32: #{generator_forward.48} parent=27 // pred_fallthru
        _
      // Predicated region
      $region33: #{generator_forward.48} parent=27 // pred_check
        %p423 = pneg %p124
      $region34: #{generator_forward.48} parent=27 // pred_check_branch
        %425 = sbr.rel (%p423) target = $region36
      $region35: #{generator_forward.48} parent=27 // pred_region
        _
      $region36: #{generator_forward.48} parent=27 // pred_fallthru
        _
    $region28: #{generator_forward.48} parent=5 // pred_fallthru
      _
    %p426 = scmp.le.s32.totalorder 2, %s10
    // Predicated region
    $region37: #{generator_forward.48} parent=5 // pred_check
      %p427 = pneg %p426
    $region38: #{generator_forward.48} parent=5 // pred_check_branch
      %429 = sbr.rel (%p427) target = $region40
    $region39: #{generator_forward.48} parent=5 // pred_region
      %s430 = ssub.s32 %s10, 2
      // Predicated region
      $region41: #{generator_forward.48} parent=39 // pred_check
        %p431 = pneg %p102
      $region42: #{generator_forward.48} parent=39 // pred_check_branch
        %433 = sbr.rel (%p431) target = $region44
      $region43: #{generator_forward.48} parent=39 // pred_region
        %s434 = smul.u32 8, %s22
        %p435 = scmp.lt.s32.totalorder %s21, 1
        %s436 = scalar_select %p435, %s21, 1
        %p437 = scmp.lt.s32.totalorder %s434, 7
        %s438 = scalar_select %p437, %s434, 7
        %s439 = smul.addr %s436, 8
        %s440 = sadd.s32 %s438, %s439
        %s441 = smul.addr %s440, 8
        %s442 = scalar_lea.vmem %s2, %s441
      $region44: #{generator_forward.48} parent=39 // pred_fallthru
        _
      // Predicated region
      $region45: #{generator_forward.48} parent=39 // pred_check
        %p443 = pneg %p130
      $region46: #{generator_forward.48} parent=39 // pred_check_branch
        %445 = sbr.rel (%p443) target = $region48
      $region47: #{generator_forward.48} parent=39 // pred_region
        %p446 = scmp.lt.s32.totalorder %s21, 1
        %s447 = scalar_select %p446, %s21, 1
        %p448 = scmp.lt.s32.totalorder %s22, 0
        %s449 = scalar_select %p448, %s22, 0
        %s450 = sadd.s32 %s449, %s447
        %s451 = smul.addr %s450, 8
        %s452 = scalar_lea.vmem %s3, %s451
      $region48: #{generator_forward.48} parent=39 // pred_fallthru
        _
    $region40: #{generator_forward.48} parent=5 // pred_fallthru
      _
  $region6: #{generator_forward.48} parent=0 // loop_footer
    %s14 = sadd.s32 1, %s10
  $region7: #{generator_forward.48} parent=0 // loop_footer_branch
    %9 = sbr.rel target = $region3
  $region8: #{generator_forward.48} parent=0 // loop_exit
    _

// kernel: generator_forward.49
$region0: #{generator_forward.49}
  #allocation0 [shape = 'u32[]', space=smem, size = 0x4, offset = 0x4, fixed_abs, tag = 'smem constant byte address 0x4 - core index']
  #allocation1 [shape = 'u32[72,128]{1,0:T(1,128)}', space=vmem, size = 0x9000, scoped, tag = 'internal scratch']
  %s0 = inlined_call_operand.vmem [shape: f32[2,64,128], index: 0, kind: input, shape index: {}]
  %s1 = inlined_call_operand.vmem [shape: f32[2,1,128], index: 1, kind: input, shape index: {}]
  %s2 = inlined_call_operand.vmem [shape: f32[2,1,128], index: 2, kind: input, shape index: {}]
  %s3 = inlined_call_operand.vmem [shape: f32[2,64,128], index: 3, kind: output, shape index: {}]
  %s4 = sld [smem:[#allocation0]]
  $region45: #{generator_forward.49} parent=0
    _
  %s6 = ssub.s32 1, %s4
  %s7 = scalar_select 0, %s6, %s4
  loop: start=0, step=1, limit=4
  $region2: #{generator_forward.49} parent=0 // loop_pre_header
    _
  $region3: #{generator_forward.49} parent=0 // loop_header
    %s9 = sphi 0, %s13
    %p10 = scmp.ge.s32.totalorder %s9, 4
    %s16 = sphi 0, %s28
    %s17 = sphi 0, %s24
    %s18 = sphi 0, %s16
    %s19 = sphi 0, %s17
    %s20 = sphi 0, %s18
    %s21 = sphi 0, %s19
    %s33 = sphi 0, %s35
    %s36 = sphi 0, %s33
    %s37 = sphi 0, %s36
    %s53 = sphi 0, %s37
    %s59 = sphi 0, %s61
    %s62 = sphi 0, %s59
    %s63 = sphi 0, %s62
    %s79 = sphi 0, %s63
    %s85 = sphi 0, %s87
    %s88 = sphi 0, %s85
    %s89 = sphi 0, %s88
    %s105 = sphi 0, %s89
    %s113 = sphi 0, %s115
    %s116 = sphi 0, %s113
    %s117 = sphi 0, %s116
    %s133 = sphi 0, %s117
  $region4: #{generator_forward.49} parent=0 // loop_header_branch
    %12 = sbr.rel (%p10) target = $region8
  $region5: #{generator_forward.49} parent=0 // loop_body
    %s14 = ssub.s32 %s9, 1
    %s15 = ssub.s32 %s9, 2
    %s22 = sadd.s32 1, %s17
    %p23 = scmp.ge.s32.totalorder %s22, 1
    %s24 = scalar_select %p23, 0, %s22
    %s25 = sadd.s32 1, %s16
    %s26 = scalar_select %p23, %s25, %s16
    %p27 = scmp.ge.s32.totalorder %s26, 2
    %s28 = scalar_select %p27, 0, %s26
    %s29 = ssub.s32 %s16, %s28
    %s30 = ssub.s32 %s17, %s24
    %s31 = sor.u32 %s29, %s30
    %p32 = scmp.eq.s32.totalorder %s31, 0
    %s34 = sadd.s32 %s33, 1
    %s35 = scalar_select %p32, %s33, %s34
    %p38 = pneg %p32
    %p39 = scmp.eq.s32.totalorder %s9, 1
    %p40 = por %p38, %p39
    %p41 = scmp.ne.s32.totalorder %s33, %s36
    %p42 = scmp.eq.s32.totalorder %s9, 0
    %p43 = por %p41, %p42
    %p44 = scmp.ne.s32.totalorder %s33, %s36
    %p45 = scmp.eq.s32.totalorder %s14, 1
    %p46 = por %p44, %p45
    %p47 = scmp.ne.s32.totalorder %s36, %s37
    %p48 = scmp.eq.s32.totalorder %s14, 0
    %p49 = por %p47, %p48
    %p50 = scmp.ne.s32.totalorder %s36, %s37
    %p51 = scmp.eq.s32.totalorder %s15, 1
    %p52 = por %p50, %p51
    %p54 = scmp.ne.s32.totalorder %s37, %s53
    %p55 = scmp.eq.s32.totalorder %s15, 0
    %p56 = por %p54, %p55
    %s57 = ssub.s32 %s16, %s28
    %p58 = scmp.eq.s32.totalorder %s57, 0
    %s60 = sadd.s32 %s59, 1
    %s61 = scalar_select %p58, %s59, %s60
    %p64 = pneg %p58
    %p65 = scmp.eq.s32.totalorder %s9, 1
    %p66 = por %p64, %p65
    %p67 = scmp.ne.s32.totalorder %s59, %s62
    %p68 = scmp.eq.s32.totalorder %s9, 0
    %p69 = por %p67, %p68
    %p70 = scmp.ne.s32.totalorder %s59, %s62
    %p71 = scmp.eq.s32.totalorder %s14, 1
    %p72 = por %p70, %p71
    %p73 = scmp.ne.s32.totalorder %s62, %s63
    %p74 = scmp.eq.s32.totalorder %s14, 0
    %p75 = por %p73, %p74
    %p76 = scmp.ne.s32.totalorder %s62, %s63
    %p77 = scmp.eq.s32.totalorder %s15, 1
    %p78 = por %p76, %p77
    %p80 = scmp.ne.s32.totalorder %s63, %s79
    %p81 = scmp.eq.s32.totalorder %s15, 0
    %p82 = por %p80, %p81
    %s83 = ssub.s32 %s16, %s28
    %p84 = scmp.eq.s32.totalorder %s83, 0
    %s86 = sadd.s32 %s85, 1
    %s87 = scalar_select %p84, %s85, %s86
    %p90 = pneg %p84
    %p91 = scmp.eq.s32.totalorder %s9, 1
    %p92 = por %p90, %p91
    %p93 = scmp.ne.s32.totalorder %s85, %s88
    %p94 = scmp.eq.s32.totalorder %s9, 0
    %p95 = por %p93, %p94
    %p96 = scmp.ne.s32.totalorder %s85, %s88
    %p97 = scmp.eq.s32.totalorder %s14, 1
    %p98 = por %p96, %p97
    %p99 = scmp.ne.s32.totalorder %s88, %s89
    %p100 = scmp.eq.s32.totalorder %s14, 0
    %p101 = por %p99, %p100
    %p102 = scmp.ne.s32.totalorder %s88, %s89
    %p103 = scmp.eq.s32.totalorder %s15, 1
    %p104 = por %p102, %p103
    %p106 = scmp.ne.s32.totalorder %s89, %s105
    %p107 = scmp.eq.s32.totalorder %s15, 0
    %p108 = por %p106, %p107
    %s109 = ssub.s32 %s16, %s28
    %s110 = ssub.s32 %s17, %s24
    %s111 = sor.u32 %s109, %s110
    %p112 = scmp.eq.s32.totalorder %s111, 0
    %s114 = sadd.s32 %s113, 1
    %s115 = scalar_select %p112, %s113, %s114
    %p118 = pneg %p112
    %p119 = scmp.eq.s32.totalorder %s9, 1
    %p120 = por %p118, %p119
    %p121 = scmp.ne.s32.totalorder %s113, %s116
    %p122 = scmp.eq.s32.totalorder %s9, 0
    %p123 = por %p121, %p122
    %p124 = scmp.ne.s32.totalorder %s113, %s116
    %p125 = scmp.eq.s32.totalorder %s14, 1
    %p126 = por %p124, %p125
    %p127 = scmp.ne.s32.totalorder %s116, %s117
    %p128 = scmp.eq.s32.totalorder %s14, 0
    %p129 = por %p127, %p128
    %p130 = scmp.ne.s32.totalorder %s116, %s117
    %p131 = scmp.eq.s32.totalorder %s15, 1
    %p132 = por %p130, %p131
    %p134 = scmp.ne.s32.totalorder %s117, %s133
    %p135 = scmp.eq.s32.totalorder %s15, 0
    %p136 = por %p134, %p135
    %p137 = scmp.le.s32.totalorder 1, %s9
    %p138 = scmp.lt.s32.totalorder %s9, 3
    %p139 = pnand %p137, %p138
    %p140 = pneg %p139
    // Predicated region
    $region9: #{generator_forward.49} parent=5 // pred_check
      _
    $region10: #{generator_forward.49} parent=5 // pred_check_branch
      %142 = sbr.rel (%p139) target = $region12
    $region11: #{generator_forward.49} parent=5 // pred_region
      %s143 = ssub.s32 %s9, 1
    $region12: #{generator_forward.49} parent=5 // pred_fallthru
      _
    %p144 = scmp.lt.s32.totalorder %s9, 2
    // Predicated region
    $region13: #{generator_forward.49} parent=5 // pred_check
      %p145 = pneg %p144
    $region14: #{generator_forward.49} parent=5 // pred_check_branch
      %147 = sbr.rel (%p145) target = $region16
    $region15: #{generator_forward.49} parent=5 // pred_region
      // Predicated region
      $region17: #{generator_forward.49} parent=15 // pred_check
        %p148 = pneg %p43
      $region18: #{generator_forward.49} parent=15 // pred_check_branch
        %150 = sbr.rel (%p148) target = $region20
      $region19: #{generator_forward.49} parent=15 // pred_region
        %s151 = smul.u32 8, %s17
        %p152 = scmp.lt.s32.totalorder %s16, 1
        %s153 = scalar_select %p152, %s16, 1
        %p154 = scmp.lt.s32.totalorder %s151, 7
        %s155 = scalar_select %p154, %s151, 7
        %s156 = smul.addr %s153, 8
        %s157 = sadd.s32 %s155, %s156
        %s158 = smul.addr %s157, 8
        %s159 = scalar_lea.vmem %s0, %s158
        %s160 = smul.u32 8, %s17
      $region20: #{generator_forward.49} parent=15 // pred_fallthru
        _
      // Predicated region
      $region21: #{generator_forward.49} parent=15 // pred_check
        %p161 = pneg %p69
      $region22: #{generator_forward.49} parent=15 // pred_check_branch
        %163 = sbr.rel (%p161) target = $region24
      $region23: #{generator_forward.49} parent=15 // pred_region
        %p164 = scmp.lt.s32.totalorder %s16, 1
        %s165 = scalar_select %p164, %s16, 1
        %s166 = scalar_lea.vmem %s1, %s165
      $region24: #{generator_forward.49} parent=15 // pred_fallthru
        _
      // Predicated region
      $region25: #{generator_forward.49} parent=15 // pred_check
        %p167 = pneg %p95
      $region26: #{generator_forward.49} parent=15 // pred_check_branch
        %169 = sbr.rel (%p167) target = $region28
      $region27: #{generator_forward.49} parent=15 // pred_region
        %p170 = scmp.lt.s32.totalorder %s16, 1
        %s171 = scalar_select %p170, %s16, 1
        %s172 = scalar_lea.vmem %s2, %s171
      $region28: #{generator_forward.49} parent=15 // pred_fallthru
        _
    $region16: #{generator_forward.49} parent=5 // pred_fallthru
      _
    %p173 = scmp.le.s32.totalorder 1, %s9
    %p174 = scmp.lt.s32.totalorder %s9, 3
    %p175 = pnand %p173, %p174
    %p176 = pneg %p175
    // Predicated region
    $region29: #{generator_forward.49} parent=5 // pred_check
      _
    $region30: #{generator_forward.49} parent=5 // pred_check_branch
      %178 = sbr.rel (%p175) target = $region32
    $region31: #{generator_forward.49} parent=5 // pred_region
      %s179 = ssub.s32 %s9, 1
      %s180 = smul.u32 8, %s19
      %p181 = scmp.lt.s32.totalorder %s18, 1
      %s182 = scalar_select %p181, %s18, 1
      %p183 = scmp.lt.s32.totalorder %s180, 7
      %s184 = scalar_select %p183, %s180, 7
      %s185 = smul.addr %s182, 8
      %s186 = sadd.s32 %s184, %s185
      %s187 = smul.addr %s186, 8
      %s188 = scalar_lea.vmem %s0, %s187
      %p189 = pneg %p49
      %p190 = pneg %p46
      %p191 = scmp.lt.s32.totalorder %s18, 1
      %s192 = scalar_select %p191, %s18, 1
      %s193 = scalar_lea.vmem %s1, %s192
      %p194 = pneg %p75
      %p195 = pneg %p72
      %p196 = scmp.lt.s32.totalorder %s18, 1
      %s197 = scalar_select %p196, %s18, 1
      %s198 = scalar_lea.vmem %s2, %s197
      %p199 = pneg %p101
      %p200 = pneg %p98
      %p201 = pneg %p129
      %p202 = pneg %p126
      %s203 = smul.u32 8, %s19
      %p204 = scmp.lt.s32.totalorder %s18, 1
      %s205 = scalar_select %p204, %s18, 1
      %p206 = scmp.lt.s32.totalorder %s203, 7
      %s207 = scalar_select %p206, %s203, 7
      %s208 = smul.addr %s205, 8
      %s209 = sadd.s32 %s207, %s208
      %s210 = smul.addr %s209, 8
      %s211 = scalar_lea.vmem %s3, %s210
      %s212 = smul.u32 8, %s19
      %p213 = scmp.lt.s32.totalorder %s18, 1
      %s214 = scalar_select %p213, %s18, 1
      %p215 = scmp.lt.s32.totalorder %s212, 7
      %s216 = scalar_select %p215, %s212, 7
      %s217 = smul.addr %s214, 8
      %s218 = sadd.s32 %s216, %s217
      %s219 = smul.addr %s218, 8
      %s220 = scalar_lea.vmem %s0, %s219
      %s221 = smul.u32 8, %s19
      %p222 = scmp.lt.s32.totalorder %s18, 1
      %s223 = scalar_select %p222, %s18, 1
      %s224 = scalar_lea.vmem %s1, %s223
      %p225 = scmp.lt.s32.totalorder %s18, 1
      %s226 = scalar_select %p225, %s18, 1
      %s227 = scalar_lea.vmem %s2, %s226
      %s228 = smul.u32 8, %s19
      %p229 = scmp.lt.s32.totalorder %s18, 1
      %s230 = scalar_select %p229, %s18, 1
      %p231 = scmp.lt.s32.totalorder %s228, 7
      %s232 = scalar_select %p231, %s228, 7
      %s233 = smul.addr %s230, 8
      %s234 = sadd.s32 %s232, %s233
      %s235 = smul.addr %s234, 8
      %s236 = scalar_lea.vmem %s3, %s235
      %s237 = smul.u32 8, %s19
      %v238 = vld [vmem:[%s220] sm:$0xff]
      %v239 = vld [vmem:[%s220 + $0x8] sm:$0xff]
      %v240 = vld [vmem:[%s220 + $0x10] sm:$0xff]
      %v241 = vld [vmem:[%s220 + $0x18] sm:$0xff]
      %v242 = vld [vmem:[%s220 + $0x20] sm:$0xff]
      %v243 = vld [vmem:[%s220 + $0x28] sm:$0xff]
      %v244 = vld [vmem:[%s220 + $0x30] sm:$0xff]
      %v245 = vld [vmem:[%s220 + $0x38] sm:$0xff]
      %v246 = vld [vmem:[%s224] sm:$0x1]
      %v248 = vperm.slane %v246, 0
      %v250 = vmul.f32 %v238, %v248
      %v251 = vmul.f32 %v239, %v248
      %v252 = vmul.f32 %v240, %v248
      %v253 = vmul.f32 %v241, %v248
      %v254 = vmul.f32 %v242, %v248
      %v255 = vmul.f32 %v243, %v248
      %v256 = vmul.f32 %v244, %v248
      %v257 = vmul.f32 %v245, %v248
      %v258 = vld [vmem:[%s227] sm:$0x1]
      %v260 = vperm.slane %v258, 0
      %v262 = vadd.f32 %v250, %v260
      %v263 = vadd.f32 %v251, %v260
      %v264 = vadd.f32 %v252, %v260
      %v265 = vadd.f32 %v253, %v260
      %v266 = vadd.f32 %v254, %v260
      %v267 = vadd.f32 %v255, %v260
      %v268 = vadd.f32 %v256, %v260
      %v269 = vadd.f32 %v257, %v260
      %v270 = vmax.f32 %v262, 0.0
      %v271 = vmax.f32 %v263, 0.0
      %v272 = vmax.f32 %v264, 0.0
      %v273 = vmax.f32 %v265, 0.0
      %v274 = vmax.f32 %v266, 0.0
      %v275 = vmax.f32 %v267, 0.0
      %v276 = vmax.f32 %v268, 0.0
      %v277 = vmax.f32 %v269, 0.0
      %278 = vst [vmem:[%s236] sm:$0xff] %v270
      %279 = vst [vmem:[%s236 + $0x8] sm:$0xff] %v271
      %280 = vst [vmem:[%s236 + $0x10] sm:$0xff] %v272
      %281 = vst [vmem:[%s236 + $0x18] sm:$0xff] %v273
      %282 = vst [vmem:[%s236 + $0x20] sm:$0xff] %v274
      %283 = vst [vmem:[%s236 + $0x28] sm:$0xff] %v275
      %284 = vst [vmem:[%s236 + $0x30] sm:$0xff] %v276
      %285 = vst [vmem:[%s236 + $0x38] sm:$0xff] %v277
      %s286 = smul.u32 8, %s19
      %p287 = scmp.lt.s32.totalorder %s18, 1
      %s288 = scalar_select %p287, %s18, 1
      %p289 = scmp.lt.s32.totalorder %s286, 7
      %s290 = scalar_select %p289, %s286, 7
      %s291 = smul.addr %s288, 8
      %s292 = sadd.s32 %s290, %s291
      %s293 = smul.addr %s292, 8
      %s294 = scalar_lea.vmem %s3, %s293
      // Predicated region
      $region33: #{generator_forward.49} parent=31 // pred_check
        %p295 = pneg %p126
      $region34: #{generator_forward.49} parent=31 // pred_check_branch
        %297 = sbr.rel (%p295) target = $region36
      $region35: #{generator_forward.49} parent=31 // pred_region
        %s298 = smul.u32 8, %s19
      $region36: #{generator_forward.49} parent=31 // pred_fallthru
        _
    $region32: #{generator_forward.49} parent=5 // pred_fallthru
      _
    %p299 = scmp.le.s32.totalorder 2, %s9
    // Predicated region
    $region37: #{generator_forward.49} parent=5 // pred_check
      %p300 = pneg %p299
    $region38: #{generator_forward.49} parent=5 // pred_check_branch
      %302 = sbr.rel (%p300) target = $region40
    $region39: #{generator_forward.49} parent=5 // pred_region
      %s303 = ssub.s32 %s9, 2
      // Predicated region
      $region41: #{generator_forward.49} parent=39 // pred_check
        %p304 = pneg %p132
      $region42: #{generator_forward.49} parent=39 // pred_check_branch
        %306 = sbr.rel (%p304) target = $region44
      $region43: #{generator_forward.49} parent=39 // pred_region
        %s307 = smul.u32 8, %s21
        %p308 = scmp.lt.s32.totalorder %s20, 1
        %s309 = scalar_select %p308, %s20, 1
        %p310 = scmp.lt.s32.totalorder %s307, 7
        %s311 = scalar_select %p310, %s307, 7
        %s312 = smul.addr %s309, 8
        %s313 = sadd.s32 %s311, %s312
        %s314 = smul.addr %s313, 8
        %s315 = scalar_lea.vmem %s3, %s314
      $region44: #{generator_forward.49} parent=39 // pred_fallthru
        _
    $region40: #{generator_forward.49} parent=5 // pred_fallthru
      _
  $region6: #{generator_forward.49} parent=0 // loop_footer
    %s13 = sadd.s32 1, %s9
  $region7: #{generator_forward.49} parent=0 // loop_footer_branch
    %8 = sbr.rel target = $region3
  $region8: #{generator_forward.49} parent=0 // loop_exit
    _

// kernel: generator_forward.51
$region0: #{generator_forward.51}
  #allocation0 [shape = 'u32[]', space=smem, size = 0x4, offset = 0x4, fixed_abs, tag = 'smem constant byte address 0x4 - core index']
  #allocation1 [shape = 'u32[72,128]{1,0:T(1,128)}', space=vmem, size = 0x9000, scoped, tag = 'internal scratch']
  %s0 = inlined_call_operand.vmem [shape: f32[2,16,128], index: 0, kind: input, shape index: {}]
  %s1 = inlined_call_operand.vmem [shape: f32[2,1,128], index: 1, kind: input, shape index: {}]
  %s2 = inlined_call_operand.vmem [shape: f32[2,1,128], index: 2, kind: input, shape index: {}]
  %s3 = inlined_call_operand.vmem [shape: f32[2,16,128], index: 3, kind: output, shape index: {}]
  %s4 = sld [smem:[#allocation0]]
  $region45: #{generator_forward.51} parent=0
    _
  %s6 = ssub.s32 1, %s4
  %s7 = scalar_select 0, %s6, %s4
  loop: start=0, step=1, limit=4
  $region2: #{generator_forward.51} parent=0 // loop_pre_header
    _
  $region3: #{generator_forward.51} parent=0 // loop_header
    %s9 = sphi 0, %s13
    %p10 = scmp.ge.s32.totalorder %s9, 4
    %s16 = sphi 0, %s28
    %s17 = sphi 0, %s24
    %s18 = sphi 0, %s16
    %s19 = sphi 0, %s17
    %s20 = sphi 0, %s18
    %s21 = sphi 0, %s19
    %s33 = sphi 0, %s35
    %s36 = sphi 0, %s33
    %s37 = sphi 0, %s36
    %s53 = sphi 0, %s37
    %s59 = sphi 0, %s61
    %s62 = sphi 0, %s59
    %s63 = sphi 0, %s62
    %s79 = sphi 0, %s63
    %s85 = sphi 0, %s87
    %s88 = sphi 0, %s85
    %s89 = sphi 0, %s88
    %s105 = sphi 0, %s89
    %s113 = sphi 0, %s115
    %s116 = sphi 0, %s113
    %s117 = sphi 0, %s116
    %s133 = sphi 0, %s117
  $region4: #{generator_forward.51} parent=0 // loop_header_branch
    %12 = sbr.rel (%p10) target = $region8
  $region5: #{generator_forward.51} parent=0 // loop_body
    %s14 = ssub.s32 %s9, 1
    %s15 = ssub.s32 %s9, 2
    %s22 = sadd.s32 1, %s17
    %p23 = scmp.ge.s32.totalorder %s22, 1
    %s24 = scalar_select %p23, 0, %s22
    %s25 = sadd.s32 1, %s16
    %s26 = scalar_select %p23, %s25, %s16
    %p27 = scmp.ge.s32.totalorder %s26, 2
    %s28 = scalar_select %p27, 0, %s26
    %s29 = ssub.s32 %s16, %s28
    %s30 = ssub.s32 %s17, %s24
    %s31 = sor.u32 %s29, %s30
    %p32 = scmp.eq.s32.totalorder %s31, 0
    %s34 = sadd.s32 %s33, 1
    %s35 = scalar_select %p32, %s33, %s34
    %p38 = pneg %p32
    %p39 = scmp.eq.s32.totalorder %s9, 1
    %p40 = por %p38, %p39
    %p41 = scmp.ne.s32.totalorder %s33, %s36
    %p42 = scmp.eq.s32.totalorder %s9, 0
    %p43 = por %p41, %p42
    %p44 = scmp.ne.s32.totalorder %s33, %s36
    %p45 = scmp.eq.s32.totalorder %s14, 1
    %p46 = por %p44, %p45
    %p47 = scmp.ne.s32.totalorder %s36, %s37
    %p48 = scmp.eq.s32.totalorder %s14, 0
    %p49 = por %p47, %p48
    %p50 = scmp.ne.s32.totalorder %s36, %s37
    %p51 = scmp.eq.s32.totalorder %s15, 1
    %p52 = por %p50, %p51
    %p54 = scmp.ne.s32.totalorder %s37, %s53
    %p55 = scmp.eq.s32.totalorder %s15, 0
    %p56 = por %p54, %p55
    %s57 = ssub.s32 %s16, %s28
    %p58 = scmp.eq.s32.totalorder %s57, 0
    %s60 = sadd.s32 %s59, 1
    %s61 = scalar_select %p58, %s59, %s60
    %p64 = pneg %p58
    %p65 = scmp.eq.s32.totalorder %s9, 1
    %p66 = por %p64, %p65
    %p67 = scmp.ne.s32.totalorder %s59, %s62
    %p68 = scmp.eq.s32.totalorder %s9, 0
    %p69 = por %p67, %p68
    %p70 = scmp.ne.s32.totalorder %s59, %s62
    %p71 = scmp.eq.s32.totalorder %s14, 1
    %p72 = por %p70, %p71
    %p73 = scmp.ne.s32.totalorder %s62, %s63
    %p74 = scmp.eq.s32.totalorder %s14, 0
    %p75 = por %p73, %p74
    %p76 = scmp.ne.s32.totalorder %s62, %s63
    %p77 = scmp.eq.s32.totalorder %s15, 1
    %p78 = por %p76, %p77
    %p80 = scmp.ne.s32.totalorder %s63, %s79
    %p81 = scmp.eq.s32.totalorder %s15, 0
    %p82 = por %p80, %p81
    %s83 = ssub.s32 %s16, %s28
    %p84 = scmp.eq.s32.totalorder %s83, 0
    %s86 = sadd.s32 %s85, 1
    %s87 = scalar_select %p84, %s85, %s86
    %p90 = pneg %p84
    %p91 = scmp.eq.s32.totalorder %s9, 1
    %p92 = por %p90, %p91
    %p93 = scmp.ne.s32.totalorder %s85, %s88
    %p94 = scmp.eq.s32.totalorder %s9, 0
    %p95 = por %p93, %p94
    %p96 = scmp.ne.s32.totalorder %s85, %s88
    %p97 = scmp.eq.s32.totalorder %s14, 1
    %p98 = por %p96, %p97
    %p99 = scmp.ne.s32.totalorder %s88, %s89
    %p100 = scmp.eq.s32.totalorder %s14, 0
    %p101 = por %p99, %p100
    %p102 = scmp.ne.s32.totalorder %s88, %s89
    %p103 = scmp.eq.s32.totalorder %s15, 1
    %p104 = por %p102, %p103
    %p106 = scmp.ne.s32.totalorder %s89, %s105
    %p107 = scmp.eq.s32.totalorder %s15, 0
    %p108 = por %p106, %p107
    %s109 = ssub.s32 %s16, %s28
    %s110 = ssub.s32 %s17, %s24
    %s111 = sor.u32 %s109, %s110
    %p112 = scmp.eq.s32.totalorder %s111, 0
    %s114 = sadd.s32 %s113, 1
    %s115 = scalar_select %p112, %s113, %s114
    %p118 = pneg %p112
    %p119 = scmp.eq.s32.totalorder %s9, 1
    %p120 = por %p118, %p119
    %p121 = scmp.ne.s32.totalorder %s113, %s116
    %p122 = scmp.eq.s32.totalorder %s9, 0
    %p123 = por %p121, %p122
    %p124 = scmp.ne.s32.totalorder %s113, %s116
    %p125 = scmp.eq.s32.totalorder %s14, 1
    %p126 = por %p124, %p125
    %p127 = scmp.ne.s32.totalorder %s116, %s117
    %p128 = scmp.eq.s32.totalorder %s14, 0
    %p129 = por %p127, %p128
    %p130 = scmp.ne.s32.totalorder %s116, %s117
    %p131 = scmp.eq.s32.totalorder %s15, 1
    %p132 = por %p130, %p131
    %p134 = scmp.ne.s32.totalorder %s117, %s133
    %p135 = scmp.eq.s32.totalorder %s15, 0
    %p136 = por %p134, %p135
    %p137 = scmp.le.s32.totalorder 1, %s9
    %p138 = scmp.lt.s32.totalorder %s9, 3
    %p139 = pnand %p137, %p138
    %p140 = pneg %p139
    // Predicated region
    $region9: #{generator_forward.51} parent=5 // pred_check
      _
    $region10: #{generator_forward.51} parent=5 // pred_check_branch
      %142 = sbr.rel (%p139) target = $region12
    $region11: #{generator_forward.51} parent=5 // pred_region
      %s143 = ssub.s32 %s9, 1
    $region12: #{generator_forward.51} parent=5 // pred_fallthru
      _
    %p144 = scmp.lt.s32.totalorder %s9, 2
    // Predicated region
    $region13: #{generator_forward.51} parent=5 // pred_check
      %p145 = pneg %p144
    $region14: #{generator_forward.51} parent=5 // pred_check_branch
      %147 = sbr.rel (%p145) target = $region16
    $region15: #{generator_forward.51} parent=5 // pred_region
      // Predicated region
      $region17: #{generator_forward.51} parent=15 // pred_check
        %p148 = pneg %p43
      $region18: #{generator_forward.51} parent=15 // pred_check_branch
        %150 = sbr.rel (%p148) target = $region20
      $region19: #{generator_forward.51} parent=15 // pred_region
        %s151 = smul.u32 2, %s17
        %p152 = scmp.lt.s32.totalorder %s16, 1
        %s153 = scalar_select %p152, %s16, 1
        %p154 = scmp.lt.s32.totalorder %s151, 1
        %s155 = scalar_select %p154, %s151, 1
        %s156 = smul.addr %s153, 2
        %s157 = sadd.s32 %s155, %s156
        %s158 = smul.addr %s157, 8
        %s159 = scalar_lea.vmem %s0, %s158
        %s160 = smul.u32 2, %s17
      $region20: #{generator_forward.51} parent=15 // pred_fallthru
        _
      // Predicated region
      $region21: #{generator_forward.51} parent=15 // pred_check
        %p161 = pneg %p69
      $region22: #{generator_forward.51} parent=15 // pred_check_branch
        %163 = sbr.rel (%p161) target = $region24
      $region23: #{generator_forward.51} parent=15 // pred_region
        %p164 = scmp.lt.s32.totalorder %s16, 1
        %s165 = scalar_select %p164, %s16, 1
        %s166 = scalar_lea.vmem %s1, %s165
      $region24: #{generator_forward.51} parent=15 // pred_fallthru
        _
      // Predicated region
      $region25: #{generator_forward.51} parent=15 // pred_check
        %p167 = pneg %p95
      $region26: #{generator_forward.51} parent=15 // pred_check_branch
        %169 = sbr.rel (%p167) target = $region28
      $region27: #{generator_forward.51} parent=15 // pred_region
        %p170 = scmp.lt.s32.totalorder %s16, 1
        %s171 = scalar_select %p170, %s16, 1
        %s172 = scalar_lea.vmem %s2, %s171
      $region28: #{generator_forward.51} parent=15 // pred_fallthru
        _
    $region16: #{generator_forward.51} parent=5 // pred_fallthru
      _
    %p173 = scmp.le.s32.totalorder 1, %s9
    %p174 = scmp.lt.s32.totalorder %s9, 3
    %p175 = pnand %p173, %p174
    %p176 = pneg %p175
    // Predicated region
    $region29: #{generator_forward.51} parent=5 // pred_check
      _
    $region30: #{generator_forward.51} parent=5 // pred_check_branch
      %178 = sbr.rel (%p175) target = $region32
    $region31: #{generator_forward.51} parent=5 // pred_region
      %s179 = ssub.s32 %s9, 1
      %s180 = smul.u32 2, %s19
      %p181 = scmp.lt.s32.totalorder %s18, 1
      %s182 = scalar_select %p181, %s18, 1
      %p183 = scmp.lt.s32.totalorder %s180, 1
      %s184 = scalar_select %p183, %s180, 1
      %s185 = smul.addr %s182, 2
      %s186 = sadd.s32 %s184, %s185
      %s187 = smul.addr %s186, 8
      %s188 = scalar_lea.vmem %s0, %s187
      %p189 = pneg %p49
      %p190 = pneg %p46
      %p191 = scmp.lt.s32.totalorder %s18, 1
      %s192 = scalar_select %p191, %s18, 1
      %s193 = scalar_lea.vmem %s1, %s192
      %p194 = pneg %p75
      %p195 = pneg %p72
      %p196 = scmp.lt.s32.totalorder %s18, 1
      %s197 = scalar_select %p196, %s18, 1
      %s198 = scalar_lea.vmem %s2, %s197
      %p199 = pneg %p101
      %p200 = pneg %p98
      %p201 = pneg %p129
      %p202 = pneg %p126
      %s203 = smul.u32 2, %s19
      %p204 = scmp.lt.s32.totalorder %s18, 1
      %s205 = scalar_select %p204, %s18, 1
      %p206 = scmp.lt.s32.totalorder %s203, 1
      %s207 = scalar_select %p206, %s203, 1
      %s208 = smul.addr %s205, 2
      %s209 = sadd.s32 %s207, %s208
      %s210 = smul.addr %s209, 8
      %s211 = scalar_lea.vmem %s3, %s210
      %s212 = smul.u32 2, %s19
      %p213 = scmp.lt.s32.totalorder %s18, 1
      %s214 = scalar_select %p213, %s18, 1
      %p215 = scmp.lt.s32.totalorder %s212, 1
      %s216 = scalar_select %p215, %s212, 1
      %s217 = smul.addr %s214, 2
      %s218 = sadd.s32 %s216, %s217
      %s219 = smul.addr %s218, 8
      %s220 = scalar_lea.vmem %s0, %s219
      %s221 = smul.u32 2, %s19
      %p222 = scmp.lt.s32.totalorder %s18, 1
      %s223 = scalar_select %p222, %s18, 1
      %s224 = scalar_lea.vmem %s1, %s223
      %p225 = scmp.lt.s32.totalorder %s18, 1
      %s226 = scalar_select %p225, %s18, 1
      %s227 = scalar_lea.vmem %s2, %s226
      %s228 = smul.u32 2, %s19
      %p229 = scmp.lt.s32.totalorder %s18, 1
      %s230 = scalar_select %p229, %s18, 1
      %p231 = scmp.lt.s32.totalorder %s228, 1
      %s232 = scalar_select %p231, %s228, 1
      %s233 = smul.addr %s230, 2
      %s234 = sadd.s32 %s232, %s233
      %s235 = smul.addr %s234, 8
      %s236 = scalar_lea.vmem %s3, %s235
      %s237 = smul.u32 2, %s19
      %v238 = vld [vmem:[%s220] sm:$0xff]
      %v239 = vld [vmem:[%s220 + $0x8] sm:$0xff]
      %v240 = vld [vmem:[%s224] sm:$0x1]
      %v242 = vperm.slane %v240, 0
      %v244 = vmul.f32 %v238, %v242
      %v245 = vmul.f32 %v239, %v242
      %v246 = vld [vmem:[%s227] sm:$0x1]
      %v248 = vperm.slane %v246, 0
      %v250 = vadd.f32 %v244, %v248
      %v251 = vadd.f32 %v245, %v248
      %v252 = vmax.f32 %v250, 0.0
      %v253 = vmax.f32 %v251, 0.0
      %254 = vst [vmem:[%s236] sm:$0xff] %v252
      %255 = vst [vmem:[%s236 + $0x8] sm:$0xff] %v253
      %s256 = smul.u32 2, %s19
      %p257 = scmp.lt.s32.totalorder %s18, 1
      %s258 = scalar_select %p257, %s18, 1
      %p259 = scmp.lt.s32.totalorder %s256, 1
      %s260 = scalar_select %p259, %s256, 1
      %s261 = smul.addr %s258, 2
      %s262 = sadd.s32 %s260, %s261
      %s263 = smul.addr %s262, 8
      %s264 = scalar_lea.vmem %s3, %s263
      // Predicated region
      $region33: #{generator_forward.51} parent=31 // pred_check
        %p265 = pneg %p126
      $region34: #{generator_forward.51} parent=31 // pred_check_branch
        %267 = sbr.rel (%p265) target = $region36
      $region35: #{generator_forward.51} parent=31 // pred_region
        %s268 = smul.u32 2, %s19
      $region36: #{generator_forward.51} parent=31 // pred_fallthru
        _
    $region32: #{generator_forward.51} parent=5 // pred_fallthru
      _
    %p269 = scmp.le.s32.totalorder 2, %s9
    // Predicated region
    $region37: #{generator_forward.51} parent=5 // pred_check
      %p270 = pneg %p269
    $region38: #{generator_forward.51} parent=5 // pred_check_branch
      %272 = sbr.rel (%p270) target = $region40
    $region39: #{generator_forward.51} parent=5 // pred_region
      %s273 = ssub.s32 %s9, 2
      // Predicated region
      $region41: #{generator_forward.51} parent=39 // pred_check
        %p274 = pneg %p132
      $region42: #{generator_forward.51} parent=39 // pred_check_branch
        %276 = sbr.rel (%p274) target = $region44
      $region43: #{generator_forward.51} parent=39 // pred_region
        %s277 = smul.u32 2, %s21
        %p278 = scmp.lt.s32.totalorder %s20, 1
        %s279 = scalar_select %p278, %s20, 1
        %p280 = scmp.lt.s32.totalorder %s277, 1
        %s281 = scalar_select %p280, %s277, 1
        %s282 = smul.addr %s279, 2
        %s283 = sadd.s32 %s281, %s282
        %s284 = smul.addr %s283, 8
        %s285 = scalar_lea.vmem %s3, %s284
      $region44: #{generator_forward.51} parent=39 // pred_fallthru
        _
    $region40: #{generator_forward.51} parent=5 // pred_fallthru
      _
  $region6: #{generator_forward.51} parent=0 // loop_footer
    %s13 = sadd.s32 1, %s9
  $region7: #{generator_forward.51} parent=0 // loop_footer_branch
    %8 = sbr.rel target = $region3
  $region8: #{generator_forward.51} parent=0 // loop_exit
    _

// kernel: generator_forward.50
$region0: #{generator_forward.50}
  #allocation0 [shape = 'u32[]', space=smem, size = 0x4, offset = 0x4, fixed_abs, tag = 'smem constant byte address 0x4 - core index']
  #allocation1 [shape = 'u32[72,128]{1,0:T(1,128)}', space=vmem, size = 0x9000, scoped, tag = 'internal scratch']
  %s0 = inlined_call_operand.vmem [shape: bf16[2,16,256], index: 0, kind: input, shape index: {}]
  %s1 = inlined_call_operand.vmem [shape: bf16[256,128], index: 1, kind: input, shape index: {}]
  %s2 = inlined_call_operand.vmem [shape: f32[2,16,128], index: 2, kind: output, shape index: {0}]
  %s3 = inlined_call_operand.vmem [shape: f32[2,1,8,128], index: 3, kind: output, shape index: {1}]
  %4 = xla_tuple %s2, %s3
  %s5 = sld [smem:[#allocation0]]
  $region49: #{generator_forward.50} parent=0
    _
  %s7 = ssub.s32 1, %s5
  %s8 = scalar_select 0, %s7, %s5
  loop: start=0, step=1, limit=4
  $region2: #{generator_forward.50} parent=0 // loop_pre_header
    _
  $region3: #{generator_forward.50} parent=0 // loop_header
    %s10 = sphi 0, %s14
    %p11 = scmp.ge.s32.totalorder %s10, 4
    %s17 = sphi 0, %s29
    %s18 = sphi 0, %s25
    %s19 = sphi 0, %s17
    %s20 = sphi 0, %s18
    %s21 = sphi 0, %s19
    %s22 = sphi 0, %s20
    %s34 = sphi 0, %s36
    %s37 = sphi 0, %s34
    %s38 = sphi 0, %s37
    %s54 = sphi 0, %s38
    %s58 = sphi 0, %s58
    %s60 = sphi 0, %s58
    %s61 = sphi 0, %s60
    %s75 = sphi 0, %s61
    %s83 = sphi 0, %s85
    %s86 = sphi 0, %s83
    %s87 = sphi 0, %s86
    %s103 = sphi 0, %s87
    %s111 = sphi 0, %s113
    %s114 = sphi 0, %s111
    %s115 = sphi 0, %s114
    %s131 = sphi 0, %s115
  $region4: #{generator_forward.50} parent=0 // loop_header_branch
    %13 = sbr.rel (%p11) target = $region8
  $region5: #{generator_forward.50} parent=0 // loop_body
    %s15 = ssub.s32 %s10, 1
    %s16 = ssub.s32 %s10, 2
    %s23 = sadd.s32 1, %s18
    %p24 = scmp.ge.s32.totalorder %s23, 1
    %s25 = scalar_select %p24, 0, %s23
    %s26 = sadd.s32 1, %s17
    %s27 = scalar_select %p24, %s26, %s17
    %p28 = scmp.ge.s32.totalorder %s27, 2
    %s29 = scalar_select %p28, 0, %s27
    %s30 = ssub.s32 %s17, %s29
    %s31 = ssub.s32 %s18, %s25
    %s32 = sor.u32 %s30, %s31
    %p33 = scmp.eq.s32.totalorder %s32, 0
    %s35 = sadd.s32 %s34, 1
    %s36 = scalar_select %p33, %s34, %s35
    %p39 = pneg %p33
    %p40 = scmp.eq.s32.totalorder %s10, 1
    %p41 = por %p39, %p40
    %p42 = scmp.ne.s32.totalorder %s34, %s37
    %p43 = scmp.eq.s32.totalorder %s10, 0
    %p44 = por %p42, %p43
    %p45 = scmp.ne.s32.totalorder %s34, %s37
    %p46 = scmp.eq.s32.totalorder %s15, 1
    %p47 = por %p45, %p46
    %p48 = scmp.ne.s32.totalorder %s37, %s38
    %p49 = scmp.eq.s32.totalorder %s15, 0
    %p50 = por %p48, %p49
    %p51 = scmp.ne.s32.totalorder %s37, %s38
    %p52 = scmp.eq.s32.totalorder %s16, 1
    %p53 = por %p51, %p52
    %p55 = scmp.ne.s32.totalorder %s38, %s54
    %p56 = scmp.eq.s32.totalorder %s16, 0
    %p57 = por %p55, %p56
    %s59 = sadd.s32 %s58, 1
    %p62 = scmp.eq.s32.totalorder %s10, 1
    %p63 = scmp.ne.s32.totalorder %s58, %s60
    %p64 = scmp.eq.s32.totalorder %s10, 0
    %p65 = por %p63, %p64
    %p66 = scmp.ne.s32.totalorder %s58, %s60
    %p67 = scmp.eq.s32.totalorder %s15, 1
    %p68 = por %p66, %p67
    %p69 = scmp.ne.s32.totalorder %s60, %s61
    %p70 = scmp.eq.s32.totalorder %s15, 0
    %p71 = por %p69, %p70
    %p72 = scmp.ne.s32.totalorder %s60, %s61
    %p73 = scmp.eq.s32.totalorder %s16, 1
    %p74 = por %p72, %p73
    %p76 = scmp.ne.s32.totalorder %s61, %s75
    %p77 = scmp.eq.s32.totalorder %s16, 0
    %p78 = por %p76, %p77
    %s79 = ssub.s32 %s17, %s29
    %s80 = ssub.s32 %s18, %s25
    %s81 = sor.u32 %s79, %s80
    %p82 = scmp.eq.s32.totalorder %s81, 0
    %s84 = sadd.s32 %s83, 1
    %s85 = scalar_select %p82, %s83, %s84
    %p88 = pneg %p82
    %p89 = scmp.eq.s32.totalorder %s10, 1
    %p90 = por %p88, %p89
    %p91 = scmp.ne.s32.totalorder %s83, %s86
    %p92 = scmp.eq.s32.totalorder %s10, 0
    %p93 = por %p91, %p92
    %p94 = scmp.ne.s32.totalorder %s83, %s86
    %p95 = scmp.eq.s32.totalorder %s15, 1
    %p96 = por %p94, %p95
    %p97 = scmp.ne.s32.totalorder %s86, %s87
    %p98 = scmp.eq.s32.totalorder %s15, 0
    %p99 = por %p97, %p98
    %p100 = scmp.ne.s32.totalorder %s86, %s87
    %p101 = scmp.eq.s32.totalorder %s16, 1
    %p102 = por %p100, %p101
    %p104 = scmp.ne.s32.totalorder %s87, %s103
    %p105 = scmp.eq.s32.totalorder %s16, 0
    %p106 = por %p104, %p105
    %s107 = ssub.s32 %s17, %s29
    %s108 = ssub.s32 %s18, %s25
    %s109 = sor.u32 %s107, %s108
    %p110 = scmp.eq.s32.totalorder %s109, 0
    %s112 = sadd.s32 %s111, 1
    %s113 = scalar_select %p110, %s111, %s112
    %p116 = pneg %p110
    %p117 = scmp.eq.s32.totalorder %s10, 1
    %p118 = por %p116, %p117
    %p119 = scmp.ne.s32.totalorder %s111, %s114
    %p120 = scmp.eq.s32.totalorder %s10, 0
    %p121 = por %p119, %p120
    %p122 = scmp.ne.s32.totalorder %s111, %s114
    %p123 = scmp.eq.s32.totalorder %s15, 1
    %p124 = por %p122, %p123
    %p125 = scmp.ne.s32.totalorder %s114, %s115
    %p126 = scmp.eq.s32.totalorder %s15, 0
    %p127 = por %p125, %p126
    %p128 = scmp.ne.s32.totalorder %s114, %s115
    %p129 = scmp.eq.s32.totalorder %s16, 1
    %p130 = por %p128, %p129
    %p132 = scmp.ne.s32.totalorder %s115, %s131
    %p133 = scmp.eq.s32.totalorder %s16, 0
    %p134 = por %p132, %p133
    %p135 = scmp.le.s32.totalorder 1, %s10
    %p136 = scmp.lt.s32.totalorder %s10, 3
    %p137 = pnand %p135, %p136
    %p138 = pneg %p137
    // Predicated region
    $region9: #{generator_forward.50} parent=5 // pred_check
      _
    $region10: #{generator_forward.50} parent=5 // pred_check_branch
      %140 = sbr.rel (%p137) target = $region12
    $region11: #{generator_forward.50} parent=5 // pred_region
      %s141 = ssub.s32 %s10, 1
      // Predicated region
      $region13: #{generator_forward.50} parent=11 // pred_check
        %p142 = pneg %p71
      $region14: #{generator_forward.50} parent=11 // pred_check_branch
        %144 = sbr.rel (%p142) target = $region16
      $region15: #{generator_forward.50} parent=11 // pred_region
        _
      $region16: #{generator_forward.50} parent=11 // pred_fallthru
        _
    $region12: #{generator_forward.50} parent=5 // pred_fallthru
      _
    %p145 = scmp.lt.s32.totalorder %s10, 2
    // Predicated region
    $region17: #{generator_forward.50} parent=5 // pred_check
      %p146 = pneg %p145
    $region18: #{generator_forward.50} parent=5 // pred_check_branch
      %148 = sbr.rel (%p146) target = $region20
    $region19: #{generator_forward.50} parent=5 // pred_region
      // Predicated region
      $region21: #{generator_forward.50} parent=19 // pred_check
        %p149 = pneg %p44
      $region22: #{generator_forward.50} parent=19 // pred_check_branch
        %151 = sbr.rel (%p149) target = $region24
      $region23: #{generator_forward.50} parent=19 // pred_region
        %s152 = smul.u32 2, %s18
        %p153 = scmp.lt.s32.totalorder %s17, 1
        %s154 = scalar_select %p153, %s17, 1
        %p155 = scmp.lt.s32.totalorder %s152, 1
        %s156 = scalar_select %p155, %s152, 1
        %s157 = smul.addr %s156, 2
        %s158 = smul.addr %s154, 4
        %s159 = sadd.s32 %s157, %s158
        %s160 = smul.addr %s159, 4
        %s161 = scalar_lea.vmem %s0, %s160
        %s162 = smul.u32 2, %s18
      $region24: #{generator_forward.50} parent=19 // pred_fallthru
        _
    $region20: #{generator_forward.50} parent=5 // pred_fallthru
      _
    %p163 = scmp.le.s32.totalorder 1, %s10
    %p164 = scmp.lt.s32.totalorder %s10, 3
    %p165 = pnand %p163, %p164
    %p166 = pneg %p165
    // Predicated region
    $region25: #{generator_forward.50} parent=5 // pred_check
      _
    $region26: #{generator_forward.50} parent=5 // pred_check_branch
      %168 = sbr.rel (%p165) target = $region28
    $region27: #{generator_forward.50} parent=5 // pred_region
      %s169 = ssub.s32 %s10, 1
      %s170 = smul.u32 2, %s20
      %p171 = scmp.lt.s32.totalorder %s19, 1
      %s172 = scalar_select %p171, %s19, 1
      %p173 = scmp.lt.s32.totalorder %s170, 1
      %s174 = scalar_select %p173, %s170, 1
      %s175 = smul.addr %s174, 2
      %s176 = smul.addr %s172, 4
      %s177 = sadd.s32 %s175, %s176
      %s178 = smul.addr %s177, 4
      %s179 = scalar_lea.vmem %s0, %s178
      %p180 = pneg %p50
      %p181 = pneg %p47
      %p182 = pneg %p71
      %p183 = pneg %p68
      %p184 = pneg %p99
      %p185 = pneg %p96
      %s186 = smul.u32 2, %s20
      %p187 = scmp.lt.s32.totalorder %s19, 1
      %s188 = scalar_select %p187, %s19, 1
      %p189 = scmp.lt.s32.totalorder %s186, 1
      %s190 = scalar_select %p189, %s186, 1
      %s191 = smul.addr %s188, 2
      %s192 = sadd.s32 %s190, %s191
      %s193 = smul.addr %s192, 8
      %s194 = scalar_lea.vmem %s2, %s193
      %p195 = pneg %p127
      %p196 = pneg %p124
      %p197 = scmp.lt.s32.totalorder %s19, 1
      %s198 = scalar_select %p197, %s19, 1
      %p199 = scmp.lt.s32.totalorder %s20, 0
      %s200 = scalar_select %p199, %s20, 0
      %s201 = sadd.s32 %s200, %s198
      %s202 = smul.addr %s201, 8
      %s203 = scalar_lea.vmem %s3, %s202
      %s204 = smul.u32 2, %s20
      %p205 = scmp.lt.s32.totalorder %s19, 1
      %s206 = scalar_select %p205, %s19, 1
      %p207 = scmp.lt.s32.totalorder %s204, 1
      %s208 = scalar_select %p207, %s204, 1
      %s209 = smul.addr %s208, 2
      %s210 = smul.addr %s206, 4
      %s211 = sadd.s32 %s209, %s210
      %s212 = smul.addr %s211, 4
      %s213 = scalar_lea.vmem %s0, %s212
      %s214 = smul.u32 2, %s20
      %s215 = smul.u32 2, %s20
      %p216 = scmp.lt.s32.totalorder %s19, 1
      %s217 = scalar_select %p216, %s19, 1
      %p218 = scmp.lt.s32.totalorder %s215, 1
      %s219 = scalar_select %p218, %s215, 1
      %s220 = smul.addr %s217, 2
      %s221 = sadd.s32 %s219, %s220
      %s222 = smul.addr %s221, 8
      %s223 = scalar_lea.vmem %s2, %s222
      %s224 = smul.u32 2, %s20
      %p225 = scmp.lt.s32.totalorder %s19, 1
      %s226 = scalar_select %p225, %s19, 1
      %p227 = scmp.lt.s32.totalorder %s20, 0
      %s228 = scalar_select %p227, %s20, 0
      %s229 = sadd.s32 %s228, %s226
      %s230 = smul.addr %s229, 8
      %s231 = scalar_lea.vmem %s3, %s230
      %v232 = vld [vmem:[%s213] sm:$0xff]
      %v233 = vld [vmem:[%s213 + $0x8] sm:$0xff]
      %v234 = vld [vmem:[%s1] sm:$0xf]
      %v235 = vld [vmem:[%s1 + $0x4] sm:$0xf]
      %v236 = vld [vmem:[%s1 + $0x8] sm:$0xf]
      %v237 = vld [vmem:[%s1 + $0xc] sm:$0xf]
      %v238 = vld [vmem:[%s1 + $0x10] sm:$0xf]
      %v239 = vld [vmem:[%s1 + $0x14] sm:$0xf]
      %v240 = vld [vmem:[%s1 + $0x18] sm:$0xf]
      %v241 = vld [vmem:[%s1 + $0x1c] sm:$0xf]
      %v242 = vld [vmem:[%s1 + $0x20] sm:$0xf]
      %v243 = vld [vmem:[%s1 + $0x24] sm:$0xf]
      %v244 = vld [vmem:[%s1 + $0x28] sm:$0xf]
      %v245 = vld [vmem:[%s1 + $0x2c] sm:$0xf]
      %v246 = vld [vmem:[%s1 + $0x30] sm:$0xf]
      %v247 = vld [vmem:[%s1 + $0x34] sm:$0xf]
      %v248 = vld [vmem:[%s1 + $0x38] sm:$0xf]
      %v249 = vld [vmem:[%s1 + $0x3c] sm:$0xf]
      %v250 = vld [vmem:[%s1 + $0x40] sm:$0xf]
      %v251 = vld [vmem:[%s1 + $0x44] sm:$0xf]
      %v252 = vld [vmem:[%s1 + $0x48] sm:$0xf]
      %v253 = vld [vmem:[%s1 + $0x4c] sm:$0xf]
      %v254 = vld [vmem:[%s1 + $0x50] sm:$0xf]
      %v255 = vld [vmem:[%s1 + $0x54] sm:$0xf]
      %v256 = vld [vmem:[%s1 + $0x58] sm:$0xf]
      %v257 = vld [vmem:[%s1 + $0x5c] sm:$0xf]
      %v258 = vld [vmem:[%s1 + $0x60] sm:$0xf]
      %v259 = vld [vmem:[%s1 + $0x64] sm:$0xf]
      %v260 = vld [vmem:[%s1 + $0x68] sm:$0xf]
      %v261 = vld [vmem:[%s1 + $0x6c] sm:$0xf]
      %v262 = vld [vmem:[%s1 + $0x70] sm:$0xf]
      %v263 = vld [vmem:[%s1 + $0x74] sm:$0xf]
      %v264 = vld [vmem:[%s1 + $0x78] sm:$0xf]
      %v265 = vld [vmem:[%s1 + $0x7c] sm:$0xf]
      %v268 = vunpack.c.l.b16 %v232
      %v269 = vunpack.c.h.b16 %v232
      %v270 = vunpack.c.l.b16 %v233
      %v271 = vunpack.c.h.b16 %v233
      %v272 = vpack.c.b16 %v270, %v268
      %v273 = vpack.c.b16 %v271, %v269
      %v308 = vunpack.c.l.b16 %v234
      %v309 = vunpack.c.l.b16 %v235
      %v310 = vunpack.c.l.b16 %v236
      %v311 = vunpack.c.l.b16 %v237
      %v312 = vunpack.c.l.b16 %v238
      %v313 = vunpack.c.l.b16 %v239
      %v314 = vunpack.c.l.b16 %v240
      %v315 = vunpack.c.l.b16 %v241
      %v316 = vunpack.c.l.b16 %v242
      %v317 = vunpack.c.l.b16 %v243
      %v318 = vunpack.c.l.b16 %v244
      %v319 = vunpack.c.l.b16 %v245
      %v320 = vunpack.c.l.b16 %v246
      %v321 = vunpack.c.l.b16 %v247
      %v322 = vunpack.c.l.b16 %v248
      %v323 = vunpack.c.l.b16 %v249
      %v324 = vunpack.c.l.b16 %v250
      %v325 = vunpack.c.l.b16 %v251
      %v326 = vunpack.c.l.b16 %v252
      %v327 = vunpack.c.l.b16 %v253
      %v328 = vunpack.c.l.b16 %v254
      %v329 = vunpack.c.l.b16 %v255
      %v330 = vunpack.c.l.b16 %v256
      %v331 = vunpack.c.l.b16 %v257
      %v332 = vunpack.c.l.b16 %v258
      %v333 = vunpack.c.l.b16 %v259
      %v334 = vunpack.c.l.b16 %v260
      %v335 = vunpack.c.l.b16 %v261
      %v336 = vunpack.c.l.b16 %v262
      %v337 = vunpack.c.l.b16 %v263
      %v338 = vunpack.c.l.b16 %v264
      %v339 = vunpack.c.l.b16 %v265
      %v340 = vpack.c.b16 %v309, %v308
      %v341 = vpack.c.b16 %v311, %v310
      %v342 = vpack.c.b16 %v313, %v312
      %v343 = vpack.c.b16 %v315, %v314
      %v344 = vpack.c.b16 %v317, %v316
      %v345 = vpack.c.b16 %v319, %v318
      %v346 = vpack.c.b16 %v321, %v320
      %v347 = vpack.c.b16 %v323, %v322
      %v348 = vpack.c.b16 %v325, %v324
      %v349 = vpack.c.b16 %v327, %v326
      %v350 = vpack.c.b16 %v329, %v328
      %v351 = vpack.c.b16 %v331, %v330
      %v352 = vpack.c.b16 %v333, %v332
      %v353 = vpack.c.b16 %v335, %v334
      %v354 = vpack.c.b16 %v337, %v336
      %v355 = vpack.c.b16 %v339, %v338
      %372 = vmatpush.bf16.msra.mxu0 %v347
      %373 = vmatpush.bf16.msra.mxu0 %v346
      %374 = vmatpush.bf16.msra.mxu0 %v345
      %375 = vmatpush.bf16.msra.mxu0 %v344
      %376 = vmatpush.bf16.msra.mxu0 %v343
      %377 = vmatpush.bf16.msra.mxu0 %v342
      %378 = vmatpush.bf16.msra.mxu0 %v341
      %379 = vmatpush.bf16.msra.mxu0 %v340
      %380 = vmatmul.bf16.gmra.mxu0 %v272
      %v381 = vpop.f32.mrf.mxu0
      %v382 = vadd.f32 0.0, %v381
      %v383 = vpop.f32.mrf.mxu0
      %v384 = vadd.f32 0.0, %v383
      %385 = vdwg.mxu0
      %386 = vmatpush.bf16.msra.mxu0 %v355
      %387 = vmatpush.bf16.msra.mxu0 %v354
      %388 = vmatpush.bf16.msra.mxu0 %v353
      %389 = vmatpush.bf16.msra.mxu0 %v352
      %390 = vmatpush.bf16.msra.mxu0 %v351
      %391 = vmatpush.bf16.msra.mxu0 %v350
      %392 = vmatpush.bf16.msra.mxu0 %v349
      %393 = vmatpush.bf16.msra.mxu0 %v348
      %394 = vmatmul.bf16.gmra.mxu0 %v273
      %v395 = vpop.f32.mrf.mxu0
      %v396 = vadd.f32 %v382, %v395
      %v397 = vpop.f32.mrf.mxu0
      %v398 = vadd.f32 %v384, %v397
      %399 = vdwg.mxu0
      %400 = vst [vmem:[%s223] sm:$0xff] %v396
      %401 = vst [vmem:[%s223 + $0x8] sm:$0xff] %v398
      %v402 = vadd.f32 %v396, %v398
      %v403 = vrot.slane %v402, 4
      %v404 = vadd.f32 %v402, %v403
      %v405 = vrot.slane %v404, 2
      %v406 = vadd.f32 %v404, %v405
      %v407 = vrot.slane %v406, 1
      %v408 = vadd.f32 %v406, %v407
      %v409 = vmul.f32 %v396, %v396
      %v410 = vmul.f32 %v398, %v398
      %v411 = vadd.f32 %v409, %v410
      %v412 = vrot.slane %v411, 4
      %v413 = vadd.f32 %v411, %v412
      %v414 = vrot.slane %v413, 2
      %v415 = vadd.f32 %v413, %v414
      %v416 = vrot.slane %v415, 1
      %v417 = vadd.f32 %v415, %v416
      %v418 = vlaneseq
      %v419 = vshrl.u32 %v418, 7
      %vm420 = vcmp.eq.s32.totalorder %v419, 0
      %vm421 = vcmp.eq.s32.totalorder %v419, 1
      %v422 = vsel %vm421, %v417, 0.0
      %v423 = vsel %vm420, %v408, %v422
      %424 = vst [vmem:[%s231] sm:$0xff] %v423
      %s425 = smul.u32 2, %s20
      %p426 = scmp.lt.s32.totalorder %s19, 1
      %s427 = scalar_select %p426, %s19, 1
      %p428 = scmp.lt.s32.totalorder %s425, 1
      %s429 = scalar_select %p428, %s425, 1
      %s430 = smul.addr %s427, 2
      %s431 = sadd.s32 %s429, %s430
      %s432 = smul.addr %s431, 8
      %s433 = scalar_lea.vmem %s2, %s432
      %p434 = scmp.lt.s32.totalorder %s19, 1
      %s435 = scalar_select %p434, %s19, 1
      %p436 = scmp.lt.s32.totalorder %s20, 0
      %s437 = scalar_select %p436, %s20, 0
      %s438 = sadd.s32 %s437, %s435
      %s439 = smul.addr %s438, 8
      %s440 = scalar_lea.vmem %s3, %s439
      // Predicated region
      $region29: #{generator_forward.50} parent=27 // pred_check
        %p441 = pneg %p96
      $region30: #{generator_forward.50} parent=27 // pred_check_branch
        %443 = sbr.rel (%p441) target = $region32
      $region31: #{generator_forward.50} parent=27 // pred_region
        %s444 = smul.u32 2, %s20
      $region32: #{generator_forward.50} parent=27 // pred_fallthru
        _
      // Predicated region
      $region33: #{generator_forward.50} parent=27 // pred_check
        %p445 = pneg %p124
      $region34: #{generator_forward.50} parent=27 // pred_check_branch
        %447 = sbr.rel (%p445) target = $region36
      $region35: #{generator_forward.50} parent=27 // pred_region
        _
      $region36: #{generator_forward.50} parent=27 // pred_fallthru
        _
    $region28: #{generator_forward.50} parent=5 // pred_fallthru
      _
    %p448 = scmp.le.s32.totalorder 2, %s10
    // Predicated region
    $region37: #{generator_forward.50} parent=5 // pred_check
      %p449 = pneg %p448
    $region38: #{generator_forward.50} parent=5 // pred_check_branch
      %451 = sbr.rel (%p449) target = $region40
    $region39: #{generator_forward.50} parent=5 // pred_region
      %s452 = ssub.s32 %s10, 2
      // Predicated region
      $region41: #{generator_forward.50} parent=39 // pred_check
        %p453 = pneg %p102
      $region42: #{generator_forward.50} parent=39 // pred_check_branch
        %455 = sbr.rel (%p453) target = $region44
      $region43: #{generator_forward.50} parent=39 // pred_region
        %s456 = smul.u32 2, %s22
        %p457 = scmp.lt.s32.totalorder %s21, 1
        %s458 = scalar_select %p457, %s21, 1
        %p459 = scmp.lt.s32.totalorder %s456, 1
        %s460 = scalar_select %p459, %s456, 1
        %s461 = smul.addr %s458, 2
        %s462 = sadd.s32 %s460, %s461
        %s463 = smul.addr %s462, 8
        %s464 = scalar_lea.vmem %s2, %s463
      $region44: #{generator_forward.50} parent=39 // pred_fallthru
        _
      // Predicated region
      $region45: #{generator_forward.50} parent=39 // pred_check
        %p465 = pneg %p130
      $region46: #{generator_forward.50} parent=39 // pred_check_branch
        %467 = sbr.rel (%p465) target = $region48
      $region47: #{generator_forward.50} parent=39 // pred_region
        %p468 = scmp.lt.s32.totalorder %s21, 1
        %s469 = scalar_select %p468, %s21, 1
        %p470 = scmp.lt.s32.totalorder %s22, 0
        %s471 = scalar_select %p470, %s22, 0
        %s472 = sadd.s32 %s471, %s469
        %s473 = smul.addr %s472, 8
        %s474 = scalar_lea.vmem %s3, %s473
      $region48: #{generator_forward.50} parent=39 // pred_fallthru
        _
    $region40: #{generator_forward.50} parent=5 // pred_fallthru
      _
  $region6: #{generator_forward.50} parent=0 // loop_footer
    %s14 = sadd.s32 1, %s10
  $region7: #{generator_forward.50} parent=0 // loop_footer_branch
    %9 = sbr.rel target = $region3
  $region8: #{generator_forward.50} parent=0 // loop_exit
    _

// kernel: generator_forward.56
$region0: #{generator_forward.56}
  #allocation0 [shape = 'u32[]', space=smem, size = 0x4, offset = 0x4, fixed_abs, tag = 'smem constant byte address 0x4 - core index']
  #allocation1 [shape = 'u32[72,128]{1,0:T(1,128)}', space=vmem, size = 0x9000, scoped, tag = 'internal scratch']
  %s0 = inlined_call_operand.vmem [shape: bf16[2,16,384], index: 0, kind: input, shape index: {}]
  %s1 = inlined_call_operand.vmem [shape: bf16[384,128], index: 1, kind: input, shape index: {}]
  %s2 = inlined_call_operand.vmem [shape: f32[2,16,128], index: 2, kind: output, shape index: {0}]
  %s3 = inlined_call_operand.vmem [shape: f32[2,1,8,128], index: 3, kind: output, shape index: {1}]
  %4 = xla_tuple %s2, %s3
  %s5 = sld [smem:[#allocation0]]
  $region49: #{generator_forward.56} parent=0
    _
  %s7 = ssub.s32 1, %s5
  %s8 = scalar_select 0, %s7, %s5
  loop: start=0, step=1, limit=4
  $region2: #{generator_forward.56} parent=0 // loop_pre_header
    _
  $region3: #{generator_forward.56} parent=0 // loop_header
    %s10 = sphi 0, %s14
    %p11 = scmp.ge.s32.totalorder %s10, 4
    %s17 = sphi 0, %s29
    %s18 = sphi 0, %s25
    %s19 = sphi 0, %s17
    %s20 = sphi 0, %s18
    %s21 = sphi 0, %s19
    %s22 = sphi 0, %s20
    %s34 = sphi 0, %s36
    %s37 = sphi 0, %s34
    %s38 = sphi 0, %s37
    %s54 = sphi 0, %s38
    %s58 = sphi 0, %s58
    %s60 = sphi 0, %s58
    %s61 = sphi 0, %s60
    %s75 = sphi 0, %s61
    %s83 = sphi 0, %s85
    %s86 = sphi 0, %s83
    %s87 = sphi 0, %s86
    %s103 = sphi 0, %s87
    %s111 = sphi 0, %s113
    %s114 = sphi 0, %s111
    %s115 = sphi 0, %s114
    %s131 = sphi 0, %s115
  $region4: #{generator_forward.56} parent=0 // loop_header_branch
    %13 = sbr.rel (%p11) target = $region8
  $region5: #{generator_forward.56} parent=0 // loop_body
    %s15 = ssub.s32 %s10, 1
    %s16 = ssub.s32 %s10, 2
    %s23 = sadd.s32 1, %s18
    %p24 = scmp.ge.s32.totalorder %s23, 1
    %s25 = scalar_select %p24, 0, %s23
    %s26 = sadd.s32 1, %s17
    %s27 = scalar_select %p24, %s26, %s17
    %p28 = scmp.ge.s32.totalorder %s27, 2
    %s29 = scalar_select %p28, 0, %s27
    %s30 = ssub.s32 %s17, %s29
    %s31 = ssub.s32 %s18, %s25
    %s32 = sor.u32 %s30, %s31
    %p33 = scmp.eq.s32.totalorder %s32, 0
    %s35 = sadd.s32 %s34, 1
    %s36 = scalar_select %p33, %s34, %s35
    %p39 = pneg %p33
    %p40 = scmp.eq.s32.totalorder %s10, 1
    %p41 = por %p39, %p40
    %p42 = scmp.ne.s32.totalorder %s34, %s37
    %p43 = scmp.eq.s32.totalorder %s10, 0
    %p44 = por %p42, %p43
    %p45 = scmp.ne.s32.totalorder %s34, %s37
    %p46 = scmp.eq.s32.totalorder %s15, 1
    %p47 = por %p45, %p46
    %p48 = scmp.ne.s32.totalorder %s37, %s38
    %p49 = scmp.eq.s32.totalorder %s15, 0
    %p50 = por %p48, %p49
    %p51 = scmp.ne.s32.totalorder %s37, %s38
    %p52 = scmp.eq.s32.totalorder %s16, 1
    %p53 = por %p51, %p52
    %p55 = scmp.ne.s32.totalorder %s38, %s54
    %p56 = scmp.eq.s32.totalorder %s16, 0
    %p57 = por %p55, %p56
    %s59 = sadd.s32 %s58, 1
    %p62 = scmp.eq.s32.totalorder %s10, 1
    %p63 = scmp.ne.s32.totalorder %s58, %s60
    %p64 = scmp.eq.s32.totalorder %s10, 0
    %p65 = por %p63, %p64
    %p66 = scmp.ne.s32.totalorder %s58, %s60
    %p67 = scmp.eq.s32.totalorder %s15, 1
    %p68 = por %p66, %p67
    %p69 = scmp.ne.s32.totalorder %s60, %s61
    %p70 = scmp.eq.s32.totalorder %s15, 0
    %p71 = por %p69, %p70
    %p72 = scmp.ne.s32.totalorder %s60, %s61
    %p73 = scmp.eq.s32.totalorder %s16, 1
    %p74 = por %p72, %p73
    %p76 = scmp.ne.s32.totalorder %s61, %s75
    %p77 = scmp.eq.s32.totalorder %s16, 0
    %p78 = por %p76, %p77
    %s79 = ssub.s32 %s17, %s29
    %s80 = ssub.s32 %s18, %s25
    %s81 = sor.u32 %s79, %s80
    %p82 = scmp.eq.s32.totalorder %s81, 0
    %s84 = sadd.s32 %s83, 1
    %s85 = scalar_select %p82, %s83, %s84
    %p88 = pneg %p82
    %p89 = scmp.eq.s32.totalorder %s10, 1
    %p90 = por %p88, %p89
    %p91 = scmp.ne.s32.totalorder %s83, %s86
    %p92 = scmp.eq.s32.totalorder %s10, 0
    %p93 = por %p91, %p92
    %p94 = scmp.ne.s32.totalorder %s83, %s86
    %p95 = scmp.eq.s32.totalorder %s15, 1
    %p96 = por %p94, %p95
    %p97 = scmp.ne.s32.totalorder %s86, %s87
    %p98 = scmp.eq.s32.totalorder %s15, 0
    %p99 = por %p97, %p98
    %p100 = scmp.ne.s32.totalorder %s86, %s87
    %p101 = scmp.eq.s32.totalorder %s16, 1
    %p102 = por %p100, %p101
    %p104 = scmp.ne.s32.totalorder %s87, %s103
    %p105 = scmp.eq.s32.totalorder %s16, 0
    %p106 = por %p104, %p105
    %s107 = ssub.s32 %s17, %s29
    %s108 = ssub.s32 %s18, %s25
    %s109 = sor.u32 %s107, %s108
    %p110 = scmp.eq.s32.totalorder %s109, 0
    %s112 = sadd.s32 %s111, 1
    %s113 = scalar_select %p110, %s111, %s112
    %p116 = pneg %p110
    %p117 = scmp.eq.s32.totalorder %s10, 1
    %p118 = por %p116, %p117
    %p119 = scmp.ne.s32.totalorder %s111, %s114
    %p120 = scmp.eq.s32.totalorder %s10, 0
    %p121 = por %p119, %p120
    %p122 = scmp.ne.s32.totalorder %s111, %s114
    %p123 = scmp.eq.s32.totalorder %s15, 1
    %p124 = por %p122, %p123
    %p125 = scmp.ne.s32.totalorder %s114, %s115
    %p126 = scmp.eq.s32.totalorder %s15, 0
    %p127 = por %p125, %p126
    %p128 = scmp.ne.s32.totalorder %s114, %s115
    %p129 = scmp.eq.s32.totalorder %s16, 1
    %p130 = por %p128, %p129
    %p132 = scmp.ne.s32.totalorder %s115, %s131
    %p133 = scmp.eq.s32.totalorder %s16, 0
    %p134 = por %p132, %p133
    %p135 = scmp.le.s32.totalorder 1, %s10
    %p136 = scmp.lt.s32.totalorder %s10, 3
    %p137 = pnand %p135, %p136
    %p138 = pneg %p137
    // Predicated region
    $region9: #{generator_forward.56} parent=5 // pred_check
      _
    $region10: #{generator_forward.56} parent=5 // pred_check_branch
      %140 = sbr.rel (%p137) target = $region12
    $region11: #{generator_forward.56} parent=5 // pred_region
      %s141 = ssub.s32 %s10, 1
      // Predicated region
      $region13: #{generator_forward.56} parent=11 // pred_check
        %p142 = pneg %p71
      $region14: #{generator_forward.56} parent=11 // pred_check_branch
        %144 = sbr.rel (%p142) target = $region16
      $region15: #{generator_forward.56} parent=11 // pred_region
        _
      $region16: #{generator_forward.56} parent=11 // pred_fallthru
        _
    $region12: #{generator_forward.56} parent=5 // pred_fallthru
      _
    %p145 = scmp.lt.s32.totalorder %s10, 2
    // Predicated region
    $region17: #{generator_forward.56} parent=5 // pred_check
      %p146 = pneg %p145
    $region18: #{generator_forward.56} parent=5 // pred_check_branch
      %148 = sbr.rel (%p146) target = $region20
    $region19: #{generator_forward.56} parent=5 // pred_region
      // Predicated region
      $region21: #{generator_forward.56} parent=19 // pred_check
        %p149 = pneg %p44
      $region22: #{generator_forward.56} parent=19 // pred_check_branch
        %151 = sbr.rel (%p149) target = $region24
      $region23: #{generator_forward.56} parent=19 // pred_region
        %s152 = smul.u32 2, %s18
        %p153 = scmp.lt.s32.totalorder %s17, 1
        %s154 = scalar_select %p153, %s17, 1
        %p155 = scmp.lt.s32.totalorder %s152, 1
        %s156 = scalar_select %p155, %s152, 1
        %s157 = smul.addr %s156, 3
        %s158 = smul.addr %s154, 6
        %s159 = sadd.s32 %s157, %s158
        %s160 = smul.addr %s159, 4
        %s161 = scalar_lea.vmem %s0, %s160
        %s162 = smul.u32 2, %s18
      $region24: #{generator_forward.56} parent=19 // pred_fallthru
        _
    $region20: #{generator_forward.56} parent=5 // pred_fallthru
      _
    %p163 = scmp.le.s32.totalorder 1, %s10
    %p164 = scmp.lt.s32.totalorder %s10, 3
    %p165 = pnand %p163, %p164
    %p166 = pneg %p165
    // Predicated region
    $region25: #{generator_forward.56} parent=5 // pred_check
      _
    $region26: #{generator_forward.56} parent=5 // pred_check_branch
      %168 = sbr.rel (%p165) target = $region28
    $region27: #{generator_forward.56} parent=5 // pred_region
      %s169 = ssub.s32 %s10, 1
      %s170 = smul.u32 2, %s20
      %p171 = scmp.lt.s32.totalorder %s19, 1
      %s172 = scalar_select %p171, %s19, 1
      %p173 = scmp.lt.s32.totalorder %s170, 1
      %s174 = scalar_select %p173, %s170, 1
      %s175 = smul.addr %s174, 3
      %s176 = smul.addr %s172, 6
      %s177 = sadd.s32 %s175, %s176
      %s178 = smul.addr %s177, 4
      %s179 = scalar_lea.vmem %s0, %s178
      %p180 = pneg %p50
      %p181 = pneg %p47
      %p182 = pneg %p71
      %p183 = pneg %p68
      %p184 = pneg %p99
      %p185 = pneg %p96
      %s186 = smul.u32 2, %s20
      %p187 = scmp.lt.s32.totalorder %s19, 1
      %s188 = scalar_select %p187, %s19, 1
      %p189 = scmp.lt.s32.totalorder %s186, 1
      %s190 = scalar_select %p189, %s186, 1
      %s191 = smul.addr %s188, 2
      %s192 = sadd.s32 %s190, %s191
      %s193 = smul.addr %s192, 8
      %s194 = scalar_lea.vmem %s2, %s193
      %p195 = pneg %p127
      %p196 = pneg %p124
      %p197 = scmp.lt.s32.totalorder %s19, 1
      %s198 = scalar_select %p197, %s19, 1
      %p199 = scmp.lt.s32.totalorder %s20, 0
      %s200 = scalar_select %p199, %s20, 0
      %s201 = sadd.s32 %s200, %s198
      %s202 = smul.addr %s201, 8
      %s203 = scalar_lea.vmem %s3, %s202
      %s204 = smul.u32 2, %s20
      %p205 = scmp.lt.s32.totalorder %s19, 1
      %s206 = scalar_select %p205, %s19, 1
      %p207 = scmp.lt.s32.totalorder %s204, 1
      %s208 = scalar_select %p207, %s204, 1
      %s209 = smul.addr %s208, 3
      %s210 = smul.addr %s206, 6
      %s211 = sadd.s32 %s209, %s210
      %s212 = smul.addr %s211, 4
      %s213 = scalar_lea.vmem %s0, %s212
      %s214 = smul.u32 2, %s20
      %s215 = smul.u32 2, %s20
      %p216 = scmp.lt.s32.totalorder %s19, 1
      %s217 = scalar_select %p216, %s19, 1
      %p218 = scmp.lt.s32.totalorder %s215, 1
      %s219 = scalar_select %p218, %s215, 1
      %s220 = smul.addr %s217, 2
      %s221 = sadd.s32 %s219, %s220
      %s222 = smul.addr %s221, 8
      %s223 = scalar_lea.vmem %s2, %s222
      %s224 = smul.u32 2, %s20
      %p225 = scmp.lt.s32.totalorder %s19, 1
      %s226 = scalar_select %p225, %s19, 1
      %p227 = scmp.lt.s32.totalorder %s20, 0
      %s228 = scalar_select %p227, %s20, 0
      %s229 = sadd.s32 %s228, %s226
      %s230 = smul.addr %s229, 8
      %s231 = scalar_lea.vmem %s3, %s230
      %v232 = vld [vmem:[%s213] sm:$0xff]
      %v233 = vld [vmem:[%s213 + $0x8] sm:$0xf]
      %v234 = vld [vmem:[%s213 + $0xc] sm:$0xff]
      %v235 = vld [vmem:[%s213 + $0x14] sm:$0xf]
      %v236 = vld [vmem:[%s1] sm:$0xf]
      %v237 = vld [vmem:[%s1 + $0x4] sm:$0xf]
      %v238 = vld [vmem:[%s1 + $0x8] sm:$0xf]
      %v239 = vld [vmem:[%s1 + $0xc] sm:$0xf]
      %v240 = vld [vmem:[%s1 + $0x10] sm:$0xf]
      %v241 = vld [vmem:[%s1 + $0x14] sm:$0xf]
      %v242 = vld [vmem:[%s1 + $0x18] sm:$0xf]
      %v243 = vld [vmem:[%s1 + $0x1c] sm:$0xf]
      %v244 = vld [vmem:[%s1 + $0x20] sm:$0xf]
      %v245 = vld [vmem:[%s1 + $0x24] sm:$0xf]
      %v246 = vld [vmem:[%s1 + $0x28] sm:$0xf]
      %v247 = vld [vmem:[%s1 + $0x2c] sm:$0xf]
      %v248 = vld [vmem:[%s1 + $0x30] sm:$0xf]
      %v249 = vld [vmem:[%s1 + $0x34] sm:$0xf]
      %v250 = vld [vmem:[%s1 + $0x38] sm:$0xf]
      %v251 = vld [vmem:[%s1 + $0x3c] sm:$0xf]
      %v252 = vld [vmem:[%s1 + $0x40] sm:$0xf]
      %v253 = vld [vmem:[%s1 + $0x44] sm:$0xf]
      %v254 = vld [vmem:[%s1 + $0x48] sm:$0xf]
      %v255 = vld [vmem:[%s1 + $0x4c] sm:$0xf]
      %v256 = vld [vmem:[%s1 + $0x50] sm:$0xf]
      %v257 = vld [vmem:[%s1 + $0x54] sm:$0xf]
      %v258 = vld [vmem:[%s1 + $0x58] sm:$0xf]
      %v259 = vld [vmem:[%s1 + $0x5c] sm:$0xf]
      %v260 = vld [vmem:[%s1 + $0x60] sm:$0xf]
      %v261 = vld [vmem:[%s1 + $0x64] sm:$0xf]
      %v262 = vld [vmem:[%s1 + $0x68] sm:$0xf]
      %v263 = vld [vmem:[%s1 + $0x6c] sm:$0xf]
      %v264 = vld [vmem:[%s1 + $0x70] sm:$0xf]
      %v265 = vld [vmem:[%s1 + $0x74] sm:$0xf]
      %v266 = vld [vmem:[%s1 + $0x78] sm:$0xf]
      %v267 = vld [vmem:[%s1 + $0x7c] sm:$0xf]
      %v268 = vld [vmem:[%s1 + $0x80] sm:$0xf]
      %v269 = vld [vmem:[%s1 + $0x84] sm:$0xf]
      %v270 = vld [vmem:[%s1 + $0x88] sm:$0xf]
      %v271 = vld [vmem:[%s1 + $0x8c] sm:$0xf]
      %v272 = vld [vmem:[%s1 + $0x90] sm:$0xf]
      %v273 = vld [vmem:[%s1 + $0x94] sm:$0xf]
      %v274 = vld [vmem:[%s1 + $0x98] sm:$0xf]
      %v275 = vld [vmem:[%s1 + $0x9c] sm:$0xf]
      %v276 = vld [vmem:[%s1 + $0xa0] sm:$0xf]
      %v277 = vld [vmem:[%s1 + $0xa4] sm:$0xf]
      %v278 = vld [vmem:[%s1 + $0xa8] sm:$0xf]
      %v279 = vld [vmem:[%s1 + $0xac] sm:$0xf]
      %v280 = vld [vmem:[%s1 + $0xb0] sm:$0xf]
      %v281 = vld [vmem:[%s1 + $0xb4] sm:$0xf]
      %v282 = vld [vmem:[%s1 + $0xb8] sm:$0xf]
      %v283 = vld [vmem:[%s1 + $0xbc] sm:$0xf]
      %v288 = vunpack.c.l.b16 %v232
      %v289 = vunpack.c.h.b16 %v232
      %v290 = vunpack.c.l.b16 %v233
      %v291 = vunpack.c.l.b16 %v234
      %v292 = vunpack.c.h.b16 %v234
      %v293 = vunpack.c.l.b16 %v235
      %v294 = vpack.c.b16 %v291, %v288
      %v295 = vpack.c.b16 %v292, %v289
      %v296 = vpack.c.b16 %v293, %v290
      %v348 = vunpack.c.l.b16 %v236
      %v349 = vunpack.c.l.b16 %v237
      %v350 = vunpack.c.l.b16 %v238
      %v351 = vunpack.c.l.b16 %v239
      %v352 = vunpack.c.l.b16 %v240
      %v353 = vunpack.c.l.b16 %v241
      %v354 = vunpack.c.l.b16 %v242
      %v355 = vunpack.c.l.b16 %v243
      %v356 = vunpack.c.l.b16 %v244
      %v357 = vunpack.c.l.b16 %v245
      %v358 = vunpack.c.l.b16 %v246
      %v359 = vunpack.c.l.b16 %v247
      %v360 = vunpack.c.l.b16 %v248
      %v361 = vunpack.c.l.b16 %v249
      %v362 = vunpack.c.l.b16 %v250
      %v363 = vunpack.c.l.b16 %v251
      %v364 = vunpack.c.l.b16 %v252
      %v365 = vunpack.c.l.b16 %v253
      %v366 = vunpack.c.l.b16 %v254
      %v367 = vunpack.c.l.b16 %v255
      %v368 = vunpack.c.l.b16 %v256
      %v369 = vunpack.c.l.b16 %v257
      %v370 = vunpack.c.l.b16 %v258
      %v371 = vunpack.c.l.b16 %v259
      %v372 = vunpack.c.l.b16 %v260
      %v373 = vunpack.c.l.b16 %v261
      %v374 = vunpack.c.l.b16 %v262
      %v375 = vunpack.c.l.b16 %v263
      %v376 = vunpack.c.l.b16 %v264
      %v377 = vunpack.c.l.b16 %v265
      %v378 = vunpack.c.l.b16 %v266
      %v379 = vunpack.c.l.b16 %v267
      %v380 = vunpack.c.l.b16 %v268
      %v381 = vunpack.c.l.b16 %v269
      %v382 = vunpack.c.l.b16 %v270
      %v383 = vunpack.c.l.b16 %v271
      %v384 = vunpack.c.l.b16 %v272
      %v385 = vunpack.c.l.b16 %v273
      %v386 = vunpack.c.l.b16 %v274
      %v387 = vunpack.c.l.b16 %v275
      %v388 = vunpack.c.l.b16 %v276
      %v389 = vunpack.c.l.b16 %v277
      %v390 = vunpack.c.l.b16 %v278
      %v391 = vunpack.c.l.b16 %v279
      %v392 = vunpack.c.l.b16 %v280
      %v393 = vunpack.c.l.b16 %v281
      %v394 = vunpack.c.l.b16 %v282
      %v395 = vunpack.c.l.b16 %v283
      %v396 = vpack.c.b16 %v349, %v348
      %v397 = vpack.c.b16 %v351, %v350
      %v398 = vpack.c.b16 %v353, %v352
      %v399 = vpack.c.b16 %v355, %v354
      %v400 = vpack.c.b16 %v357, %v356
      %v401 = vpack.c.b16 %v359, %v358
      %v402 = vpack.c.b16 %v361, %v360
      %v403 = vpack.c.b16 %v363, %v362
      %v404 = vpack.c.b16 %v365, %v364
      %v405 = vpack.c.b16 %v367, %v366
      %v406 = vpack.c.b16 %v369, %v368
      %v407 = vpack.c.b16 %v371, %v370
      %v408 = vpack.c.b16 %v373, %v372
      %v409 = vpack.c.b16 %v375, %v374
      %v410 = vpack.c.b16 %v377, %v376
      %v411 = vpack.c.b16 %v379, %v378
      %v412 = vpack.c.b16 %v381, %v380
      %v413 = vpack.c.b16 %v383, %v382
      %v414 = vpack.c.b16 %v385, %v384
      %v415 = vpack.c.b16 %v387, %v386
      %v416 = vpack.c.b16 %v389, %v388
      %v417 = vpack.c.b16 %v391, %v390
      %v418 = vpack.c.b16 %v393, %v392
      %v419 = vpack.c.b16 %v395, %v394
      %444 = vmatpush.bf16.msra.mxu0 %v403
      %445 = vmatpush.bf16.msra.mxu0 %v402
      %446 = vmatpush.bf16.msra.mxu0 %v401
      %447 = vmatpush.bf16.msra.mxu0 %v400
      %448 = vmatpush.bf16.msra.mxu0 %v399
      %449 = vmatpush.bf16.msra.mxu0 %v398
      %450 = vmatpush.bf16.msra.mxu0 %v397
      %451 = vmatpush.bf16.msra.mxu0 %v396
      %452 = vmatmul.bf16.gmra.mxu0 %v294
      %v453 = vpop.f32.mrf.mxu0
      %v454 = vadd.f32 0.0, %v453
      %v455 = vpop.f32.mrf.mxu0
      %v456 = vadd.f32 0.0, %v455
      %457 = vdwg.mxu0
      %458 = vmatpush.bf16.msra.mxu0 %v411
      %459 = vmatpush.bf16.msra.mxu0 %v410
      %460 = vmatpush.bf16.msra.mxu0 %v409
      %461 = vmatpush.bf16.msra.mxu0 %v408
      %462 = vmatpush.bf16.msra.mxu0 %v407
      %463 = vmatpush.bf16.msra.mxu0 %v406
      %464 = vmatpush.bf16.msra.mxu0 %v405
      %465 = vmatpush.bf16.msra.mxu0 %v404
      %466 = vmatmul.bf16.gmra.mxu0 %v295
      %v467 = vpop.f32.mrf.mxu0
      %v468 = vadd.f32 %v454, %v467
      %v469 = vpop.f32.mrf.mxu0
      %v470 = vadd.f32 %v456, %v469
      %471 = vdwg.mxu0
      %472 = vmatpush.bf16.msra.mxu0 %v419
      %473 = vmatpush.bf16.msra.mxu0 %v418
      %474 = vmatpush.bf16.msra.mxu0 %v417
      %475 = vmatpush.bf16.msra.mxu0 %v416
      %476 = vmatpush.bf16.msra.mxu0 %v415
      %477 = vmatpush.bf16.msra.mxu0 %v414
      %478 = vmatpush.bf16.msra.mxu0 %v413
      %479 = vmatpush.bf16.msra.mxu0 %v412
      %480 = vmatmul.bf16.gmra.mxu0 %v296
      %v481 = vpop.f32.mrf.mxu0
      %v482 = vadd.f32 %v468, %v481
      %v483 = vpop.f32.mrf.mxu0
      %v484 = vadd.f32 %v470, %v483
      %485 = vdwg.mxu0
      %486 = vst [vmem:[%s223] sm:$0xff] %v482
      %487 = vst [vmem:[%s223 + $0x8] sm:$0xff] %v484
      %v488 = vadd.f32 %v482, %v484
      %v489 = vrot.slane %v488, 4
      %v490 = vadd.f32 %v488, %v489
      %v491 = vrot.slane %v490, 2
      %v492 = vadd.f32 %v490, %v491
      %v493 = vrot.slane %v492, 1
      %v494 = vadd.f32 %v492, %v493
      %v495 = vmul.f32 %v482, %v482
      %v496 = vmul.f32 %v484, %v484
      %v497 = vadd.f32 %v495, %v496
      %v498 = vrot.slane %v497, 4
      %v499 = vadd.f32 %v497, %v498
      %v500 = vrot.slane %v499, 2
      %v501 = vadd.f32 %v499, %v500
      %v502 = vrot.slane %v501, 1
      %v503 = vadd.f32 %v501, %v502
      %v504 = vlaneseq
      %v505 = vshrl.u32 %v504, 7
      %vm506 = vcmp.eq.s32.totalorder %v505, 0
      %vm507 = vcmp.eq.s32.totalorder %v505, 1
      %v508 = vsel %vm507, %v503, 0.0
      %v509 = vsel %vm506, %v494, %v508
      %510 = vst [vmem:[%s231] sm:$0xff] %v509
      %s511 = smul.u32 2, %s20
      %p512 = scmp.lt.s32.totalorder %s19, 1
      %s513 = scalar_select %p512, %s19, 1
      %p514 = scmp.lt.s32.totalorder %s511, 1
      %s515 = scalar_select %p514, %s511, 1
      %s516 = smul.addr %s513, 2
      %s517 = sadd.s32 %s515, %s516
      %s518 = smul.addr %s517, 8
      %s519 = scalar_lea.vmem %s2, %s518
      %p520 = scmp.lt.s32.totalorder %s19, 1
      %s521 = scalar_select %p520, %s19, 1
      %p522 = scmp.lt.s32.totalorder %s20, 0
      %s523 = scalar_select %p522, %s20, 0
      %s524 = sadd.s32 %s523, %s521
      %s525 = smul.addr %s524, 8
      %s526 = scalar_lea.vmem %s3, %s525
      // Predicated region
      $region29: #{generator_forward.56} parent=27 // pred_check
        %p527 = pneg %p96
      $region30: #{generator_forward.56} parent=27 // pred_check_branch
        %529 = sbr.rel (%p527) target = $region32
      $region31: #{generator_forward.56} parent=27 // pred_region
        %s530 = smul.u32 2, %s20
      $region32: #{generator_forward.56} parent=27 // pred_fallthru
        _
      // Predicated region
      $region33: #{generator_forward.56} parent=27 // pred_check
        %p531 = pneg %p124
      $region34: #{generator_forward.56} parent=27 // pred_check_branch
        %533 = sbr.rel (%p531) target = $region36
      $region35: #{generator_forward.56} parent=27 // pred_region
        _
      $region36: #{generator_forward.56} parent=27 // pred_fallthru
        _
    $region28: #{generator_forward.56} parent=5 // pred_fallthru
      _
    %p534 = scmp.le.s32.totalorder 2, %s10
    // Predicated region
    $region37: #{generator_forward.56} parent=5 // pred_check
      %p535 = pneg %p534
    $region38: #{generator_forward.56} parent=5 // pred_check_branch
      %537 = sbr.rel (%p535) target = $region40
    $region39: #{generator_forward.56} parent=5 // pred_region
      %s538 = ssub.s32 %s10, 2
      // Predicated region
      $region41: #{generator_forward.56} parent=39 // pred_check
        %p539 = pneg %p102
      $region42: #{generator_forward.56} parent=39 // pred_check_branch
        %541 = sbr.rel (%p539) target = $region44
      $region43: #{generator_forward.56} parent=39 // pred_region
        %s542 = smul.u32 2, %s22
        %p543 = scmp.lt.s32.totalorder %s21, 1
        %s544 = scalar_select %p543, %s21, 1
        %p545 = scmp.lt.s32.totalorder %s542, 1
        %s546 = scalar_select %p545, %s542, 1
        %s547 = smul.addr %s544, 2
        %s548 = sadd.s32 %s546, %s547
        %s549 = smul.addr %s548, 8
        %s550 = scalar_lea.vmem %s2, %s549
      $region44: #{generator_forward.56} parent=39 // pred_fallthru
        _
      // Predicated region
      $region45: #{generator_forward.56} parent=39 // pred_check
        %p551 = pneg %p130
      $region46: #{generator_forward.56} parent=39 // pred_check_branch
        %553 = sbr.rel (%p551) target = $region48
      $region47: #{generator_forward.56} parent=39 // pred_region
        %p554 = scmp.lt.s32.totalorder %s21, 1
        %s555 = scalar_select %p554, %s21, 1
        %p556 = scmp.lt.s32.totalorder %s22, 0
        %s557 = scalar_select %p556, %s22, 0
        %s558 = sadd.s32 %s557, %s555
        %s559 = smul.addr %s558, 8
        %s560 = scalar_lea.vmem %s3, %s559
      $region48: #{generator_forward.56} parent=39 // pred_fallthru
        _
    $region40: #{generator_forward.56} parent=5 // pred_fallthru
      _
  $region6: #{generator_forward.56} parent=0 // loop_footer
    %s14 = sadd.s32 1, %s10
  $region7: #{generator_forward.56} parent=0 // loop_footer_branch
    %9 = sbr.rel target = $region3
  $region8: #{generator_forward.56} parent=0 // loop_exit
    _

// kernel: generator_forward.54
$region0: #{generator_forward.54}
  #allocation0 [shape = 'u32[]', space=smem, size = 0x4, offset = 0x4, fixed_abs, tag = 'smem constant byte address 0x4 - core index']
  #allocation1 [shape = 'u32[72,128]{1,0:T(1,128)}', space=vmem, size = 0x9000, scoped, tag = 'internal scratch']
  %s0 = inlined_call_operand.vmem [shape: bf16[2,16,384], index: 0, kind: input, shape index: {}]
  %s1 = inlined_call_operand.vmem [shape: bf16[2,16,384], index: 1, kind: input, shape index: {}]
  %s2 = inlined_call_operand.vmem [shape: bf16[384,128], index: 2, kind: input, shape index: {}]
  %s3 = inlined_call_operand.vmem [shape: bf16[384,128], index: 3, kind: input, shape index: {}]
  %s4 = inlined_call_operand.vmem [shape: f32[2,16,128], index: 4, kind: output, shape index: {0}]
  %s5 = inlined_call_operand.vmem [shape: f32[2,1,8,128], index: 5, kind: output, shape index: {1}]
  %6 = xla_tuple %s4, %s5
  %s7 = sld [smem:[#allocation0]]
  $region57: #{generator_forward.54} parent=0
    _
  %s9 = ssub.s32 1, %s7
  %s10 = scalar_select 0, %s9, %s7
  loop: start=0, step=1, limit=4
  $region2: #{generator_forward.54} parent=0 // loop_pre_header
    _
  $region3: #{generator_forward.54} parent=0 // loop_header
    %s12 = sphi 0, %s16
    %p13 = scmp.ge.s32.totalorder %s12, 4
    %s19 = sphi 0, %s31
    %s20 = sphi 0, %s27
    %s21 = sphi 0, %s19
    %s22 = sphi 0, %s20
    %s23 = sphi 0, %s21
    %s24 = sphi 0, %s22
    %s36 = sphi 0, %s38
    %s39 = sphi 0, %s36
    %s40 = sphi 0, %s39
    %s56 = sphi 0, %s40
    %s64 = sphi 0, %s66
    %s67 = sphi 0, %s64
    %s68 = sphi 0, %s67
    %s84 = sphi 0, %s68
    %s88 = sphi 0, %s88
    %s90 = sphi 0, %s88
    %s91 = sphi 0, %s90
    %s105 = sphi 0, %s91
    %s109 = sphi 0, %s109
    %s111 = sphi 0, %s109
    %s112 = sphi 0, %s111
    %s126 = sphi 0, %s112
    %s134 = sphi 0, %s136
    %s137 = sphi 0, %s134
    %s138 = sphi 0, %s137
    %s154 = sphi 0, %s138
    %s162 = sphi 0, %s164
    %s165 = sphi 0, %s162
    %s166 = sphi 0, %s165
    %s182 = sphi 0, %s166
  $region4: #{generator_forward.54} parent=0 // loop_header_branch
    %15 = sbr.rel (%p13) target = $region8
  $region5: #{generator_forward.54} parent=0 // loop_body
    %s17 = ssub.s32 %s12, 1
    %s18 = ssub.s32 %s12, 2
    %s25 = sadd.s32 1, %s20
    %p26 = scmp.ge.s32.totalorder %s25, 1
    %s27 = scalar_select %p26, 0, %s25
    %s28 = sadd.s32 1, %s19
    %s29 = scalar_select %p26, %s28, %s19
    %p30 = scmp.ge.s32.totalorder %s29, 2
    %s31 = scalar_select %p30, 0, %s29
    %s32 = ssub.s32 %s19, %s31
    %s33 = ssub.s32 %s20, %s27
    %s34 = sor.u32 %s32, %s33
    %p35 = scmp.eq.s32.totalorder %s34, 0
    %s37 = sadd.s32 %s36, 1
    %s38 = scalar_select %p35, %s36, %s37
    %p41 = pneg %p35
    %p42 = scmp.eq.s32.totalorder %s12, 1
    %p43 = por %p41, %p42
    %p44 = scmp.ne.s32.totalorder %s36, %s39
    %p45 = scmp.eq.s32.totalorder %s12, 0
    %p46 = por %p44, %p45
    %p47 = scmp.ne.s32.totalorder %s36, %s39
    %p48 = scmp.eq.s32.totalorder %s17, 1
    %p49 = por %p47, %p48
    %p50 = scmp.ne.s32.totalorder %s39, %s40
    %p51 = scmp.eq.s32.totalorder %s17, 0
    %p52 = por %p50, %p51
    %p53 = scmp.ne.s32.totalorder %s39, %s40
    %p54 = scmp.eq.s32.totalorder %s18, 1
    %p55 = por %p53, %p54
    %p57 = scmp.ne.s32.totalorder %s40, %s56
    %p58 = scmp.eq.s32.totalorder %s18, 0
    %p59 = por %p57, %p58
    %s60 = ssub.s32 %s19, %s31
    %s61 = ssub.s32 %s20, %s27
    %s62 = sor.u32 %s60, %s61
    %p63 = scmp.eq.s32.totalorder %s62, 0
    %s65 = sadd.s32 %s64, 1
    %s66 = scalar_select %p63, %s64, %s65
    %p69 = pneg %p63
    %p70 = scmp.eq.s32.totalorder %s12, 1
    %p71 = por %p69, %p70
    %p72 = scmp.ne.s32.totalorder %s64, %s67
    %p73 = scmp.eq.s32.totalorder %s12, 0
    %p74 = por %p72, %p73
    %p75 = scmp.ne.s32.totalorder %s64, %s67
    %p76 = scmp.eq.s32.totalorder %s17, 1
    %p77 = por %p75, %p76
    %p78 = scmp.ne.s32.totalorder %s67, %s68
    %p79 = scmp.eq.s32.totalorder %s17, 0
    %p80 = por %p78, %p79
    %p81 = scmp.ne.s32.totalorder %s67, %s68
    %p82 = scmp.eq.s32.totalorder %s18, 1
    %p83 = por %p81, %p82
    %p85 = scmp.ne.s32.totalorder %s68, %s84
    %p86 = scmp.eq.s32.totalorder %s18, 0
    %p87 = por %p85, %p86
    %s89 = sadd.s32 %s88, 1
    %p92 = scmp.eq.s32.totalorder %s12, 1
    %p93 = scmp.ne.s32.totalorder %s88, %s90
    %p94 = scmp.eq.s32.totalorder %s12, 0
    %p95 = por %p93, %p94
    %p96 = scmp.ne.s32.totalorder %s88, %s90
    %p97 = scmp.eq.s32.totalorder %s17, 1
    %p98 = por %p96, %p97
    %p99 = scmp.ne.s32.totalorder %s90, %s91
    %p100 = scmp.eq.s32.totalorder %s17, 0
    %p101 = por %p99, %p100
    %p102 = scmp.ne.s32.totalorder %s90, %s91
    %p103 = scmp.eq.s32.totalorder %s18, 1
    %p104 = por %p102, %p103
    %p106 = scmp.ne.s32.totalorder %s91, %s105
    %p107 = scmp.eq.s32.totalorder %s18, 0
    %p108 = por %p106, %p107
    %s110 = sadd.s32 %s109, 1
    %p113 = scmp.eq.s32.totalorder %s12, 1
    %p114 = scmp.ne.s32.totalorder %s109, %s111
    %p115 = scmp.eq.s32.totalorder %s12, 0
    %p116 = por %p114, %p115
    %p117 = scmp.ne.s32.totalorder %s109, %s111
    %p118 = scmp.eq.s32.totalorder %s17, 1
    %p119 = por %p117, %p118
    %p120 = scmp.ne.s32.totalorder %s111, %s112
    %p121 = scmp.eq.s32.totalorder %s17, 0
    %p122 = por %p120, %p121
    %p123 = scmp.ne.s32.totalorder %s111, %s112
    %p124 = scmp.eq.s32.totalorder %s18, 1
    %p125 = por %p123, %p124
    %p127 = scmp.ne.s32.totalorder %s112, %s126
    %p128 = scmp.eq.s32.totalorder %s18, 0
    %p129 = por %p127, %p128
    %s130 = ssub.s32 %s19, %s31
    %s131 = ssub.s32 %s20, %s27
    %s132 = sor.u32 %s130, %s131
    %p133 = scmp.eq.s32.totalorder %s132, 0
    %s135 = sadd.s32 %s134, 1
    %s136 = scalar_select %p133, %s134, %s135
    %p139 = pneg %p133
    %p140 = scmp.eq.s32.totalorder %s12, 1
    %p141 = por %p139, %p140
    %p142 = scmp.ne.s32.totalorder %s134, %s137
    %p143 = scmp.eq.s32.totalorder %s12, 0
    %p144 = por %p142, %p143
    %p145 = scmp.ne.s32.totalorder %s134, %s137
    %p146 = scmp.eq.s32.totalorder %s17, 1
    %p147 = por %p145, %p146
    %p148 = scmp.ne.s32.totalorder %s137, %s138
    %p149 = scmp.eq.s32.totalorder %s17, 0
    %p150 = por %p148, %p149
    %p151 = scmp.ne.s32.totalorder %s137, %s138
    %p152 = scmp.eq.s32.totalorder %s18, 1
    %p153 = por %p151, %p152
    %p155 = scmp.ne.s32.totalorder %s138, %s154
    %p156 = scmp.eq.s32.totalorder %s18, 0
    %p157 = por %p155, %p156
    %s158 = ssub.s32 %s19, %s31
    %s159 = ssub.s32 %s20, %s27
    %s160 = sor.u32 %s158, %s159
    %p161 = scmp.eq.s32.totalorder %s160, 0
    %s163 = sadd.s32 %s162, 1
    %s164 = scalar_select %p161, %s162, %s163
    %p167 = pneg %p161
    %p168 = scmp.eq.s32.totalorder %s12, 1
    %p169 = por %p167, %p168
    %p170 = scmp.ne.s32.totalorder %s162, %s165
    %p171 = scmp.eq.s32.totalorder %s12, 0
    %p172 = por %p170, %p171
    %p173 = scmp.ne.s32.totalorder %s162, %s165
    %p174 = scmp.eq.s32.totalorder %s17, 1
    %p175 = por %p173, %p174
    %p176 = scmp.ne.s32.totalorder %s165, %s166
    %p177 = scmp.eq.s32.totalorder %s17, 0
    %p178 = por %p176, %p177
    %p179 = scmp.ne.s32.totalorder %s165, %s166
    %p180 = scmp.eq.s32.totalorder %s18, 1
    %p181 = por %p179, %p180
    %p183 = scmp.ne.s32.totalorder %s166, %s182
    %p184 = scmp.eq.s32.totalorder %s18, 0
    %p185 = por %p183, %p184
    %p186 = scmp.le.s32.totalorder 1, %s12
    %p187 = scmp.lt.s32.totalorder %s12, 3
    %p188 = pnand %p186, %p187
    %p189 = pneg %p188
    // Predicated region
    $region9: #{generator_forward.54} parent=5 // pred_check
      _
    $region10: #{generator_forward.54} parent=5 // pred_check_branch
      %191 = sbr.rel (%p188) target = $region12
    $region11: #{generator_forward.54} parent=5 // pred_region
      %s192 = ssub.s32 %s12, 1
      // Predicated region
      $region13: #{generator_forward.54} parent=11 // pred_check
        %p193 = pneg %p101
      $region14: #{generator_forward.54} parent=11 // pred_check_branch
        %195 = sbr.rel (%p193) target = $region16
      $region15: #{generator_forward.54} parent=11 // pred_region
        _
      $region16: #{generator_forward.54} parent=11 // pred_fallthru
        _
      // Predicated region
      $region17: #{generator_forward.54} parent=11 // pred_check
        %p196 = pneg %p122
      $region18: #{generator_forward.54} parent=11 // pred_check_branch
        %198 = sbr.rel (%p196) target = $region20
      $region19: #{generator_forward.54} parent=11 // pred_region
        _
      $region20: #{generator_forward.54} parent=11 // pred_fallthru
        _
    $region12: #{generator_forward.54} parent=5 // pred_fallthru
      _
    %p199 = scmp.lt.s32.totalorder %s12, 2
    // Predicated region
    $region21: #{generator_forward.54} parent=5 // pred_check
      %p200 = pneg %p199
    $region22: #{generator_forward.54} parent=5 // pred_check_branch
      %202 = sbr.rel (%p200) target = $region24
    $region23: #{generator_forward.54} parent=5 // pred_region
      // Predicated region
      $region25: #{generator_forward.54} parent=23 // pred_check
        %p203 = pneg %p46
      $region26: #{generator_forward.54} parent=23 // pred_check_branch
        %205 = sbr.rel (%p203) target = $region28
      $region27: #{generator_forward.54} parent=23 // pred_region
        %s206 = smul.u32 2, %s20
        %p207 = scmp.lt.s32.totalorder %s19, 1
        %s208 = scalar_select %p207, %s19, 1
        %p209 = scmp.lt.s32.totalorder %s206, 1
        %s210 = scalar_select %p209, %s206, 1
        %s211 = smul.addr %s210, 3
        %s212 = smul.addr %s208, 6
        %s213 = sadd.s32 %s211, %s212
        %s214 = smul.addr %s213, 4
        %s215 = scalar_lea.vmem %s0, %s214
        %s216 = smul.u32 2, %s20
      $region28: #{generator_forward.54} parent=23 // pred_fallthru
        _
      // Predicated region
      $region29: #{generator_forward.54} parent=23 // pred_check
        %p217 = pneg %p74
      $region30: #{generator_forward.54} parent=23 // pred_check_branch
        %219 = sbr.rel (%p217) target = $region32
      $region31: #{generator_forward.54} parent=23 // pred_region
        %s220 = smul.u32 2, %s20
        %p221 = scmp.lt.s32.totalorder %s19, 1
        %s222 = scalar_select %p221, %s19, 1
        %p223 = scmp.lt.s32.totalorder %s220, 1
        %s224 = scalar_select %p223, %s220, 1
        %s225 = smul.addr %s224, 3
        %s226 = smul.addr %s222, 6
        %s227 = sadd.s32 %s225, %s226
        %s228 = smul.addr %s227, 4
        %s229 = scalar_lea.vmem %s1, %s228
        %s230 = smul.u32 2, %s20
      $region32: #{generator_forward.54} parent=23 // pred_fallthru
        _
    $region24: #{generator_forward.54} parent=5 // pred_fallthru
      _
    %p231 = scmp.le.s32.totalorder 1, %s12
    %p232 = scmp.lt.s32.totalorder %s12, 3
    %p233 = pnand %p231, %p232
    %p234 = pneg %p233
    // Predicated region
    $region33: #{generator_forward.54} parent=5 // pred_check
      _
    $region34: #{generator_forward.54} parent=5 // pred_check_branch
      %236 = sbr.rel (%p233) target = $region36
    $region35: #{generator_forward.54} parent=5 // pred_region
      %s237 = ssub.s32 %s12, 1
      %s238 = smul.u32 2, %s22
      %p239 = scmp.lt.s32.totalorder %s21, 1
      %s240 = scalar_select %p239, %s21, 1
      %p241 = scmp.lt.s32.totalorder %s238, 1
      %s242 = scalar_select %p241, %s238, 1
      %s243 = smul.addr %s242, 3
      %s244 = smul.addr %s240, 6
      %s245 = sadd.s32 %s243, %s244
      %s246 = smul.addr %s245, 4
      %s247 = scalar_lea.vmem %s0, %s246
      %p248 = pneg %p52
      %p249 = pneg %p49
      %s250 = smul.u32 2, %s22
      %p251 = scmp.lt.s32.totalorder %s21, 1
      %s252 = scalar_select %p251, %s21, 1
      %p253 = scmp.lt.s32.totalorder %s250, 1
      %s254 = scalar_select %p253, %s250, 1
      %s255 = smul.addr %s254, 3
      %s256 = smul.addr %s252, 6
      %s257 = sadd.s32 %s255, %s256
      %s258 = smul.addr %s257, 4
      %s259 = scalar_lea.vmem %s1, %s258
      %p260 = pneg %p80
      %p261 = pneg %p77
      %p262 = pneg %p101
      %p263 = pneg %p98
      %p264 = pneg %p122
      %p265 = pneg %p119
      %p266 = pneg %p150
      %p267 = pneg %p147
      %s268 = smul.u32 2, %s22
      %p269 = scmp.lt.s32.totalorder %s21, 1
      %s270 = scalar_select %p269, %s21, 1
      %p271 = scmp.lt.s32.totalorder %s268, 1
      %s272 = scalar_select %p271, %s268, 1
      %s273 = smul.addr %s270, 2
      %s274 = sadd.s32 %s272, %s273
      %s275 = smul.addr %s274, 8
      %s276 = scalar_lea.vmem %s4, %s275
      %p277 = pneg %p178
      %p278 = pneg %p175
      %p279 = scmp.lt.s32.totalorder %s21, 1
      %s280 = scalar_select %p279, %s21, 1
      %p281 = scmp.lt.s32.totalorder %s22, 0
      %s282 = scalar_select %p281, %s22, 0
      %s283 = sadd.s32 %s282, %s280
      %s284 = smul.addr %s283, 8
      %s285 = scalar_lea.vmem %s5, %s284
      %s286 = smul.u32 2, %s22
      %p287 = scmp.lt.s32.totalorder %s21, 1
      %s288 = scalar_select %p287, %s21, 1
      %p289 = scmp.lt.s32.totalorder %s286, 1
      %s290 = scalar_select %p289, %s286, 1
      %s291 = smul.addr %s290, 3
      %s292 = smul.addr %s288, 6
      %s293 = sadd.s32 %s291, %s292
      %s294 = smul.addr %s293, 4
      %s295 = scalar_lea.vmem %s0, %s294
      %s296 = smul.u32 2, %s22
      %s297 = smul.u32 2, %s22
      %p298 = scmp.lt.s32.totalorder %s21, 1
      %s299 = scalar_select %p298, %s21, 1
      %p300 = scmp.lt.s32.totalorder %s297, 1
      %s301 = scalar_select %p300, %s297, 1
      %s302 = smul.addr %s301, 3
      %s303 = smul.addr %s299, 6
      %s304 = sadd.s32 %s302, %s303
      %s305 = smul.addr %s304, 4
      %s306 = scalar_lea.vmem %s1, %s305
      %s307 = smul.u32 2, %s22
      %s308 = smul.u32 2, %s22
      %p309 = scmp.lt.s32.totalorder %s21, 1
      %s310 = scalar_select %p309, %s21, 1
      %p311 = scmp.lt.s32.totalorder %s308, 1
      %s312 = scalar_select %p311, %s308, 1
      %s313 = smul.addr %s310, 2
      %s314 = sadd.s32 %s312, %s313
      %s315 = smul.addr %s314, 8
      %s316 = scalar_lea.vmem %s4, %s315
      %s317 = smul.u32 2, %s22
      %p318 = scmp.lt.s32.totalorder %s21, 1
      %s319 = scalar_select %p318, %s21, 1
      %p320 = scmp.lt.s32.totalorder %s22, 0
      %s321 = scalar_select %p320, %s22, 0
      %s322 = sadd.s32 %s321, %s319
      %s323 = smul.addr %s322, 8
      %s324 = scalar_lea.vmem %s5, %s323
      %v325 = vld [vmem:[%s295] sm:$0xff]
      %v326 = vld [vmem:[%s295 + $0x8] sm:$0xf]
      %v327 = vld [vmem:[%s295 + $0xc] sm:$0xff]
      %v328 = vld [vmem:[%s295 + $0x14] sm:$0xf]
      %v329 = vld [vmem:[%s2] sm:$0xf]
      %v330 = vld [vmem:[%s2 + $0x4] sm:$0xf]
      %v331 = vld [vmem:[%s2 + $0x8] sm:$0xf]
      %v332 = vld [vmem:[%s2 + $0xc] sm:$0xf]
      %v333 = vld [vmem:[%s2 + $0x10] sm:$0xf]
      %v334 = vld [vmem:[%s2 + $0x14] sm:$0xf]
      %v335 = vld [vmem:[%s2 + $0x18] sm:$0xf]
      %v336 = vld [vmem:[%s2 + $0x1c] sm:$0xf]
      %v337 = vld [vmem:[%s2 + $0x20] sm:$0xf]
      %v338 = vld [vmem:[%s2 + $0x24] sm:$0xf]
      %v339 = vld [vmem:[%s2 + $0x28] sm:$0xf]
      %v340 = vld [vmem:[%s2 + $0x2c] sm:$0xf]
      %v341 = vld [vmem:[%s2 + $0x30] sm:$0xf]
      %v342 = vld [vmem:[%s2 + $0x34] sm:$0xf]
      %v343 = vld [vmem:[%s2 + $0x38] sm:$0xf]
      %v344 = vld [vmem:[%s2 + $0x3c] sm:$0xf]
      %v345 = vld [vmem:[%s2 + $0x40] sm:$0xf]
      %v346 = vld [vmem:[%s2 + $0x44] sm:$0xf]
      %v347 = vld [vmem:[%s2 + $0x48] sm:$0xf]
      %v348 = vld [vmem:[%s2 + $0x4c] sm:$0xf]
      %v349 = vld [vmem:[%s2 + $0x50] sm:$0xf]
      %v350 = vld [vmem:[%s2 + $0x54] sm:$0xf]
      %v351 = vld [vmem:[%s2 + $0x58] sm:$0xf]
      %v352 = vld [vmem:[%s2 + $0x5c] sm:$0xf]
      %v353 = vld [vmem:[%s2 + $0x60] sm:$0xf]
      %v354 = vld [vmem:[%s2 + $0x64] sm:$0xf]
      %v355 = vld [vmem:[%s2 + $0x68] sm:$0xf]
      %v356 = vld [vmem:[%s2 + $0x6c] sm:$0xf]
      %v357 = vld [vmem:[%s2 + $0x70] sm:$0xf]
      %v358 = vld [vmem:[%s2 + $0x74] sm:$0xf]
      %v359 = vld [vmem:[%s2 + $0x78] sm:$0xf]
      %v360 = vld [vmem:[%s2 + $0x7c] sm:$0xf]
      %v361 = vld [vmem:[%s2 + $0x80] sm:$0xf]
      %v362 = vld [vmem:[%s2 + $0x84] sm:$0xf]
      %v363 = vld [vmem:[%s2 + $0x88] sm:$0xf]
      %v364 = vld [vmem:[%s2 + $0x8c] sm:$0xf]
      %v365 = vld [vmem:[%s2 + $0x90] sm:$0xf]
      %v366 = vld [vmem:[%s2 + $0x94] sm:$0xf]
      %v367 = vld [vmem:[%s2 + $0x98] sm:$0xf]
      %v368 = vld [vmem:[%s2 + $0x9c] sm:$0xf]
      %v369 = vld [vmem:[%s2 + $0xa0] sm:$0xf]
      %v370 = vld [vmem:[%s2 + $0xa4] sm:$0xf]
      %v371 = vld [vmem:[%s2 + $0xa8] sm:$0xf]
      %v372 = vld [vmem:[%s2 + $0xac] sm:$0xf]
      %v373 = vld [vmem:[%s2 + $0xb0] sm:$0xf]
      %v374 = vld [vmem:[%s2 + $0xb4] sm:$0xf]
      %v375 = vld [vmem:[%s2 + $0xb8] sm:$0xf]
      %v376 = vld [vmem:[%s2 + $0xbc] sm:$0xf]
      %v377 = vld [vmem:[%s306] sm:$0xff]
      %v378 = vld [vmem:[%s306 + $0x8] sm:$0xf]
      %v379 = vld [vmem:[%s306 + $0xc] sm:$0xff]
      %v380 = vld [vmem:[%s306 + $0x14] sm:$0xf]
      %v381 = vld [vmem:[%s3] sm:$0xf]
      %v382 = vld [vmem:[%s3 + $0x4] sm:$0xf]
      %v383 = vld [vmem:[%s3 + $0x8] sm:$0xf]
      %v384 = vld [vmem:[%s3 + $0xc] sm:$0xf]
      %v385 = vld [vmem:[%s3 + $0x10] sm:$0xf]
      %v386 = vld [vmem:[%s3 + $0x14] sm:$0xf]
      %v387 = vld [vmem:[%s3 + $0x18] sm:$0xf]
      %v388 = vld [vmem:[%s3 + $0x1c] sm:$0xf]
      %v389 = vld [vmem:[%s3 + $0x20] sm:$0xf]
      %v390 = vld [vmem:[%s3 + $0x24] sm:$0xf]
      %v391 = vld [vmem:[%s3 + $0x28] sm:$0xf]
      %v392 = vld [vmem:[%s3 + $0x2c] sm:$0xf]
      %v393 = vld [vmem:[%s3 + $0x30] sm:$0xf]
      %v394 = vld [vmem:[%s3 + $0x34] sm:$0xf]
      %v395 = vld [vmem:[%s3 + $0x38] sm:$0xf]
      %v396 = vld [vmem:[%s3 + $0x3c] sm:$0xf]
      %v397 = vld [vmem:[%s3 + $0x40] sm:$0xf]
      %v398 = vld [vmem:[%s3 + $0x44] sm:$0xf]
      %v399 = vld [vmem:[%s3 + $0x48] sm:$0xf]
      %v400 = vld [vmem:[%s3 + $0x4c] sm:$0xf]
      %v401 = vld [vmem:[%s3 + $0x50] sm:$0xf]
      %v402 = vld [vmem:[%s3 + $0x54] sm:$0xf]
      %v403 = vld [vmem:[%s3 + $0x58] sm:$0xf]
      %v404 = vld [vmem:[%s3 + $0x5c] sm:$0xf]
      %v405 = vld [vmem:[%s3 + $0x60] sm:$0xf]
      %v406 = vld [vmem:[%s3 + $0x64] sm:$0xf]
      %v407 = vld [vmem:[%s3 + $0x68] sm:$0xf]
      %v408 = vld [vmem:[%s3 + $0x6c] sm:$0xf]
      %v409 = vld [vmem:[%s3 + $0x70] sm:$0xf]
      %v410 = vld [vmem:[%s3 + $0x74] sm:$0xf]
      %v411 = vld [vmem:[%s3 + $0x78] sm:$0xf]
      %v412 = vld [vmem:[%s3 + $0x7c] sm:$0xf]
      %v413 = vld [vmem:[%s3 + $0x80] sm:$0xf]
      %v414 = vld [vmem:[%s3 + $0x84] sm:$0xf]
      %v415 = vld [vmem:[%s3 + $0x88] sm:$0xf]
      %v416 = vld [vmem:[%s3 + $0x8c] sm:$0xf]
      %v417 = vld [vmem:[%s3 + $0x90] sm:$0xf]
      %v418 = vld [vmem:[%s3 + $0x94] sm:$0xf]
      %v419 = vld [vmem:[%s3 + $0x98] sm:$0xf]
      %v420 = vld [vmem:[%s3 + $0x9c] sm:$0xf]
      %v421 = vld [vmem:[%s3 + $0xa0] sm:$0xf]
      %v422 = vld [vmem:[%s3 + $0xa4] sm:$0xf]
      %v423 = vld [vmem:[%s3 + $0xa8] sm:$0xf]
      %v424 = vld [vmem:[%s3 + $0xac] sm:$0xf]
      %v425 = vld [vmem:[%s3 + $0xb0] sm:$0xf]
      %v426 = vld [vmem:[%s3 + $0xb4] sm:$0xf]
      %v427 = vld [vmem:[%s3 + $0xb8] sm:$0xf]
      %v428 = vld [vmem:[%s3 + $0xbc] sm:$0xf]
      %v433 = vunpack.c.l.b16 %v377
      %v434 = vunpack.c.h.b16 %v377
      %v435 = vunpack.c.l.b16 %v378
      %v436 = vunpack.c.l.b16 %v379
      %v437 = vunpack.c.h.b16 %v379
      %v438 = vunpack.c.l.b16 %v380
      %v439 = vpack.c.b16 %v436, %v433
      %v440 = vpack.c.b16 %v437, %v434
      %v441 = vpack.c.b16 %v438, %v435
      %v493 = vunpack.c.l.b16 %v381
      %v494 = vunpack.c.l.b16 %v382
      %v495 = vunpack.c.l.b16 %v383
      %v496 = vunpack.c.l.b16 %v384
      %v497 = vunpack.c.l.b16 %v385
      %v498 = vunpack.c.l.b16 %v386
      %v499 = vunpack.c.l.b16 %v387
      %v500 = vunpack.c.l.b16 %v388
      %v501 = vunpack.c.l.b16 %v389
      %v502 = vunpack.c.l.b16 %v390
      %v503 = vunpack.c.l.b16 %v391
      %v504 = vunpack.c.l.b16 %v392
      %v505 = vunpack.c.l.b16 %v393
      %v506 = vunpack.c.l.b16 %v394
      %v507 = vunpack.c.l.b16 %v395
      %v508 = vunpack.c.l.b16 %v396
      %v509 = vunpack.c.l.b16 %v397
      %v510 = vunpack.c.l.b16 %v398
      %v511 = vunpack.c.l.b16 %v399
      %v512 = vunpack.c.l.b16 %v400
      %v513 = vunpack.c.l.b16 %v401
      %v514 = vunpack.c.l.b16 %v402
      %v515 = vunpack.c.l.b16 %v403
      %v516 = vunpack.c.l.b16 %v404
      %v517 = vunpack.c.l.b16 %v405
      %v518 = vunpack.c.l.b16 %v406
      %v519 = vunpack.c.l.b16 %v407
      %v520 = vunpack.c.l.b16 %v408
      %v521 = vunpack.c.l.b16 %v409
      %v522 = vunpack.c.l.b16 %v410
      %v523 = vunpack.c.l.b16 %v411
      %v524 = vunpack.c.l.b16 %v412
      %v525 = vunpack.c.l.b16 %v413
      %v526 = vunpack.c.l.b16 %v414
      %v527 = vunpack.c.l.b16 %v415
      %v528 = vunpack.c.l.b16 %v416
      %v529 = vunpack.c.l.b16 %v417
      %v530 = vunpack.c.l.b16 %v418
      %v531 = vunpack.c.l.b16 %v419
      %v532 = vunpack.c.l.b16 %v420
      %v533 = vunpack.c.l.b16 %v421
      %v534 = vunpack.c.l.b16 %v422
      %v535 = vunpack.c.l.b16 %v423
      %v536 = vunpack.c.l.b16 %v424
      %v537 = vunpack.c.l.b16 %v425
      %v538 = vunpack.c.l.b16 %v426
      %v539 = vunpack.c.l.b16 %v427
      %v540 = vunpack.c.l.b16 %v428
      %v541 = vpack.c.b16 %v494, %v493
      %v542 = vpack.c.b16 %v496, %v495
      %v543 = vpack.c.b16 %v498, %v497
      %v544 = vpack.c.b16 %v500, %v499
      %v545 = vpack.c.b16 %v502, %v501
      %v546 = vpack.c.b16 %v504, %v503
      %v547 = vpack.c.b16 %v506, %v505
      %v548 = vpack.c.b16 %v508, %v507
      %v549 = vpack.c.b16 %v510, %v509
      %v550 = vpack.c.b16 %v512, %v511
      %v551 = vpack.c.b16 %v514, %v513
      %v552 = vpack.c.b16 %v516, %v515
      %v553 = vpack.c.b16 %v518, %v517
      %v554 = vpack.c.b16 %v520, %v519
      %v555 = vpack.c.b16 %v522, %v521
      %v556 = vpack.c.b16 %v524, %v523
      %v557 = vpack.c.b16 %v526, %v525
      %v558 = vpack.c.b16 %v528, %v527
      %v559 = vpack.c.b16 %v530, %v529
      %v560 = vpack.c.b16 %v532, %v531
      %v561 = vpack.c.b16 %v534, %v533
      %v562 = vpack.c.b16 %v536, %v535
      %v563 = vpack.c.b16 %v538, %v537
      %v564 = vpack.c.b16 %v540, %v539
      %589 = vmatpush.bf16.msra.mxu0 %v548
      %590 = vmatpush.bf16.msra.mxu0 %v547
      %591 = vmatpush.bf16.msra.mxu0 %v546
      %592 = vmatpush.bf16.msra.mxu0 %v545
      %593 = vmatpush.bf16.msra.mxu0 %v544
      %594 = vmatpush.bf16.msra.mxu0 %v543
      %595 = vmatpush.bf16.msra.mxu0 %v542
      %596 = vmatpush.bf16.msra.mxu0 %v541
      %597 = vmatmul.bf16.gmra.mxu0 %v439
      %v598 = vpop.f32.mrf.mxu0
      %v599 = vadd.f32 0.0, %v598
      %v600 = vpop.f32.mrf.mxu0
      %v601 = vadd.f32 0.0, %v600
      %602 = vdwg.mxu0
      %603 = vmatpush.bf16.msra.mxu0 %v556
      %604 = vmatpush.bf16.msra.mxu0 %v555
      %605 = vmatpush.bf16.msra.mxu0 %v554
      %606 = vmatpush.bf16.msra.mxu0 %v553
      %607 = vmatpush.bf16.msra.mxu0 %v552
      %608 = vmatpush.bf16.msra.mxu0 %v551
      %609 = vmatpush.bf16.msra.mxu0 %v550
      %610 = vmatpush.bf16.msra.mxu0 %v549
      %611 = vmatmul.bf16.gmra.mxu0 %v440
      %v612 = vpop.f32.mrf.mxu0
      %v613 = vadd.f32 %v599, %v612
      %v614 = vpop.f32.mrf.mxu0
      %v615 = vadd.f32 %v601, %v614
      %616 = vdwg.mxu0
      %617 = vmatpush.bf16.msra.mxu0 %v564
      %618 = vmatpush.bf16.msra.mxu0 %v563
      %619 = vmatpush.bf16.msra.mxu0 %v562
      %620 = vmatpush.bf16.msra.mxu0 %v561
      %621 = vmatpush.bf16.msra.mxu0 %v560
      %622 = vmatpush.bf16.msra.mxu0 %v559
      %623 = vmatpush.bf16.msra.mxu0 %v558
      %624 = vmatpush.bf16.msra.mxu0 %v557
      %625 = vmatmul.bf16.gmra.mxu0 %v441
      %v626 = vpop.f32.mrf.mxu0
      %v627 = vadd.f32 %v613, %v626
      %v628 = vpop.f32.mrf.mxu0
      %v629 = vadd.f32 %v615, %v628
      %630 = vdwg.mxu0
      %v635 = vunpack.c.l.b16 %v325
      %v636 = vunpack.c.h.b16 %v325
      %v637 = vunpack.c.l.b16 %v326
      %v638 = vunpack.c.l.b16 %v327
      %v639 = vunpack.c.h.b16 %v327
      %v640 = vunpack.c.l.b16 %v328
      %v641 = vpack.c.b16 %v638, %v635
      %v642 = vpack.c.b16 %v639, %v636
      %v643 = vpack.c.b16 %v640, %v637
      %v695 = vunpack.c.l.b16 %v329
      %v696 = vunpack.c.l.b16 %v330
      %v697 = vunpack.c.l.b16 %v331
      %v698 = vunpack.c.l.b16 %v332
      %v699 = vunpack.c.l.b16 %v333
      %v700 = vunpack.c.l.b16 %v334
      %v701 = vunpack.c.l.b16 %v335
      %v702 = vunpack.c.l.b16 %v336
      %v703 = vunpack.c.l.b16 %v337
      %v704 = vunpack.c.l.b16 %v338
      %v705 = vunpack.c.l.b16 %v339
      %v706 = vunpack.c.l.b16 %v340
      %v707 = vunpack.c.l.b16 %v341
      %v708 = vunpack.c.l.b16 %v342
      %v709 = vunpack.c.l.b16 %v343
      %v710 = vunpack.c.l.b16 %v344
      %v711 = vunpack.c.l.b16 %v345
      %v712 = vunpack.c.l.b16 %v346
      %v713 = vunpack.c.l.b16 %v347
      %v714 = vunpack.c.l.b16 %v348
      %v715 = vunpack.c.l.b16 %v349
      %v716 = vunpack.c.l.b16 %v350
      %v717 = vunpack.c.l.b16 %v351
      %v718 = vunpack.c.l.b16 %v352
      %v719 = vunpack.c.l.b16 %v353
      %v720 = vunpack.c.l.b16 %v354
      %v721 = vunpack.c.l.b16 %v355
      %v722 = vunpack.c.l.b16 %v356
      %v723 = vunpack.c.l.b16 %v357
      %v724 = vunpack.c.l.b16 %v358
      %v725 = vunpack.c.l.b16 %v359
      %v726 = vunpack.c.l.b16 %v360
      %v727 = vunpack.c.l.b16 %v361
      %v728 = vunpack.c.l.b16 %v362
      %v729 = vunpack.c.l.b16 %v363
      %v730 = vunpack.c.l.b16 %v364
      %v731 = vunpack.c.l.b16 %v365
      %v732 = vunpack.c.l.b16 %v366
      %v733 = vunpack.c.l.b16 %v367
      %v734 = vunpack.c.l.b16 %v368
      %v735 = vunpack.c.l.b16 %v369
      %v736 = vunpack.c.l.b16 %v370
      %v737 = vunpack.c.l.b16 %v371
      %v738 = vunpack.c.l.b16 %v372
      %v739 = vunpack.c.l.b16 %v373
      %v740 = vunpack.c.l.b16 %v374
      %v741 = vunpack.c.l.b16 %v375
      %v742 = vunpack.c.l.b16 %v376
      %v743 = vpack.c.b16 %v696, %v695
      %v744 = vpack.c.b16 %v698, %v697
      %v745 = vpack.c.b16 %v700, %v699
      %v746 = vpack.c.b16 %v702, %v701
      %v747 = vpack.c.b16 %v704, %v703
      %v748 = vpack.c.b16 %v706, %v705
      %v749 = vpack.c.b16 %v708, %v707
      %v750 = vpack.c.b16 %v710, %v709
      %v751 = vpack.c.b16 %v712, %v711
      %v752 = vpack.c.b16 %v714, %v713
      %v753 = vpack.c.b16 %v716, %v715
      %v754 = vpack.c.b16 %v718, %v717
      %v755 = vpack.c.b16 %v720, %v719
      %v756 = vpack.c.b16 %v722, %v721
      %v757 = vpack.c.b16 %v724, %v723
      %v758 = vpack.c.b16 %v726, %v725
      %v759 = vpack.c.b16 %v728, %v727
      %v760 = vpack.c.b16 %v730, %v729
      %v761 = vpack.c.b16 %v732, %v731
      %v762 = vpack.c.b16 %v734, %v733
      %v763 = vpack.c.b16 %v736, %v735
      %v764 = vpack.c.b16 %v738, %v737
      %v765 = vpack.c.b16 %v740, %v739
      %v766 = vpack.c.b16 %v742, %v741
      %791 = vmatpush.bf16.msra.mxu0 %v750
      %792 = vmatpush.bf16.msra.mxu0 %v749
      %793 = vmatpush.bf16.msra.mxu0 %v748
      %794 = vmatpush.bf16.msra.mxu0 %v747
      %795 = vmatpush.bf16.msra.mxu0 %v746
      %796 = vmatpush.bf16.msra.mxu0 %v745
      %797 = vmatpush.bf16.msra.mxu0 %v744
      %798 = vmatpush.bf16.msra.mxu0 %v743
      %799 = vmatmul.bf16.gmra.mxu0 %v641
      %v800 = vpop.f32.mrf.mxu0
      %v801 = vadd.f32 %v627, %v800
      %v802 = vpop.f32.mrf.mxu0
      %v803 = vadd.f32 %v629, %v802
      %804 = vdwg.mxu0
      %805 = vmatpush.bf16.msra.mxu0 %v758
      %806 = vmatpush.bf16.msra.mxu0 %v757
      %807 = vmatpush.bf16.msra.mxu0 %v756
      %808 = vmatpush.bf16.msra.mxu0 %v755
      %809 = vmatpush.bf16.msra.mxu0 %v754
      %810 = vmatpush.bf16.msra.mxu0 %v753
      %811 = vmatpush.bf16.msra.mxu0 %v752
      %812 = vmatpush.bf16.msra.mxu0 %v751
      %813 = vmatmul.bf16.gmra.mxu0 %v642
      %v814 = vpop.f32.mrf.mxu0
      %v815 = vadd.f32 %v801, %v814
      %v816 = vpop.f32.mrf.mxu0
      %v817 = vadd.f32 %v803, %v816
      %818 = vdwg.mxu0
      %819 = vmatpush.bf16.msra.mxu0 %v766
      %820 = vmatpush.bf16.msra.mxu0 %v765
      %821 = vmatpush.bf16.msra.mxu0 %v764
      %822 = vmatpush.bf16.msra.mxu0 %v763
      %823 = vmatpush.bf16.msra.mxu0 %v762
      %824 = vmatpush.bf16.msra.mxu0 %v761
      %825 = vmatpush.bf16.msra.mxu0 %v760
      %826 = vmatpush.bf16.msra.mxu0 %v759
      %827 = vmatmul.bf16.gmra.mxu0 %v643
      %v828 = vpop.f32.mrf.mxu0
      %v829 = vadd.f32 %v815, %v828
      %v830 = vpop.f32.mrf.mxu0
      %v831 = vadd.f32 %v817, %v830
      %832 = vdwg.mxu0
      %833 = vst [vmem:[%s316] sm:$0xff] %v829
      %834 = vst [vmem:[%s316 + $0x8] sm:$0xff] %v831
      %v835 = vadd.f32 %v829, %v831
      %v836 = vrot.slane %v835, 4
      %v837 = vadd.f32 %v835, %v836
      %v838 = vrot.slane %v837, 2
      %v839 = vadd.f32 %v837, %v838
      %v840 = vrot.slane %v839, 1
      %v841 = vadd.f32 %v839, %v840
      %v842 = vmul.f32 %v829, %v829
      %v843 = vmul.f32 %v831, %v831
      %v844 = vadd.f32 %v842, %v843
      %v845 = vrot.slane %v844, 4
      %v846 = vadd.f32 %v844, %v845
      %v847 = vrot.slane %v846, 2
      %v848 = vadd.f32 %v846, %v847
      %v849 = vrot.slane %v848, 1
      %v850 = vadd.f32 %v848, %v849
      %v851 = vlaneseq
      %v852 = vshrl.u32 %v851, 7
      %vm853 = vcmp.eq.s32.totalorder %v852, 0
      %vm854 = vcmp.eq.s32.totalorder %v852, 1
      %v855 = vsel %vm854, %v850, 0.0
      %v856 = vsel %vm853, %v841, %v855
      %857 = vst [vmem:[%s324] sm:$0xff] %v856
      %s858 = smul.u32 2, %s22
      %p859 = scmp.lt.s32.totalorder %s21, 1
      %s860 = scalar_select %p859, %s21, 1
      %p861 = scmp.lt.s32.totalorder %s858, 1
      %s862 = scalar_select %p861, %s858, 1
      %s863 = smul.addr %s860, 2
      %s864 = sadd.s32 %s862, %s863
      %s865 = smul.addr %s864, 8
      %s866 = scalar_lea.vmem %s4, %s865
      %p867 = scmp.lt.s32.totalorder %s21, 1
      %s868 = scalar_select %p867, %s21, 1
      %p869 = scmp.lt.s32.totalorder %s22, 0
      %s870 = scalar_select %p869, %s22, 0
      %s871 = sadd.s32 %s870, %s868
      %s872 = smul.addr %s871, 8
      %s873 = scalar_lea.vmem %s5, %s872
      // Predicated region
      $region37: #{generator_forward.54} parent=35 // pred_check
        %p874 = pneg %p147
      $region38: #{generator_forward.54} parent=35 // pred_check_branch
        %876 = sbr.rel (%p874) target = $region40
      $region39: #{generator_forward.54} parent=35 // pred_region
        %s877 = smul.u32 2, %s22
      $region40: #{generator_forward.54} parent=35 // pred_fallthru
        _
      // Predicated region
      $region41: #{generator_forward.54} parent=35 // pred_check
        %p878 = pneg %p175
      $region42: #{generator_forward.54} parent=35 // pred_check_branch
        %880 = sbr.rel (%p878) target = $region44
      $region43: #{generator_forward.54} parent=35 // pred_region
        _
      $region44: #{generator_forward.54} parent=35 // pred_fallthru
        _
    $region36: #{generator_forward.54} parent=5 // pred_fallthru
      _
    %p881 = scmp.le.s32.totalorder 2, %s12
    // Predicated region
    $region45: #{generator_forward.54} parent=5 // pred_check
      %p882 = pneg %p881
    $region46: #{generator_forward.54} parent=5 // pred_check_branch
      %884 = sbr.rel (%p882) target = $region48
    $region47: #{generator_forward.54} parent=5 // pred_region
      %s885 = ssub.s32 %s12, 2
      // Predicated region
      $region49: #{generator_forward.54} parent=47 // pred_check
        %p886 = pneg %p153
      $region50: #{generator_forward.54} parent=47 // pred_check_branch
        %888 = sbr.rel (%p886) target = $region52
      $region51: #{generator_forward.54} parent=47 // pred_region
        %s889 = smul.u32 2, %s24
        %p890 = scmp.lt.s32.totalorder %s23, 1
        %s891 = scalar_select %p890, %s23, 1
        %p892 = scmp.lt.s32.totalorder %s889, 1
        %s893 = scalar_select %p892, %s889, 1
        %s894 = smul.addr %s891, 2
        %s895 = sadd.s32 %s893, %s894
        %s896 = smul.addr %s895, 8
        %s897 = scalar_lea.vmem %s4, %s896
      $region52: #{generator_forward.54} parent=47 // pred_fallthru
        _
      // Predicated region
      $region53: #{generator_forward.54} parent=47 // pred_check
        %p898 = pneg %p181
      $region54: #{generator_forward.54} parent=47 // pred_check_branch
        %900 = sbr.rel (%p898) target = $region56
      $region55: #{generator_forward.54} parent=47 // pred_region
        %p901 = scmp.lt.s32.totalorder %s23, 1
        %s902 = scalar_select %p901, %s23, 1
        %p903 = scmp.lt.s32.totalorder %s24, 0
        %s904 = scalar_select %p903, %s24, 0
        %s905 = sadd.s32 %s904, %s902
        %s906 = smul.addr %s905, 8
        %s907 = scalar_lea.vmem %s5, %s906
      $region56: #{generator_forward.54} parent=47 // pred_fallthru
        _
    $region48: #{generator_forward.54} parent=5 // pred_fallthru
      _
  $region6: #{generator_forward.54} parent=0 // loop_footer
    %s16 = sadd.s32 1, %s12
  $region7: #{generator_forward.54} parent=0 // loop_footer_branch
    %11 = sbr.rel target = $region3
  $region8: #{generator_forward.54} parent=0 // loop_exit
    _

// kernel: generator_forward.52
$region0: #{generator_forward.52}
  #allocation0 [shape = 'u32[]', space=smem, size = 0x4, offset = 0x4, fixed_abs, tag = 'smem constant byte address 0x4 - core index']
  #allocation1 [shape = 'u32[72,128]{1,0:T(1,128)}', space=vmem, size = 0x9000, scoped, tag = 'internal scratch']
  %s0 = inlined_call_operand.vmem [shape: bf16[2,16,128], index: 0, kind: input, shape index: {}]
  %s1 = inlined_call_operand.vmem [shape: bf16[2,16,128], index: 1, kind: input, shape index: {}]
  %s2 = inlined_call_operand.vmem [shape: bf16[128,128], index: 2, kind: input, shape index: {}]
  %s3 = inlined_call_operand.vmem [shape: bf16[128,128], index: 3, kind: input, shape index: {}]
  %s4 = inlined_call_operand.vmem [shape: f32[2,16,128], index: 4, kind: output, shape index: {0}]
  %s5 = inlined_call_operand.vmem [shape: f32[2,1,8,128], index: 5, kind: output, shape index: {1}]
  %6 = xla_tuple %s4, %s5
  %s7 = sld [smem:[#allocation0]]
  $region57: #{generator_forward.52} parent=0
    _
  %s9 = ssub.s32 1, %s7
  %s10 = scalar_select 0, %s9, %s7
  loop: start=0, step=1, limit=4
  $region2: #{generator_forward.52} parent=0 // loop_pre_header
    _
  $region3: #{generator_forward.52} parent=0 // loop_header
    %s12 = sphi 0, %s16
    %p13 = scmp.ge.s32.totalorder %s12, 4
    %s19 = sphi 0, %s31
    %s20 = sphi 0, %s27
    %s21 = sphi 0, %s19
    %s22 = sphi 0, %s20
    %s23 = sphi 0, %s21
    %s24 = sphi 0, %s22
    %s36 = sphi 0, %s38
    %s39 = sphi 0, %s36
    %s40 = sphi 0, %s39
    %s56 = sphi 0, %s40
    %s64 = sphi 0, %s66
    %s67 = sphi 0, %s64
    %s68 = sphi 0, %s67
    %s84 = sphi 0, %s68
    %s88 = sphi 0, %s88
    %s90 = sphi 0, %s88
    %s91 = sphi 0, %s90
    %s105 = sphi 0, %s91
    %s109 = sphi 0, %s109
    %s111 = sphi 0, %s109
    %s112 = sphi 0, %s111
    %s126 = sphi 0, %s112
    %s134 = sphi 0, %s136
    %s137 = sphi 0, %s134
    %s138 = sphi 0, %s137
    %s154 = sphi 0, %s138
    %s162 = sphi 0, %s164
    %s165 = sphi 0, %s162
    %s166 = sphi 0, %s165
    %s182 = sphi 0, %s166
  $region4: #{generator_forward.52} parent=0 // loop_header_branch
    %15 = sbr.rel (%p13) target = $region8
  $region5: #{generator_forward.52} parent=0 // loop_body
    %s17 = ssub.s32 %s12, 1
    %s18 = ssub.s32 %s12, 2
    %s25 = sadd.s32 1, %s20
    %p26 = scmp.ge.s32.totalorder %s25, 1
    %s27 = scalar_select %p26, 0, %s25
    %s28 = sadd.s32 1, %s19
    %s29 = scalar_select %p26, %s28, %s19
    %p30 = scmp.ge.s32.totalorder %s29, 2
    %s31 = scalar_select %p30, 0, %s29
    %s32 = ssub.s32 %s19, %s31
    %s33 = ssub.s32 %s20, %s27
    %s34 = sor.u32 %s32, %s33
    %p35 = scmp.eq.s32.totalorder %s34, 0
    %s37 = sadd.s32 %s36, 1
    %s38 = scalar_select %p35, %s36, %s37
    %p41 = pneg %p35
    %p42 = scmp.eq.s32.totalorder %s12, 1
    %p43 = por %p41, %p42
    %p44 = scmp.ne.s32.totalorder %s36, %s39
    %p45 = scmp.eq.s32.totalorder %s12, 0
    %p46 = por %p44, %p45
    %p47 = scmp.ne.s32.totalorder %s36, %s39
    %p48 = scmp.eq.s32.totalorder %s17, 1
    %p49 = por %p47, %p48
    %p50 = scmp.ne.s32.totalorder %s39, %s40
    %p51 = scmp.eq.s32.totalorder %s17, 0
    %p52 = por %p50, %p51
    %p53 = scmp.ne.s32.totalorder %s39, %s40
    %p54 = scmp.eq.s32.totalorder %s18, 1
    %p55 = por %p53, %p54
    %p57 = scmp.ne.s32.totalorder %s40, %s56
    %p58 = scmp.eq.s32.totalorder %s18, 0
    %p59 = por %p57, %p58
    %s60 = ssub.s32 %s19, %s31
    %s61 = ssub.s32 %s20, %s27
    %s62 = sor.u32 %s60, %s61
    %p63 = scmp.eq.s32.totalorder %s62, 0
    %s65 = sadd.s32 %s64, 1
    %s66 = scalar_select %p63, %s64, %s65
    %p69 = pneg %p63
    %p70 = scmp.eq.s32.totalorder %s12, 1
    %p71 = por %p69, %p70
    %p72 = scmp.ne.s32.totalorder %s64, %s67
    %p73 = scmp.eq.s32.totalorder %s12, 0
    %p74 = por %p72, %p73
    %p75 = scmp.ne.s32.totalorder %s64, %s67
    %p76 = scmp.eq.s32.totalorder %s17, 1
    %p77 = por %p75, %p76
    %p78 = scmp.ne.s32.totalorder %s67, %s68
    %p79 = scmp.eq.s32.totalorder %s17, 0
    %p80 = por %p78, %p79
    %p81 = scmp.ne.s32.totalorder %s67, %s68
    %p82 = scmp.eq.s32.totalorder %s18, 1
    %p83 = por %p81, %p82
    %p85 = scmp.ne.s32.totalorder %s68, %s84
    %p86 = scmp.eq.s32.totalorder %s18, 0
    %p87 = por %p85, %p86
    %s89 = sadd.s32 %s88, 1
    %p92 = scmp.eq.s32.totalorder %s12, 1
    %p93 = scmp.ne.s32.totalorder %s88, %s90
    %p94 = scmp.eq.s32.totalorder %s12, 0
    %p95 = por %p93, %p94
    %p96 = scmp.ne.s32.totalorder %s88, %s90
    %p97 = scmp.eq.s32.totalorder %s17, 1
    %p98 = por %p96, %p97
    %p99 = scmp.ne.s32.totalorder %s90, %s91
    %p100 = scmp.eq.s32.totalorder %s17, 0
    %p101 = por %p99, %p100
    %p102 = scmp.ne.s32.totalorder %s90, %s91
    %p103 = scmp.eq.s32.totalorder %s18, 1
    %p104 = por %p102, %p103
    %p106 = scmp.ne.s32.totalorder %s91, %s105
    %p107 = scmp.eq.s32.totalorder %s18, 0
    %p108 = por %p106, %p107
    %s110 = sadd.s32 %s109, 1
    %p113 = scmp.eq.s32.totalorder %s12, 1
    %p114 = scmp.ne.s32.totalorder %s109, %s111
    %p115 = scmp.eq.s32.totalorder %s12, 0
    %p116 = por %p114, %p115
    %p117 = scmp.ne.s32.totalorder %s109, %s111
    %p118 = scmp.eq.s32.totalorder %s17, 1
    %p119 = por %p117, %p118
    %p120 = scmp.ne.s32.totalorder %s111, %s112
    %p121 = scmp.eq.s32.totalorder %s17, 0
    %p122 = por %p120, %p121
    %p123 = scmp.ne.s32.totalorder %s111, %s112
    %p124 = scmp.eq.s32.totalorder %s18, 1
    %p125 = por %p123, %p124
    %p127 = scmp.ne.s32.totalorder %s112, %s126
    %p128 = scmp.eq.s32.totalorder %s18, 0
    %p129 = por %p127, %p128
    %s130 = ssub.s32 %s19, %s31
    %s131 = ssub.s32 %s20, %s27
    %s132 = sor.u32 %s130, %s131
    %p133 = scmp.eq.s32.totalorder %s132, 0
    %s135 = sadd.s32 %s134, 1
    %s136 = scalar_select %p133, %s134, %s135
    %p139 = pneg %p133
    %p140 = scmp.eq.s32.totalorder %s12, 1
    %p141 = por %p139, %p140
    %p142 = scmp.ne.s32.totalorder %s134, %s137
    %p143 = scmp.eq.s32.totalorder %s12, 0
    %p144 = por %p142, %p143
    %p145 = scmp.ne.s32.totalorder %s134, %s137
    %p146 = scmp.eq.s32.totalorder %s17, 1
    %p147 = por %p145, %p146
    %p148 = scmp.ne.s32.totalorder %s137, %s138
    %p149 = scmp.eq.s32.totalorder %s17, 0
    %p150 = por %p148, %p149
    %p151 = scmp.ne.s32.totalorder %s137, %s138
    %p152 = scmp.eq.s32.totalorder %s18, 1
    %p153 = por %p151, %p152
    %p155 = scmp.ne.s32.totalorder %s138, %s154
    %p156 = scmp.eq.s32.totalorder %s18, 0
    %p157 = por %p155, %p156
    %s158 = ssub.s32 %s19, %s31
    %s159 = ssub.s32 %s20, %s27
    %s160 = sor.u32 %s158, %s159
    %p161 = scmp.eq.s32.totalorder %s160, 0
    %s163 = sadd.s32 %s162, 1
    %s164 = scalar_select %p161, %s162, %s163
    %p167 = pneg %p161
    %p168 = scmp.eq.s32.totalorder %s12, 1
    %p169 = por %p167, %p168
    %p170 = scmp.ne.s32.totalorder %s162, %s165
    %p171 = scmp.eq.s32.totalorder %s12, 0
    %p172 = por %p170, %p171
    %p173 = scmp.ne.s32.totalorder %s162, %s165
    %p174 = scmp.eq.s32.totalorder %s17, 1
    %p175 = por %p173, %p174
    %p176 = scmp.ne.s32.totalorder %s165, %s166
    %p177 = scmp.eq.s32.totalorder %s17, 0
    %p178 = por %p176, %p177
    %p179 = scmp.ne.s32.totalorder %s165, %s166
    %p180 = scmp.eq.s32.totalorder %s18, 1
    %p181 = por %p179, %p180
    %p183 = scmp.ne.s32.totalorder %s166, %s182
    %p184 = scmp.eq.s32.totalorder %s18, 0
    %p185 = por %p183, %p184
    %p186 = scmp.le.s32.totalorder 1, %s12
    %p187 = scmp.lt.s32.totalorder %s12, 3
    %p188 = pnand %p186, %p187
    %p189 = pneg %p188
    // Predicated region
    $region9: #{generator_forward.52} parent=5 // pred_check
      _
    $region10: #{generator_forward.52} parent=5 // pred_check_branch
      %191 = sbr.rel (%p188) target = $region12
    $region11: #{generator_forward.52} parent=5 // pred_region
      %s192 = ssub.s32 %s12, 1
      // Predicated region
      $region13: #{generator_forward.52} parent=11 // pred_check
        %p193 = pneg %p101
      $region14: #{generator_forward.52} parent=11 // pred_check_branch
        %195 = sbr.rel (%p193) target = $region16
      $region15: #{generator_forward.52} parent=11 // pred_region
        _
      $region16: #{generator_forward.52} parent=11 // pred_fallthru
        _
      // Predicated region
      $region17: #{generator_forward.52} parent=11 // pred_check
        %p196 = pneg %p122
      $region18: #{generator_forward.52} parent=11 // pred_check_branch
        %198 = sbr.rel (%p196) target = $region20
      $region19: #{generator_forward.52} parent=11 // pred_region
        _
      $region20: #{generator_forward.52} parent=11 // pred_fallthru
        _
    $region12: #{generator_forward.52} parent=5 // pred_fallthru
      _
    %p199 = scmp.lt.s32.totalorder %s12, 2
    // Predicated region
    $region21: #{generator_forward.52} parent=5 // pred_check
      %p200 = pneg %p199
    $region22: #{generator_forward.52} parent=5 // pred_check_branch
      %202 = sbr.rel (%p200) target = $region24
    $region23: #{generator_forward.52} parent=5 // pred_region
      // Predicated region
      $region25: #{generator_forward.52} parent=23 // pred_check
        %p203 = pneg %p46
      $region26: #{generator_forward.52} parent=23 // pred_check_branch
        %205 = sbr.rel (%p203) target = $region28
      $region27: #{generator_forward.52} parent=23 // pred_region
        %s206 = smul.u32 2, %s20
        %p207 = scmp.lt.s32.totalorder %s19, 1
        %s208 = scalar_select %p207, %s19, 1
        %p209 = scmp.lt.s32.totalorder %s206, 1
        %s210 = scalar_select %p209, %s206, 1
        %s211 = smul.addr %s208, 2
        %s212 = sadd.s32 %s210, %s211
        %s213 = smul.addr %s212, 4
        %s214 = scalar_lea.vmem %s0, %s213
        %s215 = smul.u32 2, %s20
      $region28: #{generator_forward.52} parent=23 // pred_fallthru
        _
      // Predicated region
      $region29: #{generator_forward.52} parent=23 // pred_check
        %p216 = pneg %p74
      $region30: #{generator_forward.52} parent=23 // pred_check_branch
        %218 = sbr.rel (%p216) target = $region32
      $region31: #{generator_forward.52} parent=23 // pred_region
        %s219 = smul.u32 2, %s20
        %p220 = scmp.lt.s32.totalorder %s19, 1
        %s221 = scalar_select %p220, %s19, 1
        %p222 = scmp.lt.s32.totalorder %s219, 1
        %s223 = scalar_select %p222, %s219, 1
        %s224 = smul.addr %s221, 2
        %s225 = sadd.s32 %s223, %s224
        %s226 = smul.addr %s225, 4
        %s227 = scalar_lea.vmem %s1, %s226
        %s228 = smul.u32 2, %s20
      $region32: #{generator_forward.52} parent=23 // pred_fallthru
        _
    $region24: #{generator_forward.52} parent=5 // pred_fallthru
      _
    %p229 = scmp.le.s32.totalorder 1, %s12
    %p230 = scmp.lt.s32.totalorder %s12, 3
    %p231 = pnand %p229, %p230
    %p232 = pneg %p231
    // Predicated region
    $region33: #{generator_forward.52} parent=5 // pred_check
      _
    $region34: #{generator_forward.52} parent=5 // pred_check_branch
      %234 = sbr.rel (%p231) target = $region36
    $region35: #{generator_forward.52} parent=5 // pred_region
      %s235 = ssub.s32 %s12, 1
      %s236 = smul.u32 2, %s22
      %p237 = scmp.lt.s32.totalorder %s21, 1
      %s238 = scalar_select %p237, %s21, 1
      %p239 = scmp.lt.s32.totalorder %s236, 1
      %s240 = scalar_select %p239, %s236, 1
      %s241 = smul.addr %s238, 2
      %s242 = sadd.s32 %s240, %s241
      %s243 = smul.addr %s242, 4
      %s244 = scalar_lea.vmem %s0, %s243
      %p245 = pneg %p52
      %p246 = pneg %p49
      %s247 = smul.u32 2, %s22
      %p248 = scmp.lt.s32.totalorder %s21, 1
      %s249 = scalar_select %p248, %s21, 1
      %p250 = scmp.lt.s32.totalorder %s247, 1
      %s251 = scalar_select %p250, %s247, 1
      %s252 = smul.addr %s249, 2
      %s253 = sadd.s32 %s251, %s252
      %s254 = smul.addr %s253, 4
      %s255 = scalar_lea.vmem %s1, %s254
      %p256 = pneg %p80
      %p257 = pneg %p77
      %p258 = pneg %p101
      %p259 = pneg %p98
      %p260 = pneg %p122
      %p261 = pneg %p119
      %p262 = pneg %p150
      %p263 = pneg %p147
      %s264 = smul.u32 2, %s22
      %p265 = scmp.lt.s32.totalorder %s21, 1
      %s266 = scalar_select %p265, %s21, 1
      %p267 = scmp.lt.s32.totalorder %s264, 1
      %s268 = scalar_select %p267, %s264, 1
      %s269 = smul.addr %s266, 2
      %s270 = sadd.s32 %s268, %s269
      %s271 = smul.addr %s270, 8
      %s272 = scalar_lea.vmem %s4, %s271
      %p273 = pneg %p178
      %p274 = pneg %p175
      %p275 = scmp.lt.s32.totalorder %s21, 1
      %s276 = scalar_select %p275, %s21, 1
      %p277 = scmp.lt.s32.totalorder %s22, 0
      %s278 = scalar_select %p277, %s22, 0
      %s279 = sadd.s32 %s278, %s276
      %s280 = smul.addr %s279, 8
      %s281 = scalar_lea.vmem %s5, %s280
      %s282 = smul.u32 2, %s22
      %p283 = scmp.lt.s32.totalorder %s21, 1
      %s284 = scalar_select %p283, %s21, 1
      %p285 = scmp.lt.s32.totalorder %s282, 1
      %s286 = scalar_select %p285, %s282, 1
      %s287 = smul.addr %s284, 2
      %s288 = sadd.s32 %s286, %s287
      %s289 = smul.addr %s288, 4
      %s290 = scalar_lea.vmem %s0, %s289
      %s291 = smul.u32 2, %s22
      %s292 = smul.u32 2, %s22
      %p293 = scmp.lt.s32.totalorder %s21, 1
      %s294 = scalar_select %p293, %s21, 1
      %p295 = scmp.lt.s32.totalorder %s292, 1
      %s296 = scalar_select %p295, %s292, 1
      %s297 = smul.addr %s294, 2
      %s298 = sadd.s32 %s296, %s297
      %s299 = smul.addr %s298, 4
      %s300 = scalar_lea.vmem %s1, %s299
      %s301 = smul.u32 2, %s22
      %s302 = smul.u32 2, %s22
      %p303 = scmp.lt.s32.totalorder %s21, 1
      %s304 = scalar_select %p303, %s21, 1
      %p305 = scmp.lt.s32.totalorder %s302, 1
      %s306 = scalar_select %p305, %s302, 1
      %s307 = smul.addr %s304, 2
      %s308 = sadd.s32 %s306, %s307
      %s309 = smul.addr %s308, 8
      %s310 = scalar_lea.vmem %s4, %s309
      %s311 = smul.u32 2, %s22
      %p312 = scmp.lt.s32.totalorder %s21, 1
      %s313 = scalar_select %p312, %s21, 1
      %p314 = scmp.lt.s32.totalorder %s22, 0
      %s315 = scalar_select %p314, %s22, 0
      %s316 = sadd.s32 %s315, %s313
      %s317 = smul.addr %s316, 8
      %s318 = scalar_lea.vmem %s5, %s317
      %v319 = vld [vmem:[%s290] sm:$0xf]
      %v320 = vld [vmem:[%s290 + $0x4] sm:$0xf]
      %v321 = vld [vmem:[%s2] sm:$0xf]
      %v322 = vld [vmem:[%s2 + $0x4] sm:$0xf]
      %v323 = vld [vmem:[%s2 + $0x8] sm:$0xf]
      %v324 = vld [vmem:[%s2 + $0xc] sm:$0xf]
      %v325 = vld [vmem:[%s2 + $0x10] sm:$0xf]
      %v326 = vld [vmem:[%s2 + $0x14] sm:$0xf]
      %v327 = vld [vmem:[%s2 + $0x18] sm:$0xf]
      %v328 = vld [vmem:[%s2 + $0x1c] sm:$0xf]
      %v329 = vld [vmem:[%s2 + $0x20] sm:$0xf]
      %v330 = vld [vmem:[%s2 + $0x24] sm:$0xf]
      %v331 = vld [vmem:[%s2 + $0x28] sm:$0xf]
      %v332 = vld [vmem:[%s2 + $0x2c] sm:$0xf]
      %v333 = vld [vmem:[%s2 + $0x30] sm:$0xf]
      %v334 = vld [vmem:[%s2 + $0x34] sm:$0xf]
      %v335 = vld [vmem:[%s2 + $0x38] sm:$0xf]
      %v336 = vld [vmem:[%s2 + $0x3c] sm:$0xf]
      %v337 = vld [vmem:[%s300] sm:$0xf]
      %v338 = vld [vmem:[%s300 + $0x4] sm:$0xf]
      %v339 = vld [vmem:[%s3] sm:$0xf]
      %v340 = vld [vmem:[%s3 + $0x4] sm:$0xf]
      %v341 = vld [vmem:[%s3 + $0x8] sm:$0xf]
      %v342 = vld [vmem:[%s3 + $0xc] sm:$0xf]
      %v343 = vld [vmem:[%s3 + $0x10] sm:$0xf]
      %v344 = vld [vmem:[%s3 + $0x14] sm:$0xf]
      %v345 = vld [vmem:[%s3 + $0x18] sm:$0xf]
      %v346 = vld [vmem:[%s3 + $0x1c] sm:$0xf]
      %v347 = vld [vmem:[%s3 + $0x20] sm:$0xf]
      %v348 = vld [vmem:[%s3 + $0x24] sm:$0xf]
      %v349 = vld [vmem:[%s3 + $0x28] sm:$0xf]
      %v350 = vld [vmem:[%s3 + $0x2c] sm:$0xf]
      %v351 = vld [vmem:[%s3 + $0x30] sm:$0xf]
      %v352 = vld [vmem:[%s3 + $0x34] sm:$0xf]
      %v353 = vld [vmem:[%s3 + $0x38] sm:$0xf]
      %v354 = vld [vmem:[%s3 + $0x3c] sm:$0xf]
      %v357 = vunpack.c.l.b16 %v337
      %v358 = vunpack.c.l.b16 %v338
      %v359 = vpack.c.b16 %v358, %v357
      %v377 = vunpack.c.l.b16 %v339
      %v378 = vunpack.c.l.b16 %v340
      %v379 = vunpack.c.l.b16 %v341
      %v380 = vunpack.c.l.b16 %v342
      %v381 = vunpack.c.l.b16 %v343
      %v382 = vunpack.c.l.b16 %v344
      %v383 = vunpack.c.l.b16 %v345
      %v384 = vunpack.c.l.b16 %v346
      %v385 = vunpack.c.l.b16 %v347
      %v386 = vunpack.c.l.b16 %v348
      %v387 = vunpack.c.l.b16 %v349
      %v388 = vunpack.c.l.b16 %v350
      %v389 = vunpack.c.l.b16 %v351
      %v390 = vunpack.c.l.b16 %v352
      %v391 = vunpack.c.l.b16 %v353
      %v392 = vunpack.c.l.b16 %v354
      %v393 = vpack.c.b16 %v378, %v377
      %v394 = vpack.c.b16 %v380, %v379
      %v395 = vpack.c.b16 %v382, %v381
      %v396 = vpack.c.b16 %v384, %v383
      %v397 = vpack.c.b16 %v386, %v385
      %v398 = vpack.c.b16 %v388, %v387
      %v399 = vpack.c.b16 %v390, %v389
      %v400 = vpack.c.b16 %v392, %v391
      %409 = vmatpush.bf16.msra.mxu0 %v400
      %410 = vmatpush.bf16.msra.mxu0 %v399
      %411 = vmatpush.bf16.msra.mxu0 %v398
      %412 = vmatpush.bf16.msra.mxu0 %v397
      %413 = vmatpush.bf16.msra.mxu0 %v396
      %414 = vmatpush.bf16.msra.mxu0 %v395
      %415 = vmatpush.bf16.msra.mxu0 %v394
      %416 = vmatpush.bf16.msra.mxu0 %v393
      %417 = vmatmul.bf16.gmra.mxu0 %v359
      %v418 = vpop.f32.mrf.mxu0
      %v419 = vadd.f32 0.0, %v418
      %v420 = vpop.f32.mrf.mxu0
      %v421 = vadd.f32 0.0, %v420
      %422 = vdwg.mxu0
      %v425 = vunpack.c.l.b16 %v319
      %v426 = vunpack.c.l.b16 %v320
      %v427 = vpack.c.b16 %v426, %v425
      %v445 = vunpack.c.l.b16 %v321
      %v446 = vunpack.c.l.b16 %v322
      %v447 = vunpack.c.l.b16 %v323
      %v448 = vunpack.c.l.b16 %v324
      %v449 = vunpack.c.l.b16 %v325
      %v450 = vunpack.c.l.b16 %v326
      %v451 = vunpack.c.l.b16 %v327
      %v452 = vunpack.c.l.b16 %v328
      %v453 = vunpack.c.l.b16 %v329
      %v454 = vunpack.c.l.b16 %v330
      %v455 = vunpack.c.l.b16 %v331
      %v456 = vunpack.c.l.b16 %v332
      %v457 = vunpack.c.l.b16 %v333
      %v458 = vunpack.c.l.b16 %v334
      %v459 = vunpack.c.l.b16 %v335
      %v460 = vunpack.c.l.b16 %v336
      %v461 = vpack.c.b16 %v446, %v445
      %v462 = vpack.c.b16 %v448, %v447
      %v463 = vpack.c.b16 %v450, %v449
      %v464 = vpack.c.b16 %v452, %v451
      %v465 = vpack.c.b16 %v454, %v453
      %v466 = vpack.c.b16 %v456, %v455
      %v467 = vpack.c.b16 %v458, %v457
      %v468 = vpack.c.b16 %v460, %v459
      %477 = vmatpush.bf16.msra.mxu0 %v468
      %478 = vmatpush.bf16.msra.mxu0 %v467
      %479 = vmatpush.bf16.msra.mxu0 %v466
      %480 = vmatpush.bf16.msra.mxu0 %v465
      %481 = vmatpush.bf16.msra.mxu0 %v464
      %482 = vmatpush.bf16.msra.mxu0 %v463
      %483 = vmatpush.bf16.msra.mxu0 %v462
      %484 = vmatpush.bf16.msra.mxu0 %v461
      %485 = vmatmul.bf16.gmra.mxu0 %v427
      %v486 = vpop.f32.mrf.mxu0
      %v487 = vadd.f32 %v419, %v486
      %v488 = vpop.f32.mrf.mxu0
      %v489 = vadd.f32 %v421, %v488
      %490 = vdwg.mxu0
      %491 = vst [vmem:[%s310] sm:$0xff] %v487
      %492 = vst [vmem:[%s310 + $0x8] sm:$0xff] %v489
      %v493 = vadd.f32 %v487, %v489
      %v494 = vrot.slane %v493, 4
      %v495 = vadd.f32 %v493, %v494
      %v496 = vrot.slane %v495, 2
      %v497 = vadd.f32 %v495, %v496
      %v498 = vrot.slane %v497, 1
      %v499 = vadd.f32 %v497, %v498
      %v500 = vmul.f32 %v487, %v487
      %v501 = vmul.f32 %v489, %v489
      %v502 = vadd.f32 %v500, %v501
      %v503 = vrot.slane %v502, 4
      %v504 = vadd.f32 %v502, %v503
      %v505 = vrot.slane %v504, 2
      %v506 = vadd.f32 %v504, %v505
      %v507 = vrot.slane %v506, 1
      %v508 = vadd.f32 %v506, %v507
      %v509 = vlaneseq
      %v510 = vshrl.u32 %v509, 7
      %vm511 = vcmp.eq.s32.totalorder %v510, 0
      %vm512 = vcmp.eq.s32.totalorder %v510, 1
      %v513 = vsel %vm512, %v508, 0.0
      %v514 = vsel %vm511, %v499, %v513
      %515 = vst [vmem:[%s318] sm:$0xff] %v514
      %s516 = smul.u32 2, %s22
      %p517 = scmp.lt.s32.totalorder %s21, 1
      %s518 = scalar_select %p517, %s21, 1
      %p519 = scmp.lt.s32.totalorder %s516, 1
      %s520 = scalar_select %p519, %s516, 1
      %s521 = smul.addr %s518, 2
      %s522 = sadd.s32 %s520, %s521
      %s523 = smul.addr %s522, 8
      %s524 = scalar_lea.vmem %s4, %s523
      %p525 = scmp.lt.s32.totalorder %s21, 1
      %s526 = scalar_select %p525, %s21, 1
      %p527 = scmp.lt.s32.totalorder %s22, 0
      %s528 = scalar_select %p527, %s22, 0
      %s529 = sadd.s32 %s528, %s526
      %s530 = smul.addr %s529, 8
      %s531 = scalar_lea.vmem %s5, %s530
      // Predicated region
      $region37: #{generator_forward.52} parent=35 // pred_check
        %p532 = pneg %p147
      $region38: #{generator_forward.52} parent=35 // pred_check_branch
        %534 = sbr.rel (%p532) target = $region40
      $region39: #{generator_forward.52} parent=35 // pred_region
        %s535 = smul.u32 2, %s22
      $region40: #{generator_forward.52} parent=35 // pred_fallthru
        _
      // Predicated region
      $region41: #{generator_forward.52} parent=35 // pred_check
        %p536 = pneg %p175
      $region42: #{generator_forward.52} parent=35 // pred_check_branch
        %538 = sbr.rel (%p536) target = $region44
      $region43: #{generator_forward.52} parent=35 // pred_region
        _
      $region44: #{generator_forward.52} parent=35 // pred_fallthru
        _
    $region36: #{generator_forward.52} parent=5 // pred_fallthru
      _
    %p539 = scmp.le.s32.totalorder 2, %s12
    // Predicated region
    $region45: #{generator_forward.52} parent=5 // pred_check
      %p540 = pneg %p539
    $region46: #{generator_forward.52} parent=5 // pred_check_branch
      %542 = sbr.rel (%p540) target = $region48
    $region47: #{generator_forward.52} parent=5 // pred_region
      %s543 = ssub.s32 %s12, 2
      // Predicated region
      $region49: #{generator_forward.52} parent=47 // pred_check
        %p544 = pneg %p153
      $region50: #{generator_forward.52} parent=47 // pred_check_branch
        %546 = sbr.rel (%p544) target = $region52
      $region51: #{generator_forward.52} parent=47 // pred_region
        %s547 = smul.u32 2, %s24
        %p548 = scmp.lt.s32.totalorder %s23, 1
        %s549 = scalar_select %p548, %s23, 1
        %p550 = scmp.lt.s32.totalorder %s547, 1
        %s551 = scalar_select %p550, %s547, 1
        %s552 = smul.addr %s549, 2
        %s553 = sadd.s32 %s551, %s552
        %s554 = smul.addr %s553, 8
        %s555 = scalar_lea.vmem %s4, %s554
      $region52: #{generator_forward.52} parent=47 // pred_fallthru
        _
      // Predicated region
      $region53: #{generator_forward.52} parent=47 // pred_check
        %p556 = pneg %p181
      $region54: #{generator_forward.52} parent=47 // pred_check_branch
        %558 = sbr.rel (%p556) target = $region56
      $region55: #{generator_forward.52} parent=47 // pred_region
        %p559 = scmp.lt.s32.totalorder %s23, 1
        %s560 = scalar_select %p559, %s23, 1
        %p561 = scmp.lt.s32.totalorder %s24, 0
        %s562 = scalar_select %p561, %s24, 0
        %s563 = sadd.s32 %s562, %s560
        %s564 = smul.addr %s563, 8
        %s565 = scalar_lea.vmem %s5, %s564
      $region56: #{generator_forward.52} parent=47 // pred_fallthru
        _
    $region48: #{generator_forward.52} parent=5 // pred_fallthru
      _
  $region6: #{generator_forward.52} parent=0 // loop_footer
    %s16 = sadd.s32 1, %s12
  $region7: #{generator_forward.52} parent=0 // loop_footer_branch
    %11 = sbr.rel target = $region3
  $region8: #{generator_forward.52} parent=0 // loop_exit
    _

// kernel: generator_forward.57
$region0: #{generator_forward.57}
  #allocation0 [shape = 'u32[]', space=smem, size = 0x4, offset = 0x4, fixed_abs, tag = 'smem constant byte address 0x4 - core index']
  #allocation1 [shape = 'u32[72,128]{1,0:T(1,128)}', space=vmem, size = 0x9000, scoped, tag = 'internal scratch']
  %s0 = inlined_call_operand.vmem [shape: f32[2,16,128], index: 0, kind: input, shape index: {}]
  %s1 = inlined_call_operand.vmem [shape: f32[2,1,128], index: 1, kind: input, shape index: {}]
  %s2 = inlined_call_operand.vmem [shape: f32[2,1,128], index: 2, kind: input, shape index: {}]
  %s3 = inlined_call_operand.vmem [shape: f32[2,16,128], index: 3, kind: input, shape index: {}]
  %s4 = inlined_call_operand.vmem [shape: f32[2,16,128], index: 4, kind: output, shape index: {}]
  %s5 = sld [smem:[#allocation0]]
  $region49: #{generator_forward.57} parent=0
    _
  %s7 = ssub.s32 1, %s5
  %s8 = scalar_select 0, %s7, %s5
  loop: start=0, step=1, limit=4
  $region2: #{generator_forward.57} parent=0 // loop_pre_header
    _
  $region3: #{generator_forward.57} parent=0 // loop_header
    %s10 = sphi 0, %s14
    %p11 = scmp.ge.s32.totalorder %s10, 4
    %s17 = sphi 0, %s29
    %s18 = sphi 0, %s25
    %s19 = sphi 0, %s17
    %s20 = sphi 0, %s18
    %s21 = sphi 0, %s19
    %s22 = sphi 0, %s20
    %s34 = sphi 0, %s36
    %s37 = sphi 0, %s34
    %s38 = sphi 0, %s37
    %s54 = sphi 0, %s38
    %s60 = sphi 0, %s62
    %s63 = sphi 0, %s60
    %s64 = sphi 0, %s63
    %s80 = sphi 0, %s64
    %s86 = sphi 0, %s88
    %s89 = sphi 0, %s86
    %s90 = sphi 0, %s89
    %s106 = sphi 0, %s90
    %s114 = sphi 0, %s116
    %s117 = sphi 0, %s114
    %s118 = sphi 0, %s117
    %s134 = sphi 0, %s118
    %s142 = sphi 0, %s144
    %s145 = sphi 0, %s142
    %s146 = sphi 0, %s145
    %s162 = sphi 0, %s146
  $region4: #{generator_forward.57} parent=0 // loop_header_branch
    %13 = sbr.rel (%p11) target = $region8
  $region5: #{generator_forward.57} parent=0 // loop_body
    %s15 = ssub.s32 %s10, 1
    %s16 = ssub.s32 %s10, 2
    %s23 = sadd.s32 1, %s18
    %p24 = scmp.ge.s32.totalorder %s23, 1
    %s25 = scalar_select %p24, 0, %s23
    %s26 = sadd.s32 1, %s17
    %s27 = scalar_select %p24, %s26, %s17
    %p28 = scmp.ge.s32.totalorder %s27, 2
    %s29 = scalar_select %p28, 0, %s27
    %s30 = ssub.s32 %s17, %s29
    %s31 = ssub.s32 %s18, %s25
    %s32 = sor.u32 %s30, %s31
    %p33 = scmp.eq.s32.totalorder %s32, 0
    %s35 = sadd.s32 %s34, 1
    %s36 = scalar_select %p33, %s34, %s35
    %p39 = pneg %p33
    %p40 = scmp.eq.s32.totalorder %s10, 1
    %p41 = por %p39, %p40
    %p42 = scmp.ne.s32.totalorder %s34, %s37
    %p43 = scmp.eq.s32.totalorder %s10, 0
    %p44 = por %p42, %p43
    %p45 = scmp.ne.s32.totalorder %s34, %s37
    %p46 = scmp.eq.s32.totalorder %s15, 1
    %p47 = por %p45, %p46
    %p48 = scmp.ne.s32.totalorder %s37, %s38
    %p49 = scmp.eq.s32.totalorder %s15, 0
    %p50 = por %p48, %p49
    %p51 = scmp.ne.s32.totalorder %s37, %s38
    %p52 = scmp.eq.s32.totalorder %s16, 1
    %p53 = por %p51, %p52
    %p55 = scmp.ne.s32.totalorder %s38, %s54
    %p56 = scmp.eq.s32.totalorder %s16, 0
    %p57 = por %p55, %p56
    %s58 = ssub.s32 %s17, %s29
    %p59 = scmp.eq.s32.totalorder %s58, 0
    %s61 = sadd.s32 %s60, 1
    %s62 = scalar_select %p59, %s60, %s61
    %p65 = pneg %p59
    %p66 = scmp.eq.s32.totalorder %s10, 1
    %p67 = por %p65, %p66
    %p68 = scmp.ne.s32.totalorder %s60, %s63
    %p69 = scmp.eq.s32.totalorder %s10, 0
    %p70 = por %p68, %p69
    %p71 = scmp.ne.s32.totalorder %s60, %s63
    %p72 = scmp.eq.s32.totalorder %s15, 1
    %p73 = por %p71, %p72
    %p74 = scmp.ne.s32.totalorder %s63, %s64
    %p75 = scmp.eq.s32.totalorder %s15, 0
    %p76 = por %p74, %p75
    %p77 = scmp.ne.s32.totalorder %s63, %s64
    %p78 = scmp.eq.s32.totalorder %s16, 1
    %p79 = por %p77, %p78
    %p81 = scmp.ne.s32.totalorder %s64, %s80
    %p82 = scmp.eq.s32.totalorder %s16, 0
    %p83 = por %p81, %p82
    %s84 = ssub.s32 %s17, %s29
    %p85 = scmp.eq.s32.totalorder %s84, 0
    %s87 = sadd.s32 %s86, 1
    %s88 = scalar_select %p85, %s86, %s87
    %p91 = pneg %p85
    %p92 = scmp.eq.s32.totalorder %s10, 1
    %p93 = por %p91, %p92
    %p94 = scmp.ne.s32.totalorder %s86, %s89
    %p95 = scmp.eq.s32.totalorder %s10, 0
    %p96 = por %p94, %p95
    %p97 = scmp.ne.s32.totalorder %s86, %s89
    %p98 = scmp.eq.s32.totalorder %s15, 1
    %p99 = por %p97, %p98
    %p100 = scmp.ne.s32.totalorder %s89, %s90
    %p101 = scmp.eq.s32.totalorder %s15, 0
    %p102 = por %p100, %p101
    %p103 = scmp.ne.s32.totalorder %s89, %s90
    %p104 = scmp.eq.s32.totalorder %s16, 1
    %p105 = por %p103, %p104
    %p107 = scmp.ne.s32.totalorder %s90, %s106
    %p108 = scmp.eq.s32.totalorder %s16, 0
    %p109 = por %p107, %p108
    %s110 = ssub.s32 %s17, %s29
    %s111 = ssub.s32 %s18, %s25
    %s112 = sor.u32 %s110, %s111
    %p113 = scmp.eq.s32.totalorder %s112, 0
    %s115 = sadd.s32 %s114, 1
    %s116 = scalar_select %p113, %s114, %s115
    %p119 = pneg %p113
    %p120 = scmp.eq.s32.totalorder %s10, 1
    %p121 = por %p119, %p120
    %p122 = scmp.ne.s32.totalorder %s114, %s117
    %p123 = scmp.eq.s32.totalorder %s10, 0
    %p124 = por %p122, %p123
    %p125 = scmp.ne.s32.totalorder %s114, %s117
    %p126 = scmp.eq.s32.totalorder %s15, 1
    %p127 = por %p125, %p126
    %p128 = scmp.ne.s32.totalorder %s117, %s118
    %p129 = scmp.eq.s32.totalorder %s15, 0
    %p130 = por %p128, %p129
    %p131 = scmp.ne.s32.totalorder %s117, %s118
    %p132 = scmp.eq.s32.totalorder %s16, 1
    %p133 = por %p131, %p132
    %p135 = scmp.ne.s32.totalorder %s118, %s134
    %p136 = scmp.eq.s32.totalorder %s16, 0
    %p137 = por %p135, %p136
    %s138 = ssub.s32 %s17, %s29
    %s139 = ssub.s32 %s18, %s25
    %s140 = sor.u32 %s138, %s139
    %p141 = scmp.eq.s32.totalorder %s140, 0
    %s143 = sadd.s32 %s142, 1
    %s144 = scalar_select %p141, %s142, %s143
    %p147 = pneg %p141
    %p148 = scmp.eq.s32.totalorder %s10, 1
    %p149 = por %p147, %p148
    %p150 = scmp.ne.s32.totalorder %s142, %s145
    %p151 = scmp.eq.s32.totalorder %s10, 0
    %p152 = por %p150, %p151
    %p153 = scmp.ne.s32.totalorder %s142, %s145
    %p154 = scmp.eq.s32.totalorder %s15, 1
    %p155 = por %p153, %p154
    %p156 = scmp.ne.s32.totalorder %s145, %s146
    %p157 = scmp.eq.s32.totalorder %s15, 0
    %p158 = por %p156, %p157
    %p159 = scmp.ne.s32.totalorder %s145, %s146
    %p160 = scmp.eq.s32.totalorder %s16, 1
    %p161 = por %p159, %p160
    %p163 = scmp.ne.s32.totalorder %s146, %s162
    %p164 = scmp.eq.s32.totalorder %s16, 0
    %p165 = por %p163, %p164
    %p166 = scmp.le.s32.totalorder 1, %s10
    %p167 = scmp.lt.s32.totalorder %s10, 3
    %p168 = pnand %p166, %p167
    %p169 = pneg %p168
    // Predicated region
    $region9: #{generator_forward.57} parent=5 // pred_check
      _
    $region10: #{generator_forward.57} parent=5 // pred_check_branch
      %171 = sbr.rel (%p168) target = $region12
    $region11: #{generator_forward.57} parent=5 // pred_region
      %s172 = ssub.s32 %s10, 1
    $region12: #{generator_forward.57} parent=5 // pred_fallthru
      _
    %p173 = scmp.lt.s32.totalorder %s10, 2
    // Predicated region
    $region13: #{generator_forward.57} parent=5 // pred_check
      %p174 = pneg %p173
    $region14: #{generator_forward.57} parent=5 // pred_check_branch
      %176 = sbr.rel (%p174) target = $region16
    $region15: #{generator_forward.57} parent=5 // pred_region
      // Predicated region
      $region17: #{generator_forward.57} parent=15 // pred_check
        %p177 = pneg %p44
      $region18: #{generator_forward.57} parent=15 // pred_check_branch
        %179 = sbr.rel (%p177) target = $region20
      $region19: #{generator_forward.57} parent=15 // pred_region
        %s180 = smul.u32 2, %s18
        %p181 = scmp.lt.s32.totalorder %s17, 1
        %s182 = scalar_select %p181, %s17, 1
        %p183 = scmp.lt.s32.totalorder %s180, 1
        %s184 = scalar_select %p183, %s180, 1
        %s185 = smul.addr %s182, 2
        %s186 = sadd.s32 %s184, %s185
        %s187 = smul.addr %s186, 8
        %s188 = scalar_lea.vmem %s0, %s187
        %s189 = smul.u32 2, %s18
      $region20: #{generator_forward.57} parent=15 // pred_fallthru
        _
      // Predicated region
      $region21: #{generator_forward.57} parent=15 // pred_check
        %p190 = pneg %p70
      $region22: #{generator_forward.57} parent=15 // pred_check_branch
        %192 = sbr.rel (%p190) target = $region24
      $region23: #{generator_forward.57} parent=15 // pred_region
        %p193 = scmp.lt.s32.totalorder %s17, 1
        %s194 = scalar_select %p193, %s17, 1
        %s195 = scalar_lea.vmem %s1, %s194
      $region24: #{generator_forward.57} parent=15 // pred_fallthru
        _
      // Predicated region
      $region25: #{generator_forward.57} parent=15 // pred_check
        %p196 = pneg %p96
      $region26: #{generator_forward.57} parent=15 // pred_check_branch
        %198 = sbr.rel (%p196) target = $region28
      $region27: #{generator_forward.57} parent=15 // pred_region
        %p199 = scmp.lt.s32.totalorder %s17, 1
        %s200 = scalar_select %p199, %s17, 1
        %s201 = scalar_lea.vmem %s2, %s200
      $region28: #{generator_forward.57} parent=15 // pred_fallthru
        _
      // Predicated region
      $region29: #{generator_forward.57} parent=15 // pred_check
        %p202 = pneg %p124
      $region30: #{generator_forward.57} parent=15 // pred_check_branch
        %204 = sbr.rel (%p202) target = $region32
      $region31: #{generator_forward.57} parent=15 // pred_region
        %s205 = smul.u32 2, %s18
        %p206 = scmp.lt.s32.totalorder %s17, 1
        %s207 = scalar_select %p206, %s17, 1
        %p208 = scmp.lt.s32.totalorder %s205, 1
        %s209 = scalar_select %p208, %s205, 1
        %s210 = smul.addr %s207, 2
        %s211 = sadd.s32 %s209, %s210
        %s212 = smul.addr %s211, 8
        %s213 = scalar_lea.vmem %s3, %s212
        %s214 = smul.u32 2, %s18
      $region32: #{generator_forward.57} parent=15 // pred_fallthru
        _
    $region16: #{generator_forward.57} parent=5 // pred_fallthru
      _
    %p215 = scmp.le.s32.totalorder 1, %s10
    %p216 = scmp.lt.s32.totalorder %s10, 3
    %p217 = pnand %p215, %p216
    %p218 = pneg %p217
    // Predicated region
    $region33: #{generator_forward.57} parent=5 // pred_check
      _
    $region34: #{generator_forward.57} parent=5 // pred_check_branch
      %220 = sbr.rel (%p217) target = $region36
    $region35: #{generator_forward.57} parent=5 // pred_region
      %s221 = ssub.s32 %s10, 1
      %s222 = smul.u32 2, %s20
      %p223 = scmp.lt.s32.totalorder %s19, 1
      %s224 = scalar_select %p223, %s19, 1
      %p225 = scmp.lt.s32.totalorder %s222, 1
      %s226 = scalar_select %p225, %s222, 1
      %s227 = smul.addr %s224, 2
      %s228 = sadd.s32 %s226, %s227
      %s229 = smul.addr %s228, 8
      %s230 = scalar_lea.vmem %s0, %s229
      %p231 = pneg %p50
      %p232 = pneg %p47
      %p233 = scmp.lt.s32.totalorder %s19, 1
      %s234 = scalar_select %p233, %s19, 1
      %s235 = scalar_lea.vmem %s1, %s234
      %p236 = pneg %p76
      %p237 = pneg %p73
      %p238 = scmp.lt.s32.totalorder %s19, 1
      %s239 = scalar_select %p238, %s19, 1
      %s240 = scalar_lea.vmem %s2, %s239
      %p241 = pneg %p102
      %p242 = pneg %p99
      %s243 = smul.u32 2, %s20
      %p244 = scmp.lt.s32.totalorder %s19, 1
      %s245 = scalar_select %p244, %s19, 1
      %p246 = scmp.lt.s32.totalorder %s243, 1
      %s247 = scalar_select %p246, %s243, 1
      %s248 = smul.addr %s245, 2
      %s249 = sadd.s32 %s247, %s248
      %s250 = smul.addr %s249, 8
      %s251 = scalar_lea.vmem %s3, %s250
      %p252 = pneg %p130
      %p253 = pneg %p127
      %p254 = pneg %p158
      %p255 = pneg %p155
      %s256 = smul.u32 2, %s20
      %p257 = scmp.lt.s32.totalorder %s19, 1
      %s258 = scalar_select %p257, %s19, 1
      %p259 = scmp.lt.s32.totalorder %s256, 1
      %s260 = scalar_select %p259, %s256, 1
      %s261 = smul.addr %s258, 2
      %s262 = sadd.s32 %s260, %s261
      %s263 = smul.addr %s262, 8
      %s264 = scalar_lea.vmem %s4, %s263
      %s265 = smul.u32 2, %s20
      %p266 = scmp.lt.s32.totalorder %s19, 1
      %s267 = scalar_select %p266, %s19, 1
      %p268 = scmp.lt.s32.totalorder %s265, 1
      %s269 = scalar_select %p268, %s265, 1
      %s270 = smul.addr %s267, 2
      %s271 = sadd.s32 %s269, %s270
      %s272 = smul.addr %s271, 8
      %s273 = scalar_lea.vmem %s0, %s272
      %s274 = smul.u32 2, %s20
      %p275 = scmp.lt.s32.totalorder %s19, 1
      %s276 = scalar_select %p275, %s19, 1
      %s277 = scalar_lea.vmem %s1, %s276
      %p278 = scmp.lt.s32.totalorder %s19, 1
      %s279 = scalar_select %p278, %s19, 1
      %s280 = scalar_lea.vmem %s2, %s279
      %s281 = smul.u32 2, %s20
      %p282 = scmp.lt.s32.totalorder %s19, 1
      %s283 = scalar_select %p282, %s19, 1
      %p284 = scmp.lt.s32.totalorder %s281, 1
      %s285 = scalar_select %p284, %s281, 1
      %s286 = smul.addr %s283, 2
      %s287 = sadd.s32 %s285, %s286
      %s288 = smul.addr %s287, 8
      %s289 = scalar_lea.vmem %s3, %s288
      %s290 = smul.u32 2, %s20
      %s291 = smul.u32 2, %s20
      %p292 = scmp.lt.s32.totalorder %s19, 1
      %s293 = scalar_select %p292, %s19, 1
      %p294 = scmp.lt.s32.totalorder %s291, 1
      %s295 = scalar_select %p294, %s291, 1
      %s296 = smul.addr %s293, 2
      %s297 = sadd.s32 %s295, %s296
      %s298 = smul.addr %s297, 8
      %s299 = scalar_lea.vmem %s4, %s298
      %s300 = smul.u32 2, %s20
      %v301 = vld [vmem:[%s273] sm:$0xff]
      %v302 = vld [vmem:[%s273 + $0x8] sm:$0xff]
      %v303 = vld [vmem:[%s277] sm:$0x1]
      %v305 = vperm.slane %v303, 0
      %v307 = vmul.f32 %v301, %v305
      %v308 = vmul.f32 %v302, %v305
      %v309 = vld [vmem:[%s280] sm:$0x1]
      %v311 = vperm.slane %v309, 0
      %v313 = vadd.f32 %v307, %v311
      %v314 = vadd.f32 %v308, %v311
      %v315 = vld [vmem:[%s289] sm:$0xff]
      %v316 = vld [vmem:[%s289 + $0x8] sm:$0xff]
      %v317 = vadd.f32 %v313, %v315
      %v318 = vadd.f32 %v314, %v316
      %319 = vst [vmem:[%s299] sm:$0xff] %v317
      %320 = vst [vmem:[%s299 + $0x8] sm:$0xff] %v318
      %s321 = smul.u32 2, %s20
      %p322 = scmp.lt.s32.totalorder %s19, 1
      %s323 = scalar_select %p322, %s19, 1
      %p324 = scmp.lt.s32.totalorder %s321, 1
      %s325 = scalar_select %p324, %s321, 1
      %s326 = smul.addr %s323, 2
      %s327 = sadd.s32 %s325, %s326
      %s328 = smul.addr %s327, 8
      %s329 = scalar_lea.vmem %s4, %s328
      // Predicated region
      $region37: #{generator_forward.57} parent=35 // pred_check
        %p330 = pneg %p155
      $region38: #{generator_forward.57} parent=35 // pred_check_branch
        %332 = sbr.rel (%p330) target = $region40
      $region39: #{generator_forward.57} parent=35 // pred_region
        %s333 = smul.u32 2, %s20
      $region40: #{generator_forward.57} parent=35 // pred_fallthru
        _
    $region36: #{generator_forward.57} parent=5 // pred_fallthru
      _
    %p334 = scmp.le.s32.totalorder 2, %s10
    // Predicated region
    $region41: #{generator_forward.57} parent=5 // pred_check
      %p335 = pneg %p334
    $region42: #{generator_forward.57} parent=5 // pred_check_branch
      %337 = sbr.rel (%p335) target = $region44
    $region43: #{generator_forward.57} parent=5 // pred_region
      %s338 = ssub.s32 %s10, 2
      // Predicated region
      $region45: #{generator_forward.57} parent=43 // pred_check
        %p339 = pneg %p161
      $region46: #{generator_forward.57} parent=43 // pred_check_branch
        %341 = sbr.rel (%p339) target = $region48
      $region47: #{generator_forward.57} parent=43 // pred_region
        %s342 = smul.u32 2, %s22
        %p343 = scmp.lt.s32.totalorder %s21, 1
        %s344 = scalar_select %p343, %s21, 1
        %p345 = scmp.lt.s32.totalorder %s342, 1
        %s346 = scalar_select %p345, %s342, 1
        %s347 = smul.addr %s344, 2
        %s348 = sadd.s32 %s346, %s347
        %s349 = smul.addr %s348, 8
        %s350 = scalar_lea.vmem %s4, %s349
      $region48: #{generator_forward.57} parent=43 // pred_fallthru
        _
    $region44: #{generator_forward.57} parent=5 // pred_fallthru
      _
  $region6: #{generator_forward.57} parent=0 // loop_footer
    %s14 = sadd.s32 1, %s10
  $region7: #{generator_forward.57} parent=0 // loop_footer_branch
    %9 = sbr.rel target = $region3
  $region8: #{generator_forward.57} parent=0 // loop_exit
    _

// kernel: generator_forward.85
$region0: #{generator_forward.85}
  #allocation0 [shape = 'u32[]', space=smem, size = 0x4, offset = 0x4, fixed_abs, tag = 'smem constant byte address 0x4 - core index']
  #allocation1 [shape = 'u32[72,128]{1,0:T(1,128)}', space=vmem, size = 0x9000, scoped, tag = 'internal scratch']
  %s0 = inlined_call_operand.vmem [shape: f32[2,16,128], index: 0, kind: input, shape index: {}]
  %s1 = inlined_call_operand.vmem [shape: f32[2,1,128], index: 1, kind: input, shape index: {}]
  %s2 = inlined_call_operand.vmem [shape: f32[2,1,128], index: 2, kind: input, shape index: {}]
  %s3 = inlined_call_operand.vmem [shape: f32[2,16,128], index: 3, kind: output, shape index: {}]
  %s4 = sld [smem:[#allocation0]]
  $region45: #{generator_forward.85} parent=0
    _
  %s6 = ssub.s32 1, %s4
  %s7 = scalar_select 0, %s6, %s4
  loop: start=0, step=1, limit=4
  $region2: #{generator_forward.85} parent=0 // loop_pre_header
    _
  $region3: #{generator_forward.85} parent=0 // loop_header
    %s9 = sphi 0, %s13
    %p10 = scmp.ge.s32.totalorder %s9, 4
    %s16 = sphi 0, %s28
    %s17 = sphi 0, %s24
    %s18 = sphi 0, %s16
    %s19 = sphi 0, %s17
    %s20 = sphi 0, %s18
    %s21 = sphi 0, %s19
    %s33 = sphi 0, %s35
    %s36 = sphi 0, %s33
    %s37 = sphi 0, %s36
    %s53 = sphi 0, %s37
    %s59 = sphi 0, %s61
    %s62 = sphi 0, %s59
    %s63 = sphi 0, %s62
    %s79 = sphi 0, %s63
    %s85 = sphi 0, %s87
    %s88 = sphi 0, %s85
    %s89 = sphi 0, %s88
    %s105 = sphi 0, %s89
    %s113 = sphi 0, %s115
    %s116 = sphi 0, %s113
    %s117 = sphi 0, %s116
    %s133 = sphi 0, %s117
  $region4: #{generator_forward.85} parent=0 // loop_header_branch
    %12 = sbr.rel (%p10) target = $region8
  $region5: #{generator_forward.85} parent=0 // loop_body
    %s14 = ssub.s32 %s9, 1
    %s15 = ssub.s32 %s9, 2
    %s22 = sadd.s32 1, %s17
    %p23 = scmp.ge.s32.totalorder %s22, 1
    %s24 = scalar_select %p23, 0, %s22
    %s25 = sadd.s32 1, %s16
    %s26 = scalar_select %p23, %s25, %s16
    %p27 = scmp.ge.s32.totalorder %s26, 2
    %s28 = scalar_select %p27, 0, %s26
    %s29 = ssub.s32 %s16, %s28
    %s30 = ssub.s32 %s17, %s24
    %s31 = sor.u32 %s29, %s30
    %p32 = scmp.eq.s32.totalorder %s31, 0
    %s34 = sadd.s32 %s33, 1
    %s35 = scalar_select %p32, %s33, %s34
    %p38 = pneg %p32
    %p39 = scmp.eq.s32.totalorder %s9, 1
    %p40 = por %p38, %p39
    %p41 = scmp.ne.s32.totalorder %s33, %s36
    %p42 = scmp.eq.s32.totalorder %s9, 0
    %p43 = por %p41, %p42
    %p44 = scmp.ne.s32.totalorder %s33, %s36
    %p45 = scmp.eq.s32.totalorder %s14, 1
    %p46 = por %p44, %p45
    %p47 = scmp.ne.s32.totalorder %s36, %s37
    %p48 = scmp.eq.s32.totalorder %s14, 0
    %p49 = por %p47, %p48
    %p50 = scmp.ne.s32.totalorder %s36, %s37
    %p51 = scmp.eq.s32.totalorder %s15, 1
    %p52 = por %p50, %p51
    %p54 = scmp.ne.s32.totalorder %s37, %s53
    %p55 = scmp.eq.s32.totalorder %s15, 0
    %p56 = por %p54, %p55
    %s57 = ssub.s32 %s16, %s28
    %p58 = scmp.eq.s32.totalorder %s57, 0
    %s60 = sadd.s32 %s59, 1
    %s61 = scalar_select %p58, %s59, %s60
    %p64 = pneg %p58
    %p65 = scmp.eq.s32.totalorder %s9, 1
    %p66 = por %p64, %p65
    %p67 = scmp.ne.s32.totalorder %s59, %s62
    %p68 = scmp.eq.s32.totalorder %s9, 0
    %p69 = por %p67, %p68
    %p70 = scmp.ne.s32.totalorder %s59, %s62
    %p71 = scmp.eq.s32.totalorder %s14, 1
    %p72 = por %p70, %p71
    %p73 = scmp.ne.s32.totalorder %s62, %s63
    %p74 = scmp.eq.s32.totalorder %s14, 0
    %p75 = por %p73, %p74
    %p76 = scmp.ne.s32.totalorder %s62, %s63
    %p77 = scmp.eq.s32.totalorder %s15, 1
    %p78 = por %p76, %p77
    %p80 = scmp.ne.s32.totalorder %s63, %s79
    %p81 = scmp.eq.s32.totalorder %s15, 0
    %p82 = por %p80, %p81
    %s83 = ssub.s32 %s16, %s28
    %p84 = scmp.eq.s32.totalorder %s83, 0
    %s86 = sadd.s32 %s85, 1
    %s87 = scalar_select %p84, %s85, %s86
    %p90 = pneg %p84
    %p91 = scmp.eq.s32.totalorder %s9, 1
    %p92 = por %p90, %p91
    %p93 = scmp.ne.s32.totalorder %s85, %s88
    %p94 = scmp.eq.s32.totalorder %s9, 0
    %p95 = por %p93, %p94
    %p96 = scmp.ne.s32.totalorder %s85, %s88
    %p97 = scmp.eq.s32.totalorder %s14, 1
    %p98 = por %p96, %p97
    %p99 = scmp.ne.s32.totalorder %s88, %s89
    %p100 = scmp.eq.s32.totalorder %s14, 0
    %p101 = por %p99, %p100
    %p102 = scmp.ne.s32.totalorder %s88, %s89
    %p103 = scmp.eq.s32.totalorder %s15, 1
    %p104 = por %p102, %p103
    %p106 = scmp.ne.s32.totalorder %s89, %s105
    %p107 = scmp.eq.s32.totalorder %s15, 0
    %p108 = por %p106, %p107
    %s109 = ssub.s32 %s16, %s28
    %s110 = ssub.s32 %s17, %s24
    %s111 = sor.u32 %s109, %s110
    %p112 = scmp.eq.s32.totalorder %s111, 0
    %s114 = sadd.s32 %s113, 1
    %s115 = scalar_select %p112, %s113, %s114
    %p118 = pneg %p112
    %p119 = scmp.eq.s32.totalorder %s9, 1
    %p120 = por %p118, %p119
    %p121 = scmp.ne.s32.totalorder %s113, %s116
    %p122 = scmp.eq.s32.totalorder %s9, 0
    %p123 = por %p121, %p122
    %p124 = scmp.ne.s32.totalorder %s113, %s116
    %p125 = scmp.eq.s32.totalorder %s14, 1
    %p126 = por %p124, %p125
    %p127 = scmp.ne.s32.totalorder %s116, %s117
    %p128 = scmp.eq.s32.totalorder %s14, 0
    %p129 = por %p127, %p128
    %p130 = scmp.ne.s32.totalorder %s116, %s117
    %p131 = scmp.eq.s32.totalorder %s15, 1
    %p132 = por %p130, %p131
    %p134 = scmp.ne.s32.totalorder %s117, %s133
    %p135 = scmp.eq.s32.totalorder %s15, 0
    %p136 = por %p134, %p135
    %p137 = scmp.le.s32.totalorder 1, %s9
    %p138 = scmp.lt.s32.totalorder %s9, 3
    %p139 = pnand %p137, %p138
    %p140 = pneg %p139
    // Predicated region
    $region9: #{generator_forward.85} parent=5 // pred_check
      _
    $region10: #{generator_forward.85} parent=5 // pred_check_branch
      %142 = sbr.rel (%p139) target = $region12
    $region11: #{generator_forward.85} parent=5 // pred_region
      %s143 = ssub.s32 %s9, 1
    $region12: #{generator_forward.85} parent=5 // pred_fallthru
      _
    %p144 = scmp.lt.s32.totalorder %s9, 2
    // Predicated region
    $region13: #{generator_forward.85} parent=5 // pred_check
      %p145 = pneg %p144
    $region14: #{generator_forward.85} parent=5 // pred_check_branch
      %147 = sbr.rel (%p145) target = $region16
    $region15: #{generator_forward.85} parent=5 // pred_region
      // Predicated region
      $region17: #{generator_forward.85} parent=15 // pred_check
        %p148 = pneg %p43
      $region18: #{generator_forward.85} parent=15 // pred_check_branch
        %150 = sbr.rel (%p148) target = $region20
      $region19: #{generator_forward.85} parent=15 // pred_region
        %s151 = smul.u32 2, %s17
        %p152 = scmp.lt.s32.totalorder %s16, 1
        %s153 = scalar_select %p152, %s16, 1
        %p154 = scmp.lt.s32.totalorder %s151, 1
        %s155 = scalar_select %p154, %s151, 1
        %s156 = smul.addr %s153, 2
        %s157 = sadd.s32 %s155, %s156
        %s158 = smul.addr %s157, 8
        %s159 = scalar_lea.vmem %s0, %s158
        %s160 = smul.u32 2, %s17
      $region20: #{generator_forward.85} parent=15 // pred_fallthru
        _
      // Predicated region
      $region21: #{generator_forward.85} parent=15 // pred_check
        %p161 = pneg %p69
      $region22: #{generator_forward.85} parent=15 // pred_check_branch
        %163 = sbr.rel (%p161) target = $region24
      $region23: #{generator_forward.85} parent=15 // pred_region
        %p164 = scmp.lt.s32.totalorder %s16, 1
        %s165 = scalar_select %p164, %s16, 1
        %s166 = scalar_lea.vmem %s1, %s165
      $region24: #{generator_forward.85} parent=15 // pred_fallthru
        _
      // Predicated region
      $region25: #{generator_forward.85} parent=15 // pred_check
        %p167 = pneg %p95
      $region26: #{generator_forward.85} parent=15 // pred_check_branch
        %169 = sbr.rel (%p167) target = $region28
      $region27: #{generator_forward.85} parent=15 // pred_region
        %p170 = scmp.lt.s32.totalorder %s16, 1
        %s171 = scalar_select %p170, %s16, 1
        %s172 = scalar_lea.vmem %s2, %s171
      $region28: #{generator_forward.85} parent=15 // pred_fallthru
        _
    $region16: #{generator_forward.85} parent=5 // pred_fallthru
      _
    %p173 = scmp.le.s32.totalorder 1, %s9
    %p174 = scmp.lt.s32.totalorder %s9, 3
    %p175 = pnand %p173, %p174
    %p176 = pneg %p175
    // Predicated region
    $region29: #{generator_forward.85} parent=5 // pred_check
      _
    $region30: #{generator_forward.85} parent=5 // pred_check_branch
      %178 = sbr.rel (%p175) target = $region32
    $region31: #{generator_forward.85} parent=5 // pred_region
      %s179 = ssub.s32 %s9, 1
      %s180 = smul.u32 2, %s19
      %p181 = scmp.lt.s32.totalorder %s18, 1
      %s182 = scalar_select %p181, %s18, 1
      %p183 = scmp.lt.s32.totalorder %s180, 1
      %s184 = scalar_select %p183, %s180, 1
      %s185 = smul.addr %s182, 2
      %s186 = sadd.s32 %s184, %s185
      %s187 = smul.addr %s186, 8
      %s188 = scalar_lea.vmem %s0, %s187
      %p189 = pneg %p49
      %p190 = pneg %p46
      %p191 = scmp.lt.s32.totalorder %s18, 1
      %s192 = scalar_select %p191, %s18, 1
      %s193 = scalar_lea.vmem %s1, %s192
      %p194 = pneg %p75
      %p195 = pneg %p72
      %p196 = scmp.lt.s32.totalorder %s18, 1
      %s197 = scalar_select %p196, %s18, 1
      %s198 = scalar_lea.vmem %s2, %s197
      %p199 = pneg %p101
      %p200 = pneg %p98
      %p201 = pneg %p129
      %p202 = pneg %p126
      %s203 = smul.u32 2, %s19
      %p204 = scmp.lt.s32.totalorder %s18, 1
      %s205 = scalar_select %p204, %s18, 1
      %p206 = scmp.lt.s32.totalorder %s203, 1
      %s207 = scalar_select %p206, %s203, 1
      %s208 = smul.addr %s205, 2
      %s209 = sadd.s32 %s207, %s208
      %s210 = smul.addr %s209, 8
      %s211 = scalar_lea.vmem %s3, %s210
      %s212 = smul.u32 2, %s19
      %p213 = scmp.lt.s32.totalorder %s18, 1
      %s214 = scalar_select %p213, %s18, 1
      %p215 = scmp.lt.s32.totalorder %s212, 1
      %s216 = scalar_select %p215, %s212, 1
      %s217 = smul.addr %s214, 2
      %s218 = sadd.s32 %s216, %s217
      %s219 = smul.addr %s218, 8
      %s220 = scalar_lea.vmem %s0, %s219
      %s221 = smul.u32 2, %s19
      %p222 = scmp.lt.s32.totalorder %s18, 1
      %s223 = scalar_select %p222, %s18, 1
      %s224 = scalar_lea.vmem %s1, %s223
      %p225 = scmp.lt.s32.totalorder %s18, 1
      %s226 = scalar_select %p225, %s18, 1
      %s227 = scalar_lea.vmem %s2, %s226
      %s228 = smul.u32 2, %s19
      %p229 = scmp.lt.s32.totalorder %s18, 1
      %s230 = scalar_select %p229, %s18, 1
      %p231 = scmp.lt.s32.totalorder %s228, 1
      %s232 = scalar_select %p231, %s228, 1
      %s233 = smul.addr %s230, 2
      %s234 = sadd.s32 %s232, %s233
      %s235 = smul.addr %s234, 8
      %s236 = scalar_lea.vmem %s3, %s235
      %s237 = smul.u32 2, %s19
      %v238 = vld [vmem:[%s220] sm:$0xff]
      %v239 = vld [vmem:[%s220 + $0x8] sm:$0xff]
      %v240 = vld [vmem:[%s224] sm:$0x1]
      %v242 = vperm.slane %v240, 0
      %v244 = vmul.f32 %v238, %v242
      %v245 = vmul.f32 %v239, %v242
      %v246 = vld [vmem:[%s227] sm:$0x1]
      %v248 = vperm.slane %v246, 0
      %v250 = vadd.f32 %v244, %v248
      %v251 = vadd.f32 %v245, %v248
      %252 = vst [vmem:[%s236] sm:$0xff] %v250
      %253 = vst [vmem:[%s236 + $0x8] sm:$0xff] %v251
      %s254 = smul.u32 2, %s19
      %p255 = scmp.lt.s32.totalorder %s18, 1
      %s256 = scalar_select %p255, %s18, 1
      %p257 = scmp.lt.s32.totalorder %s254, 1
      %s258 = scalar_select %p257, %s254, 1
      %s259 = smul.addr %s256, 2
      %s260 = sadd.s32 %s258, %s259
      %s261 = smul.addr %s260, 8
      %s262 = scalar_lea.vmem %s3, %s261
      // Predicated region
      $region33: #{generator_forward.85} parent=31 // pred_check
        %p263 = pneg %p126
      $region34: #{generator_forward.85} parent=31 // pred_check_branch
        %265 = sbr.rel (%p263) target = $region36
      $region35: #{generator_forward.85} parent=31 // pred_region
        %s266 = smul.u32 2, %s19
      $region36: #{generator_forward.85} parent=31 // pred_fallthru
        _
    $region32: #{generator_forward.85} parent=5 // pred_fallthru
      _
    %p267 = scmp.le.s32.totalorder 2, %s9
    // Predicated region
    $region37: #{generator_forward.85} parent=5 // pred_check
      %p268 = pneg %p267
    $region38: #{generator_forward.85} parent=5 // pred_check_branch
      %270 = sbr.rel (%p268) target = $region40
    $region39: #{generator_forward.85} parent=5 // pred_region
      %s271 = ssub.s32 %s9, 2
      // Predicated region
      $region41: #{generator_forward.85} parent=39 // pred_check
        %p272 = pneg %p132
      $region42: #{generator_forward.85} parent=39 // pred_check_branch
        %274 = sbr.rel (%p272) target = $region44
      $region43: #{generator_forward.85} parent=39 // pred_region
        %s275 = smul.u32 2, %s21
        %p276 = scmp.lt.s32.totalorder %s20, 1
        %s277 = scalar_select %p276, %s20, 1
        %p278 = scmp.lt.s32.totalorder %s275, 1
        %s279 = scalar_select %p278, %s275, 1
        %s280 = smul.addr %s277, 2
        %s281 = sadd.s32 %s279, %s280
        %s282 = smul.addr %s281, 8
        %s283 = scalar_lea.vmem %s3, %s282
      $region44: #{generator_forward.85} parent=39 // pred_fallthru
        _
    $region40: #{generator_forward.85} parent=5 // pred_fallthru
      _
  $region6: #{generator_forward.85} parent=0 // loop_footer
    %s13 = sadd.s32 1, %s9
  $region7: #{generator_forward.85} parent=0 // loop_footer_branch
    %8 = sbr.rel target = $region3
  $region8: #{generator_forward.85} parent=0 // loop_exit
    _

// kernel: tile.24
$region0: #{tile.24}
  %s0 = inlined_call_operand.vmem [shape: f32[2,4,16], index: 0, kind: input, shape index: {}]
  %s1 = inlined_call_operand.vmem [shape: f32[2,64], index: 1, kind: output, shape index: {}]
  $region1: #{tile.24} parent=0
    #allocation0 [shape = 'u8[4096]{0}', space=vmem, size = 0x1000, scoped, tag = 'scoped mem for output reshape']
    #allocation1 [shape = 'u8[8192]{0}', space=vmem, size = 0x2000, scoped, tag = 'scoped mem for input reshape']
    %s3 = ssub.s32 16, 1
    %s4 = scalar_lea.vmem %s0, 4
    %v5 = vld [vmem:[%s4] sm:%s3]
    %s6 = scalar_lea.vmem [#allocation1], 8
    %7 = vst [vmem:[%s6] sm:%s3] %v5
    %v8 = vld [vmem:[%s0] sm:%s3]
    %9 = vst [vmem:[#allocation1] sm:%s3] %v8
    %s10 = smov 3
    %v11 = vld [vmem:[#allocation1] ss:$8 sm:%s10]
    %vm12 = vcmask 130048
    %13 = vst.msk [vmem:[#allocation0] sm:$0x3] %vm12, %v11
    %s14 = scalar_lea.vmem [#allocation1], 3
    %s15 = smov 3
    %v16 = vld [vmem:[%s14] ss:$8 sm:%s15]
    %17 = vrot.lane.b32.xlu0 %v16, 48
    %v18 = vpop.permute.xlu0 %17
    %vm19 = vcmask 523648
    %20 = vst.msk [vmem:[#allocation0] sm:$0x3] %vm19, %v18
    %s21 = scalar_lea.vmem [#allocation1], 2
    %s22 = smov 3
    %v23 = vld [vmem:[%s21] ss:$8 sm:%s22]
    %24 = vrot.lane.b32.xlu0 %v23, 32
    %v25 = vpop.permute.xlu0 %24
    %vm26 = vcmask 392448
    %27 = vst.msk [vmem:[#allocation0] sm:$0x3] %vm26, %v25
    %s28 = scalar_lea.vmem [#allocation1], 1
    %s29 = smov 3
    %v30 = vld [vmem:[%s28] ss:$8 sm:%s29]
    %31 = vrot.lane.b32.xlu0 %v30, 16
    %v32 = vpop.permute.xlu0 %31
    %vm33 = vcmask 261248
    %34 = vst.msk [vmem:[#allocation0] sm:$0x3] %vm33, %v32
    %s36 = ssub.s32 4, 1
    %v37 = vld [vmem:[#allocation0] sm:%s36]
    %s39 = ssub.s32 4, 1
    %40 = vst [vmem:[%s1] sm:%s39] %v37

// kernel: generator_forward.87
$region0: #{generator_forward.87}
  #allocation0 [shape = 'u32[]', space=smem, size = 0x4, offset = 0x4, fixed_abs, tag = 'smem constant byte address 0x4 - core index']
  #allocation1 [shape = 'u32[72,128]{1,0:T(1,128)}', space=vmem, size = 0x9000, scoped, tag = 'internal scratch']
  %s0 = inlined_call_operand.vmem [shape: f32[2,16,128], index: 0, kind: input, shape index: {}]
  %s1 = inlined_call_operand.vmem [shape: f32[2,1,128], index: 1, kind: input, shape index: {}]
  %s2 = inlined_call_operand.vmem [shape: f32[2,1,128], index: 2, kind: input, shape index: {}]
  %s3 = inlined_call_operand.vmem [shape: f32[2,16,128], index: 3, kind: output, shape index: {}]
  %s4 = sld [smem:[#allocation0]]
  $region45: #{generator_forward.87} parent=0
    _
  %s6 = ssub.s32 1, %s4
  %s7 = scalar_select 0, %s6, %s4
  loop: start=0, step=1, limit=4
  $region2: #{generator_forward.87} parent=0 // loop_pre_header
    _
  $region3: #{generator_forward.87} parent=0 // loop_header
    %s9 = sphi 0, %s13
    %p10 = scmp.ge.s32.totalorder %s9, 4
    %s16 = sphi 0, %s28
    %s17 = sphi 0, %s24
    %s18 = sphi 0, %s16
    %s19 = sphi 0, %s17
    %s20 = sphi 0, %s18
    %s21 = sphi 0, %s19
    %s33 = sphi 0, %s35
    %s36 = sphi 0, %s33
    %s37 = sphi 0, %s36
    %s53 = sphi 0, %s37
    %s59 = sphi 0, %s61
    %s62 = sphi 0, %s59
    %s63 = sphi 0, %s62
    %s79 = sphi 0, %s63
    %s85 = sphi 0, %s87
    %s88 = sphi 0, %s85
    %s89 = sphi 0, %s88
    %s105 = sphi 0, %s89
    %s113 = sphi 0, %s115
    %s116 = sphi 0, %s113
    %s117 = sphi 0, %s116
    %s133 = sphi 0, %s117
  $region4: #{generator_forward.87} parent=0 // loop_header_branch
    %12 = sbr.rel (%p10) target = $region8
  $region5: #{generator_forward.87} parent=0 // loop_body
    %s14 = ssub.s32 %s9, 1
    %s15 = ssub.s32 %s9, 2
    %s22 = sadd.s32 1, %s17
    %p23 = scmp.ge.s32.totalorder %s22, 1
    %s24 = scalar_select %p23, 0, %s22
    %s25 = sadd.s32 1, %s16
    %s26 = scalar_select %p23, %s25, %s16
    %p27 = scmp.ge.s32.totalorder %s26, 2
    %s28 = scalar_select %p27, 0, %s26
    %s29 = ssub.s32 %s16, %s28
    %s30 = ssub.s32 %s17, %s24
    %s31 = sor.u32 %s29, %s30
    %p32 = scmp.eq.s32.totalorder %s31, 0
    %s34 = sadd.s32 %s33, 1
    %s35 = scalar_select %p32, %s33, %s34
    %p38 = pneg %p32
    %p39 = scmp.eq.s32.totalorder %s9, 1
    %p40 = por %p38, %p39
    %p41 = scmp.ne.s32.totalorder %s33, %s36
    %p42 = scmp.eq.s32.totalorder %s9, 0
    %p43 = por %p41, %p42
    %p44 = scmp.ne.s32.totalorder %s33, %s36
    %p45 = scmp.eq.s32.totalorder %s14, 1
    %p46 = por %p44, %p45
    %p47 = scmp.ne.s32.totalorder %s36, %s37
    %p48 = scmp.eq.s32.totalorder %s14, 0
    %p49 = por %p47, %p48
    %p50 = scmp.ne.s32.totalorder %s36, %s37
    %p51 = scmp.eq.s32.totalorder %s15, 1
    %p52 = por %p50, %p51
    %p54 = scmp.ne.s32.totalorder %s37, %s53
    %p55 = scmp.eq.s32.totalorder %s15, 0
    %p56 = por %p54, %p55
    %s57 = ssub.s32 %s16, %s28
    %p58 = scmp.eq.s32.totalorder %s57, 0
    %s60 = sadd.s32 %s59, 1
    %s61 = scalar_select %p58, %s59, %s60
    %p64 = pneg %p58
    %p65 = scmp.eq.s32.totalorder %s9, 1
    %p66 = por %p64, %p65
    %p67 = scmp.ne.s32.totalorder %s59, %s62
    %p68 = scmp.eq.s32.totalorder %s9, 0
    %p69 = por %p67, %p68
    %p70 = scmp.ne.s32.totalorder %s59, %s62
    %p71 = scmp.eq.s32.totalorder %s14, 1
    %p72 = por %p70, %p71
    %p73 = scmp.ne.s32.totalorder %s62, %s63
    %p74 = scmp.eq.s32.totalorder %s14, 0
    %p75 = por %p73, %p74
    %p76 = scmp.ne.s32.totalorder %s62, %s63
    %p77 = scmp.eq.s32.totalorder %s15, 1
    %p78 = por %p76, %p77
    %p80 = scmp.ne.s32.totalorder %s63, %s79
    %p81 = scmp.eq.s32.totalorder %s15, 0
    %p82 = por %p80, %p81
    %s83 = ssub.s32 %s16, %s28
    %p84 = scmp.eq.s32.totalorder %s83, 0
    %s86 = sadd.s32 %s85, 1
    %s87 = scalar_select %p84, %s85, %s86
    %p90 = pneg %p84
    %p91 = scmp.eq.s32.totalorder %s9, 1
    %p92 = por %p90, %p91
    %p93 = scmp.ne.s32.totalorder %s85, %s88
    %p94 = scmp.eq.s32.totalorder %s9, 0
    %p95 = por %p93, %p94
    %p96 = scmp.ne.s32.totalorder %s85, %s88
    %p97 = scmp.eq.s32.totalorder %s14, 1
    %p98 = por %p96, %p97
    %p99 = scmp.ne.s32.totalorder %s88, %s89
    %p100 = scmp.eq.s32.totalorder %s14, 0
    %p101 = por %p99, %p100
    %p102 = scmp.ne.s32.totalorder %s88, %s89
    %p103 = scmp.eq.s32.totalorder %s15, 1
    %p104 = por %p102, %p103
    %p106 = scmp.ne.s32.totalorder %s89, %s105
    %p107 = scmp.eq.s32.totalorder %s15, 0
    %p108 = por %p106, %p107
    %s109 = ssub.s32 %s16, %s28
    %s110 = ssub.s32 %s17, %s24
    %s111 = sor.u32 %s109, %s110
    %p112 = scmp.eq.s32.totalorder %s111, 0
    %s114 = sadd.s32 %s113, 1
    %s115 = scalar_select %p112, %s113, %s114
    %p118 = pneg %p112
    %p119 = scmp.eq.s32.totalorder %s9, 1
    %p120 = por %p118, %p119
    %p121 = scmp.ne.s32.totalorder %s113, %s116
    %p122 = scmp.eq.s32.totalorder %s9, 0
    %p123 = por %p121, %p122
    %p124 = scmp.ne.s32.totalorder %s113, %s116
    %p125 = scmp.eq.s32.totalorder %s14, 1
    %p126 = por %p124, %p125
    %p127 = scmp.ne.s32.totalorder %s116, %s117
    %p128 = scmp.eq.s32.totalorder %s14, 0
    %p129 = por %p127, %p128
    %p130 = scmp.ne.s32.totalorder %s116, %s117
    %p131 = scmp.eq.s32.totalorder %s15, 1
    %p132 = por %p130, %p131
    %p134 = scmp.ne.s32.totalorder %s117, %s133
    %p135 = scmp.eq.s32.totalorder %s15, 0
    %p136 = por %p134, %p135
    %p137 = scmp.le.s32.totalorder 1, %s9
    %p138 = scmp.lt.s32.totalorder %s9, 3
    %p139 = pnand %p137, %p138
    %p140 = pneg %p139
    // Predicated region
    $region9: #{generator_forward.87} parent=5 // pred_check
      _
    $region10: #{generator_forward.87} parent=5 // pred_check_branch
      %142 = sbr.rel (%p139) target = $region12
    $region11: #{generator_forward.87} parent=5 // pred_region
      %s143 = ssub.s32 %s9, 1
    $region12: #{generator_forward.87} parent=5 // pred_fallthru
      _
    %p144 = scmp.lt.s32.totalorder %s9, 2
    // Predicated region
    $region13: #{generator_forward.87} parent=5 // pred_check
      %p145 = pneg %p144
    $region14: #{generator_forward.87} parent=5 // pred_check_branch
      %147 = sbr.rel (%p145) target = $region16
    $region15: #{generator_forward.87} parent=5 // pred_region
      // Predicated region
      $region17: #{generator_forward.87} parent=15 // pred_check
        %p148 = pneg %p43
      $region18: #{generator_forward.87} parent=15 // pred_check_branch
        %150 = sbr.rel (%p148) target = $region20
      $region19: #{generator_forward.87} parent=15 // pred_region
        %s151 = smul.u32 2, %s17
        %p152 = scmp.lt.s32.totalorder %s16, 1
        %s153 = scalar_select %p152, %s16, 1
        %p154 = scmp.lt.s32.totalorder %s151, 1
        %s155 = scalar_select %p154, %s151, 1
        %s156 = smul.addr %s153, 2
        %s157 = sadd.s32 %s155, %s156
        %s158 = smul.addr %s157, 8
        %s159 = scalar_lea.vmem %s0, %s158
        %s160 = smul.u32 2, %s17
      $region20: #{generator_forward.87} parent=15 // pred_fallthru
        _
      // Predicated region
      $region21: #{generator_forward.87} parent=15 // pred_check
        %p161 = pneg %p69
      $region22: #{generator_forward.87} parent=15 // pred_check_branch
        %163 = sbr.rel (%p161) target = $region24
      $region23: #{generator_forward.87} parent=15 // pred_region
        %p164 = scmp.lt.s32.totalorder %s16, 1
        %s165 = scalar_select %p164, %s16, 1
        %s166 = scalar_lea.vmem %s1, %s165
      $region24: #{generator_forward.87} parent=15 // pred_fallthru
        _
      // Predicated region
      $region25: #{generator_forward.87} parent=15 // pred_check
        %p167 = pneg %p95
      $region26: #{generator_forward.87} parent=15 // pred_check_branch
        %169 = sbr.rel (%p167) target = $region28
      $region27: #{generator_forward.87} parent=15 // pred_region
        %p170 = scmp.lt.s32.totalorder %s16, 1
        %s171 = scalar_select %p170, %s16, 1
        %s172 = scalar_lea.vmem %s2, %s171
      $region28: #{generator_forward.87} parent=15 // pred_fallthru
        _
    $region16: #{generator_forward.87} parent=5 // pred_fallthru
      _
    %p173 = scmp.le.s32.totalorder 1, %s9
    %p174 = scmp.lt.s32.totalorder %s9, 3
    %p175 = pnand %p173, %p174
    %p176 = pneg %p175
    // Predicated region
    $region29: #{generator_forward.87} parent=5 // pred_check
      _
    $region30: #{generator_forward.87} parent=5 // pred_check_branch
      %178 = sbr.rel (%p175) target = $region32
    $region31: #{generator_forward.87} parent=5 // pred_region
      %s179 = ssub.s32 %s9, 1
      %s180 = smul.u32 2, %s19
      %p181 = scmp.lt.s32.totalorder %s18, 1
      %s182 = scalar_select %p181, %s18, 1
      %p183 = scmp.lt.s32.totalorder %s180, 1
      %s184 = scalar_select %p183, %s180, 1
      %s185 = smul.addr %s182, 2
      %s186 = sadd.s32 %s184, %s185
      %s187 = smul.addr %s186, 8
      %s188 = scalar_lea.vmem %s0, %s187
      %p189 = pneg %p49
      %p190 = pneg %p46
      %p191 = scmp.lt.s32.totalorder %s18, 1
      %s192 = scalar_select %p191, %s18, 1
      %s193 = scalar_lea.vmem %s1, %s192
      %p194 = pneg %p75
      %p195 = pneg %p72
      %p196 = scmp.lt.s32.totalorder %s18, 1
      %s197 = scalar_select %p196, %s18, 1
      %s198 = scalar_lea.vmem %s2, %s197
      %p199 = pneg %p101
      %p200 = pneg %p98
      %p201 = pneg %p129
      %p202 = pneg %p126
      %s203 = smul.u32 2, %s19
      %p204 = scmp.lt.s32.totalorder %s18, 1
      %s205 = scalar_select %p204, %s18, 1
      %p206 = scmp.lt.s32.totalorder %s203, 1
      %s207 = scalar_select %p206, %s203, 1
      %s208 = smul.addr %s205, 2
      %s209 = sadd.s32 %s207, %s208
      %s210 = smul.addr %s209, 8
      %s211 = scalar_lea.vmem %s3, %s210
      %s212 = smul.u32 2, %s19
      %p213 = scmp.lt.s32.totalorder %s18, 1
      %s214 = scalar_select %p213, %s18, 1
      %p215 = scmp.lt.s32.totalorder %s212, 1
      %s216 = scalar_select %p215, %s212, 1
      %s217 = smul.addr %s214, 2
      %s218 = sadd.s32 %s216, %s217
      %s219 = smul.addr %s218, 8
      %s220 = scalar_lea.vmem %s0, %s219
      %s221 = smul.u32 2, %s19
      %p222 = scmp.lt.s32.totalorder %s18, 1
      %s223 = scalar_select %p222, %s18, 1
      %s224 = scalar_lea.vmem %s1, %s223
      %p225 = scmp.lt.s32.totalorder %s18, 1
      %s226 = scalar_select %p225, %s18, 1
      %s227 = scalar_lea.vmem %s2, %s226
      %s228 = smul.u32 2, %s19
      %p229 = scmp.lt.s32.totalorder %s18, 1
      %s230 = scalar_select %p229, %s18, 1
      %p231 = scmp.lt.s32.totalorder %s228, 1
      %s232 = scalar_select %p231, %s228, 1
      %s233 = smul.addr %s230, 2
      %s234 = sadd.s32 %s232, %s233
      %s235 = smul.addr %s234, 8
      %s236 = scalar_lea.vmem %s3, %s235
      %s237 = smul.u32 2, %s19
      %v238 = vld [vmem:[%s220] sm:$0xff]
      %v239 = vld [vmem:[%s220 + $0x8] sm:$0xff]
      %v240 = vld [vmem:[%s224] sm:$0x1]
      %v242 = vperm.slane %v240, 0
      %v244 = vmul.f32 %v238, %v242
      %v245 = vmul.f32 %v239, %v242
      %v246 = vld [vmem:[%s227] sm:$0x1]
      %v248 = vperm.slane %v246, 0
      %v250 = vadd.f32 %v244, %v248
      %v251 = vadd.f32 %v245, %v248
      %vm252 = vcmp.gt.f32.partialorder %v250, 0.0
      %vm253 = vcmp.gt.f32.partialorder %v251, 0.0
      %v254 = vmul.f32 %v250, 0.01
      %v255 = vmul.f32 %v251, 0.01
      %v256 = vsel %vm252, %v250, %v254
      %v257 = vsel %vm253, %v251, %v255
      %258 = vst [vmem:[%s236] sm:$0xff] %v256
      %259 = vst [vmem:[%s236 + $0x8] sm:$0xff] %v257
      %s260 = smul.u32 2, %s19
      %p261 = scmp.lt.s32.totalorder %s18, 1
      %s262 = scalar_select %p261, %s18, 1
      %p263 = scmp.lt.s32.totalorder %s260, 1
      %s264 = scalar_select %p263, %s260, 1
      %s265 = smul.addr %s262, 2
      %s266 = sadd.s32 %s264, %s265
      %s267 = smul.addr %s266, 8
      %s268 = scalar_lea.vmem %s3, %s267
      // Predicated region
      $region33: #{generator_forward.87} parent=31 // pred_check
        %p269 = pneg %p126
      $region34: #{generator_forward.87} parent=31 // pred_check_branch
        %271 = sbr.rel (%p269) target = $region36
      $region35: #{generator_forward.87} parent=31 // pred_region
        %s272 = smul.u32 2, %s19
      $region36: #{generator_forward.87} parent=31 // pred_fallthru
        _
    $region32: #{generator_forward.87} parent=5 // pred_fallthru
      _
    %p273 = scmp.le.s32.totalorder 2, %s9
    // Predicated region
    $region37: #{generator_forward.87} parent=5 // pred_check
      %p274 = pneg %p273
    $region38: #{generator_forward.87} parent=5 // pred_check_branch
      %276 = sbr.rel (%p274) target = $region40
    $region39: #{generator_forward.87} parent=5 // pred_region
      %s277 = ssub.s32 %s9, 2
      // Predicated region
      $region41: #{generator_forward.87} parent=39 // pred_check
        %p278 = pneg %p132
      $region42: #{generator_forward.87} parent=39 // pred_check_branch
        %280 = sbr.rel (%p278) target = $region44
      $region43: #{generator_forward.87} parent=39 // pred_region
        %s281 = smul.u32 2, %s21
        %p282 = scmp.lt.s32.totalorder %s20, 1
        %s283 = scalar_select %p282, %s20, 1
        %p284 = scmp.lt.s32.totalorder %s281, 1
        %s285 = scalar_select %p284, %s281, 1
        %s286 = smul.addr %s283, 2
        %s287 = sadd.s32 %s285, %s286
        %s288 = smul.addr %s287, 8
        %s289 = scalar_lea.vmem %s3, %s288
      $region44: #{generator_forward.87} parent=39 // pred_fallthru
        _
    $region40: #{generator_forward.87} parent=5 // pred_fallthru
      _
  $region6: #{generator_forward.87} parent=0 // loop_footer
    %s13 = sadd.s32 1, %s9
  $region7: #{generator_forward.87} parent=0 // loop_footer_branch
    %8 = sbr.rel target = $region3
  $region8: #{generator_forward.87} parent=0 // loop_exit
    _

// kernel: tile.34
$region0: #{tile.34}
  %s0 = inlined_call_operand.vmem [shape: f32[2,4,8], index: 0, kind: input, shape index: {}]
  %s1 = inlined_call_operand.vmem [shape: f32[2,32], index: 1, kind: output, shape index: {}]
  $region1: #{tile.34} parent=0
    #allocation0 [shape = 'u8[4096]{0}', space=vmem, size = 0x1000, scoped, tag = 'scoped mem for output reshape']
    #allocation1 [shape = 'u8[8192]{0}', space=vmem, size = 0x2000, scoped, tag = 'scoped mem for input reshape']
    %s3 = ssub.s32 16, 1
    %s4 = scalar_lea.vmem %s0, 4
    %v5 = vld [vmem:[%s4] sm:%s3]
    %s6 = scalar_lea.vmem [#allocation1], 8
    %7 = vst [vmem:[%s6] sm:%s3] %v5
    %v8 = vld [vmem:[%s0] sm:%s3]
    %9 = vst [vmem:[#allocation1] sm:%s3] %v8
    %s10 = smov 3
    %v11 = vld [vmem:[#allocation1] ss:$8 sm:%s10]
    %vm12 = vcmask 64512
    %13 = vst.msk [vmem:[#allocation0] sm:$0x3] %vm12, %v11
    %s14 = scalar_lea.vmem [#allocation1], 3
    %s15 = smov 3
    %v16 = vld [vmem:[%s14] ss:$8 sm:%s15]
    %17 = vrot.lane.b32.xlu0 %v16, 24
    %v18 = vpop.permute.xlu0 %17
    %vm19 = vcmask 261312
    %20 = vst.msk [vmem:[#allocation0] sm:$0x3] %vm19, %v18
    %s21 = scalar_lea.vmem [#allocation1], 2
    %s22 = smov 3
    %v23 = vld [vmem:[%s21] ss:$8 sm:%s22]
    %24 = vrot.lane.b32.xlu0 %v23, 16
    %v25 = vpop.permute.xlu0 %24
    %vm26 = vcmask 195712
    %27 = vst.msk [vmem:[#allocation0] sm:$0x3] %vm26, %v25
    %s28 = scalar_lea.vmem [#allocation1], 1
    %s29 = smov 3
    %v30 = vld [vmem:[%s28] ss:$8 sm:%s29]
    %31 = vrot.lane.b32.xlu0 %v30, 8
    %v32 = vpop.permute.xlu0 %31
    %vm33 = vcmask 130112
    %34 = vst.msk [vmem:[#allocation0] sm:$0x3] %vm33, %v32
    %s36 = ssub.s32 4, 1
    %v37 = vld [vmem:[#allocation0] sm:%s36]
    %s39 = ssub.s32 4, 1
    %40 = vst [vmem:[%s1] sm:%s39] %v37

// kernel: generator_forward.89
$region0: #{generator_forward.89}
  #allocation0 [shape = 'u32[]', space=smem, size = 0x4, offset = 0x4, fixed_abs, tag = 'smem constant byte address 0x4 - core index']
  #allocation1 [shape = 'u32[72,128]{1,0:T(1,128)}', space=vmem, size = 0x9000, scoped, tag = 'internal scratch']
  %s0 = inlined_call_operand.vmem [shape: f32[2,64,128], index: 0, kind: input, shape index: {}]
  %s1 = inlined_call_operand.vmem [shape: f32[2,1,128], index: 1, kind: input, shape index: {}]
  %s2 = inlined_call_operand.vmem [shape: f32[2,1,128], index: 2, kind: input, shape index: {}]
  %s3 = inlined_call_operand.vmem [shape: f32[2,64,128], index: 3, kind: output, shape index: {}]
  %s4 = sld [smem:[#allocation0]]
  $region45: #{generator_forward.89} parent=0
    _
  %s6 = ssub.s32 1, %s4
  %s7 = scalar_select 0, %s6, %s4
  loop: start=0, step=1, limit=4
  $region2: #{generator_forward.89} parent=0 // loop_pre_header
    _
  $region3: #{generator_forward.89} parent=0 // loop_header
    %s9 = sphi 0, %s13
    %p10 = scmp.ge.s32.totalorder %s9, 4
    %s16 = sphi 0, %s28
    %s17 = sphi 0, %s24
    %s18 = sphi 0, %s16
    %s19 = sphi 0, %s17
    %s20 = sphi 0, %s18
    %s21 = sphi 0, %s19
    %s33 = sphi 0, %s35
    %s36 = sphi 0, %s33
    %s37 = sphi 0, %s36
    %s53 = sphi 0, %s37
    %s59 = sphi 0, %s61
    %s62 = sphi 0, %s59
    %s63 = sphi 0, %s62
    %s79 = sphi 0, %s63
    %s85 = sphi 0, %s87
    %s88 = sphi 0, %s85
    %s89 = sphi 0, %s88
    %s105 = sphi 0, %s89
    %s113 = sphi 0, %s115
    %s116 = sphi 0, %s113
    %s117 = sphi 0, %s116
    %s133 = sphi 0, %s117
  $region4: #{generator_forward.89} parent=0 // loop_header_branch
    %12 = sbr.rel (%p10) target = $region8
  $region5: #{generator_forward.89} parent=0 // loop_body
    %s14 = ssub.s32 %s9, 1
    %s15 = ssub.s32 %s9, 2
    %s22 = sadd.s32 1, %s17
    %p23 = scmp.ge.s32.totalorder %s22, 1
    %s24 = scalar_select %p23, 0, %s22
    %s25 = sadd.s32 1, %s16
    %s26 = scalar_select %p23, %s25, %s16
    %p27 = scmp.ge.s32.totalorder %s26, 2
    %s28 = scalar_select %p27, 0, %s26
    %s29 = ssub.s32 %s16, %s28
    %s30 = ssub.s32 %s17, %s24
    %s31 = sor.u32 %s29, %s30
    %p32 = scmp.eq.s32.totalorder %s31, 0
    %s34 = sadd.s32 %s33, 1
    %s35 = scalar_select %p32, %s33, %s34
    %p38 = pneg %p32
    %p39 = scmp.eq.s32.totalorder %s9, 1
    %p40 = por %p38, %p39
    %p41 = scmp.ne.s32.totalorder %s33, %s36
    %p42 = scmp.eq.s32.totalorder %s9, 0
    %p43 = por %p41, %p42
    %p44 = scmp.ne.s32.totalorder %s33, %s36
    %p45 = scmp.eq.s32.totalorder %s14, 1
    %p46 = por %p44, %p45
    %p47 = scmp.ne.s32.totalorder %s36, %s37
    %p48 = scmp.eq.s32.totalorder %s14, 0
    %p49 = por %p47, %p48
    %p50 = scmp.ne.s32.totalorder %s36, %s37
    %p51 = scmp.eq.s32.totalorder %s15, 1
    %p52 = por %p50, %p51
    %p54 = scmp.ne.s32.totalorder %s37, %s53
    %p55 = scmp.eq.s32.totalorder %s15, 0
    %p56 = por %p54, %p55
    %s57 = ssub.s32 %s16, %s28
    %p58 = scmp.eq.s32.totalorder %s57, 0
    %s60 = sadd.s32 %s59, 1
    %s61 = scalar_select %p58, %s59, %s60
    %p64 = pneg %p58
    %p65 = scmp.eq.s32.totalorder %s9, 1
    %p66 = por %p64, %p65
    %p67 = scmp.ne.s32.totalorder %s59, %s62
    %p68 = scmp.eq.s32.totalorder %s9, 0
    %p69 = por %p67, %p68
    %p70 = scmp.ne.s32.totalorder %s59, %s62
    %p71 = scmp.eq.s32.totalorder %s14, 1
    %p72 = por %p70, %p71
    %p73 = scmp.ne.s32.totalorder %s62, %s63
    %p74 = scmp.eq.s32.totalorder %s14, 0
    %p75 = por %p73, %p74
    %p76 = scmp.ne.s32.totalorder %s62, %s63
    %p77 = scmp.eq.s32.totalorder %s15, 1
    %p78 = por %p76, %p77
    %p80 = scmp.ne.s32.totalorder %s63, %s79
    %p81 = scmp.eq.s32.totalorder %s15, 0
    %p82 = por %p80, %p81
    %s83 = ssub.s32 %s16, %s28
    %p84 = scmp.eq.s32.totalorder %s83, 0
    %s86 = sadd.s32 %s85, 1
    %s87 = scalar_select %p84, %s85, %s86
    %p90 = pneg %p84
    %p91 = scmp.eq.s32.totalorder %s9, 1
    %p92 = por %p90, %p91
    %p93 = scmp.ne.s32.totalorder %s85, %s88
    %p94 = scmp.eq.s32.totalorder %s9, 0
    %p95 = por %p93, %p94
    %p96 = scmp.ne.s32.totalorder %s85, %s88
    %p97 = scmp.eq.s32.totalorder %s14, 1
    %p98 = por %p96, %p97
    %p99 = scmp.ne.s32.totalorder %s88, %s89
    %p100 = scmp.eq.s32.totalorder %s14, 0
    %p101 = por %p99, %p100
    %p102 = scmp.ne.s32.totalorder %s88, %s89
    %p103 = scmp.eq.s32.totalorder %s15, 1
    %p104 = por %p102, %p103
    %p106 = scmp.ne.s32.totalorder %s89, %s105
    %p107 = scmp.eq.s32.totalorder %s15, 0
    %p108 = por %p106, %p107
    %s109 = ssub.s32 %s16, %s28
    %s110 = ssub.s32 %s17, %s24
    %s111 = sor.u32 %s109, %s110
    %p112 = scmp.eq.s32.totalorder %s111, 0
    %s114 = sadd.s32 %s113, 1
    %s115 = scalar_select %p112, %s113, %s114
    %p118 = pneg %p112
    %p119 = scmp.eq.s32.totalorder %s9, 1
    %p120 = por %p118, %p119
    %p121 = scmp.ne.s32.totalorder %s113, %s116
    %p122 = scmp.eq.s32.totalorder %s9, 0
    %p123 = por %p121, %p122
    %p124 = scmp.ne.s32.totalorder %s113, %s116
    %p125 = scmp.eq.s32.totalorder %s14, 1
    %p126 = por %p124, %p125
    %p127 = scmp.ne.s32.totalorder %s116, %s117
    %p128 = scmp.eq.s32.totalorder %s14, 0
    %p129 = por %p127, %p128
    %p130 = scmp.ne.s32.totalorder %s116, %s117
    %p131 = scmp.eq.s32.totalorder %s15, 1
    %p132 = por %p130, %p131
    %p134 = scmp.ne.s32.totalorder %s117, %s133
    %p135 = scmp.eq.s32.totalorder %s15, 0
    %p136 = por %p134, %p135
    %p137 = scmp.le.s32.totalorder 1, %s9
    %p138 = scmp.lt.s32.totalorder %s9, 3
    %p139 = pnand %p137, %p138
    %p140 = pneg %p139
    // Predicated region
    $region9: #{generator_forward.89} parent=5 // pred_check
      _
    $region10: #{generator_forward.89} parent=5 // pred_check_branch
      %142 = sbr.rel (%p139) target = $region12
    $region11: #{generator_forward.89} parent=5 // pred_region
      %s143 = ssub.s32 %s9, 1
    $region12: #{generator_forward.89} parent=5 // pred_fallthru
      _
    %p144 = scmp.lt.s32.totalorder %s9, 2
    // Predicated region
    $region13: #{generator_forward.89} parent=5 // pred_check
      %p145 = pneg %p144
    $region14: #{generator_forward.89} parent=5 // pred_check_branch
      %147 = sbr.rel (%p145) target = $region16
    $region15: #{generator_forward.89} parent=5 // pred_region
      // Predicated region
      $region17: #{generator_forward.89} parent=15 // pred_check
        %p148 = pneg %p43
      $region18: #{generator_forward.89} parent=15 // pred_check_branch
        %150 = sbr.rel (%p148) target = $region20
      $region19: #{generator_forward.89} parent=15 // pred_region
        %s151 = smul.u32 8, %s17
        %p152 = scmp.lt.s32.totalorder %s16, 1
        %s153 = scalar_select %p152, %s16, 1
        %p154 = scmp.lt.s32.totalorder %s151, 7
        %s155 = scalar_select %p154, %s151, 7
        %s156 = smul.addr %s153, 8
        %s157 = sadd.s32 %s155, %s156
        %s158 = smul.addr %s157, 8
        %s159 = scalar_lea.vmem %s0, %s158
        %s160 = smul.u32 8, %s17
      $region20: #{generator_forward.89} parent=15 // pred_fallthru
        _
      // Predicated region
      $region21: #{generator_forward.89} parent=15 // pred_check
        %p161 = pneg %p69
      $region22: #{generator_forward.89} parent=15 // pred_check_branch
        %163 = sbr.rel (%p161) target = $region24
      $region23: #{generator_forward.89} parent=15 // pred_region
        %p164 = scmp.lt.s32.totalorder %s16, 1
        %s165 = scalar_select %p164, %s16, 1
        %s166 = scalar_lea.vmem %s1, %s165
      $region24: #{generator_forward.89} parent=15 // pred_fallthru
        _
      // Predicated region
      $region25: #{generator_forward.89} parent=15 // pred_check
        %p167 = pneg %p95
      $region26: #{generator_forward.89} parent=15 // pred_check_branch
        %169 = sbr.rel (%p167) target = $region28
      $region27: #{generator_forward.89} parent=15 // pred_region
        %p170 = scmp.lt.s32.totalorder %s16, 1
        %s171 = scalar_select %p170, %s16, 1
        %s172 = scalar_lea.vmem %s2, %s171
      $region28: #{generator_forward.89} parent=15 // pred_fallthru
        _
    $region16: #{generator_forward.89} parent=5 // pred_fallthru
      _
    %p173 = scmp.le.s32.totalorder 1, %s9
    %p174 = scmp.lt.s32.totalorder %s9, 3
    %p175 = pnand %p173, %p174
    %p176 = pneg %p175
    // Predicated region
    $region29: #{generator_forward.89} parent=5 // pred_check
      _
    $region30: #{generator_forward.89} parent=5 // pred_check_branch
      %178 = sbr.rel (%p175) target = $region32
    $region31: #{generator_forward.89} parent=5 // pred_region
      %s179 = ssub.s32 %s9, 1
      %s180 = smul.u32 8, %s19
      %p181 = scmp.lt.s32.totalorder %s18, 1
      %s182 = scalar_select %p181, %s18, 1
      %p183 = scmp.lt.s32.totalorder %s180, 7
      %s184 = scalar_select %p183, %s180, 7
      %s185 = smul.addr %s182, 8
      %s186 = sadd.s32 %s184, %s185
      %s187 = smul.addr %s186, 8
      %s188 = scalar_lea.vmem %s0, %s187
      %p189 = pneg %p49
      %p190 = pneg %p46
      %p191 = scmp.lt.s32.totalorder %s18, 1
      %s192 = scalar_select %p191, %s18, 1
      %s193 = scalar_lea.vmem %s1, %s192
      %p194 = pneg %p75
      %p195 = pneg %p72
      %p196 = scmp.lt.s32.totalorder %s18, 1
      %s197 = scalar_select %p196, %s18, 1
      %s198 = scalar_lea.vmem %s2, %s197
      %p199 = pneg %p101
      %p200 = pneg %p98
      %p201 = pneg %p129
      %p202 = pneg %p126
      %s203 = smul.u32 8, %s19
      %p204 = scmp.lt.s32.totalorder %s18, 1
      %s205 = scalar_select %p204, %s18, 1
      %p206 = scmp.lt.s32.totalorder %s203, 7
      %s207 = scalar_select %p206, %s203, 7
      %s208 = smul.addr %s205, 8
      %s209 = sadd.s32 %s207, %s208
      %s210 = smul.addr %s209, 8
      %s211 = scalar_lea.vmem %s3, %s210
      %s212 = smul.u32 8, %s19
      %p213 = scmp.lt.s32.totalorder %s18, 1
      %s214 = scalar_select %p213, %s18, 1
      %p215 = scmp.lt.s32.totalorder %s212, 7
      %s216 = scalar_select %p215, %s212, 7
      %s217 = smul.addr %s214, 8
      %s218 = sadd.s32 %s216, %s217
      %s219 = smul.addr %s218, 8
      %s220 = scalar_lea.vmem %s0, %s219
      %s221 = smul.u32 8, %s19
      %p222 = scmp.lt.s32.totalorder %s18, 1
      %s223 = scalar_select %p222, %s18, 1
      %s224 = scalar_lea.vmem %s1, %s223
      %p225 = scmp.lt.s32.totalorder %s18, 1
      %s226 = scalar_select %p225, %s18, 1
      %s227 = scalar_lea.vmem %s2, %s226
      %s228 = smul.u32 8, %s19
      %p229 = scmp.lt.s32.totalorder %s18, 1
      %s230 = scalar_select %p229, %s18, 1
      %p231 = scmp.lt.s32.totalorder %s228, 7
      %s232 = scalar_select %p231, %s228, 7
      %s233 = smul.addr %s230, 8
      %s234 = sadd.s32 %s232, %s233
      %s235 = smul.addr %s234, 8
      %s236 = scalar_lea.vmem %s3, %s235
      %s237 = smul.u32 8, %s19
      %v238 = vld [vmem:[%s220] sm:$0xff]
      %v239 = vld [vmem:[%s220 + $0x8] sm:$0xff]
      %v240 = vld [vmem:[%s220 + $0x10] sm:$0xff]
      %v241 = vld [vmem:[%s220 + $0x18] sm:$0xff]
      %v242 = vld [vmem:[%s220 + $0x20] sm:$0xff]
      %v243 = vld [vmem:[%s220 + $0x28] sm:$0xff]
      %v244 = vld [vmem:[%s220 + $0x30] sm:$0xff]
      %v245 = vld [vmem:[%s220 + $0x38] sm:$0xff]
      %v246 = vld [vmem:[%s224] sm:$0x1]
      %v248 = vperm.slane %v246, 0
      %v250 = vmul.f32 %v238, %v248
      %v251 = vmul.f32 %v239, %v248
      %v252 = vmul.f32 %v240, %v248
      %v253 = vmul.f32 %v241, %v248
      %v254 = vmul.f32 %v242, %v248
      %v255 = vmul.f32 %v243, %v248
      %v256 = vmul.f32 %v244, %v248
      %v257 = vmul.f32 %v245, %v248
      %v258 = vld [vmem:[%s227] sm:$0x1]
      %v260 = vperm.slane %v258, 0
      %v262 = vadd.f32 %v250, %v260
      %v263 = vadd.f32 %v251, %v260
      %v264 = vadd.f32 %v252, %v260
      %v265 = vadd.f32 %v253, %v260
      %v266 = vadd.f32 %v254, %v260
      %v267 = vadd.f32 %v255, %v260
      %v268 = vadd.f32 %v256, %v260
      %v269 = vadd.f32 %v257, %v260
      %vm270 = vcmp.gt.f32.partialorder %v262, 0.0
      %vm271 = vcmp.gt.f32.partialorder %v263, 0.0
      %vm272 = vcmp.gt.f32.partialorder %v264, 0.0
      %vm273 = vcmp.gt.f32.partialorder %v265, 0.0
      %vm274 = vcmp.gt.f32.partialorder %v266, 0.0
      %vm275 = vcmp.gt.f32.partialorder %v267, 0.0
      %vm276 = vcmp.gt.f32.partialorder %v268, 0.0
      %vm277 = vcmp.gt.f32.partialorder %v269, 0.0
      %v278 = vmul.f32 %v262, 0.01
      %v279 = vmul.f32 %v263, 0.01
      %v280 = vmul.f32 %v264, 0.01
      %v281 = vmul.f32 %v265, 0.01
      %v282 = vmul.f32 %v266, 0.01
      %v283 = vmul.f32 %v267, 0.01
      %v284 = vmul.f32 %v268, 0.01
      %v285 = vmul.f32 %v269, 0.01
      %v286 = vsel %vm270, %v262, %v278
      %v287 = vsel %vm271, %v263, %v279
      %v288 = vsel %vm272, %v264, %v280
      %v289 = vsel %vm273, %v265, %v281
      %v290 = vsel %vm274, %v266, %v282
      %v291 = vsel %vm275, %v267, %v283
      %v292 = vsel %vm276, %v268, %v284
      %v293 = vsel %vm277, %v269, %v285
      %294 = vst [vmem:[%s236] sm:$0xff] %v286
      %295 = vst [vmem:[%s236 + $0x8] sm:$0xff] %v287
      %296 = vst [vmem:[%s236 + $0x10] sm:$0xff] %v288
      %297 = vst [vmem:[%s236 + $0x18] sm:$0xff] %v289
      %298 = vst [vmem:[%s236 + $0x20] sm:$0xff] %v290
      %299 = vst [vmem:[%s236 + $0x28] sm:$0xff] %v291
      %300 = vst [vmem:[%s236 + $0x30] sm:$0xff] %v292
      %301 = vst [vmem:[%s236 + $0x38] sm:$0xff] %v293
      %s302 = smul.u32 8, %s19
      %p303 = scmp.lt.s32.totalorder %s18, 1
      %s304 = scalar_select %p303, %s18, 1
      %p305 = scmp.lt.s32.totalorder %s302, 7
      %s306 = scalar_select %p305, %s302, 7
      %s307 = smul.addr %s304, 8
      %s308 = sadd.s32 %s306, %s307
      %s309 = smul.addr %s308, 8
      %s310 = scalar_lea.vmem %s3, %s309
      // Predicated region
      $region33: #{generator_forward.89} parent=31 // pred_check
        %p311 = pneg %p126
      $region34: #{generator_forward.89} parent=31 // pred_check_branch
        %313 = sbr.rel (%p311) target = $region36
      $region35: #{generator_forward.89} parent=31 // pred_region
        %s314 = smul.u32 8, %s19
      $region36: #{generator_forward.89} parent=31 // pred_fallthru
        _
    $region32: #{generator_forward.89} parent=5 // pred_fallthru
      _
    %p315 = scmp.le.s32.totalorder 2, %s9
    // Predicated region
    $region37: #{generator_forward.89} parent=5 // pred_check
      %p316 = pneg %p315
    $region38: #{generator_forward.89} parent=5 // pred_check_branch
      %318 = sbr.rel (%p316) target = $region40
    $region39: #{generator_forward.89} parent=5 // pred_region
      %s319 = ssub.s32 %s9, 2
      // Predicated region
      $region41: #{generator_forward.89} parent=39 // pred_check
        %p320 = pneg %p132
      $region42: #{generator_forward.89} parent=39 // pred_check_branch
        %322 = sbr.rel (%p320) target = $region44
      $region43: #{generator_forward.89} parent=39 // pred_region
        %s323 = smul.u32 8, %s21
        %p324 = scmp.lt.s32.totalorder %s20, 1
        %s325 = scalar_select %p324, %s20, 1
        %p326 = scmp.lt.s32.totalorder %s323, 7
        %s327 = scalar_select %p326, %s323, 7
        %s328 = smul.addr %s325, 8
        %s329 = sadd.s32 %s327, %s328
        %s330 = smul.addr %s329, 8
        %s331 = scalar_lea.vmem %s3, %s330
      $region44: #{generator_forward.89} parent=39 // pred_fallthru
        _
    $region40: #{generator_forward.89} parent=5 // pred_fallthru
      _
  $region6: #{generator_forward.89} parent=0 // loop_footer
    %s13 = sadd.s32 1, %s9
  $region7: #{generator_forward.89} parent=0 // loop_footer_branch
    %8 = sbr.rel target = $region3
  $region8: #{generator_forward.89} parent=0 // loop_exit
    _

// kernel: generator_forward.88
$region0: #{generator_forward.88}
  #allocation0 [shape = 'u32[]', space=smem, size = 0x4, offset = 0x4, fixed_abs, tag = 'smem constant byte address 0x4 - core index']
  #allocation1 [shape = 'u32[72,128]{1,0:T(1,128)}', space=vmem, size = 0x9000, scoped, tag = 'internal scratch']
  %s0 = inlined_call_operand.vmem [shape: bf16[2,64,256], index: 0, kind: input, shape index: {}]
  %s1 = inlined_call_operand.vmem [shape: bf16[256,128], index: 1, kind: input, shape index: {}]
  %s2 = inlined_call_operand.vmem [shape: f32[2,64,128], index: 2, kind: output, shape index: {0}]
  %s3 = inlined_call_operand.vmem [shape: f32[2,1,8,128], index: 3, kind: output, shape index: {1}]
  %4 = xla_tuple %s2, %s3
  %s5 = sld [smem:[#allocation0]]
  $region49: #{generator_forward.88} parent=0
    _
  %s7 = ssub.s32 1, %s5
  %s8 = scalar_select 0, %s7, %s5
  loop: start=0, step=1, limit=4
  $region2: #{generator_forward.88} parent=0 // loop_pre_header
    _
  $region3: #{generator_forward.88} parent=0 // loop_header
    %s10 = sphi 0, %s14
    %p11 = scmp.ge.s32.totalorder %s10, 4
    %s17 = sphi 0, %s29
    %s18 = sphi 0, %s25
    %s19 = sphi 0, %s17
    %s20 = sphi 0, %s18
    %s21 = sphi 0, %s19
    %s22 = sphi 0, %s20
    %s34 = sphi 0, %s36
    %s37 = sphi 0, %s34
    %s38 = sphi 0, %s37
    %s54 = sphi 0, %s38
    %s58 = sphi 0, %s58
    %s60 = sphi 0, %s58
    %s61 = sphi 0, %s60
    %s75 = sphi 0, %s61
    %s83 = sphi 0, %s85
    %s86 = sphi 0, %s83
    %s87 = sphi 0, %s86
    %s103 = sphi 0, %s87
    %s111 = sphi 0, %s113
    %s114 = sphi 0, %s111
    %s115 = sphi 0, %s114
    %s131 = sphi 0, %s115
  $region4: #{generator_forward.88} parent=0 // loop_header_branch
    %13 = sbr.rel (%p11) target = $region8
  $region5: #{generator_forward.88} parent=0 // loop_body
    %s15 = ssub.s32 %s10, 1
    %s16 = ssub.s32 %s10, 2
    %s23 = sadd.s32 1, %s18
    %p24 = scmp.ge.s32.totalorder %s23, 1
    %s25 = scalar_select %p24, 0, %s23
    %s26 = sadd.s32 1, %s17
    %s27 = scalar_select %p24, %s26, %s17
    %p28 = scmp.ge.s32.totalorder %s27, 2
    %s29 = scalar_select %p28, 0, %s27
    %s30 = ssub.s32 %s17, %s29
    %s31 = ssub.s32 %s18, %s25
    %s32 = sor.u32 %s30, %s31
    %p33 = scmp.eq.s32.totalorder %s32, 0
    %s35 = sadd.s32 %s34, 1
    %s36 = scalar_select %p33, %s34, %s35
    %p39 = pneg %p33
    %p40 = scmp.eq.s32.totalorder %s10, 1
    %p41 = por %p39, %p40
    %p42 = scmp.ne.s32.totalorder %s34, %s37
    %p43 = scmp.eq.s32.totalorder %s10, 0
    %p44 = por %p42, %p43
    %p45 = scmp.ne.s32.totalorder %s34, %s37
    %p46 = scmp.eq.s32.totalorder %s15, 1
    %p47 = por %p45, %p46
    %p48 = scmp.ne.s32.totalorder %s37, %s38
    %p49 = scmp.eq.s32.totalorder %s15, 0
    %p50 = por %p48, %p49
    %p51 = scmp.ne.s32.totalorder %s37, %s38
    %p52 = scmp.eq.s32.totalorder %s16, 1
    %p53 = por %p51, %p52
    %p55 = scmp.ne.s32.totalorder %s38, %s54
    %p56 = scmp.eq.s32.totalorder %s16, 0
    %p57 = por %p55, %p56
    %s59 = sadd.s32 %s58, 1
    %p62 = scmp.eq.s32.totalorder %s10, 1
    %p63 = scmp.ne.s32.totalorder %s58, %s60
    %p64 = scmp.eq.s32.totalorder %s10, 0
    %p65 = por %p63, %p64
    %p66 = scmp.ne.s32.totalorder %s58, %s60
    %p67 = scmp.eq.s32.totalorder %s15, 1
    %p68 = por %p66, %p67
    %p69 = scmp.ne.s32.totalorder %s60, %s61
    %p70 = scmp.eq.s32.totalorder %s15, 0
    %p71 = por %p69, %p70
    %p72 = scmp.ne.s32.totalorder %s60, %s61
    %p73 = scmp.eq.s32.totalorder %s16, 1
    %p74 = por %p72, %p73
    %p76 = scmp.ne.s32.totalorder %s61, %s75
    %p77 = scmp.eq.s32.totalorder %s16, 0
    %p78 = por %p76, %p77
    %s79 = ssub.s32 %s17, %s29
    %s80 = ssub.s32 %s18, %s25
    %s81 = sor.u32 %s79, %s80
    %p82 = scmp.eq.s32.totalorder %s81, 0
    %s84 = sadd.s32 %s83, 1
    %s85 = scalar_select %p82, %s83, %s84
    %p88 = pneg %p82
    %p89 = scmp.eq.s32.totalorder %s10, 1
    %p90 = por %p88, %p89
    %p91 = scmp.ne.s32.totalorder %s83, %s86
    %p92 = scmp.eq.s32.totalorder %s10, 0
    %p93 = por %p91, %p92
    %p94 = scmp.ne.s32.totalorder %s83, %s86
    %p95 = scmp.eq.s32.totalorder %s15, 1
    %p96 = por %p94, %p95
    %p97 = scmp.ne.s32.totalorder %s86, %s87
    %p98 = scmp.eq.s32.totalorder %s15, 0
    %p99 = por %p97, %p98
    %p100 = scmp.ne.s32.totalorder %s86, %s87
    %p101 = scmp.eq.s32.totalorder %s16, 1
    %p102 = por %p100, %p101
    %p104 = scmp.ne.s32.totalorder %s87, %s103
    %p105 = scmp.eq.s32.totalorder %s16, 0
    %p106 = por %p104, %p105
    %s107 = ssub.s32 %s17, %s29
    %s108 = ssub.s32 %s18, %s25
    %s109 = sor.u32 %s107, %s108
    %p110 = scmp.eq.s32.totalorder %s109, 0
    %s112 = sadd.s32 %s111, 1
    %s113 = scalar_select %p110, %s111, %s112
    %p116 = pneg %p110
    %p117 = scmp.eq.s32.totalorder %s10, 1
    %p118 = por %p116, %p117
    %p119 = scmp.ne.s32.totalorder %s111, %s114
    %p120 = scmp.eq.s32.totalorder %s10, 0
    %p121 = por %p119, %p120
    %p122 = scmp.ne.s32.totalorder %s111, %s114
    %p123 = scmp.eq.s32.totalorder %s15, 1
    %p124 = por %p122, %p123
    %p125 = scmp.ne.s32.totalorder %s114, %s115
    %p126 = scmp.eq.s32.totalorder %s15, 0
    %p127 = por %p125, %p126
    %p128 = scmp.ne.s32.totalorder %s114, %s115
    %p129 = scmp.eq.s32.totalorder %s16, 1
    %p130 = por %p128, %p129
    %p132 = scmp.ne.s32.totalorder %s115, %s131
    %p133 = scmp.eq.s32.totalorder %s16, 0
    %p134 = por %p132, %p133
    %p135 = scmp.le.s32.totalorder 1, %s10
    %p136 = scmp.lt.s32.totalorder %s10, 3
    %p137 = pnand %p135, %p136
    %p138 = pneg %p137
    // Predicated region
    $region9: #{generator_forward.88} parent=5 // pred_check
      _
    $region10: #{generator_forward.88} parent=5 // pred_check_branch
      %140 = sbr.rel (%p137) target = $region12
    $region11: #{generator_forward.88} parent=5 // pred_region
      %s141 = ssub.s32 %s10, 1
      // Predicated region
      $region13: #{generator_forward.88} parent=11 // pred_check
        %p142 = pneg %p71
      $region14: #{generator_forward.88} parent=11 // pred_check_branch
        %144 = sbr.rel (%p142) target = $region16
      $region15: #{generator_forward.88} parent=11 // pred_region
        _
      $region16: #{generator_forward.88} parent=11 // pred_fallthru
        _
    $region12: #{generator_forward.88} parent=5 // pred_fallthru
      _
    %p145 = scmp.lt.s32.totalorder %s10, 2
    // Predicated region
    $region17: #{generator_forward.88} parent=5 // pred_check
      %p146 = pneg %p145
    $region18: #{generator_forward.88} parent=5 // pred_check_branch
      %148 = sbr.rel (%p146) target = $region20
    $region19: #{generator_forward.88} parent=5 // pred_region
      // Predicated region
      $region21: #{generator_forward.88} parent=19 // pred_check
        %p149 = pneg %p44
      $region22: #{generator_forward.88} parent=19 // pred_check_branch
        %151 = sbr.rel (%p149) target = $region24
      $region23: #{generator_forward.88} parent=19 // pred_region
        %s152 = smul.u32 8, %s18
        %p153 = scmp.lt.s32.totalorder %s17, 1
        %s154 = scalar_select %p153, %s17, 1
        %p155 = scmp.lt.s32.totalorder %s152, 7
        %s156 = scalar_select %p155, %s152, 7
        %s157 = smul.addr %s156, 2
        %s158 = smul.addr %s154, 16
        %s159 = sadd.s32 %s157, %s158
        %s160 = smul.addr %s159, 4
        %s161 = scalar_lea.vmem %s0, %s160
        %s162 = smul.u32 8, %s18
      $region24: #{generator_forward.88} parent=19 // pred_fallthru
        _
    $region20: #{generator_forward.88} parent=5 // pred_fallthru
      _
    %p163 = scmp.le.s32.totalorder 1, %s10
    %p164 = scmp.lt.s32.totalorder %s10, 3
    %p165 = pnand %p163, %p164
    %p166 = pneg %p165
    // Predicated region
    $region25: #{generator_forward.88} parent=5 // pred_check
      _
    $region26: #{generator_forward.88} parent=5 // pred_check_branch
      %168 = sbr.rel (%p165) target = $region28
    $region27: #{generator_forward.88} parent=5 // pred_region
      %s169 = ssub.s32 %s10, 1
      %s170 = smul.u32 8, %s20
      %p171 = scmp.lt.s32.totalorder %s19, 1
      %s172 = scalar_select %p171, %s19, 1
      %p173 = scmp.lt.s32.totalorder %s170, 7
      %s174 = scalar_select %p173, %s170, 7
      %s175 = smul.addr %s174, 2
      %s176 = smul.addr %s172, 16
      %s177 = sadd.s32 %s175, %s176
      %s178 = smul.addr %s177, 4
      %s179 = scalar_lea.vmem %s0, %s178
      %p180 = pneg %p50
      %p181 = pneg %p47
      %p182 = pneg %p71
      %p183 = pneg %p68
      %p184 = pneg %p99
      %p185 = pneg %p96
      %s186 = smul.u32 8, %s20
      %p187 = scmp.lt.s32.totalorder %s19, 1
      %s188 = scalar_select %p187, %s19, 1
      %p189 = scmp.lt.s32.totalorder %s186, 7
      %s190 = scalar_select %p189, %s186, 7
      %s191 = smul.addr %s188, 8
      %s192 = sadd.s32 %s190, %s191
      %s193 = smul.addr %s192, 8
      %s194 = scalar_lea.vmem %s2, %s193
      %p195 = pneg %p127
      %p196 = pneg %p124
      %p197 = scmp.lt.s32.totalorder %s19, 1
      %s198 = scalar_select %p197, %s19, 1
      %p199 = scmp.lt.s32.totalorder %s20, 0
      %s200 = scalar_select %p199, %s20, 0
      %s201 = sadd.s32 %s200, %s198
      %s202 = smul.addr %s201, 8
      %s203 = scalar_lea.vmem %s3, %s202
      %s204 = smul.u32 8, %s20
      %p205 = scmp.lt.s32.totalorder %s19, 1
      %s206 = scalar_select %p205, %s19, 1
      %p207 = scmp.lt.s32.totalorder %s204, 7
      %s208 = scalar_select %p207, %s204, 7
      %s209 = smul.addr %s208, 2
      %s210 = smul.addr %s206, 16
      %s211 = sadd.s32 %s209, %s210
      %s212 = smul.addr %s211, 4
      %s213 = scalar_lea.vmem %s0, %s212
      %s214 = smul.u32 8, %s20
      %s215 = smul.u32 8, %s20
      %p216 = scmp.lt.s32.totalorder %s19, 1
      %s217 = scalar_select %p216, %s19, 1
      %p218 = scmp.lt.s32.totalorder %s215, 7
      %s219 = scalar_select %p218, %s215, 7
      %s220 = smul.addr %s217, 8
      %s221 = sadd.s32 %s219, %s220
      %s222 = smul.addr %s221, 8
      %s223 = scalar_lea.vmem %s2, %s222
      %s224 = smul.u32 8, %s20
      %p225 = scmp.lt.s32.totalorder %s19, 1
      %s226 = scalar_select %p225, %s19, 1
      %p227 = scmp.lt.s32.totalorder %s20, 0
      %s228 = scalar_select %p227, %s20, 0
      %s229 = sadd.s32 %s228, %s226
      %s230 = smul.addr %s229, 8
      %s231 = scalar_lea.vmem %s3, %s230
      %v232 = vld [vmem:[%s213] sm:$0xff]
      %v233 = vld [vmem:[%s213 + $0x8] sm:$0xff]
      %v234 = vld [vmem:[%s213 + $0x10] sm:$0xff]
      %v235 = vld [vmem:[%s213 + $0x18] sm:$0xff]
      %v236 = vld [vmem:[%s213 + $0x20] sm:$0xff]
      %v237 = vld [vmem:[%s213 + $0x28] sm:$0xff]
      %v238 = vld [vmem:[%s213 + $0x30] sm:$0xff]
      %v239 = vld [vmem:[%s213 + $0x38] sm:$0xff]
      %v240 = vld [vmem:[%s1] sm:$0xf]
      %v241 = vld [vmem:[%s1 + $0x4] sm:$0xf]
      %v242 = vld [vmem:[%s1 + $0x8] sm:$0xf]
      %v243 = vld [vmem:[%s1 + $0xc] sm:$0xf]
      %v244 = vld [vmem:[%s1 + $0x10] sm:$0xf]
      %v245 = vld [vmem:[%s1 + $0x14] sm:$0xf]
      %v246 = vld [vmem:[%s1 + $0x18] sm:$0xf]
      %v247 = vld [vmem:[%s1 + $0x1c] sm:$0xf]
      %v248 = vld [vmem:[%s1 + $0x20] sm:$0xf]
      %v249 = vld [vmem:[%s1 + $0x24] sm:$0xf]
      %v250 = vld [vmem:[%s1 + $0x28] sm:$0xf]
      %v251 = vld [vmem:[%s1 + $0x2c] sm:$0xf]
      %v252 = vld [vmem:[%s1 + $0x30] sm:$0xf]
      %v253 = vld [vmem:[%s1 + $0x34] sm:$0xf]
      %v254 = vld [vmem:[%s1 + $0x38] sm:$0xf]
      %v255 = vld [vmem:[%s1 + $0x3c] sm:$0xf]
      %v256 = vld [vmem:[%s1 + $0x40] sm:$0xf]
      %v257 = vld [vmem:[%s1 + $0x44] sm:$0xf]
      %v258 = vld [vmem:[%s1 + $0x48] sm:$0xf]
      %v259 = vld [vmem:[%s1 + $0x4c] sm:$0xf]
      %v260 = vld [vmem:[%s1 + $0x50] sm:$0xf]
      %v261 = vld [vmem:[%s1 + $0x54] sm:$0xf]
      %v262 = vld [vmem:[%s1 + $0x58] sm:$0xf]
      %v263 = vld [vmem:[%s1 + $0x5c] sm:$0xf]
      %v264 = vld [vmem:[%s1 + $0x60] sm:$0xf]
      %v265 = vld [vmem:[%s1 + $0x64] sm:$0xf]
      %v266 = vld [vmem:[%s1 + $0x68] sm:$0xf]
      %v267 = vld [vmem:[%s1 + $0x6c] sm:$0xf]
      %v268 = vld [vmem:[%s1 + $0x70] sm:$0xf]
      %v269 = vld [vmem:[%s1 + $0x74] sm:$0xf]
      %v270 = vld [vmem:[%s1 + $0x78] sm:$0xf]
      %v271 = vld [vmem:[%s1 + $0x7c] sm:$0xf]
      %v280 = vunpack.c.l.b16 %v232
      %v281 = vunpack.c.h.b16 %v232
      %v282 = vunpack.c.l.b16 %v233
      %v283 = vunpack.c.h.b16 %v233
      %v284 = vunpack.c.l.b16 %v234
      %v285 = vunpack.c.h.b16 %v234
      %v286 = vunpack.c.l.b16 %v235
      %v287 = vunpack.c.h.b16 %v235
      %v288 = vunpack.c.l.b16 %v236
      %v289 = vunpack.c.h.b16 %v236
      %v290 = vunpack.c.l.b16 %v237
      %v291 = vunpack.c.h.b16 %v237
      %v292 = vunpack.c.l.b16 %v238
      %v293 = vunpack.c.h.b16 %v238
      %v294 = vunpack.c.l.b16 %v239
      %v295 = vunpack.c.h.b16 %v239
      %v296 = vpack.c.b16 %v282, %v280
      %v297 = vpack.c.b16 %v283, %v281
      %v298 = vpack.c.b16 %v286, %v284
      %v299 = vpack.c.b16 %v287, %v285
      %v300 = vpack.c.b16 %v290, %v288
      %v301 = vpack.c.b16 %v291, %v289
      %v302 = vpack.c.b16 %v294, %v292
      %v303 = vpack.c.b16 %v295, %v293
      %v344 = vunpack.c.l.b16 %v240
      %v345 = vunpack.c.l.b16 %v241
      %v346 = vunpack.c.l.b16 %v242
      %v347 = vunpack.c.l.b16 %v243
      %v348 = vunpack.c.l.b16 %v244
      %v349 = vunpack.c.l.b16 %v245
      %v350 = vunpack.c.l.b16 %v246
      %v351 = vunpack.c.l.b16 %v247
      %v352 = vunpack.c.l.b16 %v248
      %v353 = vunpack.c.l.b16 %v249
      %v354 = vunpack.c.l.b16 %v250
      %v355 = vunpack.c.l.b16 %v251
      %v356 = vunpack.c.l.b16 %v252
      %v357 = vunpack.c.l.b16 %v253
      %v358 = vunpack.c.l.b16 %v254
      %v359 = vunpack.c.l.b16 %v255
      %v360 = vunpack.c.l.b16 %v256
      %v361 = vunpack.c.l.b16 %v257
      %v362 = vunpack.c.l.b16 %v258
      %v363 = vunpack.c.l.b16 %v259
      %v364 = vunpack.c.l.b16 %v260
      %v365 = vunpack.c.l.b16 %v261
      %v366 = vunpack.c.l.b16 %v262
      %v367 = vunpack.c.l.b16 %v263
      %v368 = vunpack.c.l.b16 %v264
      %v369 = vunpack.c.l.b16 %v265
      %v370 = vunpack.c.l.b16 %v266
      %v371 = vunpack.c.l.b16 %v267
      %v372 = vunpack.c.l.b16 %v268
      %v373 = vunpack.c.l.b16 %v269
      %v374 = vunpack.c.l.b16 %v270
      %v375 = vunpack.c.l.b16 %v271
      %v376 = vpack.c.b16 %v345, %v344
      %v377 = vpack.c.b16 %v347, %v346
      %v378 = vpack.c.b16 %v349, %v348
      %v379 = vpack.c.b16 %v351, %v350
      %v380 = vpack.c.b16 %v353, %v352
      %v381 = vpack.c.b16 %v355, %v354
      %v382 = vpack.c.b16 %v357, %v356
      %v383 = vpack.c.b16 %v359, %v358
      %v384 = vpack.c.b16 %v361, %v360
      %v385 = vpack.c.b16 %v363, %v362
      %v386 = vpack.c.b16 %v365, %v364
      %v387 = vpack.c.b16 %v367, %v366
      %v388 = vpack.c.b16 %v369, %v368
      %v389 = vpack.c.b16 %v371, %v370
      %v390 = vpack.c.b16 %v373, %v372
      %v391 = vpack.c.b16 %v375, %v374
      %408 = vmatpush.bf16.msra.mxu0 %v383
      %409 = vmatpush.bf16.msra.mxu0 %v382
      %410 = vmatpush.bf16.msra.mxu0 %v381
      %411 = vmatpush.bf16.msra.mxu0 %v380
      %412 = vmatpush.bf16.msra.mxu0 %v379
      %413 = vmatpush.bf16.msra.mxu0 %v378
      %414 = vmatpush.bf16.msra.mxu0 %v377
      %415 = vmatpush.bf16.msra.mxu0 %v376
      %416 = vmatmul.bf16.gmra.mxu0 %v296
      %v417 = vpop.f32.mrf.mxu0
      %v418 = vadd.f32 0.0, %v417
      %v419 = vpop.f32.mrf.mxu0
      %v420 = vadd.f32 0.0, %v419
      %421 = vmatmul.bf16.gmra.mxu0 %v298
      %v422 = vpop.f32.mrf.mxu0
      %v423 = vadd.f32 0.0, %v422
      %v424 = vpop.f32.mrf.mxu0
      %v425 = vadd.f32 0.0, %v424
      %426 = vmatmul.bf16.gmra.mxu0 %v300
      %v427 = vpop.f32.mrf.mxu0
      %v428 = vadd.f32 0.0, %v427
      %v429 = vpop.f32.mrf.mxu0
      %v430 = vadd.f32 0.0, %v429
      %431 = vmatmul.bf16.gmra.mxu0 %v302
      %v432 = vpop.f32.mrf.mxu0
      %v433 = vadd.f32 0.0, %v432
      %v434 = vpop.f32.mrf.mxu0
      %v435 = vadd.f32 0.0, %v434
      %436 = vdwg.mxu0
      %437 = vmatpush.bf16.msra.mxu0 %v391
      %438 = vmatpush.bf16.msra.mxu0 %v390
      %439 = vmatpush.bf16.msra.mxu0 %v389
      %440 = vmatpush.bf16.msra.mxu0 %v388
      %441 = vmatpush.bf16.msra.mxu0 %v387
      %442 = vmatpush.bf16.msra.mxu0 %v386
      %443 = vmatpush.bf16.msra.mxu0 %v385
      %444 = vmatpush.bf16.msra.mxu0 %v384
      %445 = vmatmul.bf16.gmra.mxu0 %v297
      %v446 = vpop.f32.mrf.mxu0
      %v447 = vadd.f32 %v418, %v446
      %v448 = vpop.f32.mrf.mxu0
      %v449 = vadd.f32 %v420, %v448
      %450 = vmatmul.bf16.gmra.mxu0 %v299
      %v451 = vpop.f32.mrf.mxu0
      %v452 = vadd.f32 %v423, %v451
      %v453 = vpop.f32.mrf.mxu0
      %v454 = vadd.f32 %v425, %v453
      %455 = vmatmul.bf16.gmra.mxu0 %v301
      %v456 = vpop.f32.mrf.mxu0
      %v457 = vadd.f32 %v428, %v456
      %v458 = vpop.f32.mrf.mxu0
      %v459 = vadd.f32 %v430, %v458
      %460 = vmatmul.bf16.gmra.mxu0 %v303
      %v461 = vpop.f32.mrf.mxu0
      %v462 = vadd.f32 %v433, %v461
      %v463 = vpop.f32.mrf.mxu0
      %v464 = vadd.f32 %v435, %v463
      %465 = vdwg.mxu0
      %466 = vst [vmem:[%s223] sm:$0xff] %v447
      %467 = vst [vmem:[%s223 + $0x8] sm:$0xff] %v449
      %468 = vst [vmem:[%s223 + $0x10] sm:$0xff] %v452
      %469 = vst [vmem:[%s223 + $0x18] sm:$0xff] %v454
      %470 = vst [vmem:[%s223 + $0x20] sm:$0xff] %v457
      %471 = vst [vmem:[%s223 + $0x28] sm:$0xff] %v459
      %472 = vst [vmem:[%s223 + $0x30] sm:$0xff] %v462
      %473 = vst [vmem:[%s223 + $0x38] sm:$0xff] %v464
      %v474 = vadd.f32 %v447, %v449
      %v475 = vadd.f32 %v474, %v452
      %v476 = vadd.f32 %v475, %v454
      %v477 = vadd.f32 %v476, %v457
      %v478 = vadd.f32 %v477, %v459
      %v479 = vadd.f32 %v478, %v462
      %v480 = vadd.f32 %v479, %v464
      %v481 = vrot.slane %v480, 4
      %v482 = vadd.f32 %v480, %v481
      %v483 = vrot.slane %v482, 2
      %v484 = vadd.f32 %v482, %v483
      %v485 = vrot.slane %v484, 1
      %v486 = vadd.f32 %v484, %v485
      %v487 = vmul.f32 %v447, %v447
      %v488 = vmul.f32 %v449, %v449
      %v489 = vmul.f32 %v452, %v452
      %v490 = vmul.f32 %v454, %v454
      %v491 = vmul.f32 %v457, %v457
      %v492 = vmul.f32 %v459, %v459
      %v493 = vmul.f32 %v462, %v462
      %v494 = vmul.f32 %v464, %v464
      %v495 = vadd.f32 %v487, %v488
      %v496 = vadd.f32 %v495, %v489
      %v497 = vadd.f32 %v496, %v490
      %v498 = vadd.f32 %v497, %v491
      %v499 = vadd.f32 %v498, %v492
      %v500 = vadd.f32 %v499, %v493
      %v501 = vadd.f32 %v500, %v494
      %v502 = vrot.slane %v501, 4
      %v503 = vadd.f32 %v501, %v502
      %v504 = vrot.slane %v503, 2
      %v505 = vadd.f32 %v503, %v504
      %v506 = vrot.slane %v505, 1
      %v507 = vadd.f32 %v505, %v506
      %v508 = vlaneseq
      %v509 = vshrl.u32 %v508, 7
      %vm510 = vcmp.eq.s32.totalorder %v509, 0
      %vm511 = vcmp.eq.s32.totalorder %v509, 1
      %v512 = vsel %vm511, %v507, 0.0
      %v513 = vsel %vm510, %v486, %v512
      %514 = vst [vmem:[%s231] sm:$0xff] %v513
      %s515 = smul.u32 8, %s20
      %p516 = scmp.lt.s32.totalorder %s19, 1
      %s517 = scalar_select %p516, %s19, 1
      %p518 = scmp.lt.s32.totalorder %s515, 7
      %s519 = scalar_select %p518, %s515, 7
      %s520 = smul.addr %s517, 8
      %s521 = sadd.s32 %s519, %s520
      %s522 = smul.addr %s521, 8
      %s523 = scalar_lea.vmem %s2, %s522
      %p524 = scmp.lt.s32.totalorder %s19, 1
      %s525 = scalar_select %p524, %s19, 1
      %p526 = scmp.lt.s32.totalorder %s20, 0
      %s527 = scalar_select %p526, %s20, 0
      %s528 = sadd.s32 %s527, %s525
      %s529 = smul.addr %s528, 8
      %s530 = scalar_lea.vmem %s3, %s529
      // Predicated region
      $region29: #{generator_forward.88} parent=27 // pred_check
        %p531 = pneg %p96
      $region30: #{generator_forward.88} parent=27 // pred_check_branch
        %533 = sbr.rel (%p531) target = $region32
      $region31: #{generator_forward.88} parent=27 // pred_region
        %s534 = smul.u32 8, %s20
      $region32: #{generator_forward.88} parent=27 // pred_fallthru
        _
      // Predicated region
      $region33: #{generator_forward.88} parent=27 // pred_check
        %p535 = pneg %p124
      $region34: #{generator_forward.88} parent=27 // pred_check_branch
        %537 = sbr.rel (%p535) target = $region36
      $region35: #{generator_forward.88} parent=27 // pred_region
        _
      $region36: #{generator_forward.88} parent=27 // pred_fallthru
        _
    $region28: #{generator_forward.88} parent=5 // pred_fallthru
      _
    %p538 = scmp.le.s32.totalorder 2, %s10
    // Predicated region
    $region37: #{generator_forward.88} parent=5 // pred_check
      %p539 = pneg %p538
    $region38: #{generator_forward.88} parent=5 // pred_check_branch
      %541 = sbr.rel (%p539) target = $region40
    $region39: #{generator_forward.88} parent=5 // pred_region
      %s542 = ssub.s32 %s10, 2
      // Predicated region
      $region41: #{generator_forward.88} parent=39 // pred_check
        %p543 = pneg %p102
      $region42: #{generator_forward.88} parent=39 // pred_check_branch
        %545 = sbr.rel (%p543) target = $region44
      $region43: #{generator_forward.88} parent=39 // pred_region
        %s546 = smul.u32 8, %s22
        %p547 = scmp.lt.s32.totalorder %s21, 1
        %s548 = scalar_select %p547, %s21, 1
        %p549 = scmp.lt.s32.totalorder %s546, 7
        %s550 = scalar_select %p549, %s546, 7
        %s551 = smul.addr %s548, 8
        %s552 = sadd.s32 %s550, %s551
        %s553 = smul.addr %s552, 8
        %s554 = scalar_lea.vmem %s2, %s553
      $region44: #{generator_forward.88} parent=39 // pred_fallthru
        _
      // Predicated region
      $region45: #{generator_forward.88} parent=39 // pred_check
        %p555 = pneg %p130
      $region46: #{generator_forward.88} parent=39 // pred_check_branch
        %557 = sbr.rel (%p555) target = $region48
      $region47: #{generator_forward.88} parent=39 // pred_region
        %p558 = scmp.lt.s32.totalorder %s21, 1
        %s559 = scalar_select %p558, %s21, 1
        %p560 = scmp.lt.s32.totalorder %s22, 0
        %s561 = scalar_select %p560, %s22, 0
        %s562 = sadd.s32 %s561, %s559
        %s563 = smul.addr %s562, 8
        %s564 = scalar_lea.vmem %s3, %s563
      $region48: #{generator_forward.88} parent=39 // pred_fallthru
        _
    $region40: #{generator_forward.88} parent=5 // pred_fallthru
      _
  $region6: #{generator_forward.88} parent=0 // loop_footer
    %s14 = sadd.s32 1, %s10
  $region7: #{generator_forward.88} parent=0 // loop_footer_branch
    %9 = sbr.rel target = $region3
  $region8: #{generator_forward.88} parent=0 // loop_exit
    _

// kernel: generator_forward.90
$region0: #{generator_forward.90}
  #allocation0 [shape = 'u32[]', space=smem, size = 0x4, offset = 0x4, fixed_abs, tag = 'smem constant byte address 0x4 - core index']
  #allocation1 [shape = 'u32[72,128]{1,0:T(1,128)}', space=vmem, size = 0x9000, scoped, tag = 'internal scratch']
  %s0 = inlined_call_operand.vmem [shape: bf16[2,256,512], index: 0, kind: input, shape index: {}]
  %s1 = inlined_call_operand.vmem [shape: bf16[512,128], index: 1, kind: input, shape index: {}]
  %s2 = inlined_call_operand.vmem [shape: f32[2,256,128], index: 2, kind: output, shape index: {0}]
  %s3 = inlined_call_operand.vmem [shape: f32[2,1,8,128], index: 3, kind: output, shape index: {1}]
  %4 = xla_tuple %s2, %s3
  %s5 = sld [smem:[#allocation0]]
  $region49: #{generator_forward.90} parent=0
    _
  %s7 = ssub.s32 1, %s5
  %s8 = scalar_select 0, %s7, %s5
  loop: start=0, step=1, limit=4
  $region2: #{generator_forward.90} parent=0 // loop_pre_header
    _
  $region3: #{generator_forward.90} parent=0 // loop_header
    %s10 = sphi 0, %s14
    %p11 = scmp.ge.s32.totalorder %s10, 4
    %s17 = sphi 0, %s29
    %s18 = sphi 0, %s25
    %s19 = sphi 0, %s17
    %s20 = sphi 0, %s18
    %s21 = sphi 0, %s19
    %s22 = sphi 0, %s20
    %s34 = sphi 0, %s36
    %s37 = sphi 0, %s34
    %s38 = sphi 0, %s37
    %s54 = sphi 0, %s38
    %s58 = sphi 0, %s58
    %s60 = sphi 0, %s58
    %s61 = sphi 0, %s60
    %s75 = sphi 0, %s61
    %s83 = sphi 0, %s85
    %s86 = sphi 0, %s83
    %s87 = sphi 0, %s86
    %s103 = sphi 0, %s87
    %s111 = sphi 0, %s113
    %s114 = sphi 0, %s111
    %s115 = sphi 0, %s114
    %s131 = sphi 0, %s115
  $region4: #{generator_forward.90} parent=0 // loop_header_branch
    %13 = sbr.rel (%p11) target = $region8
  $region5: #{generator_forward.90} parent=0 // loop_body
    %s15 = ssub.s32 %s10, 1
    %s16 = ssub.s32 %s10, 2
    %s23 = sadd.s32 1, %s18
    %p24 = scmp.ge.s32.totalorder %s23, 1
    %s25 = scalar_select %p24, 0, %s23
    %s26 = sadd.s32 1, %s17
    %s27 = scalar_select %p24, %s26, %s17
    %p28 = scmp.ge.s32.totalorder %s27, 2
    %s29 = scalar_select %p28, 0, %s27
    %s30 = ssub.s32 %s17, %s29
    %s31 = ssub.s32 %s18, %s25
    %s32 = sor.u32 %s30, %s31
    %p33 = scmp.eq.s32.totalorder %s32, 0
    %s35 = sadd.s32 %s34, 1
    %s36 = scalar_select %p33, %s34, %s35
    %p39 = pneg %p33
    %p40 = scmp.eq.s32.totalorder %s10, 1
    %p41 = por %p39, %p40
    %p42 = scmp.ne.s32.totalorder %s34, %s37
    %p43 = scmp.eq.s32.totalorder %s10, 0
    %p44 = por %p42, %p43
    %p45 = scmp.ne.s32.totalorder %s34, %s37
    %p46 = scmp.eq.s32.totalorder %s15, 1
    %p47 = por %p45, %p46
    %p48 = scmp.ne.s32.totalorder %s37, %s38
    %p49 = scmp.eq.s32.totalorder %s15, 0
    %p50 = por %p48, %p49
    %p51 = scmp.ne.s32.totalorder %s37, %s38
    %p52 = scmp.eq.s32.totalorder %s16, 1
    %p53 = por %p51, %p52
    %p55 = scmp.ne.s32.totalorder %s38, %s54
    %p56 = scmp.eq.s32.totalorder %s16, 0
    %p57 = por %p55, %p56
    %s59 = sadd.s32 %s58, 1
    %p62 = scmp.eq.s32.totalorder %s10, 1
    %p63 = scmp.ne.s32.totalorder %s58, %s60
    %p64 = scmp.eq.s32.totalorder %s10, 0
    %p65 = por %p63, %p64
    %p66 = scmp.ne.s32.totalorder %s58, %s60
    %p67 = scmp.eq.s32.totalorder %s15, 1
    %p68 = por %p66, %p67
    %p69 = scmp.ne.s32.totalorder %s60, %s61
    %p70 = scmp.eq.s32.totalorder %s15, 0
    %p71 = por %p69, %p70
    %p72 = scmp.ne.s32.totalorder %s60, %s61
    %p73 = scmp.eq.s32.totalorder %s16, 1
    %p74 = por %p72, %p73
    %p76 = scmp.ne.s32.totalorder %s61, %s75
    %p77 = scmp.eq.s32.totalorder %s16, 0
    %p78 = por %p76, %p77
    %s79 = ssub.s32 %s17, %s29
    %s80 = ssub.s32 %s18, %s25
    %s81 = sor.u32 %s79, %s80
    %p82 = scmp.eq.s32.totalorder %s81, 0
    %s84 = sadd.s32 %s83, 1
    %s85 = scalar_select %p82, %s83, %s84
    %p88 = pneg %p82
    %p89 = scmp.eq.s32.totalorder %s10, 1
    %p90 = por %p88, %p89
    %p91 = scmp.ne.s32.totalorder %s83, %s86
    %p92 = scmp.eq.s32.totalorder %s10, 0
    %p93 = por %p91, %p92
    %p94 = scmp.ne.s32.totalorder %s83, %s86
    %p95 = scmp.eq.s32.totalorder %s15, 1
    %p96 = por %p94, %p95
    %p97 = scmp.ne.s32.totalorder %s86, %s87
    %p98 = scmp.eq.s32.totalorder %s15, 0
    %p99 = por %p97, %p98
    %p100 = scmp.ne.s32.totalorder %s86, %s87
    %p101 = scmp.eq.s32.totalorder %s16, 1
    %p102 = por %p100, %p101
    %p104 = scmp.ne.s32.totalorder %s87, %s103
    %p105 = scmp.eq.s32.totalorder %s16, 0
    %p106 = por %p104, %p105
    %s107 = ssub.s32 %s17, %s29
    %s108 = ssub.s32 %s18, %s25
    %s109 = sor.u32 %s107, %s108
    %p110 = scmp.eq.s32.totalorder %s109, 0
    %s112 = sadd.s32 %s111, 1
    %s113 = scalar_select %p110, %s111, %s112
    %p116 = pneg %p110
    %p117 = scmp.eq.s32.totalorder %s10, 1
    %p118 = por %p116, %p117
    %p119 = scmp.ne.s32.totalorder %s111, %s114
    %p120 = scmp.eq.s32.totalorder %s10, 0
    %p121 = por %p119, %p120
    %p122 = scmp.ne.s32.totalorder %s111, %s114
    %p123 = scmp.eq.s32.totalorder %s15, 1
    %p124 = por %p122, %p123
    %p125 = scmp.ne.s32.totalorder %s114, %s115
    %p126 = scmp.eq.s32.totalorder %s15, 0
    %p127 = por %p125, %p126
    %p128 = scmp.ne.s32.totalorder %s114, %s115
    %p129 = scmp.eq.s32.totalorder %s16, 1
    %p130 = por %p128, %p129
    %p132 = scmp.ne.s32.totalorder %s115, %s131
    %p133 = scmp.eq.s32.totalorder %s16, 0
    %p134 = por %p132, %p133
    %p135 = scmp.le.s32.totalorder 1, %s10
    %p136 = scmp.lt.s32.totalorder %s10, 3
    %p137 = pnand %p135, %p136
    %p138 = pneg %p137
    // Predicated region
    $region9: #{generator_forward.90} parent=5 // pred_check
      _
    $region10: #{generator_forward.90} parent=5 // pred_check_branch
      %140 = sbr.rel (%p137) target = $region12
    $region11: #{generator_forward.90} parent=5 // pred_region
      %s141 = ssub.s32 %s10, 1
      // Predicated region
      $region13: #{generator_forward.90} parent=11 // pred_check
        %p142 = pneg %p71
      $region14: #{generator_forward.90} parent=11 // pred_check_branch
        %144 = sbr.rel (%p142) target = $region16
      $region15: #{generator_forward.90} parent=11 // pred_region
        _
      $region16: #{generator_forward.90} parent=11 // pred_fallthru
        _
    $region12: #{generator_forward.90} parent=5 // pred_fallthru
      _
    %p145 = scmp.lt.s32.totalorder %s10, 2
    // Predicated region
    $region17: #{generator_forward.90} parent=5 // pred_check
      %p146 = pneg %p145
    $region18: #{generator_forward.90} parent=5 // pred_check_branch
      %148 = sbr.rel (%p146) target = $region20
    $region19: #{generator_forward.90} parent=5 // pred_region
      // Predicated region
      $region21: #{generator_forward.90} parent=19 // pred_check
        %p149 = pneg %p44
      $region22: #{generator_forward.90} parent=19 // pred_check_branch
        %151 = sbr.rel (%p149) target = $region24
      $region23: #{generator_forward.90} parent=19 // pred_region
        %s152 = smul.u32 32, %s18
        %p153 = scmp.lt.s32.totalorder %s17, 1
        %s154 = scalar_select %p153, %s17, 1
        %p155 = scmp.lt.s32.totalorder %s152, 31
        %s156 = scalar_select %p155, %s152, 31
        %s157 = smul.addr %s156, 4
        %s158 = smul.addr %s154, 128
        %s159 = sadd.s32 %s157, %s158
        %s160 = smul.addr %s159, 4
        %s161 = scalar_lea.vmem %s0, %s160
        %s162 = smul.u32 32, %s18
      $region24: #{generator_forward.90} parent=19 // pred_fallthru
        _
    $region20: #{generator_forward.90} parent=5 // pred_fallthru
      _
    %p163 = scmp.le.s32.totalorder 1, %s10
    %p164 = scmp.lt.s32.totalorder %s10, 3
    %p165 = pnand %p163, %p164
    %p166 = pneg %p165
    // Predicated region
    $region25: #{generator_forward.90} parent=5 // pred_check
      _
    $region26: #{generator_forward.90} parent=5 // pred_check_branch
      %168 = sbr.rel (%p165) target = $region28
    $region27: #{generator_forward.90} parent=5 // pred_region
      %s169 = ssub.s32 %s10, 1
      %s170 = smul.u32 32, %s20
      %p171 = scmp.lt.s32.totalorder %s19, 1
      %s172 = scalar_select %p171, %s19, 1
      %p173 = scmp.lt.s32.totalorder %s170, 31
      %s174 = scalar_select %p173, %s170, 31
      %s175 = smul.addr %s174, 4
      %s176 = smul.addr %s172, 128
      %s177 = sadd.s32 %s175, %s176
      %s178 = smul.addr %s177, 4
      %s179 = scalar_lea.vmem %s0, %s178
      %p180 = pneg %p50
      %p181 = pneg %p47
      %p182 = pneg %p71
      %p183 = pneg %p68
      %p184 = pneg %p99
      %p185 = pneg %p96
      %s186 = smul.u32 32, %s20
      %p187 = scmp.lt.s32.totalorder %s19, 1
      %s188 = scalar_select %p187, %s19, 1
      %p189 = scmp.lt.s32.totalorder %s186, 31
      %s190 = scalar_select %p189, %s186, 31
      %s191 = smul.addr %s188, 32
      %s192 = sadd.s32 %s190, %s191
      %s193 = smul.addr %s192, 8
      %s194 = scalar_lea.vmem %s2, %s193
      %p195 = pneg %p127
      %p196 = pneg %p124
      %p197 = scmp.lt.s32.totalorder %s19, 1
      %s198 = scalar_select %p197, %s19, 1
      %p199 = scmp.lt.s32.totalorder %s20, 0
      %s200 = scalar_select %p199, %s20, 0
      %s201 = sadd.s32 %s200, %s198
      %s202 = smul.addr %s201, 8
      %s203 = scalar_lea.vmem %s3, %s202
      %s204 = smul.u32 32, %s20
      %p205 = scmp.lt.s32.totalorder %s19, 1
      %s206 = scalar_select %p205, %s19, 1
      %p207 = scmp.lt.s32.totalorder %s204, 31
      %s208 = scalar_select %p207, %s204, 31
      %s209 = smul.addr %s208, 4
      %s210 = smul.addr %s206, 128
      %s211 = sadd.s32 %s209, %s210
      %s212 = smul.addr %s211, 4
      %s213 = scalar_lea.vmem %s0, %s212
      %s214 = smul.u32 32, %s20
      %s215 = smul.u32 32, %s20
      %p216 = scmp.lt.s32.totalorder %s19, 1
      %s217 = scalar_select %p216, %s19, 1
      %p218 = scmp.lt.s32.totalorder %s215, 31
      %s219 = scalar_select %p218, %s215, 31
      %s220 = smul.addr %s217, 32
      %s221 = sadd.s32 %s219, %s220
      %s222 = smul.addr %s221, 8
      %s223 = scalar_lea.vmem %s2, %s222
      %s224 = smul.u32 32, %s20
      %p225 = scmp.lt.s32.totalorder %s19, 1
      %s226 = scalar_select %p225, %s19, 1
      %p227 = scmp.lt.s32.totalorder %s20, 0
      %s228 = scalar_select %p227, %s20, 0
      %s229 = sadd.s32 %s228, %s226
      %s230 = smul.addr %s229, 8
      %s231 = scalar_lea.vmem %s3, %s230
      %v232 = vld [vmem:[%s213] sm:$0xff]
      %v233 = vld [vmem:[%s213 + $0x8] sm:$0xff]
      %v234 = vld [vmem:[%s213 + $0x10] sm:$0xff]
      %v235 = vld [vmem:[%s213 + $0x18] sm:$0xff]
      %v236 = vld [vmem:[%s213 + $0x20] sm:$0xff]
      %v237 = vld [vmem:[%s213 + $0x28] sm:$0xff]
      %v238 = vld [vmem:[%s213 + $0x30] sm:$0xff]
      %v239 = vld [vmem:[%s213 + $0x38] sm:$0xff]
      %v240 = vld [vmem:[%s213 + $0x40] sm:$0xff]
      %v241 = vld [vmem:[%s213 + $0x48] sm:$0xff]
      %v242 = vld [vmem:[%s213 + $0x50] sm:$0xff]
      %v243 = vld [vmem:[%s213 + $0x58] sm:$0xff]
      %v244 = vld [vmem:[%s213 + $0x60] sm:$0xff]
      %v245 = vld [vmem:[%s213 + $0x68] sm:$0xff]
      %v246 = vld [vmem:[%s213 + $0x70] sm:$0xff]
      %v247 = vld [vmem:[%s213 + $0x78] sm:$0xff]
      %v248 = vld [vmem:[%s213 + $0x80] sm:$0xff]
      %v249 = vld [vmem:[%s213 + $0x88] sm:$0xff]
      %v250 = vld [vmem:[%s213 + $0x90] sm:$0xff]
      %v251 = vld [vmem:[%s213 + $0x98] sm:$0xff]
      %v252 = vld [vmem:[%s213 + $0xa0] sm:$0xff]
      %v253 = vld [vmem:[%s213 + $0xa8] sm:$0xff]
      %v254 = vld [vmem:[%s213 + $0xb0] sm:$0xff]
      %v255 = vld [vmem:[%s213 + $0xb8] sm:$0xff]
      %v256 = vld [vmem:[%s213 + $0xc0] sm:$0xff]
      %v257 = vld [vmem:[%s213 + $0xc8] sm:$0xff]
      %v258 = vld [vmem:[%s213 + $0xd0] sm:$0xff]
      %v259 = vld [vmem:[%s213 + $0xd8] sm:$0xff]
      %v260 = vld [vmem:[%s213 + $0xe0] sm:$0xff]
      %v261 = vld [vmem:[%s213 + $0xe8] sm:$0xff]
      %v262 = vld [vmem:[%s213 + $0xf0] sm:$0xff]
      %v263 = vld [vmem:[%s213 + $0xf8] sm:$0xff]
      %v264 = vld [vmem:[%s213 + $0x100] sm:$0xff]
      %v265 = vld [vmem:[%s213 + $0x108] sm:$0xff]
      %v266 = vld [vmem:[%s213 + $0x110] sm:$0xff]
      %v267 = vld [vmem:[%s213 + $0x118] sm:$0xff]
      %v268 = vld [vmem:[%s213 + $0x120] sm:$0xff]
      %v269 = vld [vmem:[%s213 + $0x128] sm:$0xff]
      %v270 = vld [vmem:[%s213 + $0x130] sm:$0xff]
      %v271 = vld [vmem:[%s213 + $0x138] sm:$0xff]
      %v272 = vld [vmem:[%s213 + $0x140] sm:$0xff]
      %v273 = vld [vmem:[%s213 + $0x148] sm:$0xff]
      %v274 = vld [vmem:[%s213 + $0x150] sm:$0xff]
      %v275 = vld [vmem:[%s213 + $0x158] sm:$0xff]
      %v276 = vld [vmem:[%s213 + $0x160] sm:$0xff]
      %v277 = vld [vmem:[%s213 + $0x168] sm:$0xff]
      %v278 = vld [vmem:[%s213 + $0x170] sm:$0xff]
      %v279 = vld [vmem:[%s213 + $0x178] sm:$0xff]
      %v280 = vld [vmem:[%s213 + $0x180] sm:$0xff]
      %v281 = vld [vmem:[%s213 + $0x188] sm:$0xff]
      %v282 = vld [vmem:[%s213 + $0x190] sm:$0xff]
      %v283 = vld [vmem:[%s213 + $0x198] sm:$0xff]
      %v284 = vld [vmem:[%s213 + $0x1a0] sm:$0xff]
      %v285 = vld [vmem:[%s213 + $0x1a8] sm:$0xff]
      %v286 = vld [vmem:[%s213 + $0x1b0] sm:$0xff]
      %v287 = vld [vmem:[%s213 + $0x1b8] sm:$0xff]
      %v288 = vld [vmem:[%s213 + $0x1c0] sm:$0xff]
      %v289 = vld [vmem:[%s213 + $0x1c8] sm:$0xff]
      %v290 = vld [vmem:[%s213 + $0x1d0] sm:$0xff]
      %v291 = vld [vmem:[%s213 + $0x1d8] sm:$0xff]
      %v292 = vld [vmem:[%s213 + $0x1e0] sm:$0xff]
      %v293 = vld [vmem:[%s213 + $0x1e8] sm:$0xff]
      %v294 = vld [vmem:[%s213 + $0x1f0] sm:$0xff]
      %v295 = vld [vmem:[%s213 + $0x1f8] sm:$0xff]
      %v296 = vld [vmem:[%s1] sm:$0xf]
      %v297 = vld [vmem:[%s1 + $0x4] sm:$0xf]
      %v298 = vld [vmem:[%s1 + $0x8] sm:$0xf]
      %v299 = vld [vmem:[%s1 + $0xc] sm:$0xf]
      %v300 = vld [vmem:[%s1 + $0x10] sm:$0xf]
      %v301 = vld [vmem:[%s1 + $0x14] sm:$0xf]
      %v302 = vld [vmem:[%s1 + $0x18] sm:$0xf]
      %v303 = vld [vmem:[%s1 + $0x1c] sm:$0xf]
      %v304 = vld [vmem:[%s1 + $0x20] sm:$0xf]
      %v305 = vld [vmem:[%s1 + $0x24] sm:$0xf]
      %v306 = vld [vmem:[%s1 + $0x28] sm:$0xf]
      %v307 = vld [vmem:[%s1 + $0x2c] sm:$0xf]
      %v308 = vld [vmem:[%s1 + $0x30] sm:$0xf]
      %v309 = vld [vmem:[%s1 + $0x34] sm:$0xf]
      %v310 = vld [vmem:[%s1 + $0x38] sm:$0xf]
      %v311 = vld [vmem:[%s1 + $0x3c] sm:$0xf]
      %v312 = vld [vmem:[%s1 + $0x40] sm:$0xf]
      %v313 = vld [vmem:[%s1 + $0x44] sm:$0xf]
      %v314 = vld [vmem:[%s1 + $0x48] sm:$0xf]
      %v315 = vld [vmem:[%s1 + $0x4c] sm:$0xf]
      %v316 = vld [vmem:[%s1 + $0x50] sm:$0xf]
      %v317 = vld [vmem:[%s1 + $0x54] sm:$0xf]
      %v318 = vld [vmem:[%s1 + $0x58] sm:$0xf]
      %v319 = vld [vmem:[%s1 + $0x5c] sm:$0xf]
      %v320 = vld [vmem:[%s1 + $0x60] sm:$0xf]
      %v321 = vld [vmem:[%s1 + $0x64] sm:$0xf]
      %v322 = vld [vmem:[%s1 + $0x68] sm:$0xf]
      %v323 = vld [vmem:[%s1 + $0x6c] sm:$0xf]
      %v324 = vld [vmem:[%s1 + $0x70] sm:$0xf]
      %v325 = vld [vmem:[%s1 + $0x74] sm:$0xf]
      %v326 = vld [vmem:[%s1 + $0x78] sm:$0xf]
      %v327 = vld [vmem:[%s1 + $0x7c] sm:$0xf]
      %v328 = vld [vmem:[%s1 + $0x80] sm:$0xf]
      %v329 = vld [vmem:[%s1 + $0x84] sm:$0xf]
      %v330 = vld [vmem:[%s1 + $0x88] sm:$0xf]
      %v331 = vld [vmem:[%s1 + $0x8c] sm:$0xf]
      %v332 = vld [vmem:[%s1 + $0x90] sm:$0xf]
      %v333 = vld [vmem:[%s1 + $0x94] sm:$0xf]
      %v334 = vld [vmem:[%s1 + $0x98] sm:$0xf]
      %v335 = vld [vmem:[%s1 + $0x9c] sm:$0xf]
      %v336 = vld [vmem:[%s1 + $0xa0] sm:$0xf]
      %v337 = vld [vmem:[%s1 + $0xa4] sm:$0xf]
      %v338 = vld [vmem:[%s1 + $0xa8] sm:$0xf]
      %v339 = vld [vmem:[%s1 + $0xac] sm:$0xf]
      %v340 = vld [vmem:[%s1 + $0xb0] sm:$0xf]
      %v341 = vld [vmem:[%s1 + $0xb4] sm:$0xf]
      %v342 = vld [vmem:[%s1 + $0xb8] sm:$0xf]
      %v343 = vld [vmem:[%s1 + $0xbc] sm:$0xf]
      %v344 = vld [vmem:[%s1 + $0xc0] sm:$0xf]
      %v345 = vld [vmem:[%s1 + $0xc4] sm:$0xf]
      %v346 = vld [vmem:[%s1 + $0xc8] sm:$0xf]
      %v347 = vld [vmem:[%s1 + $0xcc] sm:$0xf]
      %v348 = vld [vmem:[%s1 + $0xd0] sm:$0xf]
      %v349 = vld [vmem:[%s1 + $0xd4] sm:$0xf]
      %v350 = vld [vmem:[%s1 + $0xd8] sm:$0xf]
      %v351 = vld [vmem:[%s1 + $0xdc] sm:$0xf]
      %v352 = vld [vmem:[%s1 + $0xe0] sm:$0xf]
      %v353 = vld [vmem:[%s1 + $0xe4] sm:$0xf]
      %v354 = vld [vmem:[%s1 + $0xe8] sm:$0xf]
      %v355 = vld [vmem:[%s1 + $0xec] sm:$0xf]
      %v356 = vld [vmem:[%s1 + $0xf0] sm:$0xf]
      %v357 = vld [vmem:[%s1 + $0xf4] sm:$0xf]
      %v358 = vld [vmem:[%s1 + $0xf8] sm:$0xf]
      %v359 = vld [vmem:[%s1 + $0xfc] sm:$0xf]
      %v424 = vunpack.c.l.b16 %v232
      %v425 = vunpack.c.h.b16 %v232
      %v426 = vunpack.c.l.b16 %v233
      %v427 = vunpack.c.h.b16 %v233
      %v428 = vunpack.c.l.b16 %v234
      %v429 = vunpack.c.h.b16 %v234
      %v430 = vunpack.c.l.b16 %v235
      %v431 = vunpack.c.h.b16 %v235
      %v432 = vunpack.c.l.b16 %v236
      %v433 = vunpack.c.h.b16 %v236
      %v434 = vunpack.c.l.b16 %v237
      %v435 = vunpack.c.h.b16 %v237
      %v436 = vunpack.c.l.b16 %v238
      %v437 = vunpack.c.h.b16 %v238
      %v438 = vunpack.c.l.b16 %v239
      %v439 = vunpack.c.h.b16 %v239
      %v440 = vunpack.c.l.b16 %v240
      %v441 = vunpack.c.h.b16 %v240
      %v442 = vunpack.c.l.b16 %v241
      %v443 = vunpack.c.h.b16 %v241
      %v444 = vunpack.c.l.b16 %v242
      %v445 = vunpack.c.h.b16 %v242
      %v446 = vunpack.c.l.b16 %v243
      %v447 = vunpack.c.h.b16 %v243
      %v448 = vunpack.c.l.b16 %v244
      %v449 = vunpack.c.h.b16 %v244
      %v450 = vunpack.c.l.b16 %v245
      %v451 = vunpack.c.h.b16 %v245
      %v452 = vunpack.c.l.b16 %v246
      %v453 = vunpack.c.h.b16 %v246
      %v454 = vunpack.c.l.b16 %v247
      %v455 = vunpack.c.h.b16 %v247
      %v456 = vunpack.c.l.b16 %v248
      %v457 = vunpack.c.h.b16 %v248
      %v458 = vunpack.c.l.b16 %v249
      %v459 = vunpack.c.h.b16 %v249
      %v460 = vunpack.c.l.b16 %v250
      %v461 = vunpack.c.h.b16 %v250
      %v462 = vunpack.c.l.b16 %v251
      %v463 = vunpack.c.h.b16 %v251
      %v464 = vunpack.c.l.b16 %v252
      %v465 = vunpack.c.h.b16 %v252
      %v466 = vunpack.c.l.b16 %v253
      %v467 = vunpack.c.h.b16 %v253
      %v468 = vunpack.c.l.b16 %v254
      %v469 = vunpack.c.h.b16 %v254
      %v470 = vunpack.c.l.b16 %v255
      %v471 = vunpack.c.h.b16 %v255
      %v472 = vunpack.c.l.b16 %v256
      %v473 = vunpack.c.h.b16 %v256
      %v474 = vunpack.c.l.b16 %v257
      %v475 = vunpack.c.h.b16 %v257
      %v476 = vunpack.c.l.b16 %v258
      %v477 = vunpack.c.h.b16 %v258
      %v478 = vunpack.c.l.b16 %v259
      %v479 = vunpack.c.h.b16 %v259
      %v480 = vunpack.c.l.b16 %v260
      %v481 = vunpack.c.h.b16 %v260
      %v482 = vunpack.c.l.b16 %v261
      %v483 = vunpack.c.h.b16 %v261
      %v484 = vunpack.c.l.b16 %v262
      %v485 = vunpack.c.h.b16 %v262
      %v486 = vunpack.c.l.b16 %v263
      %v487 = vunpack.c.h.b16 %v263
      %v488 = vunpack.c.l.b16 %v264
      %v489 = vunpack.c.h.b16 %v264
      %v490 = vunpack.c.l.b16 %v265
      %v491 = vunpack.c.h.b16 %v265
      %v492 = vunpack.c.l.b16 %v266
      %v493 = vunpack.c.h.b16 %v266
      %v494 = vunpack.c.l.b16 %v267
      %v495 = vunpack.c.h.b16 %v267
      %v496 = vunpack.c.l.b16 %v268
      %v497 = vunpack.c.h.b16 %v268
      %v498 = vunpack.c.l.b16 %v269
      %v499 = vunpack.c.h.b16 %v269
      %v500 = vunpack.c.l.b16 %v270
      %v501 = vunpack.c.h.b16 %v270
      %v502 = vunpack.c.l.b16 %v271
      %v503 = vunpack.c.h.b16 %v271
      %v504 = vunpack.c.l.b16 %v272
      %v505 = vunpack.c.h.b16 %v272
      %v506 = vunpack.c.l.b16 %v273
      %v507 = vunpack.c.h.b16 %v273
      %v508 = vunpack.c.l.b16 %v274
      %v509 = vunpack.c.h.b16 %v274
      %v510 = vunpack.c.l.b16 %v275
      %v511 = vunpack.c.h.b16 %v275
      %v512 = vunpack.c.l.b16 %v276
      %v513 = vunpack.c.h.b16 %v276
      %v514 = vunpack.c.l.b16 %v277
      %v515 = vunpack.c.h.b16 %v277
      %v516 = vunpack.c.l.b16 %v278
      %v517 = vunpack.c.h.b16 %v278
      %v518 = vunpack.c.l.b16 %v279
      %v519 = vunpack.c.h.b16 %v279
      %v520 = vunpack.c.l.b16 %v280
      %v521 = vunpack.c.h.b16 %v280
      %v522 = vunpack.c.l.b16 %v281
      %v523 = vunpack.c.h.b16 %v281
      %v524 = vunpack.c.l.b16 %v282
      %v525 = vunpack.c.h.b16 %v282
      %v526 = vunpack.c.l.b16 %v283
      %v527 = vunpack.c.h.b16 %v283
      %v528 = vunpack.c.l.b16 %v284
      %v529 = vunpack.c.h.b16 %v284
      %v530 = vunpack.c.l.b16 %v285
      %v531 = vunpack.c.h.b16 %v285
      %v532 = vunpack.c.l.b16 %v286
      %v533 = vunpack.c.h.b16 %v286
      %v534 = vunpack.c.l.b16 %v287
      %v535 = vunpack.c.h.b16 %v287
      %v536 = vunpack.c.l.b16 %v288
      %v537 = vunpack.c.h.b16 %v288
      %v538 = vunpack.c.l.b16 %v289
      %v539 = vunpack.c.h.b16 %v289
      %v540 = vunpack.c.l.b16 %v290
      %v541 = vunpack.c.h.b16 %v290
      %v542 = vunpack.c.l.b16 %v291
      %v543 = vunpack.c.h.b16 %v291
      %v544 = vunpack.c.l.b16 %v292
      %v545 = vunpack.c.h.b16 %v292
      %v546 = vunpack.c.l.b16 %v293
      %v547 = vunpack.c.h.b16 %v293
      %v548 = vunpack.c.l.b16 %v294
      %v549 = vunpack.c.h.b16 %v294
      %v550 = vunpack.c.l.b16 %v295
      %v551 = vunpack.c.h.b16 %v295
      %v552 = vpack.c.b16 %v428, %v424
      %v553 = vpack.c.b16 %v429, %v425
      %v554 = vpack.c.b16 %v430, %v426
      %v555 = vpack.c.b16 %v431, %v427
      %v556 = vpack.c.b16 %v436, %v432
      %v557 = vpack.c.b16 %v437, %v433
      %v558 = vpack.c.b16 %v438, %v434
      %v559 = vpack.c.b16 %v439, %v435
      %v560 = vpack.c.b16 %v444, %v440
      %v561 = vpack.c.b16 %v445, %v441
      %v562 = vpack.c.b16 %v446, %v442
      %v563 = vpack.c.b16 %v447, %v443
      %v564 = vpack.c.b16 %v452, %v448
      %v565 = vpack.c.b16 %v453, %v449
      %v566 = vpack.c.b16 %v454, %v450
      %v567 = vpack.c.b16 %v455, %v451
      %v568 = vpack.c.b16 %v460, %v456
      %v569 = vpack.c.b16 %v461, %v457
      %v570 = vpack.c.b16 %v462, %v458
      %v571 = vpack.c.b16 %v463, %v459
      %v572 = vpack.c.b16 %v468, %v464
      %v573 = vpack.c.b16 %v469, %v465
      %v574 = vpack.c.b16 %v470, %v466
      %v575 = vpack.c.b16 %v471, %v467
      %v576 = vpack.c.b16 %v476, %v472
      %v577 = vpack.c.b16 %v477, %v473
      %v578 = vpack.c.b16 %v478, %v474
      %v579 = vpack.c.b16 %v479, %v475
      %v580 = vpack.c.b16 %v484, %v480
      %v581 = vpack.c.b16 %v485, %v481
      %v582 = vpack.c.b16 %v486, %v482
      %v583 = vpack.c.b16 %v487, %v483
      %v584 = vpack.c.b16 %v492, %v488
      %v585 = vpack.c.b16 %v493, %v489
      %v586 = vpack.c.b16 %v494, %v490
      %v587 = vpack.c.b16 %v495, %v491
      %v588 = vpack.c.b16 %v500, %v496
      %v589 = vpack.c.b16 %v501, %v497
      %v590 = vpack.c.b16 %v502, %v498
      %v591 = vpack.c.b16 %v503, %v499
      %v592 = vpack.c.b16 %v508, %v504
      %v593 = vpack.c.b16 %v509, %v505
      %v594 = vpack.c.b16 %v510, %v506
      %v595 = vpack.c.b16 %v511, %v507
      %v596 = vpack.c.b16 %v516, %v512
      %v597 = vpack.c.b16 %v517, %v513
      %v598 = vpack.c.b16 %v518, %v514
      %v599 = vpack.c.b16 %v519, %v515
      %v600 = vpack.c.b16 %v524, %v520
      %v601 = vpack.c.b16 %v525, %v521
      %v602 = vpack.c.b16 %v526, %v522
      %v603 = vpack.c.b16 %v527, %v523
      %v604 = vpack.c.b16 %v532, %v528
      %v605 = vpack.c.b16 %v533, %v529
      %v606 = vpack.c.b16 %v534, %v530
      %v607 = vpack.c.b16 %v535, %v531
      %v608 = vpack.c.b16 %v540, %v536
      %v609 = vpack.c.b16 %v541, %v537
      %v610 = vpack.c.b16 %v542, %v538
      %v611 = vpack.c.b16 %v543, %v539
      %v612 = vpack.c.b16 %v548, %v544
      %v613 = vpack.c.b16 %v549, %v545
      %v614 = vpack.c.b16 %v550, %v546
      %v615 = vpack.c.b16 %v551, %v547
      %v744 = vunpack.c.l.b16 %v296
      %v745 = vunpack.c.l.b16 %v297
      %v746 = vunpack.c.l.b16 %v298
      %v747 = vunpack.c.l.b16 %v299
      %v748 = vunpack.c.l.b16 %v300
      %v749 = vunpack.c.l.b16 %v301
      %v750 = vunpack.c.l.b16 %v302
      %v751 = vunpack.c.l.b16 %v303
      %v752 = vunpack.c.l.b16 %v304
      %v753 = vunpack.c.l.b16 %v305
      %v754 = vunpack.c.l.b16 %v306
      %v755 = vunpack.c.l.b16 %v307
      %v756 = vunpack.c.l.b16 %v308
      %v757 = vunpack.c.l.b16 %v309
      %v758 = vunpack.c.l.b16 %v310
      %v759 = vunpack.c.l.b16 %v311
      %v760 = vunpack.c.l.b16 %v312
      %v761 = vunpack.c.l.b16 %v313
      %v762 = vunpack.c.l.b16 %v314
      %v763 = vunpack.c.l.b16 %v315
      %v764 = vunpack.c.l.b16 %v316
      %v765 = vunpack.c.l.b16 %v317
      %v766 = vunpack.c.l.b16 %v318
      %v767 = vunpack.c.l.b16 %v319
      %v768 = vunpack.c.l.b16 %v320
      %v769 = vunpack.c.l.b16 %v321
      %v770 = vunpack.c.l.b16 %v322
      %v771 = vunpack.c.l.b16 %v323
      %v772 = vunpack.c.l.b16 %v324
      %v773 = vunpack.c.l.b16 %v325
      %v774 = vunpack.c.l.b16 %v326
      %v775 = vunpack.c.l.b16 %v327
      %v776 = vunpack.c.l.b16 %v328
      %v777 = vunpack.c.l.b16 %v329
      %v778 = vunpack.c.l.b16 %v330
      %v779 = vunpack.c.l.b16 %v331
      %v780 = vunpack.c.l.b16 %v332
      %v781 = vunpack.c.l.b16 %v333
      %v782 = vunpack.c.l.b16 %v334
      %v783 = vunpack.c.l.b16 %v335
      %v784 = vunpack.c.l.b16 %v336
      %v785 = vunpack.c.l.b16 %v337
      %v786 = vunpack.c.l.b16 %v338
      %v787 = vunpack.c.l.b16 %v339
      %v788 = vunpack.c.l.b16 %v340
      %v789 = vunpack.c.l.b16 %v341
      %v790 = vunpack.c.l.b16 %v342
      %v791 = vunpack.c.l.b16 %v343
      %v792 = vunpack.c.l.b16 %v344
      %v793 = vunpack.c.l.b16 %v345
      %v794 = vunpack.c.l.b16 %v346
      %v795 = vunpack.c.l.b16 %v347
      %v796 = vunpack.c.l.b16 %v348
      %v797 = vunpack.c.l.b16 %v349
      %v798 = vunpack.c.l.b16 %v350
      %v799 = vunpack.c.l.b16 %v351
      %v800 = vunpack.c.l.b16 %v352
      %v801 = vunpack.c.l.b16 %v353
      %v802 = vunpack.c.l.b16 %v354
      %v803 = vunpack.c.l.b16 %v355
      %v804 = vunpack.c.l.b16 %v356
      %v805 = vunpack.c.l.b16 %v357
      %v806 = vunpack.c.l.b16 %v358
      %v807 = vunpack.c.l.b16 %v359
      %v808 = vpack.c.b16 %v745, %v744
      %v809 = vpack.c.b16 %v747, %v746
      %v810 = vpack.c.b16 %v749, %v748
      %v811 = vpack.c.b16 %v751, %v750
      %v812 = vpack.c.b16 %v753, %v752
      %v813 = vpack.c.b16 %v755, %v754
      %v814 = vpack.c.b16 %v757, %v756
      %v815 = vpack.c.b16 %v759, %v758
      %v816 = vpack.c.b16 %v761, %v760
      %v817 = vpack.c.b16 %v763, %v762
      %v818 = vpack.c.b16 %v765, %v764
      %v819 = vpack.c.b16 %v767, %v766
      %v820 = vpack.c.b16 %v769, %v768
      %v821 = vpack.c.b16 %v771, %v770
      %v822 = vpack.c.b16 %v773, %v772
      %v823 = vpack.c.b16 %v775, %v774
      %v824 = vpack.c.b16 %v777, %v776
      %v825 = vpack.c.b16 %v779, %v778
      %v826 = vpack.c.b16 %v781, %v780
      %v827 = vpack.c.b16 %v783, %v782
      %v828 = vpack.c.b16 %v785, %v784
      %v829 = vpack.c.b16 %v787, %v786
      %v830 = vpack.c.b16 %v789, %v788
      %v831 = vpack.c.b16 %v791, %v790
      %v832 = vpack.c.b16 %v793, %v792
      %v833 = vpack.c.b16 %v795, %v794
      %v834 = vpack.c.b16 %v797, %v796
      %v835 = vpack.c.b16 %v799, %v798
      %v836 = vpack.c.b16 %v801, %v800
      %v837 = vpack.c.b16 %v803, %v802
      %v838 = vpack.c.b16 %v805, %v804
      %v839 = vpack.c.b16 %v807, %v806
      %872 = vmatpush.bf16.msra.mxu0 %v815
      %873 = vmatpush.bf16.msra.mxu0 %v814
      %874 = vmatpush.bf16.msra.mxu0 %v813
      %875 = vmatpush.bf16.msra.mxu0 %v812
      %876 = vmatpush.bf16.msra.mxu0 %v811
      %877 = vmatpush.bf16.msra.mxu0 %v810
      %878 = vmatpush.bf16.msra.mxu0 %v809
      %879 = vmatpush.bf16.msra.mxu0 %v808
      %880 = vmatmul.bf16.gmra.mxu0 %v552
      %v881 = vpop.f32.mrf.mxu0
      %v882 = vadd.f32 0.0, %v881
      %v883 = vpop.f32.mrf.mxu0
      %v884 = vadd.f32 0.0, %v883
      %885 = vmatmul.bf16.gmra.mxu0 %v556
      %v886 = vpop.f32.mrf.mxu0
      %v887 = vadd.f32 0.0, %v886
      %v888 = vpop.f32.mrf.mxu0
      %v889 = vadd.f32 0.0, %v888
      %890 = vmatmul.bf16.gmra.mxu0 %v560
      %v891 = vpop.f32.mrf.mxu0
      %v892 = vadd.f32 0.0, %v891
      %v893 = vpop.f32.mrf.mxu0
      %v894 = vadd.f32 0.0, %v893
      %895 = vmatmul.bf16.gmra.mxu0 %v564
      %v896 = vpop.f32.mrf.mxu0
      %v897 = vadd.f32 0.0, %v896
      %v898 = vpop.f32.mrf.mxu0
      %v899 = vadd.f32 0.0, %v898
      %900 = vmatmul.bf16.gmra.mxu0 %v568
      %v901 = vpop.f32.mrf.mxu0
      %v902 = vadd.f32 0.0, %v901
      %v903 = vpop.f32.mrf.mxu0
      %v904 = vadd.f32 0.0, %v903
      %905 = vmatmul.bf16.gmra.mxu0 %v572
      %v906 = vpop.f32.mrf.mxu0
      %v907 = vadd.f32 0.0, %v906
      %v908 = vpop.f32.mrf.mxu0
      %v909 = vadd.f32 0.0, %v908
      %910 = vmatmul.bf16.gmra.mxu0 %v576
      %v911 = vpop.f32.mrf.mxu0
      %v912 = vadd.f32 0.0, %v911
      %v913 = vpop.f32.mrf.mxu0
      %v914 = vadd.f32 0.0, %v913
      %915 = vmatmul.bf16.gmra.mxu0 %v580
      %v916 = vpop.f32.mrf.mxu0
      %v917 = vadd.f32 0.0, %v916
      %v918 = vpop.f32.mrf.mxu0
      %v919 = vadd.f32 0.0, %v918
      %920 = vmatmul.bf16.gmra.mxu0 %v584
      %v921 = vpop.f32.mrf.mxu0
      %v922 = vadd.f32 0.0, %v921
      %v923 = vpop.f32.mrf.mxu0
      %v924 = vadd.f32 0.0, %v923
      %925 = vmatmul.bf16.gmra.mxu0 %v588
      %v926 = vpop.f32.mrf.mxu0
      %v927 = vadd.f32 0.0, %v926
      %v928 = vpop.f32.mrf.mxu0
      %v929 = vadd.f32 0.0, %v928
      %930 = vmatmul.bf16.gmra.mxu0 %v592
      %v931 = vpop.f32.mrf.mxu0
      %v932 = vadd.f32 0.0, %v931
      %v933 = vpop.f32.mrf.mxu0
      %v934 = vadd.f32 0.0, %v933
      %935 = vmatmul.bf16.gmra.mxu0 %v596
      %v936 = vpop.f32.mrf.mxu0
      %v937 = vadd.f32 0.0, %v936
      %v938 = vpop.f32.mrf.mxu0
      %v939 = vadd.f32 0.0, %v938
      %940 = vmatmul.bf16.gmra.mxu0 %v600
      %v941 = vpop.f32.mrf.mxu0
      %v942 = vadd.f32 0.0, %v941
      %v943 = vpop.f32.mrf.mxu0
      %v944 = vadd.f32 0.0, %v943
      %945 = vmatmul.bf16.gmra.mxu0 %v604
      %v946 = vpop.f32.mrf.mxu0
      %v947 = vadd.f32 0.0, %v946
      %v948 = vpop.f32.mrf.mxu0
      %v949 = vadd.f32 0.0, %v948
      %950 = vmatmul.bf16.gmra.mxu0 %v608
      %v951 = vpop.f32.mrf.mxu0
      %v952 = vadd.f32 0.0, %v951
      %v953 = vpop.f32.mrf.mxu0
      %v954 = vadd.f32 0.0, %v953
      %955 = vmatmul.bf16.gmra.mxu0 %v612
      %v956 = vpop.f32.mrf.mxu0
      %v957 = vadd.f32 0.0, %v956
      %v958 = vpop.f32.mrf.mxu0
      %v959 = vadd.f32 0.0, %v958
      %960 = vdwg.mxu0
      %961 = vmatpush.bf16.msra.mxu0 %v823
      %962 = vmatpush.bf16.msra.mxu0 %v822
      %963 = vmatpush.bf16.msra.mxu0 %v821
      %964 = vmatpush.bf16.msra.mxu0 %v820
      %965 = vmatpush.bf16.msra.mxu0 %v819
      %966 = vmatpush.bf16.msra.mxu0 %v818
      %967 = vmatpush.bf16.msra.mxu0 %v817
      %968 = vmatpush.bf16.msra.mxu0 %v816
      %969 = vmatmul.bf16.gmra.mxu0 %v553
      %v970 = vpop.f32.mrf.mxu0
      %v971 = vadd.f32 %v882, %v970
      %v972 = vpop.f32.mrf.mxu0
      %v973 = vadd.f32 %v884, %v972
      %974 = vmatmul.bf16.gmra.mxu0 %v557
      %v975 = vpop.f32.mrf.mxu0
      %v976 = vadd.f32 %v887, %v975
      %v977 = vpop.f32.mrf.mxu0
      %v978 = vadd.f32 %v889, %v977
      %979 = vmatmul.bf16.gmra.mxu0 %v561
      %v980 = vpop.f32.mrf.mxu0
      %v981 = vadd.f32 %v892, %v980
      %v982 = vpop.f32.mrf.mxu0
      %v983 = vadd.f32 %v894, %v982
      %984 = vmatmul.bf16.gmra.mxu0 %v565
      %v985 = vpop.f32.mrf.mxu0
      %v986 = vadd.f32 %v897, %v985
      %v987 = vpop.f32.mrf.mxu0
      %v988 = vadd.f32 %v899, %v987
      %989 = vmatmul.bf16.gmra.mxu0 %v569
      %v990 = vpop.f32.mrf.mxu0
      %v991 = vadd.f32 %v902, %v990
      %v992 = vpop.f32.mrf.mxu0
      %v993 = vadd.f32 %v904, %v992
      %994 = vmatmul.bf16.gmra.mxu0 %v573
      %v995 = vpop.f32.mrf.mxu0
      %v996 = vadd.f32 %v907, %v995
      %v997 = vpop.f32.mrf.mxu0
      %v998 = vadd.f32 %v909, %v997
      %999 = vmatmul.bf16.gmra.mxu0 %v577
      %v1000 = vpop.f32.mrf.mxu0
      %v1001 = vadd.f32 %v912, %v1000
      %v1002 = vpop.f32.mrf.mxu0
      %v1003 = vadd.f32 %v914, %v1002
      %1004 = vmatmul.bf16.gmra.mxu0 %v581
      %v1005 = vpop.f32.mrf.mxu0
      %v1006 = vadd.f32 %v917, %v1005
      %v1007 = vpop.f32.mrf.mxu0
      %v1008 = vadd.f32 %v919, %v1007
      %1009 = vmatmul.bf16.gmra.mxu0 %v585
      %v1010 = vpop.f32.mrf.mxu0
      %v1011 = vadd.f32 %v922, %v1010
      %v1012 = vpop.f32.mrf.mxu0
      %v1013 = vadd.f32 %v924, %v1012
      %1014 = vmatmul.bf16.gmra.mxu0 %v589
      %v1015 = vpop.f32.mrf.mxu0
      %v1016 = vadd.f32 %v927, %v1015
      %v1017 = vpop.f32.mrf.mxu0
      %v1018 = vadd.f32 %v929, %v1017
      %1019 = vmatmul.bf16.gmra.mxu0 %v593
      %v1020 = vpop.f32.mrf.mxu0
      %v1021 = vadd.f32 %v932, %v1020
      %v1022 = vpop.f32.mrf.mxu0
      %v1023 = vadd.f32 %v934, %v1022
      %1024 = vmatmul.bf16.gmra.mxu0 %v597
      %v1025 = vpop.f32.mrf.mxu0
      %v1026 = vadd.f32 %v937, %v1025
      %v1027 = vpop.f32.mrf.mxu0
      %v1028 = vadd.f32 %v939, %v1027
      %1029 = vmatmul.bf16.gmra.mxu0 %v601
      %v1030 = vpop.f32.mrf.mxu0
      %v1031 = vadd.f32 %v942, %v1030
      %v1032 = vpop.f32.mrf.mxu0
      %v1033 = vadd.f32 %v944, %v1032
      %1034 = vmatmul.bf16.gmra.mxu0 %v605
      %v1035 = vpop.f32.mrf.mxu0
      %v1036 = vadd.f32 %v947, %v1035
      %v1037 = vpop.f32.mrf.mxu0
      %v1038 = vadd.f32 %v949, %v1037
      %1039 = vmatmul.bf16.gmra.mxu0 %v609
      %v1040 = vpop.f32.mrf.mxu0
      %v1041 = vadd.f32 %v952, %v1040
      %v1042 = vpop.f32.mrf.mxu0
      %v1043 = vadd.f32 %v954, %v1042
      %1044 = vmatmul.bf16.gmra.mxu0 %v613
      %v1045 = vpop.f32.mrf.mxu0
      %v1046 = vadd.f32 %v957, %v1045
      %v1047 = vpop.f32.mrf.mxu0
      %v1048 = vadd.f32 %v959, %v1047
      %1049 = vdwg.mxu0
      %1050 = vmatpush.bf16.msra.mxu0 %v831
      %1051 = vmatpush.bf16.msra.mxu0 %v830
      %1052 = vmatpush.bf16.msra.mxu0 %v829
      %1053 = vmatpush.bf16.msra.mxu0 %v828
      %1054 = vmatpush.bf16.msra.mxu0 %v827
      %1055 = vmatpush.bf16.msra.mxu0 %v826
      %1056 = vmatpush.bf16.msra.mxu0 %v825
      %1057 = vmatpush.bf16.msra.mxu0 %v824
      %1058 = vmatmul.bf16.gmra.mxu0 %v554
      %v1059 = vpop.f32.mrf.mxu0
      %v1060 = vadd.f32 %v971, %v1059
      %v1061 = vpop.f32.mrf.mxu0
      %v1062 = vadd.f32 %v973, %v1061
      %1063 = vmatmul.bf16.gmra.mxu0 %v558
      %v1064 = vpop.f32.mrf.mxu0
      %v1065 = vadd.f32 %v976, %v1064
      %v1066 = vpop.f32.mrf.mxu0
      %v1067 = vadd.f32 %v978, %v1066
      %1068 = vmatmul.bf16.gmra.mxu0 %v562
      %v1069 = vpop.f32.mrf.mxu0
      %v1070 = vadd.f32 %v981, %v1069
      %v1071 = vpop.f32.mrf.mxu0
      %v1072 = vadd.f32 %v983, %v1071
      %1073 = vmatmul.bf16.gmra.mxu0 %v566
      %v1074 = vpop.f32.mrf.mxu0
      %v1075 = vadd.f32 %v986, %v1074
      %v1076 = vpop.f32.mrf.mxu0
      %v1077 = vadd.f32 %v988, %v1076
      %1078 = vmatmul.bf16.gmra.mxu0 %v570
      %v1079 = vpop.f32.mrf.mxu0
      %v1080 = vadd.f32 %v991, %v1079
      %v1081 = vpop.f32.mrf.mxu0
      %v1082 = vadd.f32 %v993, %v1081
      %1083 = vmatmul.bf16.gmra.mxu0 %v574
      %v1084 = vpop.f32.mrf.mxu0
      %v1085 = vadd.f32 %v996, %v1084
      %v1086 = vpop.f32.mrf.mxu0
      %v1087 = vadd.f32 %v998, %v1086
      %1088 = vmatmul.bf16.gmra.mxu0 %v578
      %v1089 = vpop.f32.mrf.mxu0
      %v1090 = vadd.f32 %v1001, %v1089
      %v1091 = vpop.f32.mrf.mxu0
      %v1092 = vadd.f32 %v1003, %v1091
      %1093 = vmatmul.bf16.gmra.mxu0 %v582
      %v1094 = vpop.f32.mrf.mxu0
      %v1095 = vadd.f32 %v1006, %v1094
      %v1096 = vpop.f32.mrf.mxu0
      %v1097 = vadd.f32 %v1008, %v1096
      %1098 = vmatmul.bf16.gmra.mxu0 %v586
      %v1099 = vpop.f32.mrf.mxu0
      %v1100 = vadd.f32 %v1011, %v1099
      %v1101 = vpop.f32.mrf.mxu0
      %v1102 = vadd.f32 %v1013, %v1101
      %1103 = vmatmul.bf16.gmra.mxu0 %v590
      %v1104 = vpop.f32.mrf.mxu0
      %v1105 = vadd.f32 %v1016, %v1104
      %v1106 = vpop.f32.mrf.mxu0
      %v1107 = vadd.f32 %v1018, %v1106
      %1108 = vmatmul.bf16.gmra.mxu0 %v594
      %v1109 = vpop.f32.mrf.mxu0
      %v1110 = vadd.f32 %v1021, %v1109
      %v1111 = vpop.f32.mrf.mxu0
      %v1112 = vadd.f32 %v1023, %v1111
      %1113 = vmatmul.bf16.gmra.mxu0 %v598
      %v1114 = vpop.f32.mrf.mxu0
      %v1115 = vadd.f32 %v1026, %v1114
      %v1116 = vpop.f32.mrf.mxu0
      %v1117 = vadd.f32 %v1028, %v1116
      %1118 = vmatmul.bf16.gmra.mxu0 %v602
      %v1119 = vpop.f32.mrf.mxu0
      %v1120 = vadd.f32 %v1031, %v1119
      %v1121 = vpop.f32.mrf.mxu0
      %v1122 = vadd.f32 %v1033, %v1121
      %1123 = vmatmul.bf16.gmra.mxu0 %v606
      %v1124 = vpop.f32.mrf.mxu0
      %v1125 = vadd.f32 %v1036, %v1124
      %v1126 = vpop.f32.mrf.mxu0
      %v1127 = vadd.f32 %v1038, %v1126
      %1128 = vmatmul.bf16.gmra.mxu0 %v610
      %v1129 = vpop.f32.mrf.mxu0
      %v1130 = vadd.f32 %v1041, %v1129
      %v1131 = vpop.f32.mrf.mxu0
      %v1132 = vadd.f32 %v1043, %v1131
      %1133 = vmatmul.bf16.gmra.mxu0 %v614
      %v1134 = vpop.f32.mrf.mxu0
      %v1135 = vadd.f32 %v1046, %v1134
      %v1136 = vpop.f32.mrf.mxu0
      %v1137 = vadd.f32 %v1048, %v1136
      %1138 = vdwg.mxu0
      %1139 = vmatpush.bf16.msra.mxu0 %v839
      %1140 = vmatpush.bf16.msra.mxu0 %v838
      %1141 = vmatpush.bf16.msra.mxu0 %v837
      %1142 = vmatpush.bf16.msra.mxu0 %v836
      %1143 = vmatpush.bf16.msra.mxu0 %v835
      %1144 = vmatpush.bf16.msra.mxu0 %v834
      %1145 = vmatpush.bf16.msra.mxu0 %v833
      %1146 = vmatpush.bf16.msra.mxu0 %v832
      %1147 = vmatmul.bf16.gmra.mxu0 %v555
      %v1148 = vpop.f32.mrf.mxu0
      %v1149 = vadd.f32 %v1060, %v1148
      %v1150 = vpop.f32.mrf.mxu0
      %v1151 = vadd.f32 %v1062, %v1150
      %1152 = vmatmul.bf16.gmra.mxu0 %v559
      %v1153 = vpop.f32.mrf.mxu0
      %v1154 = vadd.f32 %v1065, %v1153
      %v1155 = vpop.f32.mrf.mxu0
      %v1156 = vadd.f32 %v1067, %v1155
      %1157 = vmatmul.bf16.gmra.mxu0 %v563
      %v1158 = vpop.f32.mrf.mxu0
      %v1159 = vadd.f32 %v1070, %v1158
      %v1160 = vpop.f32.mrf.mxu0
      %v1161 = vadd.f32 %v1072, %v1160
      %1162 = vmatmul.bf16.gmra.mxu0 %v567
      %v1163 = vpop.f32.mrf.mxu0
      %v1164 = vadd.f32 %v1075, %v1163
      %v1165 = vpop.f32.mrf.mxu0
      %v1166 = vadd.f32 %v1077, %v1165
      %1167 = vmatmul.bf16.gmra.mxu0 %v571
      %v1168 = vpop.f32.mrf.mxu0
      %v1169 = vadd.f32 %v1080, %v1168
      %v1170 = vpop.f32.mrf.mxu0
      %v1171 = vadd.f32 %v1082, %v1170
      %1172 = vmatmul.bf16.gmra.mxu0 %v575
      %v1173 = vpop.f32.mrf.mxu0
      %v1174 = vadd.f32 %v1085, %v1173
      %v1175 = vpop.f32.mrf.mxu0
      %v1176 = vadd.f32 %v1087, %v1175
      %1177 = vmatmul.bf16.gmra.mxu0 %v579
      %v1178 = vpop.f32.mrf.mxu0
      %v1179 = vadd.f32 %v1090, %v1178
      %v1180 = vpop.f32.mrf.mxu0
      %v1181 = vadd.f32 %v1092, %v1180
      %1182 = vmatmul.bf16.gmra.mxu0 %v583
      %v1183 = vpop.f32.mrf.mxu0
      %v1184 = vadd.f32 %v1095, %v1183
      %v1185 = vpop.f32.mrf.mxu0
      %v1186 = vadd.f32 %v1097, %v1185
      %1187 = vmatmul.bf16.gmra.mxu0 %v587
      %v1188 = vpop.f32.mrf.mxu0
      %v1189 = vadd.f32 %v1100, %v1188
      %v1190 = vpop.f32.mrf.mxu0
      %v1191 = vadd.f32 %v1102, %v1190
      %1192 = vmatmul.bf16.gmra.mxu0 %v591
      %v1193 = vpop.f32.mrf.mxu0
      %v1194 = vadd.f32 %v1105, %v1193
      %v1195 = vpop.f32.mrf.mxu0
      %v1196 = vadd.f32 %v1107, %v1195
      %1197 = vmatmul.bf16.gmra.mxu0 %v595
      %v1198 = vpop.f32.mrf.mxu0
      %v1199 = vadd.f32 %v1110, %v1198
      %v1200 = vpop.f32.mrf.mxu0
      %v1201 = vadd.f32 %v1112, %v1200
      %1202 = vmatmul.bf16.gmra.mxu0 %v599
      %v1203 = vpop.f32.mrf.mxu0
      %v1204 = vadd.f32 %v1115, %v1203
      %v1205 = vpop.f32.mrf.mxu0
      %v1206 = vadd.f32 %v1117, %v1205
      %1207 = vmatmul.bf16.gmra.mxu0 %v603
      %v1208 = vpop.f32.mrf.mxu0
      %v1209 = vadd.f32 %v1120, %v1208
      %v1210 = vpop.f32.mrf.mxu0
      %v1211 = vadd.f32 %v1122, %v1210
      %1212 = vmatmul.bf16.gmra.mxu0 %v607
      %v1213 = vpop.f32.mrf.mxu0
      %v1214 = vadd.f32 %v1125, %v1213
      %v1215 = vpop.f32.mrf.mxu0
      %v1216 = vadd.f32 %v1127, %v1215
      %1217 = vmatmul.bf16.gmra.mxu0 %v611
      %v1218 = vpop.f32.mrf.mxu0
      %v1219 = vadd.f32 %v1130, %v1218
      %v1220 = vpop.f32.mrf.mxu0
      %v1221 = vadd.f32 %v1132, %v1220
      %1222 = vmatmul.bf16.gmra.mxu0 %v615
      %v1223 = vpop.f32.mrf.mxu0
      %v1224 = vadd.f32 %v1135, %v1223
      %v1225 = vpop.f32.mrf.mxu0
      %v1226 = vadd.f32 %v1137, %v1225
      %1227 = vdwg.mxu0
      %1228 = vst [vmem:[%s223] sm:$0xff] %v1149
      %1229 = vst [vmem:[%s223 + $0x8] sm:$0xff] %v1151
      %1230 = vst [vmem:[%s223 + $0x10] sm:$0xff] %v1154
      %1231 = vst [vmem:[%s223 + $0x18] sm:$0xff] %v1156
      %1232 = vst [vmem:[%s223 + $0x20] sm:$0xff] %v1159
      %1233 = vst [vmem:[%s223 + $0x28] sm:$0xff] %v1161
      %1234 = vst [vmem:[%s223 + $0x30] sm:$0xff] %v1164
      %1235 = vst [vmem:[%s223 + $0x38] sm:$0xff] %v1166
      %1236 = vst [vmem:[%s223 + $0x40] sm:$0xff] %v1169
      %1237 = vst [vmem:[%s223 + $0x48] sm:$0xff] %v1171
      %1238 = vst [vmem:[%s223 + $0x50] sm:$0xff] %v1174
      %1239 = vst [vmem:[%s223 + $0x58] sm:$0xff] %v1176
      %1240 = vst [vmem:[%s223 + $0x60] sm:$0xff] %v1179
      %1241 = vst [vmem:[%s223 + $0x68] sm:$0xff] %v1181
      %1242 = vst [vmem:[%s223 + $0x70] sm:$0xff] %v1184
      %1243 = vst [vmem:[%s223 + $0x78] sm:$0xff] %v1186
      %1244 = vst [vmem:[%s223 + $0x80] sm:$0xff] %v1189
      %1245 = vst [vmem:[%s223 + $0x88] sm:$0xff] %v1191
      %1246 = vst [vmem:[%s223 + $0x90] sm:$0xff] %v1194
      %1247 = vst [vmem:[%s223 + $0x98] sm:$0xff] %v1196
      %1248 = vst [vmem:[%s223 + $0xa0] sm:$0xff] %v1199
      %1249 = vst [vmem:[%s223 + $0xa8] sm:$0xff] %v1201
      %1250 = vst [vmem:[%s223 + $0xb0] sm:$0xff] %v1204
      %1251 = vst [vmem:[%s223 + $0xb8] sm:$0xff] %v1206
      %1252 = vst [vmem:[%s223 + $0xc0] sm:$0xff] %v1209
      %1253 = vst [vmem:[%s223 + $0xc8] sm:$0xff] %v1211
      %1254 = vst [vmem:[%s223 + $0xd0] sm:$0xff] %v1214
      %1255 = vst [vmem:[%s223 + $0xd8] sm:$0xff] %v1216
      %1256 = vst [vmem:[%s223 + $0xe0] sm:$0xff] %v1219
      %1257 = vst [vmem:[%s223 + $0xe8] sm:$0xff] %v1221
      %1258 = vst [vmem:[%s223 + $0xf0] sm:$0xff] %v1224
      %1259 = vst [vmem:[%s223 + $0xf8] sm:$0xff] %v1226
      %v1260 = vadd.f32 %v1149, %v1151
      %v1261 = vadd.f32 %v1260, %v1154
      %v1262 = vadd.f32 %v1261, %v1156
      %v1263 = vadd.f32 %v1262, %v1159
      %v1264 = vadd.f32 %v1263, %v1161
      %v1265 = vadd.f32 %v1264, %v1164
      %v1266 = vadd.f32 %v1265, %v1166
      %v1267 = vadd.f32 %v1266, %v1169
      %v1268 = vadd.f32 %v1267, %v1171
      %v1269 = vadd.f32 %v1268, %v1174
      %v1270 = vadd.f32 %v1269, %v1176
      %v1271 = vadd.f32 %v1270, %v1179
      %v1272 = vadd.f32 %v1271, %v1181
      %v1273 = vadd.f32 %v1272, %v1184
      %v1274 = vadd.f32 %v1273, %v1186
      %v1275 = vadd.f32 %v1274, %v1189
      %v1276 = vadd.f32 %v1275, %v1191
      %v1277 = vadd.f32 %v1276, %v1194
      %v1278 = vadd.f32 %v1277, %v1196
      %v1279 = vadd.f32 %v1278, %v1199
      %v1280 = vadd.f32 %v1279, %v1201
      %v1281 = vadd.f32 %v1280, %v1204
      %v1282 = vadd.f32 %v1281, %v1206
      %v1283 = vadd.f32 %v1282, %v1209
      %v1284 = vadd.f32 %v1283, %v1211
      %v1285 = vadd.f32 %v1284, %v1214
      %v1286 = vadd.f32 %v1285, %v1216
      %v1287 = vadd.f32 %v1286, %v1219
      %v1288 = vadd.f32 %v1287, %v1221
      %v1289 = vadd.f32 %v1288, %v1224
      %v1290 = vadd.f32 %v1289, %v1226
      %v1291 = vrot.slane %v1290, 4
      %v1292 = vadd.f32 %v1290, %v1291
      %v1293 = vrot.slane %v1292, 2
      %v1294 = vadd.f32 %v1292, %v1293
      %v1295 = vrot.slane %v1294, 1
      %v1296 = vadd.f32 %v1294, %v1295
      %v1297 = vmul.f32 %v1149, %v1149
      %v1298 = vmul.f32 %v1151, %v1151
      %v1299 = vmul.f32 %v1154, %v1154
      %v1300 = vmul.f32 %v1156, %v1156
      %v1301 = vmul.f32 %v1159, %v1159
      %v1302 = vmul.f32 %v1161, %v1161
      %v1303 = vmul.f32 %v1164, %v1164
      %v1304 = vmul.f32 %v1166, %v1166
      %v1305 = vmul.f32 %v1169, %v1169
      %v1306 = vmul.f32 %v1171, %v1171
      %v1307 = vmul.f32 %v1174, %v1174
      %v1308 = vmul.f32 %v1176, %v1176
      %v1309 = vmul.f32 %v1179, %v1179
      %v1310 = vmul.f32 %v1181, %v1181
      %v1311 = vmul.f32 %v1184, %v1184
      %v1312 = vmul.f32 %v1186, %v1186
      %v1313 = vmul.f32 %v1189, %v1189
      %v1314 = vmul.f32 %v1191, %v1191
      %v1315 = vmul.f32 %v1194, %v1194
      %v1316 = vmul.f32 %v1196, %v1196
      %v1317 = vmul.f32 %v1199, %v1199
      %v1318 = vmul.f32 %v1201, %v1201
      %v1319 = vmul.f32 %v1204, %v1204
      %v1320 = vmul.f32 %v1206, %v1206
      %v1321 = vmul.f32 %v1209, %v1209
      %v1322 = vmul.f32 %v1211, %v1211
      %v1323 = vmul.f32 %v1214, %v1214
      %v1324 = vmul.f32 %v1216, %v1216
      %v1325 = vmul.f32 %v1219, %v1219
      %v1326 = vmul.f32 %v1221, %v1221
      %v1327 = vmul.f32 %v1224, %v1224
      %v1328 = vmul.f32 %v1226, %v1226
      %v1329 = vadd.f32 %v1297, %v1298
      %v1330 = vadd.f32 %v1329, %v1299
      %v1331 = vadd.f32 %v1330, %v1300
      %v1332 = vadd.f32 %v1331, %v1301
      %v1333 = vadd.f32 %v1332, %v1302
      %v1334 = vadd.f32 %v1333, %v1303
      %v1335 = vadd.f32 %v1334, %v1304
      %v1336 = vadd.f32 %v1335, %v1305
      %v1337 = vadd.f32 %v1336, %v1306
      %v1338 = vadd.f32 %v1337, %v1307
      %v1339 = vadd.f32 %v1338, %v1308
      %v1340 = vadd.f32 %v1339, %v1309
      %v1341 = vadd.f32 %v1340, %v1310
      %v1342 = vadd.f32 %v1341, %v1311
      %v1343 = vadd.f32 %v1342, %v1312
      %v1344 = vadd.f32 %v1343, %v1313
      %v1345 = vadd.f32 %v1344, %v1314
      %v1346 = vadd.f32 %v1345, %v1315
      %v1347 = vadd.f32 %v1346, %v1316
      %v1348 = vadd.f32 %v1347, %v1317
      %v1349 = vadd.f32 %v1348, %v1318
      %v1350 = vadd.f32 %v1349, %v1319
      %v1351 = vadd.f32 %v1350, %v1320
      %v1352 = vadd.f32 %v1351, %v1321
      %v1353 = vadd.f32 %v1352, %v1322
      %v1354 = vadd.f32 %v1353, %v1323
      %v1355 = vadd.f32 %v1354, %v1324
      %v1356 = vadd.f32 %v1355, %v1325
      %v1357 = vadd.f32 %v1356, %v1326
      %v1358 = vadd.f32 %v1357, %v1327
      %v1359 = vadd.f32 %v1358, %v1328
      %v1360 = vrot.slane %v1359, 4
      %v1361 = vadd.f32 %v1359, %v1360
      %v1362 = vrot.slane %v1361, 2
      %v1363 = vadd.f32 %v1361, %v1362
      %v1364 = vrot.slane %v1363, 1
      %v1365 = vadd.f32 %v1363, %v1364
      %v1366 = vlaneseq
      %v1367 = vshrl.u32 %v1366, 7
      %vm1368 = vcmp.eq.s32.totalorder %v1367, 0
      %vm1369 = vcmp.eq.s32.totalorder %v1367, 1
      %v1370 = vsel %vm1369, %v1365, 0.0
      %v1371 = vsel %vm1368, %v1296, %v1370
      %1372 = vst [vmem:[%s231] sm:$0xff] %v1371
      %s1373 = smul.u32 32, %s20
      %p1374 = scmp.lt.s32.totalorder %s19, 1
      %s1375 = scalar_select %p1374, %s19, 1
      %p1376 = scmp.lt.s32.totalorder %s1373, 31
      %s1377 = scalar_select %p1376, %s1373, 31
      %s1378 = smul.addr %s1375, 32
      %s1379 = sadd.s32 %s1377, %s1378
      %s1380 = smul.addr %s1379, 8
      %s1381 = scalar_lea.vmem %s2, %s1380
      %p1382 = scmp.lt.s32.totalorder %s19, 1
      %s1383 = scalar_select %p1382, %s19, 1
      %p1384 = scmp.lt.s32.totalorder %s20, 0
      %s1385 = scalar_select %p1384, %s20, 0
      %s1386 = sadd.s32 %s1385, %s1383
      %s1387 = smul.addr %s1386, 8
      %s1388 = scalar_lea.vmem %s3, %s1387
      // Predicated region
      $region29: #{generator_forward.90} parent=27 // pred_check
        %p1389 = pneg %p96
      $region30: #{generator_forward.90} parent=27 // pred_check_branch
        %1391 = sbr.rel (%p1389) target = $region32
      $region31: #{generator_forward.90} parent=27 // pred_region
        %s1392 = smul.u32 32, %s20
      $region32: #{generator_forward.90} parent=27 // pred_fallthru
        _
      // Predicated region
      $region33: #{generator_forward.90} parent=27 // pred_check
        %p1393 = pneg %p124
      $region34: #{generator_forward.90} parent=27 // pred_check_branch
        %1395 = sbr.rel (%p1393) target = $region36
      $region35: #{generator_forward.90} parent=27 // pred_region
        _
      $region36: #{generator_forward.90} parent=27 // pred_fallthru
        _
    $region28: #{generator_forward.90} parent=5 // pred_fallthru
      _
    %p1396 = scmp.le.s32.totalorder 2, %s10
    // Predicated region
    $region37: #{generator_forward.90} parent=5 // pred_check
      %p1397 = pneg %p1396
    $region38: #{generator_forward.90} parent=5 // pred_check_branch
      %1399 = sbr.rel (%p1397) target = $region40
    $region39: #{generator_forward.90} parent=5 // pred_region
      %s1400 = ssub.s32 %s10, 2
      // Predicated region
      $region41: #{generator_forward.90} parent=39 // pred_check
        %p1401 = pneg %p102
      $region42: #{generator_forward.90} parent=39 // pred_check_branch
        %1403 = sbr.rel (%p1401) target = $region44
      $region43: #{generator_forward.90} parent=39 // pred_region
        %s1404 = smul.u32 32, %s22
        %p1405 = scmp.lt.s32.totalorder %s21, 1
        %s1406 = scalar_select %p1405, %s21, 1
        %p1407 = scmp.lt.s32.totalorder %s1404, 31
        %s1408 = scalar_select %p1407, %s1404, 31
        %s1409 = smul.addr %s1406, 32
        %s1410 = sadd.s32 %s1408, %s1409
        %s1411 = smul.addr %s1410, 8
        %s1412 = scalar_lea.vmem %s2, %s1411
      $region44: #{generator_forward.90} parent=39 // pred_fallthru
        _
      // Predicated region
      $region45: #{generator_forward.90} parent=39 // pred_check
        %p1413 = pneg %p130
      $region46: #{generator_forward.90} parent=39 // pred_check_branch
        %1415 = sbr.rel (%p1413) target = $region48
      $region47: #{generator_forward.90} parent=39 // pred_region
        %p1416 = scmp.lt.s32.totalorder %s21, 1
        %s1417 = scalar_select %p1416, %s21, 1
        %p1418 = scmp.lt.s32.totalorder %s22, 0
        %s1419 = scalar_select %p1418, %s22, 0
        %s1420 = sadd.s32 %s1419, %s1417
        %s1421 = smul.addr %s1420, 8
        %s1422 = scalar_lea.vmem %s3, %s1421
      $region48: #{generator_forward.90} parent=39 // pred_fallthru
        _
    $region40: #{generator_forward.90} parent=5 // pred_fallthru
      _
  $region6: #{generator_forward.90} parent=0 // loop_footer
    %s14 = sadd.s32 1, %s10
  $region7: #{generator_forward.90} parent=0 // loop_footer_branch
    %9 = sbr.rel target = $region3
  $region8: #{generator_forward.90} parent=0 // loop_exit
    _

// kernel: generator_forward.91
$region0: #{generator_forward.91}
  #allocation0 [shape = 'u32[]', space=smem, size = 0x4, offset = 0x4, fixed_abs, tag = 'smem constant byte address 0x4 - core index']
  #allocation1 [shape = 'u32[72,128]{1,0:T(1,128)}', space=vmem, size = 0x9000, scoped, tag = 'internal scratch']
  %s0 = inlined_call_operand.vmem [shape: f32[2,256,128], index: 0, kind: input, shape index: {}]
  %s1 = inlined_call_operand.vmem [shape: f32[2,1,128], index: 1, kind: input, shape index: {}]
  %s2 = inlined_call_operand.vmem [shape: f32[2,1,128], index: 2, kind: input, shape index: {}]
  %s3 = inlined_call_operand.vmem [shape: f32[2,256,128], index: 3, kind: output, shape index: {}]
  %s4 = sld [smem:[#allocation0]]
  $region45: #{generator_forward.91} parent=0
    _
  %s6 = ssub.s32 1, %s4
  %s7 = scalar_select 0, %s6, %s4
  loop: start=0, step=1, limit=4
  $region2: #{generator_forward.91} parent=0 // loop_pre_header
    _
  $region3: #{generator_forward.91} parent=0 // loop_header
    %s9 = sphi 0, %s13
    %p10 = scmp.ge.s32.totalorder %s9, 4
    %s16 = sphi 0, %s28
    %s17 = sphi 0, %s24
    %s18 = sphi 0, %s16
    %s19 = sphi 0, %s17
    %s20 = sphi 0, %s18
    %s21 = sphi 0, %s19
    %s33 = sphi 0, %s35
    %s36 = sphi 0, %s33
    %s37 = sphi 0, %s36
    %s53 = sphi 0, %s37
    %s59 = sphi 0, %s61
    %s62 = sphi 0, %s59
    %s63 = sphi 0, %s62
    %s79 = sphi 0, %s63
    %s85 = sphi 0, %s87
    %s88 = sphi 0, %s85
    %s89 = sphi 0, %s88
    %s105 = sphi 0, %s89
    %s113 = sphi 0, %s115
    %s116 = sphi 0, %s113
    %s117 = sphi 0, %s116
    %s133 = sphi 0, %s117
  $region4: #{generator_forward.91} parent=0 // loop_header_branch
    %12 = sbr.rel (%p10) target = $region8
  $region5: #{generator_forward.91} parent=0 // loop_body
    %s14 = ssub.s32 %s9, 1
    %s15 = ssub.s32 %s9, 2
    %s22 = sadd.s32 1, %s17
    %p23 = scmp.ge.s32.totalorder %s22, 1
    %s24 = scalar_select %p23, 0, %s22
    %s25 = sadd.s32 1, %s16
    %s26 = scalar_select %p23, %s25, %s16
    %p27 = scmp.ge.s32.totalorder %s26, 2
    %s28 = scalar_select %p27, 0, %s26
    %s29 = ssub.s32 %s16, %s28
    %s30 = ssub.s32 %s17, %s24
    %s31 = sor.u32 %s29, %s30
    %p32 = scmp.eq.s32.totalorder %s31, 0
    %s34 = sadd.s32 %s33, 1
    %s35 = scalar_select %p32, %s33, %s34
    %p38 = pneg %p32
    %p39 = scmp.eq.s32.totalorder %s9, 1
    %p40 = por %p38, %p39
    %p41 = scmp.ne.s32.totalorder %s33, %s36
    %p42 = scmp.eq.s32.totalorder %s9, 0
    %p43 = por %p41, %p42
    %p44 = scmp.ne.s32.totalorder %s33, %s36
    %p45 = scmp.eq.s32.totalorder %s14, 1
    %p46 = por %p44, %p45
    %p47 = scmp.ne.s32.totalorder %s36, %s37
    %p48 = scmp.eq.s32.totalorder %s14, 0
    %p49 = por %p47, %p48
    %p50 = scmp.ne.s32.totalorder %s36, %s37
    %p51 = scmp.eq.s32.totalorder %s15, 1
    %p52 = por %p50, %p51
    %p54 = scmp.ne.s32.totalorder %s37, %s53
    %p55 = scmp.eq.s32.totalorder %s15, 0
    %p56 = por %p54, %p55
    %s57 = ssub.s32 %s16, %s28
    %p58 = scmp.eq.s32.totalorder %s57, 0
    %s60 = sadd.s32 %s59, 1
    %s61 = scalar_select %p58, %s59, %s60
    %p64 = pneg %p58
    %p65 = scmp.eq.s32.totalorder %s9, 1
    %p66 = por %p64, %p65
    %p67 = scmp.ne.s32.totalorder %s59, %s62
    %p68 = scmp.eq.s32.totalorder %s9, 0
    %p69 = por %p67, %p68
    %p70 = scmp.ne.s32.totalorder %s59, %s62
    %p71 = scmp.eq.s32.totalorder %s14, 1
    %p72 = por %p70, %p71
    %p73 = scmp.ne.s32.totalorder %s62, %s63
    %p74 = scmp.eq.s32.totalorder %s14, 0
    %p75 = por %p73, %p74
    %p76 = scmp.ne.s32.totalorder %s62, %s63
    %p77 = scmp.eq.s32.totalorder %s15, 1
    %p78 = por %p76, %p77
    %p80 = scmp.ne.s32.totalorder %s63, %s79
    %p81 = scmp.eq.s32.totalorder %s15, 0
    %p82 = por %p80, %p81
    %s83 = ssub.s32 %s16, %s28
    %p84 = scmp.eq.s32.totalorder %s83, 0
    %s86 = sadd.s32 %s85, 1
    %s87 = scalar_select %p84, %s85, %s86
    %p90 = pneg %p84
    %p91 = scmp.eq.s32.totalorder %s9, 1
    %p92 = por %p90, %p91
    %p93 = scmp.ne.s32.totalorder %s85, %s88
    %p94 = scmp.eq.s32.totalorder %s9, 0
    %p95 = por %p93, %p94
    %p96 = scmp.ne.s32.totalorder %s85, %s88
    %p97 = scmp.eq.s32.totalorder %s14, 1
    %p98 = por %p96, %p97
    %p99 = scmp.ne.s32.totalorder %s88, %s89
    %p100 = scmp.eq.s32.totalorder %s14, 0
    %p101 = por %p99, %p100
    %p102 = scmp.ne.s32.totalorder %s88, %s89
    %p103 = scmp.eq.s32.totalorder %s15, 1
    %p104 = por %p102, %p103
    %p106 = scmp.ne.s32.totalorder %s89, %s105
    %p107 = scmp.eq.s32.totalorder %s15, 0
    %p108 = por %p106, %p107
    %s109 = ssub.s32 %s16, %s28
    %s110 = ssub.s32 %s17, %s24
    %s111 = sor.u32 %s109, %s110
    %p112 = scmp.eq.s32.totalorder %s111, 0
    %s114 = sadd.s32 %s113, 1
    %s115 = scalar_select %p112, %s113, %s114
    %p118 = pneg %p112
    %p119 = scmp.eq.s32.totalorder %s9, 1
    %p120 = por %p118, %p119
    %p121 = scmp.ne.s32.totalorder %s113, %s116
    %p122 = scmp.eq.s32.totalorder %s9, 0
    %p123 = por %p121, %p122
    %p124 = scmp.ne.s32.totalorder %s113, %s116
    %p125 = scmp.eq.s32.totalorder %s14, 1
    %p126 = por %p124, %p125
    %p127 = scmp.ne.s32.totalorder %s116, %s117
    %p128 = scmp.eq.s32.totalorder %s14, 0
    %p129 = por %p127, %p128
    %p130 = scmp.ne.s32.totalorder %s116, %s117
    %p131 = scmp.eq.s32.totalorder %s15, 1
    %p132 = por %p130, %p131
    %p134 = scmp.ne.s32.totalorder %s117, %s133
    %p135 = scmp.eq.s32.totalorder %s15, 0
    %p136 = por %p134, %p135
    %p137 = scmp.le.s32.totalorder 1, %s9
    %p138 = scmp.lt.s32.totalorder %s9, 3
    %p139 = pnand %p137, %p138
    %p140 = pneg %p139
    // Predicated region
    $region9: #{generator_forward.91} parent=5 // pred_check
      _
    $region10: #{generator_forward.91} parent=5 // pred_check_branch
      %142 = sbr.rel (%p139) target = $region12
    $region11: #{generator_forward.91} parent=5 // pred_region
      %s143 = ssub.s32 %s9, 1
    $region12: #{generator_forward.91} parent=5 // pred_fallthru
      _
    %p144 = scmp.lt.s32.totalorder %s9, 2
    // Predicated region
    $region13: #{generator_forward.91} parent=5 // pred_check
      %p145 = pneg %p144
    $region14: #{generator_forward.91} parent=5 // pred_check_branch
      %147 = sbr.rel (%p145) target = $region16
    $region15: #{generator_forward.91} parent=5 // pred_region
      // Predicated region
      $region17: #{generator_forward.91} parent=15 // pred_check
        %p148 = pneg %p43
      $region18: #{generator_forward.91} parent=15 // pred_check_branch
        %150 = sbr.rel (%p148) target = $region20
      $region19: #{generator_forward.91} parent=15 // pred_region
        %s151 = smul.u32 32, %s17
        %p152 = scmp.lt.s32.totalorder %s16, 1
        %s153 = scalar_select %p152, %s16, 1
        %p154 = scmp.lt.s32.totalorder %s151, 31
        %s155 = scalar_select %p154, %s151, 31
        %s156 = smul.addr %s153, 32
        %s157 = sadd.s32 %s155, %s156
        %s158 = smul.addr %s157, 8
        %s159 = scalar_lea.vmem %s0, %s158
        %s160 = smul.u32 32, %s17
      $region20: #{generator_forward.91} parent=15 // pred_fallthru
        _
      // Predicated region
      $region21: #{generator_forward.91} parent=15 // pred_check
        %p161 = pneg %p69
      $region22: #{generator_forward.91} parent=15 // pred_check_branch
        %163 = sbr.rel (%p161) target = $region24
      $region23: #{generator_forward.91} parent=15 // pred_region
        %p164 = scmp.lt.s32.totalorder %s16, 1
        %s165 = scalar_select %p164, %s16, 1
        %s166 = scalar_lea.vmem %s1, %s165
      $region24: #{generator_forward.91} parent=15 // pred_fallthru
        _
      // Predicated region
      $region25: #{generator_forward.91} parent=15 // pred_check
        %p167 = pneg %p95
      $region26: #{generator_forward.91} parent=15 // pred_check_branch
        %169 = sbr.rel (%p167) target = $region28
      $region27: #{generator_forward.91} parent=15 // pred_region
        %p170 = scmp.lt.s32.totalorder %s16, 1
        %s171 = scalar_select %p170, %s16, 1
        %s172 = scalar_lea.vmem %s2, %s171
      $region28: #{generator_forward.91} parent=15 // pred_fallthru
        _
    $region16: #{generator_forward.91} parent=5 // pred_fallthru
      _
    %p173 = scmp.le.s32.totalorder 1, %s9
    %p174 = scmp.lt.s32.totalorder %s9, 3
    %p175 = pnand %p173, %p174
    %p176 = pneg %p175
    // Predicated region
    $region29: #{generator_forward.91} parent=5 // pred_check
      _
    $region30: #{generator_forward.91} parent=5 // pred_check_branch
      %178 = sbr.rel (%p175) target = $region32
    $region31: #{generator_forward.91} parent=5 // pred_region
      %s179 = ssub.s32 %s9, 1
      %s180 = smul.u32 32, %s19
      %p181 = scmp.lt.s32.totalorder %s18, 1
      %s182 = scalar_select %p181, %s18, 1
      %p183 = scmp.lt.s32.totalorder %s180, 31
      %s184 = scalar_select %p183, %s180, 31
      %s185 = smul.addr %s182, 32
      %s186 = sadd.s32 %s184, %s185
      %s187 = smul.addr %s186, 8
      %s188 = scalar_lea.vmem %s0, %s187
      %p189 = pneg %p49
      %p190 = pneg %p46
      %p191 = scmp.lt.s32.totalorder %s18, 1
      %s192 = scalar_select %p191, %s18, 1
      %s193 = scalar_lea.vmem %s1, %s192
      %p194 = pneg %p75
      %p195 = pneg %p72
      %p196 = scmp.lt.s32.totalorder %s18, 1
      %s197 = scalar_select %p196, %s18, 1
      %s198 = scalar_lea.vmem %s2, %s197
      %p199 = pneg %p101
      %p200 = pneg %p98
      %p201 = pneg %p129
      %p202 = pneg %p126
      %s203 = smul.u32 32, %s19
      %p204 = scmp.lt.s32.totalorder %s18, 1
      %s205 = scalar_select %p204, %s18, 1
      %p206 = scmp.lt.s32.totalorder %s203, 31
      %s207 = scalar_select %p206, %s203, 31
      %s208 = smul.addr %s205, 32
      %s209 = sadd.s32 %s207, %s208
      %s210 = smul.addr %s209, 8
      %s211 = scalar_lea.vmem %s3, %s210
      %s212 = smul.u32 32, %s19
      %p213 = scmp.lt.s32.totalorder %s18, 1
      %s214 = scalar_select %p213, %s18, 1
      %p215 = scmp.lt.s32.totalorder %s212, 31
      %s216 = scalar_select %p215, %s212, 31
      %s217 = smul.addr %s214, 32
      %s218 = sadd.s32 %s216, %s217
      %s219 = smul.addr %s218, 8
      %s220 = scalar_lea.vmem %s0, %s219
      %s221 = smul.u32 32, %s19
      %p222 = scmp.lt.s32.totalorder %s18, 1
      %s223 = scalar_select %p222, %s18, 1
      %s224 = scalar_lea.vmem %s1, %s223
      %p225 = scmp.lt.s32.totalorder %s18, 1
      %s226 = scalar_select %p225, %s18, 1
      %s227 = scalar_lea.vmem %s2, %s226
      %s228 = smul.u32 32, %s19
      %p229 = scmp.lt.s32.totalorder %s18, 1
      %s230 = scalar_select %p229, %s18, 1
      %p231 = scmp.lt.s32.totalorder %s228, 31
      %s232 = scalar_select %p231, %s228, 31
      %s233 = smul.addr %s230, 32
      %s234 = sadd.s32 %s232, %s233
      %s235 = smul.addr %s234, 8
      %s236 = scalar_lea.vmem %s3, %s235
      %s237 = smul.u32 32, %s19
      %v238 = vld [vmem:[%s220] sm:$0xff]
      %v239 = vld [vmem:[%s220 + $0x8] sm:$0xff]
      %v240 = vld [vmem:[%s220 + $0x10] sm:$0xff]
      %v241 = vld [vmem:[%s220 + $0x18] sm:$0xff]
      %v242 = vld [vmem:[%s220 + $0x20] sm:$0xff]
      %v243 = vld [vmem:[%s220 + $0x28] sm:$0xff]
      %v244 = vld [vmem:[%s220 + $0x30] sm:$0xff]
      %v245 = vld [vmem:[%s220 + $0x38] sm:$0xff]
      %v246 = vld [vmem:[%s220 + $0x40] sm:$0xff]
      %v247 = vld [vmem:[%s220 + $0x48] sm:$0xff]
      %v248 = vld [vmem:[%s220 + $0x50] sm:$0xff]
      %v249 = vld [vmem:[%s220 + $0x58] sm:$0xff]
      %v250 = vld [vmem:[%s220 + $0x60] sm:$0xff]
      %v251 = vld [vmem:[%s220 + $0x68] sm:$0xff]
      %v252 = vld [vmem:[%s220 + $0x70] sm:$0xff]
      %v253 = vld [vmem:[%s220 + $0x78] sm:$0xff]
      %v254 = vld [vmem:[%s220 + $0x80] sm:$0xff]
      %v255 = vld [vmem:[%s220 + $0x88] sm:$0xff]
      %v256 = vld [vmem:[%s220 + $0x90] sm:$0xff]
      %v257 = vld [vmem:[%s220 + $0x98] sm:$0xff]
      %v258 = vld [vmem:[%s220 + $0xa0] sm:$0xff]
      %v259 = vld [vmem:[%s220 + $0xa8] sm:$0xff]
      %v260 = vld [vmem:[%s220 + $0xb0] sm:$0xff]
      %v261 = vld [vmem:[%s220 + $0xb8] sm:$0xff]
      %v262 = vld [vmem:[%s220 + $0xc0] sm:$0xff]
      %v263 = vld [vmem:[%s220 + $0xc8] sm:$0xff]
      %v264 = vld [vmem:[%s220 + $0xd0] sm:$0xff]
      %v265 = vld [vmem:[%s220 + $0xd8] sm:$0xff]
      %v266 = vld [vmem:[%s220 + $0xe0] sm:$0xff]
      %v267 = vld [vmem:[%s220 + $0xe8] sm:$0xff]
      %v268 = vld [vmem:[%s220 + $0xf0] sm:$0xff]
      %v269 = vld [vmem:[%s220 + $0xf8] sm:$0xff]
      %v270 = vld [vmem:[%s224] sm:$0x1]
      %v272 = vperm.slane %v270, 0
      %v274 = vmul.f32 %v238, %v272
      %v275 = vmul.f32 %v239, %v272
      %v276 = vmul.f32 %v240, %v272
      %v277 = vmul.f32 %v241, %v272
      %v278 = vmul.f32 %v242, %v272
      %v279 = vmul.f32 %v243, %v272
      %v280 = vmul.f32 %v244, %v272
      %v281 = vmul.f32 %v245, %v272
      %v282 = vmul.f32 %v246, %v272
      %v283 = vmul.f32 %v247, %v272
      %v284 = vmul.f32 %v248, %v272
      %v285 = vmul.f32 %v249, %v272
      %v286 = vmul.f32 %v250, %v272
      %v287 = vmul.f32 %v251, %v272
      %v288 = vmul.f32 %v252, %v272
      %v289 = vmul.f32 %v253, %v272
      %v290 = vmul.f32 %v254, %v272
      %v291 = vmul.f32 %v255, %v272
      %v292 = vmul.f32 %v256, %v272
      %v293 = vmul.f32 %v257, %v272
      %v294 = vmul.f32 %v258, %v272
      %v295 = vmul.f32 %v259, %v272
      %v296 = vmul.f32 %v260, %v272
      %v297 = vmul.f32 %v261, %v272
      %v298 = vmul.f32 %v262, %v272
      %v299 = vmul.f32 %v263, %v272
      %v300 = vmul.f32 %v264, %v272
      %v301 = vmul.f32 %v265, %v272
      %v302 = vmul.f32 %v266, %v272
      %v303 = vmul.f32 %v267, %v272
      %v304 = vmul.f32 %v268, %v272
      %v305 = vmul.f32 %v269, %v272
      %v306 = vld [vmem:[%s227] sm:$0x1]
      %v308 = vperm.slane %v306, 0
      %v310 = vadd.f32 %v274, %v308
      %v311 = vadd.f32 %v275, %v308
      %v312 = vadd.f32 %v276, %v308
      %v313 = vadd.f32 %v277, %v308
      %v314 = vadd.f32 %v278, %v308
      %v315 = vadd.f32 %v279, %v308
      %v316 = vadd.f32 %v280, %v308
      %v317 = vadd.f32 %v281, %v308
      %v318 = vadd.f32 %v282, %v308
      %v319 = vadd.f32 %v283, %v308
      %v320 = vadd.f32 %v284, %v308
      %v321 = vadd.f32 %v285, %v308
      %v322 = vadd.f32 %v286, %v308
      %v323 = vadd.f32 %v287, %v308
      %v324 = vadd.f32 %v288, %v308
      %v325 = vadd.f32 %v289, %v308
      %v326 = vadd.f32 %v290, %v308
      %v327 = vadd.f32 %v291, %v308
      %v328 = vadd.f32 %v292, %v308
      %v329 = vadd.f32 %v293, %v308
      %v330 = vadd.f32 %v294, %v308
      %v331 = vadd.f32 %v295, %v308
      %v332 = vadd.f32 %v296, %v308
      %v333 = vadd.f32 %v297, %v308
      %v334 = vadd.f32 %v298, %v308
      %v335 = vadd.f32 %v299, %v308
      %v336 = vadd.f32 %v300, %v308
      %v337 = vadd.f32 %v301, %v308
      %v338 = vadd.f32 %v302, %v308
      %v339 = vadd.f32 %v303, %v308
      %v340 = vadd.f32 %v304, %v308
      %v341 = vadd.f32 %v305, %v308
      %vm342 = vcmp.gt.f32.partialorder %v310, 0.0
      %vm343 = vcmp.gt.f32.partialorder %v311, 0.0
      %vm344 = vcmp.gt.f32.partialorder %v312, 0.0
      %vm345 = vcmp.gt.f32.partialorder %v313, 0.0
      %vm346 = vcmp.gt.f32.partialorder %v314, 0.0
      %vm347 = vcmp.gt.f32.partialorder %v315, 0.0
      %vm348 = vcmp.gt.f32.partialorder %v316, 0.0
      %vm349 = vcmp.gt.f32.partialorder %v317, 0.0
      %vm350 = vcmp.gt.f32.partialorder %v318, 0.0
      %vm351 = vcmp.gt.f32.partialorder %v319, 0.0
      %vm352 = vcmp.gt.f32.partialorder %v320, 0.0
      %vm353 = vcmp.gt.f32.partialorder %v321, 0.0
      %vm354 = vcmp.gt.f32.partialorder %v322, 0.0
      %vm355 = vcmp.gt.f32.partialorder %v323, 0.0
      %vm356 = vcmp.gt.f32.partialorder %v324, 0.0
      %vm357 = vcmp.gt.f32.partialorder %v325, 0.0
      %vm358 = vcmp.gt.f32.partialorder %v326, 0.0
      %vm359 = vcmp.gt.f32.partialorder %v327, 0.0
      %vm360 = vcmp.gt.f32.partialorder %v328, 0.0
      %vm361 = vcmp.gt.f32.partialorder %v329, 0.0
      %vm362 = vcmp.gt.f32.partialorder %v330, 0.0
      %vm363 = vcmp.gt.f32.partialorder %v331, 0.0
      %vm364 = vcmp.gt.f32.partialorder %v332, 0.0
      %vm365 = vcmp.gt.f32.partialorder %v333, 0.0
      %vm366 = vcmp.gt.f32.partialorder %v334, 0.0
      %vm367 = vcmp.gt.f32.partialorder %v335, 0.0
      %vm368 = vcmp.gt.f32.partialorder %v336, 0.0
      %vm369 = vcmp.gt.f32.partialorder %v337, 0.0
      %vm370 = vcmp.gt.f32.partialorder %v338, 0.0
      %vm371 = vcmp.gt.f32.partialorder %v339, 0.0
      %vm372 = vcmp.gt.f32.partialorder %v340, 0.0
      %vm373 = vcmp.gt.f32.partialorder %v341, 0.0
      %v374 = vmul.f32 %v310, 0.01
      %v375 = vmul.f32 %v311, 0.01
      %v376 = vmul.f32 %v312, 0.01
      %v377 = vmul.f32 %v313, 0.01
      %v378 = vmul.f32 %v314, 0.01
      %v379 = vmul.f32 %v315, 0.01
      %v380 = vmul.f32 %v316, 0.01
      %v381 = vmul.f32 %v317, 0.01
      %v382 = vmul.f32 %v318, 0.01
      %v383 = vmul.f32 %v319, 0.01
      %v384 = vmul.f32 %v320, 0.01
      %v385 = vmul.f32 %v321, 0.01
      %v386 = vmul.f32 %v322, 0.01
      %v387 = vmul.f32 %v323, 0.01
      %v388 = vmul.f32 %v324, 0.01
      %v389 = vmul.f32 %v325, 0.01
      %v390 = vmul.f32 %v326, 0.01
      %v391 = vmul.f32 %v327, 0.01
      %v392 = vmul.f32 %v328, 0.01
      %v393 = vmul.f32 %v329, 0.01
      %v394 = vmul.f32 %v330, 0.01
      %v395 = vmul.f32 %v331, 0.01
      %v396 = vmul.f32 %v332, 0.01
      %v397 = vmul.f32 %v333, 0.01
      %v398 = vmul.f32 %v334, 0.01
      %v399 = vmul.f32 %v335, 0.01
      %v400 = vmul.f32 %v336, 0.01
      %v401 = vmul.f32 %v337, 0.01
      %v402 = vmul.f32 %v338, 0.01
      %v403 = vmul.f32 %v339, 0.01
      %v404 = vmul.f32 %v340, 0.01
      %v405 = vmul.f32 %v341, 0.01
      %v406 = vsel %vm342, %v310, %v374
      %v407 = vsel %vm343, %v311, %v375
      %v408 = vsel %vm344, %v312, %v376
      %v409 = vsel %vm345, %v313, %v377
      %v410 = vsel %vm346, %v314, %v378
      %v411 = vsel %vm347, %v315, %v379
      %v412 = vsel %vm348, %v316, %v380
      %v413 = vsel %vm349, %v317, %v381
      %v414 = vsel %vm350, %v318, %v382
      %v415 = vsel %vm351, %v319, %v383
      %v416 = vsel %vm352, %v320, %v384
      %v417 = vsel %vm353, %v321, %v385
      %v418 = vsel %vm354, %v322, %v386
      %v419 = vsel %vm355, %v323, %v387
      %v420 = vsel %vm356, %v324, %v388
      %v421 = vsel %vm357, %v325, %v389
      %v422 = vsel %vm358, %v326, %v390
      %v423 = vsel %vm359, %v327, %v391
      %v424 = vsel %vm360, %v328, %v392
      %v425 = vsel %vm361, %v329, %v393
      %v426 = vsel %vm362, %v330, %v394
      %v427 = vsel %vm363, %v331, %v395
      %v428 = vsel %vm364, %v332, %v396
      %v429 = vsel %vm365, %v333, %v397
      %v430 = vsel %vm366, %v334, %v398
      %v431 = vsel %vm367, %v335, %v399
      %v432 = vsel %vm368, %v336, %v400
      %v433 = vsel %vm369, %v337, %v401
      %v434 = vsel %vm370, %v338, %v402
      %v435 = vsel %vm371, %v339, %v403
      %v436 = vsel %vm372, %v340, %v404
      %v437 = vsel %vm373, %v341, %v405
      %438 = vst [vmem:[%s236] sm:$0xff] %v406
      %439 = vst [vmem:[%s236 + $0x8] sm:$0xff] %v407
      %440 = vst [vmem:[%s236 + $0x10] sm:$0xff] %v408
      %441 = vst [vmem:[%s236 + $0x18] sm:$0xff] %v409
      %442 = vst [vmem:[%s236 + $0x20] sm:$0xff] %v410
      %443 = vst [vmem:[%s236 + $0x28] sm:$0xff] %v411
      %444 = vst [vmem:[%s236 + $0x30] sm:$0xff] %v412
      %445 = vst [vmem:[%s236 + $0x38] sm:$0xff] %v413
      %446 = vst [vmem:[%s236 + $0x40] sm:$0xff] %v414
      %447 = vst [vmem:[%s236 + $0x48] sm:$0xff] %v415
      %448 = vst [vmem:[%s236 + $0x50] sm:$0xff] %v416
      %449 = vst [vmem:[%s236 + $0x58] sm:$0xff] %v417
      %450 = vst [vmem:[%s236 + $0x60] sm:$0xff] %v418
      %451 = vst [vmem:[%s236 + $0x68] sm:$0xff] %v419
      %452 = vst [vmem:[%s236 + $0x70] sm:$0xff] %v420
      %453 = vst [vmem:[%s236 + $0x78] sm:$0xff] %v421
      %454 = vst [vmem:[%s236 + $0x80] sm:$0xff] %v422
      %455 = vst [vmem:[%s236 + $0x88] sm:$0xff] %v423
      %456 = vst [vmem:[%s236 + $0x90] sm:$0xff] %v424
      %457 = vst [vmem:[%s236 + $0x98] sm:$0xff] %v425
      %458 = vst [vmem:[%s236 + $0xa0] sm:$0xff] %v426
      %459 = vst [vmem:[%s236 + $0xa8] sm:$0xff] %v427
      %460 = vst [vmem:[%s236 + $0xb0] sm:$0xff] %v428
      %461 = vst [vmem:[%s236 + $0xb8] sm:$0xff] %v429
      %462 = vst [vmem:[%s236 + $0xc0] sm:$0xff] %v430
      %463 = vst [vmem:[%s236 + $0xc8] sm:$0xff] %v431
      %464 = vst [vmem:[%s236 + $0xd0] sm:$0xff] %v432
      %465 = vst [vmem:[%s236 + $0xd8] sm:$0xff] %v433
      %466 = vst [vmem:[%s236 + $0xe0] sm:$0xff] %v434
      %467 = vst [vmem:[%s236 + $0xe8] sm:$0xff] %v435
      %468 = vst [vmem:[%s236 + $0xf0] sm:$0xff] %v436
      %469 = vst [vmem:[%s236 + $0xf8] sm:$0xff] %v437
      %s470 = smul.u32 32, %s19
      %p471 = scmp.lt.s32.totalorder %s18, 1
      %s472 = scalar_select %p471, %s18, 1
      %p473 = scmp.lt.s32.totalorder %s470, 31
      %s474 = scalar_select %p473, %s470, 31
      %s475 = smul.addr %s472, 32
      %s476 = sadd.s32 %s474, %s475
      %s477 = smul.addr %s476, 8
      %s478 = scalar_lea.vmem %s3, %s477
      // Predicated region
      $region33: #{generator_forward.91} parent=31 // pred_check
        %p479 = pneg %p126
      $region34: #{generator_forward.91} parent=31 // pred_check_branch
        %481 = sbr.rel (%p479) target = $region36
      $region35: #{generator_forward.91} parent=31 // pred_region
        %s482 = smul.u32 32, %s19
      $region36: #{generator_forward.91} parent=31 // pred_fallthru
        _
    $region32: #{generator_forward.91} parent=5 // pred_fallthru
      _
    %p483 = scmp.le.s32.totalorder 2, %s9
    // Predicated region
    $region37: #{generator_forward.91} parent=5 // pred_check
      %p484 = pneg %p483
    $region38: #{generator_forward.91} parent=5 // pred_check_branch
      %486 = sbr.rel (%p484) target = $region40
    $region39: #{generator_forward.91} parent=5 // pred_region
      %s487 = ssub.s32 %s9, 2
      // Predicated region
      $region41: #{generator_forward.91} parent=39 // pred_check
        %p488 = pneg %p132
      $region42: #{generator_forward.91} parent=39 // pred_check_branch
        %490 = sbr.rel (%p488) target = $region44
      $region43: #{generator_forward.91} parent=39 // pred_region
        %s491 = smul.u32 32, %s21
        %p492 = scmp.lt.s32.totalorder %s20, 1
        %s493 = scalar_select %p492, %s20, 1
        %p494 = scmp.lt.s32.totalorder %s491, 31
        %s495 = scalar_select %p494, %s491, 31
        %s496 = smul.addr %s493, 32
        %s497 = sadd.s32 %s495, %s496
        %s498 = smul.addr %s497, 8
        %s499 = scalar_lea.vmem %s3, %s498
      $region44: #{generator_forward.91} parent=39 // pred_fallthru
        _
    $region40: #{generator_forward.91} parent=5 // pred_fallthru
      _
  $region6: #{generator_forward.91} parent=0 // loop_footer
    %s13 = sadd.s32 1, %s9
  $region7: #{generator_forward.91} parent=0 // loop_footer_branch
    %8 = sbr.rel target = $region3
  $region8: #{generator_forward.91} parent=0 // loop_exit
    _

</llo_original>
